<compile_context>
chip_gen: v6e
topology: v6e:2x2x1
jax: 0.10.0
libtpu: 0.0.40
codegen_flags: <defaults>
</compile_context>

<pallas_src>
import jax
import jax.numpy as jnp
from jax.experimental import pallas as pl
from jax.experimental.pallas import tpu as pltpu

EPS = 1e-5           # InstanceNorm1d default eps
CP = 72              # fixed 8-aligned channel width used inside the kernel
_CONV1_OUT = 64      # channels produced by the first conv (as in the PyTorch model)
_RB_KS = (9, 5, 3)   # residual-block kernel sizes


def _round_up(n, m):
    return ((n + m - 1) // m) * m


# ------------------------------ fused kernel ---------------------------------

def _make_fused_kernel(L):
    inv_l = 1.0 / L

    def shifted(h, lane, s):
        # out[:, l] = h[:, l - s] for 0 <= l - s < L, zero outside ('same' padding).
        # pltpu.roll follows jnp.roll semantics (positive shift -> higher lanes);
        # the wrapped lanes are exactly the ones masked to zero.
        if s == 0:
            return h
        r = pltpu.roll(h, s % L, 1)
        if s > 0:
            return jnp.where(lane >= s, r, 0.0)
        return jnp.where(lane < L + s, r, 0.0)

    def conv(h, lane, w_ref, b_ref, K):
        # Conv1d(padding=K//2) as ONE matmul: taps folded into the contraction dim.
        pad = K // 2
        cols = [shifted(h, lane, pad - k) for k in range(K)]
        im = jnp.concatenate(cols, axis=0)                      # (K*C, L)
        return jnp.dot(w_ref[...], im,
                       preferred_element_type=jnp.float32) + b_ref[...]

    def inorm(v):
        # InstanceNorm1d (affine=False): single-pass stats, biased variance.
        mean = jnp.sum(v, axis=-1, keepdims=True) * inv_l
        msq = jnp.sum(v * v, axis=-1, keepdims=True) * inv_l
        var = jnp.maximum(msq - mean * mean, 0.0)
        return (v - mean) * jax.lax.rsqrt(var + EPS)

    def prelu(v, a):                         # a: scalar read from SMEM
        return jnp.where(v > 0, v, v * a)

    def resblock(h, lane, a, w1, b1, w2, b2, w3, b3):
        residual = inorm(h)
        out = prelu(inorm(conv(h, lane, w1, b1, _RB_KS[0])), a)
        out = prelu(inorm(conv(out, lane, w2, b2, _RB_KS[1])), a)
        out = inorm(conv(out, lane, w3, b3, _RB_KS[2]))
        return jnp.maximum(out + residual, 0.0)

    def kernel(alphas_ref, xin_ref, sbpf_ref,
               c1w, c1b,
               r1w1, r1b1, r1w2, r1b2, r1w3, r1b3,
               r2w1, r2b1, r2w2, r2b2, r2w3, r2b3,
               r3w1, r3b1, r3w2, r3b2, r3w3, r3b3,
               fcw, fcb,
               out_ref):
        x0 = xin_ref[0]                                          # (cin0p, L)
        sbp_b = jnp.broadcast_to(sbpf_ref[0], (CP, L))           # sbp feature row
        lane0 = jax.lax.broadcasted_iota(jnp.int32, x0.shape, 1)
        lane = jax.lax.broadcasted_iota(jnp.int32, (CP, L), 1)
        row = jax.lax.broadcasted_iota(jnp.int32, (CP, L), 0)

        # conv1 -> InstanceNorm -> PReLU (real channels 0..63; padded rows stay 0)
        h = prelu(inorm(conv(x0, lane0, c1w, c1b, 7)), alphas_ref[0])

        # torch.cat((h, sbp), dim=1) == write sbp into the reserved channel slot.
        h = jnp.where(row == _CONV1_OUT, sbp_b, h)
        h = resblock(h, lane, alphas_ref[1], r1w1, r1b1, r1w2, r1b2, r1w3, r1b3)

        h = jnp.where(row == _CONV1_OUT + 1, sbp_b, h)
        h = resblock(h, lane, alphas_ref[2], r2w1, r2b1, r2w2, r2b2, r2w3, r2b3)

        h = jnp.where(row == _CONV1_OUT + 2, sbp_b, h)
        h = resblock(h, lane, alphas_ref[3], r3w1, r3b1, r3w2, r3b2, r3w3, r3b3)

        # AdaptiveAvgPool1d(1) + Linear(67, num_classes), folded as one matmul
        # over the full (CP, L) tile followed by a lane reduction.
        scores = jnp.dot(fcw[...], h, preferred_element_type=jnp.float32)  # (ncp, L)
        out_ref[0] = jnp.sum(scores, axis=-1, keepdims=True) * inv_l + fcb[...]

    return kernel


# ---------------------------- weight packing (glue) ---------------------------

def _pack_conv(w, b, cin_p, cout_p):
    """(Cout, Cin, K) conv weight -> (cout_p, K*cin_p) matmul matrix (tap-major
    contraction, zero-padded channels) plus a (cout_p, 1) bias column."""
    cout, cin, K = w.shape
    wpad = jnp.zeros((cout_p, cin_p, K), jnp.float32).at[:cout, :cin, :].set(
        w.astype(jnp.float32))
    wmat = jnp.transpose(wpad, (0, 2, 1)).reshape(cout_p, K * cin_p)
    bpad = jnp.zeros((cout_p, 1), jnp.float32).at[:cout, 0].set(
        b.astype(jnp.float32))
    return wmat, bpad


# ------------------------------- model forward --------------------------------

def resnet_forward(params, x, sbp):
    """x: (B, input_channels, L) float32, sbp: (B,) float32 -> (B, num_classes)."""
    B, cin, L = x.shape
    if L % 128 != 0:
        # TODO(synk): general seq_len (e.g. 875) needs lane padding plus masked
        # InstanceNorm / GAP statistics over the real length; demo uses 128.
        raise ValueError("seq_len must be a multiple of 128 lanes")

    num_classes = params["fc_w"].shape[0]
    ncp = _round_up(max(num_classes, 1), 8)
    cin0 = cin + 1
    cin0p = _round_up(max(cin0, 1), 8)

    # fc_sbp = Linear(1, seq_len): tiny glue kept in plain JAX.
    sbp_feat = (sbp[:, None].astype(jnp.float32) * params["w_sbp"][None, :]
                + params["b_sbp"][None, :])                        # (B, L)
    sbpf = sbp_feat[:, None, :]                                    # (B, 1, L)

    # torch.cat((x, sbp_feature), dim=1), zero-padded to an 8-aligned channel count.
    xin = jnp.concatenate([x.astype(jnp.float32), sbpf], axis=1)   # (B, cin+1, L)
    xin = jnp.pad(xin, ((0, 0), (0, cin0p - cin0), (0, 0)))

    # Pack weights (cheap; could be hoisted/cached for repeated inference).
    c1w, c1b = _pack_conv(params["conv1_w"], params["conv1_b"], cin0p, CP)
    wargs = [c1w, c1b]
    for name in ("rb1", "rb2", "rb3"):
        p = params[name]
        for wk, bk in (("w1", "b1"), ("w2", "b2"), ("w3", "b3")):
            wm, bm = _pack_conv(p[wk], p[bk], CP, CP)
            wargs += [wm, bm]
    c_fc = params["fc_w"].shape[1]
    fcw = jnp.zeros((ncp, CP), jnp.float32).at[:num_classes, :c_fc].set(
        params["fc_w"].astype(jnp.float32))
    fcb = jnp.zeros((ncp, 1), jnp.float32).at[:num_classes, 0].set(
        params["fc_b"].astype(jnp.float32))
    wargs += [fcw, fcb]

    # PReLU slopes (ResNet.prelu, rb1/rb2/rb3.prelu) as SMEM scalars.
    alphas = jnp.stack([params["prelu"], params["rb1"]["alpha"],
                        params["rb2"]["alpha"], params["rb3"]["alpha"]]
                       ).astype(jnp.float32)                       # (4,)

    kernel = _make_fused_kernel(L)

    in_specs = [
        pl.BlockSpec(memory_space=pltpu.MemorySpace.SMEM),         # PReLU alphas
        pl.BlockSpec((1, cin0p, L), lambda i: (i, 0, 0)),          # padded input
        pl.BlockSpec((1, 1, L), lambda i: (i, 0, 0)),              # sbp feature row
    ] + [pl.BlockSpec(w.shape, lambda i: (0, 0)) for w in wargs]   # resident weights

    out = pl.pallas_call(
        kernel,
        out_shape=jax.ShapeDtypeStruct((B, ncp, 1), jnp.float32),
        grid=(B,),
        in_specs=in_specs,
        out_specs=pl.BlockSpec((1, ncp, 1), lambda i: (i, 0, 0)),
        compiler_params=pltpu.CompilerParams(
            dimension_semantics=("parallel",),       # batch -> both TCs on v7x
            vmem_limit_bytes=32 * 1024 * 1024,
        ),
    )(alphas, xin, sbpf, *wargs)

    return out[:, :num_classes, 0]


# ------------------------------ parameter setup --------------------------------

def init_params(key, input_channels, num_classes, seq_len):
    keys = jax.random.split(key, 32)
    it = iter(keys)

    def nrm(shape, scale=0.05):
        return scale * jax.random.normal(next(it), shape, jnp.float32)

    def rb(c):
        return dict(
            w1=nrm((c, c, 9)), b1=nrm((c,)),
            w2=nrm((c, c, 5)), b2=nrm((c,)),
            w3=nrm((c, c, 3)), b3=nrm((c,)),
            alpha=jnp.asarray(0.25, jnp.float32),    # PReLU default init
        )

    return dict(
        w_sbp=nrm((seq_len,)), b_sbp=nrm((seq_len,)),              # Linear(1, seq_len)
        conv1_w=nrm((64, input_channels + 1, 7)), conv1_b=nrm((64,)),
        prelu=jnp.asarray(0.25, jnp.float32),
        rb1=rb(65), rb2=rb(66), rb3=rb(67),
        fc_w=nrm((num_classes, 67)), fc_b=nrm((num_classes,)),     # Linear(67, classes)
    )


if __name__ == "__main__":
    key = jax.random.PRNGKey(0)
    B, input_channels, seq_len, num_classes = 2, 2, 128, 4

    kx, ks, kp = jax.random.split(key, 3)
    x = jax.random.normal(kx, (B, input_channels, seq_len), jnp.float32)
    sbp = jax.random.normal(ks, (B,), jnp.float32)
    params = init_params(kp, input_channels, num_classes, seq_len)

    out = jax.jit(resnet_forward)(params, x, sbp)
    out = jax.block_until_ready(out)
    assert out.shape == (B, num_classes)
    assert bool(jnp.all(jnp.isfinite(out)))
    print("KERNEL_OK")
</pallas_src>

<mosaic_0001>
module attributes {stable_mosaic.version = 11 : i64} {
  func.func @kernel(%arg0: i32, %arg1: memref<4xf32, #tpu.memory_space<smem>>, %arg2: memref<1x8x128xf32, #tpu.memory_space<vmem>>, %arg3: memref<1x1x128xf32, #tpu.memory_space<vmem>>, %arg4: memref<72x56xf32, #tpu.memory_space<vmem>>, %arg5: memref<72x1xf32, #tpu.memory_space<vmem>>, %arg6: memref<72x648xf32, #tpu.memory_space<vmem>>, %arg7: memref<72x1xf32, #tpu.memory_space<vmem>>, %arg8: memref<72x360xf32, #tpu.memory_space<vmem>>, %arg9: memref<72x1xf32, #tpu.memory_space<vmem>>, %arg10: memref<72x216xf32, #tpu.memory_space<vmem>>, %arg11: memref<72x1xf32, #tpu.memory_space<vmem>>, %arg12: memref<72x648xf32, #tpu.memory_space<vmem>>, %arg13: memref<72x1xf32, #tpu.memory_space<vmem>>, %arg14: memref<72x360xf32, #tpu.memory_space<vmem>>, %arg15: memref<72x1xf32, #tpu.memory_space<vmem>>, %arg16: memref<72x216xf32, #tpu.memory_space<vmem>>, %arg17: memref<72x1xf32, #tpu.memory_space<vmem>>, %arg18: memref<72x648xf32, #tpu.memory_space<vmem>>, %arg19: memref<72x1xf32, #tpu.memory_space<vmem>>, %arg20: memref<72x360xf32, #tpu.memory_space<vmem>>, %arg21: memref<72x1xf32, #tpu.memory_space<vmem>>, %arg22: memref<72x216xf32, #tpu.memory_space<vmem>>, %arg23: memref<72x1xf32, #tpu.memory_space<vmem>>, %arg24: memref<8x72xf32, #tpu.memory_space<vmem>>, %arg25: memref<8x1xf32, #tpu.memory_space<vmem>>, %arg26: memref<1x8x1xf32, #tpu.memory_space<vmem>>) attributes {dimension_semantics = [#tpu.dimension_semantics<parallel>], iteration_bounds = array<i64: 2>, scalar_prefetch = 0 : i64, scratch_operands = 0 : i64, tpu.core_type = #tpu.core_type<tc>, window_params = [{transform_indices = @transform_0, window_bounds = array<i64: 4>}, {transform_indices = @transform_1, window_bounds = array<i64: 1, 8, 128>}, {transform_indices = @transform_2, window_bounds = array<i64: 1, 1, 128>}, {pipeline_mode = #tpu.pipeline_mode<synchronous>, transform_indices = @transform_3, window_bounds = array<i64: 72, 56>}, {pipeline_mode = #tpu.pipeline_mode<synchronous>, transform_indices = @transform_4, window_bounds = array<i64: 72, 1>}, {pipeline_mode = #tpu.pipeline_mode<synchronous>, transform_indices = @transform_5, window_bounds = array<i64: 72, 648>}, {pipeline_mode = #tpu.pipeline_mode<synchronous>, transform_indices = @transform_6, window_bounds = array<i64: 72, 1>}, {pipeline_mode = #tpu.pipeline_mode<synchronous>, transform_indices = @transform_7, window_bounds = array<i64: 72, 360>}, {pipeline_mode = #tpu.pipeline_mode<synchronous>, transform_indices = @transform_8, window_bounds = array<i64: 72, 1>}, {pipeline_mode = #tpu.pipeline_mode<synchronous>, transform_indices = @transform_9, window_bounds = array<i64: 72, 216>}, {pipeline_mode = #tpu.pipeline_mode<synchronous>, transform_indices = @transform_10, window_bounds = array<i64: 72, 1>}, {pipeline_mode = #tpu.pipeline_mode<synchronous>, transform_indices = @transform_11, window_bounds = array<i64: 72, 648>}, {pipeline_mode = #tpu.pipeline_mode<synchronous>, transform_indices = @transform_12, window_bounds = array<i64: 72, 1>}, {pipeline_mode = #tpu.pipeline_mode<synchronous>, transform_indices = @transform_13, window_bounds = array<i64: 72, 360>}, {pipeline_mode = #tpu.pipeline_mode<synchronous>, transform_indices = @transform_14, window_bounds = array<i64: 72, 1>}, {pipeline_mode = #tpu.pipeline_mode<synchronous>, transform_indices = @transform_15, window_bounds = array<i64: 72, 216>}, {pipeline_mode = #tpu.pipeline_mode<synchronous>, transform_indices = @transform_16, window_bounds = array<i64: 72, 1>}, {pipeline_mode = #tpu.pipeline_mode<synchronous>, transform_indices = @transform_17, window_bounds = array<i64: 72, 648>}, {pipeline_mode = #tpu.pipeline_mode<synchronous>, transform_indices = @transform_18, window_bounds = array<i64: 72, 1>}, {pipeline_mode = #tpu.pipeline_mode<synchronous>, transform_indices = @transform_19, window_bounds = array<i64: 72, 360>}, {pipeline_mode = #tpu.pipeline_mode<synchronous>, transform_indices = @transform_20, window_bounds = array<i64: 72, 1>}, {pipeline_mode = #tpu.pipeline_mode<synchronous>, transform_indices = @transform_21, window_bounds = array<i64: 72, 216>}, {pipeline_mode = #tpu.pipeline_mode<synchronous>, transform_indices = @transform_22, window_bounds = array<i64: 72, 1>}, {pipeline_mode = #tpu.pipeline_mode<synchronous>, transform_indices = @transform_23, window_bounds = array<i64: 8, 72>}, {pipeline_mode = #tpu.pipeline_mode<synchronous>, transform_indices = @transform_24, window_bounds = array<i64: 8, 1>}, {transform_indices = @transform_25, window_bounds = array<i64: 1, 8, 1>}]} {
    %c0 = arith.constant 0 : index
    %c0_0 = arith.constant 0 : index
    %c0_1 = arith.constant 0 : index
    %0 = vector.load %arg2[%c0, %c0_0, %c0_1] : memref<1x8x128xf32, #tpu.memory_space<vmem>>, vector<1x8x128xf32>
    %1 = vector.shape_cast %0 : vector<1x8x128xf32> to vector<8x128xf32>
    %c0_2 = arith.constant 0 : index
    %c0_3 = arith.constant 0 : index
    %c0_4 = arith.constant 0 : index
    %2 = vector.load %arg3[%c0_2, %c0_3, %c0_4] : memref<1x1x128xf32, #tpu.memory_space<vmem>>, vector<1x1x128xf32>
    %3 = vector.shape_cast %2 : vector<1x1x128xf32> to vector<1x128xf32>
    %4 = vector.shape_cast %3 : vector<1x128xf32> to vector<1x128xf32>
    %5 = vector.broadcast %4 : vector<1x128xf32> to vector<72x128xf32>
    %6 = tpu.iota {dimensions = array<i32: 1>} : vector<8x128xi32>
    %7 = tpu.iota {dimensions = array<i32: 1>} : vector<72x128xi32>
    %8 = tpu.iota {dimensions = array<i32: 0>} : vector<72x128xi32>
    %c3_i32 = arith.constant 3 : i32
    %9 = tpu.dynamic_rotate %1 by %c3_i32 dim 1 : vector<8x128xf32>, i32 -> vector<8x128xf32>
    %c3_i32_5 = arith.constant 3 : i32
    %10 = vector.broadcast %c3_i32_5 : i32 to vector<8x128xi32>
    %11 = arith.cmpi sge, %6, %10 : vector<8x128xi32>
    %cst = arith.constant 0.000000e+00 : f32
    %12 = vector.broadcast %cst : f32 to vector<8x128xf32>
    %13 = arith.select %11, %9, %12 : vector<8x128xi1>, vector<8x128xf32>
    %c2_i32 = arith.constant 2 : i32
    %14 = tpu.dynamic_rotate %1 by %c2_i32 dim 1 : vector<8x128xf32>, i32 -> vector<8x128xf32>
    %c2_i32_6 = arith.constant 2 : i32
    %15 = vector.broadcast %c2_i32_6 : i32 to vector<8x128xi32>
    %16 = arith.cmpi sge, %6, %15 : vector<8x128xi32>
    %cst_7 = arith.constant 0.000000e+00 : f32
    %17 = vector.broadcast %cst_7 : f32 to vector<8x128xf32>
    %18 = arith.select %16, %14, %17 : vector<8x128xi1>, vector<8x128xf32>
    %c1_i32 = arith.constant 1 : i32
    %19 = tpu.dynamic_rotate %1 by %c1_i32 dim 1 : vector<8x128xf32>, i32 -> vector<8x128xf32>
    %c1_i32_8 = arith.constant 1 : i32
    %20 = vector.broadcast %c1_i32_8 : i32 to vector<8x128xi32>
    %21 = arith.cmpi sge, %6, %20 : vector<8x128xi32>
    %cst_9 = arith.constant 0.000000e+00 : f32
    %22 = vector.broadcast %cst_9 : f32 to vector<8x128xf32>
    %23 = arith.select %21, %19, %22 : vector<8x128xi1>, vector<8x128xf32>
    %c127_i32 = arith.constant 127 : i32
    %24 = tpu.dynamic_rotate %1 by %c127_i32 dim 1 : vector<8x128xf32>, i32 -> vector<8x128xf32>
    %c127_i32_10 = arith.constant 127 : i32
    %25 = vector.broadcast %c127_i32_10 : i32 to vector<8x128xi32>
    %26 = arith.cmpi slt, %6, %25 : vector<8x128xi32>
    %cst_11 = arith.constant 0.000000e+00 : f32
    %27 = vector.broadcast %cst_11 : f32 to vector<8x128xf32>
    %28 = arith.select %26, %24, %27 : vector<8x128xi1>, vector<8x128xf32>
    %c126_i32 = arith.constant 126 : i32
    %29 = tpu.dynamic_rotate %1 by %c126_i32 dim 1 : vector<8x128xf32>, i32 -> vector<8x128xf32>
    %c126_i32_12 = arith.constant 126 : i32
    %30 = vector.broadcast %c126_i32_12 : i32 to vector<8x128xi32>
    %31 = arith.cmpi slt, %6, %30 : vector<8x128xi32>
    %cst_13 = arith.constant 0.000000e+00 : f32
    %32 = vector.broadcast %cst_13 : f32 to vector<8x128xf32>
    %33 = arith.select %31, %29, %32 : vector<8x128xi1>, vector<8x128xf32>
    %c125_i32 = arith.constant 125 : i32
    %34 = tpu.dynamic_rotate %1 by %c125_i32 dim 1 : vector<8x128xf32>, i32 -> vector<8x128xf32>
    %c125_i32_14 = arith.constant 125 : i32
    %35 = vector.broadcast %c125_i32_14 : i32 to vector<8x128xi32>
    %36 = arith.cmpi slt, %6, %35 : vector<8x128xi32>
    %cst_15 = arith.constant 0.000000e+00 : f32
    %37 = vector.broadcast %cst_15 : f32 to vector<8x128xf32>
    %38 = arith.select %36, %34, %37 : vector<8x128xi1>, vector<8x128xf32>
    %39 = tpu.concatenate %13, %18, %23, %1, %28, %33, %38 in 0 : vector<8x128xf32>, vector<8x128xf32>, vector<8x128xf32>, vector<8x128xf32>, vector<8x128xf32>, vector<8x128xf32>, vector<8x128xf32> -> vector<56x128xf32>
    %c0_16 = arith.constant 0 : index
    %c0_17 = arith.constant 0 : index
    %40 = vector.load %arg4[%c0_16, %c0_17] : memref<72x56xf32, #tpu.memory_space<vmem>>, vector<72x56xf32>
    %cst_18 = arith.constant dense<0.000000e+00> : vector<72x128xf32>
    %41 = tpu.matmul %40, %39, %cst_18 {dimension_numbers = #tpu.dot_dimension_numbers<[1], [0], [0], [1], [0, 0, 1, 1], [], []>} : vector<72x56xf32>, vector<56x128xf32>, vector<72x128xf32> -> vector<72x128xf32>
    %c0_19 = arith.constant 0 : index
    %c0_20 = arith.constant 0 : index
    %42 = vector.load %arg5[%c0_19, %c0_20] : memref<72x1xf32, #tpu.memory_space<vmem>>, vector<72x1xf32>
    %43 = vector.broadcast %42 : vector<72x1xf32> to vector<72x128xf32>
    %44 = arith.addf %41, %43 : vector<72x128xf32>
    %cst_21 = arith.constant dense<0.000000e+00> : vector<72xf32>
    %45 = vector.multi_reduction <add>, %44, %cst_21 [1] : vector<72x128xf32> to vector<72xf32>
    %46 = vector.shape_cast %45 : vector<72xf32> to vector<72x1xf32>
    %cst_22 = arith.constant 7.812500e-03 : f32
    %47 = vector.broadcast %cst_22 : f32 to vector<72x1xf32>
    %48 = arith.mulf %46, %47 : vector<72x1xf32>
    %49 = arith.mulf %44, %44 : vector<72x128xf32>
    %cst_23 = arith.constant dense<0.000000e+00> : vector<72xf32>
    %50 = vector.multi_reduction <add>, %49, %cst_23 [1] : vector<72x128xf32> to vector<72xf32>
    %51 = vector.shape_cast %50 : vector<72xf32> to vector<72x1xf32>
    %cst_24 = arith.constant 7.812500e-03 : f32
    %52 = vector.broadcast %cst_24 : f32 to vector<72x1xf32>
    %53 = arith.mulf %51, %52 : vector<72x1xf32>
    %54 = arith.mulf %48, %48 : vector<72x1xf32>
    %55 = arith.subf %53, %54 : vector<72x1xf32>
    %cst_25 = arith.constant 0.000000e+00 : f32
    %56 = vector.broadcast %cst_25 : f32 to vector<72x1xf32>
    %57 = arith.maximumf %55, %56 : vector<72x1xf32>
    %58 = vector.broadcast %48 : vector<72x1xf32> to vector<72x128xf32>
    %59 = arith.subf %44, %58 : vector<72x128xf32>
    %cst_26 = arith.constant 9.99999974E-6 : f32
    %60 = vector.broadcast %cst_26 : f32 to vector<72x1xf32>
    %61 = arith.addf %57, %60 : vector<72x1xf32>
    %62 = math.rsqrt %61 : vector<72x1xf32>
    %63 = vector.broadcast %62 : vector<72x1xf32> to vector<72x128xf32>
    %64 = arith.mulf %59, %63 : vector<72x128xf32>
    %c0_27 = arith.constant 0 : index
    %65 = memref.load %arg1[%c0_27] : memref<4xf32, #tpu.memory_space<smem>>
    %cst_28 = arith.constant 0.000000e+00 : f32
    %66 = vector.broadcast %cst_28 : f32 to vector<72x128xf32>
    %67 = arith.cmpf ogt, %64, %66 : vector<72x128xf32>
    %68 = vector.broadcast %65 : f32 to vector<72x128xf32>
    %69 = arith.mulf %64, %68 : vector<72x128xf32>
    %70 = arith.select %67, %64, %69 : vector<72x128xi1>, vector<72x128xf32>
    %c64_i32 = arith.constant 64 : i32
    %71 = vector.broadcast %c64_i32 : i32 to vector<72x128xi32>
    %72 = arith.cmpi eq, %8, %71 : vector<72x128xi32>
    %73 = arith.select %72, %5, %70 : vector<72x128xi1>, vector<72x128xf32>
    %c1 = arith.constant 1 : index
    %74 = memref.load %arg1[%c1] : memref<4xf32, #tpu.memory_space<smem>>
    %cst_29 = arith.constant dense<0.000000e+00> : vector<72xf32>
    %75 = vector.multi_reduction <add>, %73, %cst_29 [1] : vector<72x128xf32> to vector<72xf32>
    %76 = vector.shape_cast %75 : vector<72xf32> to vector<72x1xf32>
    %cst_30 = arith.constant 7.812500e-03 : f32
    %77 = vector.broadcast %cst_30 : f32 to vector<72x1xf32>
    %78 = arith.mulf %76, %77 : vector<72x1xf32>
    %79 = arith.mulf %73, %73 : vector<72x128xf32>
    %cst_31 = arith.constant dense<0.000000e+00> : vector<72xf32>
    %80 = vector.multi_reduction <add>, %79, %cst_31 [1] : vector<72x128xf32> to vector<72xf32>
    %81 = vector.shape_cast %80 : vector<72xf32> to vector<72x1xf32>
    %cst_32 = arith.constant 7.812500e-03 : f32
    %82 = vector.broadcast %cst_32 : f32 to vector<72x1xf32>
    %83 = arith.mulf %81, %82 : vector<72x1xf32>
    %84 = arith.mulf %78, %78 : vector<72x1xf32>
    %85 = arith.subf %83, %84 : vector<72x1xf32>
    %cst_33 = arith.constant 0.000000e+00 : f32
    %86 = vector.broadcast %cst_33 : f32 to vector<72x1xf32>
    %87 = arith.maximumf %85, %86 : vector<72x1xf32>
    %88 = vector.broadcast %78 : vector<72x1xf32> to vector<72x128xf32>
    %89 = arith.subf %73, %88 : vector<72x128xf32>
    %cst_34 = arith.constant 9.99999974E-6 : f32
    %90 = vector.broadcast %cst_34 : f32 to vector<72x1xf32>
    %91 = arith.addf %87, %90 : vector<72x1xf32>
    %92 = math.rsqrt %91 : vector<72x1xf32>
    %93 = vector.broadcast %92 : vector<72x1xf32> to vector<72x128xf32>
    %94 = arith.mulf %89, %93 : vector<72x128xf32>
    %c4_i32 = arith.constant 4 : i32
    %95 = tpu.dynamic_rotate %73 by %c4_i32 dim 1 : vector<72x128xf32>, i32 -> vector<72x128xf32>
    %c4_i32_35 = arith.constant 4 : i32
    %96 = vector.broadcast %c4_i32_35 : i32 to vector<72x128xi32>
    %97 = arith.cmpi sge, %7, %96 : vector<72x128xi32>
    %cst_36 = arith.constant 0.000000e+00 : f32
    %98 = vector.broadcast %cst_36 : f32 to vector<72x128xf32>
    %99 = arith.select %97, %95, %98 : vector<72x128xi1>, vector<72x128xf32>
    %c3_i32_37 = arith.constant 3 : i32
    %100 = tpu.dynamic_rotate %73 by %c3_i32_37 dim 1 : vector<72x128xf32>, i32 -> vector<72x128xf32>
    %c3_i32_38 = arith.constant 3 : i32
    %101 = vector.broadcast %c3_i32_38 : i32 to vector<72x128xi32>
    %102 = arith.cmpi sge, %7, %101 : vector<72x128xi32>
    %cst_39 = arith.constant 0.000000e+00 : f32
    %103 = vector.broadcast %cst_39 : f32 to vector<72x128xf32>
    %104 = arith.select %102, %100, %103 : vector<72x128xi1>, vector<72x128xf32>
    %c2_i32_40 = arith.constant 2 : i32
    %105 = tpu.dynamic_rotate %73 by %c2_i32_40 dim 1 : vector<72x128xf32>, i32 -> vector<72x128xf32>
    %c2_i32_41 = arith.constant 2 : i32
    %106 = vector.broadcast %c2_i32_41 : i32 to vector<72x128xi32>
    %107 = arith.cmpi sge, %7, %106 : vector<72x128xi32>
    %cst_42 = arith.constant 0.000000e+00 : f32
    %108 = vector.broadcast %cst_42 : f32 to vector<72x128xf32>
    %109 = arith.select %107, %105, %108 : vector<72x128xi1>, vector<72x128xf32>
    %c1_i32_43 = arith.constant 1 : i32
    %110 = tpu.dynamic_rotate %73 by %c1_i32_43 dim 1 : vector<72x128xf32>, i32 -> vector<72x128xf32>
    %c1_i32_44 = arith.constant 1 : i32
    %111 = vector.broadcast %c1_i32_44 : i32 to vector<72x128xi32>
    %112 = arith.cmpi sge, %7, %111 : vector<72x128xi32>
    %cst_45 = arith.constant 0.000000e+00 : f32
    %113 = vector.broadcast %cst_45 : f32 to vector<72x128xf32>
    %114 = arith.select %112, %110, %113 : vector<72x128xi1>, vector<72x128xf32>
    %c127_i32_46 = arith.constant 127 : i32
    %115 = tpu.dynamic_rotate %73 by %c127_i32_46 dim 1 : vector<72x128xf32>, i32 -> vector<72x128xf32>
    %c127_i32_47 = arith.constant 127 : i32
    %116 = vector.broadcast %c127_i32_47 : i32 to vector<72x128xi32>
    %117 = arith.cmpi slt, %7, %116 : vector<72x128xi32>
    %cst_48 = arith.constant 0.000000e+00 : f32
    %118 = vector.broadcast %cst_48 : f32 to vector<72x128xf32>
    %119 = arith.select %117, %115, %118 : vector<72x128xi1>, vector<72x128xf32>
    %c126_i32_49 = arith.constant 126 : i32
    %120 = tpu.dynamic_rotate %73 by %c126_i32_49 dim 1 : vector<72x128xf32>, i32 -> vector<72x128xf32>
    %c126_i32_50 = arith.constant 126 : i32
    %121 = vector.broadcast %c126_i32_50 : i32 to vector<72x128xi32>
    %122 = arith.cmpi slt, %7, %121 : vector<72x128xi32>
    %cst_51 = arith.constant 0.000000e+00 : f32
    %123 = vector.broadcast %cst_51 : f32 to vector<72x128xf32>
    %124 = arith.select %122, %120, %123 : vector<72x128xi1>, vector<72x128xf32>
    %c125_i32_52 = arith.constant 125 : i32
    %125 = tpu.dynamic_rotate %73 by %c125_i32_52 dim 1 : vector<72x128xf32>, i32 -> vector<72x128xf32>
    %c125_i32_53 = arith.constant 125 : i32
    %126 = vector.broadcast %c125_i32_53 : i32 to vector<72x128xi32>
    %127 = arith.cmpi slt, %7, %126 : vector<72x128xi32>
    %cst_54 = arith.constant 0.000000e+00 : f32
    %128 = vector.broadcast %cst_54 : f32 to vector<72x128xf32>
    %129 = arith.select %127, %125, %128 : vector<72x128xi1>, vector<72x128xf32>
    %c124_i32 = arith.constant 124 : i32
    %130 = tpu.dynamic_rotate %73 by %c124_i32 dim 1 : vector<72x128xf32>, i32 -> vector<72x128xf32>
    %c124_i32_55 = arith.constant 124 : i32
    %131 = vector.broadcast %c124_i32_55 : i32 to vector<72x128xi32>
    %132 = arith.cmpi slt, %7, %131 : vector<72x128xi32>
    %cst_56 = arith.constant 0.000000e+00 : f32
    %133 = vector.broadcast %cst_56 : f32 to vector<72x128xf32>
    %134 = arith.select %132, %130, %133 : vector<72x128xi1>, vector<72x128xf32>
    %135 = tpu.concatenate %99, %104, %109, %114, %73, %119, %124, %129, %134 in 0 : vector<72x128xf32>, vector<72x128xf32>, vector<72x128xf32>, vector<72x128xf32>, vector<72x128xf32>, vector<72x128xf32>, vector<72x128xf32>, vector<72x128xf32>, vector<72x128xf32> -> vector<648x128xf32>
    %c0_57 = arith.constant 0 : index
    %c0_58 = arith.constant 0 : index
    %136 = vector.load %arg6[%c0_57, %c0_58] : memref<72x648xf32, #tpu.memory_space<vmem>>, vector<72x648xf32>
    %cst_59 = arith.constant dense<0.000000e+00> : vector<72x128xf32>
    %137 = tpu.matmul %136, %135, %cst_59 {dimension_numbers = #tpu.dot_dimension_numbers<[1], [0], [0], [1], [0, 0, 1, 1], [], []>} : vector<72x648xf32>, vector<648x128xf32>, vector<72x128xf32> -> vector<72x128xf32>
    %c0_60 = arith.constant 0 : index
    %c0_61 = arith.constant 0 : index
    %138 = vector.load %arg7[%c0_60, %c0_61] : memref<72x1xf32, #tpu.memory_space<vmem>>, vector<72x1xf32>
    %139 = vector.broadcast %138 : vector<72x1xf32> to vector<72x128xf32>
    %140 = arith.addf %137, %139 : vector<72x128xf32>
    %cst_62 = arith.constant dense<0.000000e+00> : vector<72xf32>
    %141 = vector.multi_reduction <add>, %140, %cst_62 [1] : vector<72x128xf32> to vector<72xf32>
    %142 = vector.shape_cast %141 : vector<72xf32> to vector<72x1xf32>
    %cst_63 = arith.constant 7.812500e-03 : f32
    %143 = vector.broadcast %cst_63 : f32 to vector<72x1xf32>
    %144 = arith.mulf %142, %143 : vector<72x1xf32>
    %145 = arith.mulf %140, %140 : vector<72x128xf32>
    %cst_64 = arith.constant dense<0.000000e+00> : vector<72xf32>
    %146 = vector.multi_reduction <add>, %145, %cst_64 [1] : vector<72x128xf32> to vector<72xf32>
    %147 = vector.shape_cast %146 : vector<72xf32> to vector<72x1xf32>
    %cst_65 = arith.constant 7.812500e-03 : f32
    %148 = vector.broadcast %cst_65 : f32 to vector<72x1xf32>
    %149 = arith.mulf %147, %148 : vector<72x1xf32>
    %150 = arith.mulf %144, %144 : vector<72x1xf32>
    %151 = arith.subf %149, %150 : vector<72x1xf32>
    %cst_66 = arith.constant 0.000000e+00 : f32
    %152 = vector.broadcast %cst_66 : f32 to vector<72x1xf32>
    %153 = arith.maximumf %151, %152 : vector<72x1xf32>
    %154 = vector.broadcast %144 : vector<72x1xf32> to vector<72x128xf32>
    %155 = arith.subf %140, %154 : vector<72x128xf32>
    %cst_67 = arith.constant 9.99999974E-6 : f32
    %156 = vector.broadcast %cst_67 : f32 to vector<72x1xf32>
    %157 = arith.addf %153, %156 : vector<72x1xf32>
    %158 = math.rsqrt %157 : vector<72x1xf32>
    %159 = vector.broadcast %158 : vector<72x1xf32> to vector<72x128xf32>
    %160 = arith.mulf %155, %159 : vector<72x128xf32>
    %cst_68 = arith.constant 0.000000e+00 : f32
    %161 = vector.broadcast %cst_68 : f32 to vector<72x128xf32>
    %162 = arith.cmpf ogt, %160, %161 : vector<72x128xf32>
    %163 = vector.broadcast %74 : f32 to vector<72x128xf32>
    %164 = arith.mulf %160, %163 : vector<72x128xf32>
    %165 = arith.select %162, %160, %164 : vector<72x128xi1>, vector<72x128xf32>
    %c2_i32_69 = arith.constant 2 : i32
    %166 = tpu.dynamic_rotate %165 by %c2_i32_69 dim 1 : vector<72x128xf32>, i32 -> vector<72x128xf32>
    %c2_i32_70 = arith.constant 2 : i32
    %167 = vector.broadcast %c2_i32_70 : i32 to vector<72x128xi32>
    %168 = arith.cmpi sge, %7, %167 : vector<72x128xi32>
    %cst_71 = arith.constant 0.000000e+00 : f32
    %169 = vector.broadcast %cst_71 : f32 to vector<72x128xf32>
    %170 = arith.select %168, %166, %169 : vector<72x128xi1>, vector<72x128xf32>
    %c1_i32_72 = arith.constant 1 : i32
    %171 = tpu.dynamic_rotate %165 by %c1_i32_72 dim 1 : vector<72x128xf32>, i32 -> vector<72x128xf32>
    %c1_i32_73 = arith.constant 1 : i32
    %172 = vector.broadcast %c1_i32_73 : i32 to vector<72x128xi32>
    %173 = arith.cmpi sge, %7, %172 : vector<72x128xi32>
    %cst_74 = arith.constant 0.000000e+00 : f32
    %174 = vector.broadcast %cst_74 : f32 to vector<72x128xf32>
    %175 = arith.select %173, %171, %174 : vector<72x128xi1>, vector<72x128xf32>
    %c127_i32_75 = arith.constant 127 : i32
    %176 = tpu.dynamic_rotate %165 by %c127_i32_75 dim 1 : vector<72x128xf32>, i32 -> vector<72x128xf32>
    %c127_i32_76 = arith.constant 127 : i32
    %177 = vector.broadcast %c127_i32_76 : i32 to vector<72x128xi32>
    %178 = arith.cmpi slt, %7, %177 : vector<72x128xi32>
    %cst_77 = arith.constant 0.000000e+00 : f32
    %179 = vector.broadcast %cst_77 : f32 to vector<72x128xf32>
    %180 = arith.select %178, %176, %179 : vector<72x128xi1>, vector<72x128xf32>
    %c126_i32_78 = arith.constant 126 : i32
    %181 = tpu.dynamic_rotate %165 by %c126_i32_78 dim 1 : vector<72x128xf32>, i32 -> vector<72x128xf32>
    %c126_i32_79 = arith.constant 126 : i32
    %182 = vector.broadcast %c126_i32_79 : i32 to vector<72x128xi32>
    %183 = arith.cmpi slt, %7, %182 : vector<72x128xi32>
    %cst_80 = arith.constant 0.000000e+00 : f32
    %184 = vector.broadcast %cst_80 : f32 to vector<72x128xf32>
    %185 = arith.select %183, %181, %184 : vector<72x128xi1>, vector<72x128xf32>
    %186 = tpu.concatenate %170, %175, %165, %180, %185 in 0 : vector<72x128xf32>, vector<72x128xf32>, vector<72x128xf32>, vector<72x128xf32>, vector<72x128xf32> -> vector<360x128xf32>
    %c0_81 = arith.constant 0 : index
    %c0_82 = arith.constant 0 : index
    %187 = vector.load %arg8[%c0_81, %c0_82] : memref<72x360xf32, #tpu.memory_space<vmem>>, vector<72x360xf32>
    %cst_83 = arith.constant dense<0.000000e+00> : vector<72x128xf32>
    %188 = tpu.matmul %187, %186, %cst_83 {dimension_numbers = #tpu.dot_dimension_numbers<[1], [0], [0], [1], [0, 0, 1, 1], [], []>} : vector<72x360xf32>, vector<360x128xf32>, vector<72x128xf32> -> vector<72x128xf32>
    %c0_84 = arith.constant 0 : index
    %c0_85 = arith.constant 0 : index
    %189 = vector.load %arg9[%c0_84, %c0_85] : memref<72x1xf32, #tpu.memory_space<vmem>>, vector<72x1xf32>
    %190 = vector.broadcast %189 : vector<72x1xf32> to vector<72x128xf32>
    %191 = arith.addf %188, %190 : vector<72x128xf32>
    %cst_86 = arith.constant dense<0.000000e+00> : vector<72xf32>
    %192 = vector.multi_reduction <add>, %191, %cst_86 [1] : vector<72x128xf32> to vector<72xf32>
    %193 = vector.shape_cast %192 : vector<72xf32> to vector<72x1xf32>
    %cst_87 = arith.constant 7.812500e-03 : f32
    %194 = vector.broadcast %cst_87 : f32 to vector<72x1xf32>
    %195 = arith.mulf %193, %194 : vector<72x1xf32>
    %196 = arith.mulf %191, %191 : vector<72x128xf32>
    %cst_88 = arith.constant dense<0.000000e+00> : vector<72xf32>
    %197 = vector.multi_reduction <add>, %196, %cst_88 [1] : vector<72x128xf32> to vector<72xf32>
    %198 = vector.shape_cast %197 : vector<72xf32> to vector<72x1xf32>
    %cst_89 = arith.constant 7.812500e-03 : f32
    %199 = vector.broadcast %cst_89 : f32 to vector<72x1xf32>
    %200 = arith.mulf %198, %199 : vector<72x1xf32>
    %201 = arith.mulf %195, %195 : vector<72x1xf32>
    %202 = arith.subf %200, %201 : vector<72x1xf32>
    %cst_90 = arith.constant 0.000000e+00 : f32
    %203 = vector.broadcast %cst_90 : f32 to vector<72x1xf32>
    %204 = arith.maximumf %202, %203 : vector<72x1xf32>
    %205 = vector.broadcast %195 : vector<72x1xf32> to vector<72x128xf32>
    %206 = arith.subf %191, %205 : vector<72x128xf32>
    %cst_91 = arith.constant 9.99999974E-6 : f32
    %207 = vector.broadcast %cst_91 : f32 to vector<72x1xf32>
    %208 = arith.addf %204, %207 : vector<72x1xf32>
    %209 = math.rsqrt %208 : vector<72x1xf32>
    %210 = vector.broadcast %209 : vector<72x1xf32> to vector<72x128xf32>
    %211 = arith.mulf %206, %210 : vector<72x128xf32>
    %cst_92 = arith.constant 0.000000e+00 : f32
    %212 = vector.broadcast %cst_92 : f32 to vector<72x128xf32>
    %213 = arith.cmpf ogt, %211, %212 : vector<72x128xf32>
    %214 = vector.broadcast %74 : f32 to vector<72x128xf32>
    %215 = arith.mulf %211, %214 : vector<72x128xf32>
    %216 = arith.select %213, %211, %215 : vector<72x128xi1>, vector<72x128xf32>
    %c1_i32_93 = arith.constant 1 : i32
    %217 = tpu.dynamic_rotate %216 by %c1_i32_93 dim 1 : vector<72x128xf32>, i32 -> vector<72x128xf32>
    %c1_i32_94 = arith.constant 1 : i32
    %218 = vector.broadcast %c1_i32_94 : i32 to vector<72x128xi32>
    %219 = arith.cmpi sge, %7, %218 : vector<72x128xi32>
    %cst_95 = arith.constant 0.000000e+00 : f32
    %220 = vector.broadcast %cst_95 : f32 to vector<72x128xf32>
    %221 = arith.select %219, %217, %220 : vector<72x128xi1>, vector<72x128xf32>
    %c127_i32_96 = arith.constant 127 : i32
    %222 = tpu.dynamic_rotate %216 by %c127_i32_96 dim 1 : vector<72x128xf32>, i32 -> vector<72x128xf32>
    %c127_i32_97 = arith.constant 127 : i32
    %223 = vector.broadcast %c127_i32_97 : i32 to vector<72x128xi32>
    %224 = arith.cmpi slt, %7, %223 : vector<72x128xi32>
    %cst_98 = arith.constant 0.000000e+00 : f32
    %225 = vector.broadcast %cst_98 : f32 to vector<72x128xf32>
    %226 = arith.select %224, %222, %225 : vector<72x128xi1>, vector<72x128xf32>
    %227 = tpu.concatenate %221, %216, %226 in 0 : vector<72x128xf32>, vector<72x128xf32>, vector<72x128xf32> -> vector<216x128xf32>
    %c0_99 = arith.constant 0 : index
    %c0_100 = arith.constant 0 : index
    %228 = vector.load %arg10[%c0_99, %c0_100] : memref<72x216xf32, #tpu.memory_space<vmem>>, vector<72x216xf32>
    %cst_101 = arith.constant dense<0.000000e+00> : vector<72x128xf32>
    %229 = tpu.matmul %228, %227, %cst_101 {dimension_numbers = #tpu.dot_dimension_numbers<[1], [0], [0], [1], [0, 0, 1, 1], [], []>} : vector<72x216xf32>, vector<216x128xf32>, vector<72x128xf32> -> vector<72x128xf32>
    %c0_102 = arith.constant 0 : index
    %c0_103 = arith.constant 0 : index
    %230 = vector.load %arg11[%c0_102, %c0_103] : memref<72x1xf32, #tpu.memory_space<vmem>>, vector<72x1xf32>
    %231 = vector.broadcast %230 : vector<72x1xf32> to vector<72x128xf32>
    %232 = arith.addf %229, %231 : vector<72x128xf32>
    %cst_104 = arith.constant dense<0.000000e+00> : vector<72xf32>
    %233 = vector.multi_reduction <add>, %232, %cst_104 [1] : vector<72x128xf32> to vector<72xf32>
    %234 = vector.shape_cast %233 : vector<72xf32> to vector<72x1xf32>
    %cst_105 = arith.constant 7.812500e-03 : f32
    %235 = vector.broadcast %cst_105 : f32 to vector<72x1xf32>
    %236 = arith.mulf %234, %235 : vector<72x1xf32>
    %237 = arith.mulf %232, %232 : vector<72x128xf32>
    %cst_106 = arith.constant dense<0.000000e+00> : vector<72xf32>
    %238 = vector.multi_reduction <add>, %237, %cst_106 [1] : vector<72x128xf32> to vector<72xf32>
    %239 = vector.shape_cast %238 : vector<72xf32> to vector<72x1xf32>
    %cst_107 = arith.constant 7.812500e-03 : f32
    %240 = vector.broadcast %cst_107 : f32 to vector<72x1xf32>
    %241 = arith.mulf %239, %240 : vector<72x1xf32>
    %242 = arith.mulf %236, %236 : vector<72x1xf32>
    %243 = arith.subf %241, %242 : vector<72x1xf32>
    %cst_108 = arith.constant 0.000000e+00 : f32
    %244 = vector.broadcast %cst_108 : f32 to vector<72x1xf32>
    %245 = arith.maximumf %243, %244 : vector<72x1xf32>
    %246 = vector.broadcast %236 : vector<72x1xf32> to vector<72x128xf32>
    %247 = arith.subf %232, %246 : vector<72x128xf32>
    %cst_109 = arith.constant 9.99999974E-6 : f32
    %248 = vector.broadcast %cst_109 : f32 to vector<72x1xf32>
    %249 = arith.addf %245, %248 : vector<72x1xf32>
    %250 = math.rsqrt %249 : vector<72x1xf32>
    %251 = vector.broadcast %250 : vector<72x1xf32> to vector<72x128xf32>
    %252 = arith.mulf %247, %251 : vector<72x128xf32>
    %253 = arith.addf %252, %94 : vector<72x128xf32>
    %cst_110 = arith.constant 0.000000e+00 : f32
    %254 = vector.broadcast %cst_110 : f32 to vector<72x128xf32>
    %255 = arith.maximumf %253, %254 : vector<72x128xf32>
    %c65_i32 = arith.constant 65 : i32
    %256 = vector.broadcast %c65_i32 : i32 to vector<72x128xi32>
    %257 = arith.cmpi eq, %8, %256 : vector<72x128xi32>
    %258 = arith.select %257, %5, %255 : vector<72x128xi1>, vector<72x128xf32>
    %c2 = arith.constant 2 : index
    %259 = memref.load %arg1[%c2] : memref<4xf32, #tpu.memory_space<smem>>
    %cst_111 = arith.constant dense<0.000000e+00> : vector<72xf32>
    %260 = vector.multi_reduction <add>, %258, %cst_111 [1] : vector<72x128xf32> to vector<72xf32>
    %261 = vector.shape_cast %260 : vector<72xf32> to vector<72x1xf32>
    %cst_112 = arith.constant 7.812500e-03 : f32
    %262 = vector.broadcast %cst_112 : f32 to vector<72x1xf32>
    %263 = arith.mulf %261, %262 : vector<72x1xf32>
    %264 = arith.mulf %258, %258 : vector<72x128xf32>
    %cst_113 = arith.constant dense<0.000000e+00> : vector<72xf32>
    %265 = vector.multi_reduction <add>, %264, %cst_113 [1] : vector<72x128xf32> to vector<72xf32>
    %266 = vector.shape_cast %265 : vector<72xf32> to vector<72x1xf32>
    %cst_114 = arith.constant 7.812500e-03 : f32
    %267 = vector.broadcast %cst_114 : f32 to vector<72x1xf32>
    %268 = arith.mulf %266, %267 : vector<72x1xf32>
    %269 = arith.mulf %263, %263 : vector<72x1xf32>
    %270 = arith.subf %268, %269 : vector<72x1xf32>
    %cst_115 = arith.constant 0.000000e+00 : f32
    %271 = vector.broadcast %cst_115 : f32 to vector<72x1xf32>
    %272 = arith.maximumf %270, %271 : vector<72x1xf32>
    %273 = vector.broadcast %263 : vector<72x1xf32> to vector<72x128xf32>
    %274 = arith.subf %258, %273 : vector<72x128xf32>
    %cst_116 = arith.constant 9.99999974E-6 : f32
    %275 = vector.broadcast %cst_116 : f32 to vector<72x1xf32>
    %276 = arith.addf %272, %275 : vector<72x1xf32>
    %277 = math.rsqrt %276 : vector<72x1xf32>
    %278 = vector.broadcast %277 : vector<72x1xf32> to vector<72x128xf32>
    %279 = arith.mulf %274, %278 : vector<72x128xf32>
    %c4_i32_117 = arith.constant 4 : i32
    %280 = tpu.dynamic_rotate %258 by %c4_i32_117 dim 1 : vector<72x128xf32>, i32 -> vector<72x128xf32>
    %c4_i32_118 = arith.constant 4 : i32
    %281 = vector.broadcast %c4_i32_118 : i32 to vector<72x128xi32>
    %282 = arith.cmpi sge, %7, %281 : vector<72x128xi32>
    %cst_119 = arith.constant 0.000000e+00 : f32
    %283 = vector.broadcast %cst_119 : f32 to vector<72x128xf32>
    %284 = arith.select %282, %280, %283 : vector<72x128xi1>, vector<72x128xf32>
    %c3_i32_120 = arith.constant 3 : i32
    %285 = tpu.dynamic_rotate %258 by %c3_i32_120 dim 1 : vector<72x128xf32>, i32 -> vector<72x128xf32>
    %c3_i32_121 = arith.constant 3 : i32
    %286 = vector.broadcast %c3_i32_121 : i32 to vector<72x128xi32>
    %287 = arith.cmpi sge, %7, %286 : vector<72x128xi32>
    %cst_122 = arith.constant 0.000000e+00 : f32
    %288 = vector.broadcast %cst_122 : f32 to vector<72x128xf32>
    %289 = arith.select %287, %285, %288 : vector<72x128xi1>, vector<72x128xf32>
    %c2_i32_123 = arith.constant 2 : i32
    %290 = tpu.dynamic_rotate %258 by %c2_i32_123 dim 1 : vector<72x128xf32>, i32 -> vector<72x128xf32>
    %c2_i32_124 = arith.constant 2 : i32
    %291 = vector.broadcast %c2_i32_124 : i32 to vector<72x128xi32>
    %292 = arith.cmpi sge, %7, %291 : vector<72x128xi32>
    %cst_125 = arith.constant 0.000000e+00 : f32
    %293 = vector.broadcast %cst_125 : f32 to vector<72x128xf32>
    %294 = arith.select %292, %290, %293 : vector<72x128xi1>, vector<72x128xf32>
    %c1_i32_126 = arith.constant 1 : i32
    %295 = tpu.dynamic_rotate %258 by %c1_i32_126 dim 1 : vector<72x128xf32>, i32 -> vector<72x128xf32>
    %c1_i32_127 = arith.constant 1 : i32
    %296 = vector.broadcast %c1_i32_127 : i32 to vector<72x128xi32>
    %297 = arith.cmpi sge, %7, %296 : vector<72x128xi32>
    %cst_128 = arith.constant 0.000000e+00 : f32
    %298 = vector.broadcast %cst_128 : f32 to vector<72x128xf32>
    %299 = arith.select %297, %295, %298 : vector<72x128xi1>, vector<72x128xf32>
    %c127_i32_129 = arith.constant 127 : i32
    %300 = tpu.dynamic_rotate %258 by %c127_i32_129 dim 1 : vector<72x128xf32>, i32 -> vector<72x128xf32>
    %c127_i32_130 = arith.constant 127 : i32
    %301 = vector.broadcast %c127_i32_130 : i32 to vector<72x128xi32>
    %302 = arith.cmpi slt, %7, %301 : vector<72x128xi32>
    %cst_131 = arith.constant 0.000000e+00 : f32
    %303 = vector.broadcast %cst_131 : f32 to vector<72x128xf32>
    %304 = arith.select %302, %300, %303 : vector<72x128xi1>, vector<72x128xf32>
    %c126_i32_132 = arith.constant 126 : i32
    %305 = tpu.dynamic_rotate %258 by %c126_i32_132 dim 1 : vector<72x128xf32>, i32 -> vector<72x128xf32>
    %c126_i32_133 = arith.constant 126 : i32
    %306 = vector.broadcast %c126_i32_133 : i32 to vector<72x128xi32>
    %307 = arith.cmpi slt, %7, %306 : vector<72x128xi32>
    %cst_134 = arith.constant 0.000000e+00 : f32
    %308 = vector.broadcast %cst_134 : f32 to vector<72x128xf32>
    %309 = arith.select %307, %305, %308 : vector<72x128xi1>, vector<72x128xf32>
    %c125_i32_135 = arith.constant 125 : i32
    %310 = tpu.dynamic_rotate %258 by %c125_i32_135 dim 1 : vector<72x128xf32>, i32 -> vector<72x128xf32>
    %c125_i32_136 = arith.constant 125 : i32
    %311 = vector.broadcast %c125_i32_136 : i32 to vector<72x128xi32>
    %312 = arith.cmpi slt, %7, %311 : vector<72x128xi32>
    %cst_137 = arith.constant 0.000000e+00 : f32
    %313 = vector.broadcast %cst_137 : f32 to vector<72x128xf32>
    %314 = arith.select %312, %310, %313 : vector<72x128xi1>, vector<72x128xf32>
    %c124_i32_138 = arith.constant 124 : i32
    %315 = tpu.dynamic_rotate %258 by %c124_i32_138 dim 1 : vector<72x128xf32>, i32 -> vector<72x128xf32>
    %c124_i32_139 = arith.constant 124 : i32
    %316 = vector.broadcast %c124_i32_139 : i32 to vector<72x128xi32>
    %317 = arith.cmpi slt, %7, %316 : vector<72x128xi32>
    %cst_140 = arith.constant 0.000000e+00 : f32
    %318 = vector.broadcast %cst_140 : f32 to vector<72x128xf32>
    %319 = arith.select %317, %315, %318 : vector<72x128xi1>, vector<72x128xf32>
    %320 = tpu.concatenate %284, %289, %294, %299, %258, %304, %309, %314, %319 in 0 : vector<72x128xf32>, vector<72x128xf32>, vector<72x128xf32>, vector<72x128xf32>, vector<72x128xf32>, vector<72x128xf32>, vector<72x128xf32>, vector<72x128xf32>, vector<72x128xf32> -> vector<648x128xf32>
    %c0_141 = arith.constant 0 : index
    %c0_142 = arith.constant 0 : index
    %321 = vector.load %arg12[%c0_141, %c0_142] : memref<72x648xf32, #tpu.memory_space<vmem>>, vector<72x648xf32>
    %cst_143 = arith.constant dense<0.000000e+00> : vector<72x128xf32>
    %322 = tpu.matmul %321, %320, %cst_143 {dimension_numbers = #tpu.dot_dimension_numbers<[1], [0], [0], [1], [0, 0, 1, 1], [], []>} : vector<72x648xf32>, vector<648x128xf32>, vector<72x128xf32> -> vector<72x128xf32>
    %c0_144 = arith.constant 0 : index
    %c0_145 = arith.constant 0 : index
    %323 = vector.load %arg13[%c0_144, %c0_145] : memref<72x1xf32, #tpu.memory_space<vmem>>, vector<72x1xf32>
    %324 = vector.broadcast %323 : vector<72x1xf32> to vector<72x128xf32>
    %325 = arith.addf %322, %324 : vector<72x128xf32>
    %cst_146 = arith.constant dense<0.000000e+00> : vector<72xf32>
    %326 = vector.multi_reduction <add>, %325, %cst_146 [1] : vector<72x128xf32> to vector<72xf32>
    %327 = vector.shape_cast %326 : vector<72xf32> to vector<72x1xf32>
    %cst_147 = arith.constant 7.812500e-03 : f32
    %328 = vector.broadcast %cst_147 : f32 to vector<72x1xf32>
    %329 = arith.mulf %327, %328 : vector<72x1xf32>
    %330 = arith.mulf %325, %325 : vector<72x128xf32>
    %cst_148 = arith.constant dense<0.000000e+00> : vector<72xf32>
    %331 = vector.multi_reduction <add>, %330, %cst_148 [1] : vector<72x128xf32> to vector<72xf32>
    %332 = vector.shape_cast %331 : vector<72xf32> to vector<72x1xf32>
    %cst_149 = arith.constant 7.812500e-03 : f32
    %333 = vector.broadcast %cst_149 : f32 to vector<72x1xf32>
    %334 = arith.mulf %332, %333 : vector<72x1xf32>
    %335 = arith.mulf %329, %329 : vector<72x1xf32>
    %336 = arith.subf %334, %335 : vector<72x1xf32>
    %cst_150 = arith.constant 0.000000e+00 : f32
    %337 = vector.broadcast %cst_150 : f32 to vector<72x1xf32>
    %338 = arith.maximumf %336, %337 : vector<72x1xf32>
    %339 = vector.broadcast %329 : vector<72x1xf32> to vector<72x128xf32>
    %340 = arith.subf %325, %339 : vector<72x128xf32>
    %cst_151 = arith.constant 9.99999974E-6 : f32
    %341 = vector.broadcast %cst_151 : f32 to vector<72x1xf32>
    %342 = arith.addf %338, %341 : vector<72x1xf32>
    %343 = math.rsqrt %342 : vector<72x1xf32>
    %344 = vector.broadcast %343 : vector<72x1xf32> to vector<72x128xf32>
    %345 = arith.mulf %340, %344 : vector<72x128xf32>
    %cst_152 = arith.constant 0.000000e+00 : f32
    %346 = vector.broadcast %cst_152 : f32 to vector<72x128xf32>
    %347 = arith.cmpf ogt, %345, %346 : vector<72x128xf32>
    %348 = vector.broadcast %259 : f32 to vector<72x128xf32>
    %349 = arith.mulf %345, %348 : vector<72x128xf32>
    %350 = arith.select %347, %345, %349 : vector<72x128xi1>, vector<72x128xf32>
    %c2_i32_153 = arith.constant 2 : i32
    %351 = tpu.dynamic_rotate %350 by %c2_i32_153 dim 1 : vector<72x128xf32>, i32 -> vector<72x128xf32>
    %c2_i32_154 = arith.constant 2 : i32
    %352 = vector.broadcast %c2_i32_154 : i32 to vector<72x128xi32>
    %353 = arith.cmpi sge, %7, %352 : vector<72x128xi32>
    %cst_155 = arith.constant 0.000000e+00 : f32
    %354 = vector.broadcast %cst_155 : f32 to vector<72x128xf32>
    %355 = arith.select %353, %351, %354 : vector<72x128xi1>, vector<72x128xf32>
    %c1_i32_156 = arith.constant 1 : i32
    %356 = tpu.dynamic_rotate %350 by %c1_i32_156 dim 1 : vector<72x128xf32>, i32 -> vector<72x128xf32>
    %c1_i32_157 = arith.constant 1 : i32
    %357 = vector.broadcast %c1_i32_157 : i32 to vector<72x128xi32>
    %358 = arith.cmpi sge, %7, %357 : vector<72x128xi32>
    %cst_158 = arith.constant 0.000000e+00 : f32
    %359 = vector.broadcast %cst_158 : f32 to vector<72x128xf32>
    %360 = arith.select %358, %356, %359 : vector<72x128xi1>, vector<72x128xf32>
    %c127_i32_159 = arith.constant 127 : i32
    %361 = tpu.dynamic_rotate %350 by %c127_i32_159 dim 1 : vector<72x128xf32>, i32 -> vector<72x128xf32>
    %c127_i32_160 = arith.constant 127 : i32
    %362 = vector.broadcast %c127_i32_160 : i32 to vector<72x128xi32>
    %363 = arith.cmpi slt, %7, %362 : vector<72x128xi32>
    %cst_161 = arith.constant 0.000000e+00 : f32
    %364 = vector.broadcast %cst_161 : f32 to vector<72x128xf32>
    %365 = arith.select %363, %361, %364 : vector<72x128xi1>, vector<72x128xf32>
    %c126_i32_162 = arith.constant 126 : i32
    %366 = tpu.dynamic_rotate %350 by %c126_i32_162 dim 1 : vector<72x128xf32>, i32 -> vector<72x128xf32>
    %c126_i32_163 = arith.constant 126 : i32
    %367 = vector.broadcast %c126_i32_163 : i32 to vector<72x128xi32>
    %368 = arith.cmpi slt, %7, %367 : vector<72x128xi32>
    %cst_164 = arith.constant 0.000000e+00 : f32
    %369 = vector.broadcast %cst_164 : f32 to vector<72x128xf32>
    %370 = arith.select %368, %366, %369 : vector<72x128xi1>, vector<72x128xf32>
    %371 = tpu.concatenate %355, %360, %350, %365, %370 in 0 : vector<72x128xf32>, vector<72x128xf32>, vector<72x128xf32>, vector<72x128xf32>, vector<72x128xf32> -> vector<360x128xf32>
    %c0_165 = arith.constant 0 : index
    %c0_166 = arith.constant 0 : index
    %372 = vector.load %arg14[%c0_165, %c0_166] : memref<72x360xf32, #tpu.memory_space<vmem>>, vector<72x360xf32>
    %cst_167 = arith.constant dense<0.000000e+00> : vector<72x128xf32>
    %373 = tpu.matmul %372, %371, %cst_167 {dimension_numbers = #tpu.dot_dimension_numbers<[1], [0], [0], [1], [0, 0, 1, 1], [], []>} : vector<72x360xf32>, vector<360x128xf32>, vector<72x128xf32> -> vector<72x128xf32>
    %c0_168 = arith.constant 0 : index
    %c0_169 = arith.constant 0 : index
    %374 = vector.load %arg15[%c0_168, %c0_169] : memref<72x1xf32, #tpu.memory_space<vmem>>, vector<72x1xf32>
    %375 = vector.broadcast %374 : vector<72x1xf32> to vector<72x128xf32>
    %376 = arith.addf %373, %375 : vector<72x128xf32>
    %cst_170 = arith.constant dense<0.000000e+00> : vector<72xf32>
    %377 = vector.multi_reduction <add>, %376, %cst_170 [1] : vector<72x128xf32> to vector<72xf32>
    %378 = vector.shape_cast %377 : vector<72xf32> to vector<72x1xf32>
    %cst_171 = arith.constant 7.812500e-03 : f32
    %379 = vector.broadcast %cst_171 : f32 to vector<72x1xf32>
    %380 = arith.mulf %378, %379 : vector<72x1xf32>
    %381 = arith.mulf %376, %376 : vector<72x128xf32>
    %cst_172 = arith.constant dense<0.000000e+00> : vector<72xf32>
    %382 = vector.multi_reduction <add>, %381, %cst_172 [1] : vector<72x128xf32> to vector<72xf32>
    %383 = vector.shape_cast %382 : vector<72xf32> to vector<72x1xf32>
    %cst_173 = arith.constant 7.812500e-03 : f32
    %384 = vector.broadcast %cst_173 : f32 to vector<72x1xf32>
    %385 = arith.mulf %383, %384 : vector<72x1xf32>
    %386 = arith.mulf %380, %380 : vector<72x1xf32>
    %387 = arith.subf %385, %386 : vector<72x1xf32>
    %cst_174 = arith.constant 0.000000e+00 : f32
    %388 = vector.broadcast %cst_174 : f32 to vector<72x1xf32>
    %389 = arith.maximumf %387, %388 : vector<72x1xf32>
    %390 = vector.broadcast %380 : vector<72x1xf32> to vector<72x128xf32>
    %391 = arith.subf %376, %390 : vector<72x128xf32>
    %cst_175 = arith.constant 9.99999974E-6 : f32
    %392 = vector.broadcast %cst_175 : f32 to vector<72x1xf32>
    %393 = arith.addf %389, %392 : vector<72x1xf32>
    %394 = math.rsqrt %393 : vector<72x1xf32>
    %395 = vector.broadcast %394 : vector<72x1xf32> to vector<72x128xf32>
    %396 = arith.mulf %391, %395 : vector<72x128xf32>
    %cst_176 = arith.constant 0.000000e+00 : f32
    %397 = vector.broadcast %cst_176 : f32 to vector<72x128xf32>
    %398 = arith.cmpf ogt, %396, %397 : vector<72x128xf32>
    %399 = vector.broadcast %259 : f32 to vector<72x128xf32>
    %400 = arith.mulf %396, %399 : vector<72x128xf32>
    %401 = arith.select %398, %396, %400 : vector<72x128xi1>, vector<72x128xf32>
    %c1_i32_177 = arith.constant 1 : i32
    %402 = tpu.dynamic_rotate %401 by %c1_i32_177 dim 1 : vector<72x128xf32>, i32 -> vector<72x128xf32>
    %c1_i32_178 = arith.constant 1 : i32
    %403 = vector.broadcast %c1_i32_178 : i32 to vector<72x128xi32>
    %404 = arith.cmpi sge, %7, %403 : vector<72x128xi32>
    %cst_179 = arith.constant 0.000000e+00 : f32
    %405 = vector.broadcast %cst_179 : f32 to vector<72x128xf32>
    %406 = arith.select %404, %402, %405 : vector<72x128xi1>, vector<72x128xf32>
    %c127_i32_180 = arith.constant 127 : i32
    %407 = tpu.dynamic_rotate %401 by %c127_i32_180 dim 1 : vector<72x128xf32>, i32 -> vector<72x128xf32>
    %c127_i32_181 = arith.constant 127 : i32
    %408 = vector.broadcast %c127_i32_181 : i32 to vector<72x128xi32>
    %409 = arith.cmpi slt, %7, %408 : vector<72x128xi32>
    %cst_182 = arith.constant 0.000000e+00 : f32
    %410 = vector.broadcast %cst_182 : f32 to vector<72x128xf32>
    %411 = arith.select %409, %407, %410 : vector<72x128xi1>, vector<72x128xf32>
    %412 = tpu.concatenate %406, %401, %411 in 0 : vector<72x128xf32>, vector<72x128xf32>, vector<72x128xf32> -> vector<216x128xf32>
    %c0_183 = arith.constant 0 : index
    %c0_184 = arith.constant 0 : index
    %413 = vector.load %arg16[%c0_183, %c0_184] : memref<72x216xf32, #tpu.memory_space<vmem>>, vector<72x216xf32>
    %cst_185 = arith.constant dense<0.000000e+00> : vector<72x128xf32>
    %414 = tpu.matmul %413, %412, %cst_185 {dimension_numbers = #tpu.dot_dimension_numbers<[1], [0], [0], [1], [0, 0, 1, 1], [], []>} : vector<72x216xf32>, vector<216x128xf32>, vector<72x128xf32> -> vector<72x128xf32>
    %c0_186 = arith.constant 0 : index
    %c0_187 = arith.constant 0 : index
    %415 = vector.load %arg17[%c0_186, %c0_187] : memref<72x1xf32, #tpu.memory_space<vmem>>, vector<72x1xf32>
    %416 = vector.broadcast %415 : vector<72x1xf32> to vector<72x128xf32>
    %417 = arith.addf %414, %416 : vector<72x128xf32>
    %cst_188 = arith.constant dense<0.000000e+00> : vector<72xf32>
    %418 = vector.multi_reduction <add>, %417, %cst_188 [1] : vector<72x128xf32> to vector<72xf32>
    %419 = vector.shape_cast %418 : vector<72xf32> to vector<72x1xf32>
    %cst_189 = arith.constant 7.812500e-03 : f32
    %420 = vector.broadcast %cst_189 : f32 to vector<72x1xf32>
    %421 = arith.mulf %419, %420 : vector<72x1xf32>
    %422 = arith.mulf %417, %417 : vector<72x128xf32>
    %cst_190 = arith.constant dense<0.000000e+00> : vector<72xf32>
    %423 = vector.multi_reduction <add>, %422, %cst_190 [1] : vector<72x128xf32> to vector<72xf32>
    %424 = vector.shape_cast %423 : vector<72xf32> to vector<72x1xf32>
    %cst_191 = arith.constant 7.812500e-03 : f32
    %425 = vector.broadcast %cst_191 : f32 to vector<72x1xf32>
    %426 = arith.mulf %424, %425 : vector<72x1xf32>
    %427 = arith.mulf %421, %421 : vector<72x1xf32>
    %428 = arith.subf %426, %427 : vector<72x1xf32>
    %cst_192 = arith.constant 0.000000e+00 : f32
    %429 = vector.broadcast %cst_192 : f32 to vector<72x1xf32>
    %430 = arith.maximumf %428, %429 : vector<72x1xf32>
    %431 = vector.broadcast %421 : vector<72x1xf32> to vector<72x128xf32>
    %432 = arith.subf %417, %431 : vector<72x128xf32>
    %cst_193 = arith.constant 9.99999974E-6 : f32
    %433 = vector.broadcast %cst_193 : f32 to vector<72x1xf32>
    %434 = arith.addf %430, %433 : vector<72x1xf32>
    %435 = math.rsqrt %434 : vector<72x1xf32>
    %436 = vector.broadcast %435 : vector<72x1xf32> to vector<72x128xf32>
    %437 = arith.mulf %432, %436 : vector<72x128xf32>
    %438 = arith.addf %437, %279 : vector<72x128xf32>
    %cst_194 = arith.constant 0.000000e+00 : f32
    %439 = vector.broadcast %cst_194 : f32 to vector<72x128xf32>
    %440 = arith.maximumf %438, %439 : vector<72x128xf32>
    %c66_i32 = arith.constant 66 : i32
    %441 = vector.broadcast %c66_i32 : i32 to vector<72x128xi32>
    %442 = arith.cmpi eq, %8, %441 : vector<72x128xi32>
    %443 = arith.select %442, %5, %440 : vector<72x128xi1>, vector<72x128xf32>
    %c3 = arith.constant 3 : index
    %444 = memref.load %arg1[%c3] : memref<4xf32, #tpu.memory_space<smem>>
    %cst_195 = arith.constant dense<0.000000e+00> : vector<72xf32>
    %445 = vector.multi_reduction <add>, %443, %cst_195 [1] : vector<72x128xf32> to vector<72xf32>
    %446 = vector.shape_cast %445 : vector<72xf32> to vector<72x1xf32>
    %cst_196 = arith.constant 7.812500e-03 : f32
    %447 = vector.broadcast %cst_196 : f32 to vector<72x1xf32>
    %448 = arith.mulf %446, %447 : vector<72x1xf32>
    %449 = arith.mulf %443, %443 : vector<72x128xf32>
    %cst_197 = arith.constant dense<0.000000e+00> : vector<72xf32>
    %450 = vector.multi_reduction <add>, %449, %cst_197 [1] : vector<72x128xf32> to vector<72xf32>
    %451 = vector.shape_cast %450 : vector<72xf32> to vector<72x1xf32>
    %cst_198 = arith.constant 7.812500e-03 : f32
    %452 = vector.broadcast %cst_198 : f32 to vector<72x1xf32>
    %453 = arith.mulf %451, %452 : vector<72x1xf32>
    %454 = arith.mulf %448, %448 : vector<72x1xf32>
    %455 = arith.subf %453, %454 : vector<72x1xf32>
    %cst_199 = arith.constant 0.000000e+00 : f32
    %456 = vector.broadcast %cst_199 : f32 to vector<72x1xf32>
    %457 = arith.maximumf %455, %456 : vector<72x1xf32>
    %458 = vector.broadcast %448 : vector<72x1xf32> to vector<72x128xf32>
    %459 = arith.subf %443, %458 : vector<72x128xf32>
    %cst_200 = arith.constant 9.99999974E-6 : f32
    %460 = vector.broadcast %cst_200 : f32 to vector<72x1xf32>
    %461 = arith.addf %457, %460 : vector<72x1xf32>
    %462 = math.rsqrt %461 : vector<72x1xf32>
    %463 = vector.broadcast %462 : vector<72x1xf32> to vector<72x128xf32>
    %464 = arith.mulf %459, %463 : vector<72x128xf32>
    %c4_i32_201 = arith.constant 4 : i32
    %465 = tpu.dynamic_rotate %443 by %c4_i32_201 dim 1 : vector<72x128xf32>, i32 -> vector<72x128xf32>
    %c4_i32_202 = arith.constant 4 : i32
    %466 = vector.broadcast %c4_i32_202 : i32 to vector<72x128xi32>
    %467 = arith.cmpi sge, %7, %466 : vector<72x128xi32>
    %cst_203 = arith.constant 0.000000e+00 : f32
    %468 = vector.broadcast %cst_203 : f32 to vector<72x128xf32>
    %469 = arith.select %467, %465, %468 : vector<72x128xi1>, vector<72x128xf32>
    %c3_i32_204 = arith.constant 3 : i32
    %470 = tpu.dynamic_rotate %443 by %c3_i32_204 dim 1 : vector<72x128xf32>, i32 -> vector<72x128xf32>
    %c3_i32_205 = arith.constant 3 : i32
    %471 = vector.broadcast %c3_i32_205 : i32 to vector<72x128xi32>
    %472 = arith.cmpi sge, %7, %471 : vector<72x128xi32>
    %cst_206 = arith.constant 0.000000e+00 : f32
    %473 = vector.broadcast %cst_206 : f32 to vector<72x128xf32>
    %474 = arith.select %472, %470, %473 : vector<72x128xi1>, vector<72x128xf32>
    %c2_i32_207 = arith.constant 2 : i32
    %475 = tpu.dynamic_rotate %443 by %c2_i32_207 dim 1 : vector<72x128xf32>, i32 -> vector<72x128xf32>
    %c2_i32_208 = arith.constant 2 : i32
    %476 = vector.broadcast %c2_i32_208 : i32 to vector<72x128xi32>
    %477 = arith.cmpi sge, %7, %476 : vector<72x128xi32>
    %cst_209 = arith.constant 0.000000e+00 : f32
    %478 = vector.broadcast %cst_209 : f32 to vector<72x128xf32>
    %479 = arith.select %477, %475, %478 : vector<72x128xi1>, vector<72x128xf32>
    %c1_i32_210 = arith.constant 1 : i32
    %480 = tpu.dynamic_rotate %443 by %c1_i32_210 dim 1 : vector<72x128xf32>, i32 -> vector<72x128xf32>
    %c1_i32_211 = arith.constant 1 : i32
    %481 = vector.broadcast %c1_i32_211 : i32 to vector<72x128xi32>
    %482 = arith.cmpi sge, %7, %481 : vector<72x128xi32>
    %cst_212 = arith.constant 0.000000e+00 : f32
    %483 = vector.broadcast %cst_212 : f32 to vector<72x128xf32>
    %484 = arith.select %482, %480, %483 : vector<72x128xi1>, vector<72x128xf32>
    %c127_i32_213 = arith.constant 127 : i32
    %485 = tpu.dynamic_rotate %443 by %c127_i32_213 dim 1 : vector<72x128xf32>, i32 -> vector<72x128xf32>
    %c127_i32_214 = arith.constant 127 : i32
    %486 = vector.broadcast %c127_i32_214 : i32 to vector<72x128xi32>
    %487 = arith.cmpi slt, %7, %486 : vector<72x128xi32>
    %cst_215 = arith.constant 0.000000e+00 : f32
    %488 = vector.broadcast %cst_215 : f32 to vector<72x128xf32>
    %489 = arith.select %487, %485, %488 : vector<72x128xi1>, vector<72x128xf32>
    %c126_i32_216 = arith.constant 126 : i32
    %490 = tpu.dynamic_rotate %443 by %c126_i32_216 dim 1 : vector<72x128xf32>, i32 -> vector<72x128xf32>
    %c126_i32_217 = arith.constant 126 : i32
    %491 = vector.broadcast %c126_i32_217 : i32 to vector<72x128xi32>
    %492 = arith.cmpi slt, %7, %491 : vector<72x128xi32>
    %cst_218 = arith.constant 0.000000e+00 : f32
    %493 = vector.broadcast %cst_218 : f32 to vector<72x128xf32>
    %494 = arith.select %492, %490, %493 : vector<72x128xi1>, vector<72x128xf32>
    %c125_i32_219 = arith.constant 125 : i32
    %495 = tpu.dynamic_rotate %443 by %c125_i32_219 dim 1 : vector<72x128xf32>, i32 -> vector<72x128xf32>
    %c125_i32_220 = arith.constant 125 : i32
    %496 = vector.broadcast %c125_i32_220 : i32 to vector<72x128xi32>
    %497 = arith.cmpi slt, %7, %496 : vector<72x128xi32>
    %cst_221 = arith.constant 0.000000e+00 : f32
    %498 = vector.broadcast %cst_221 : f32 to vector<72x128xf32>
    %499 = arith.select %497, %495, %498 : vector<72x128xi1>, vector<72x128xf32>
    %c124_i32_222 = arith.constant 124 : i32
    %500 = tpu.dynamic_rotate %443 by %c124_i32_222 dim 1 : vector<72x128xf32>, i32 -> vector<72x128xf32>
    %c124_i32_223 = arith.constant 124 : i32
    %501 = vector.broadcast %c124_i32_223 : i32 to vector<72x128xi32>
    %502 = arith.cmpi slt, %7, %501 : vector<72x128xi32>
    %cst_224 = arith.constant 0.000000e+00 : f32
    %503 = vector.broadcast %cst_224 : f32 to vector<72x128xf32>
    %504 = arith.select %502, %500, %503 : vector<72x128xi1>, vector<72x128xf32>
    %505 = tpu.concatenate %469, %474, %479, %484, %443, %489, %494, %499, %504 in 0 : vector<72x128xf32>, vector<72x128xf32>, vector<72x128xf32>, vector<72x128xf32>, vector<72x128xf32>, vector<72x128xf32>, vector<72x128xf32>, vector<72x128xf32>, vector<72x128xf32> -> vector<648x128xf32>
    %c0_225 = arith.constant 0 : index
    %c0_226 = arith.constant 0 : index
    %506 = vector.load %arg18[%c0_225, %c0_226] : memref<72x648xf32, #tpu.memory_space<vmem>>, vector<72x648xf32>
    %cst_227 = arith.constant dense<0.000000e+00> : vector<72x128xf32>
    %507 = tpu.matmul %506, %505, %cst_227 {dimension_numbers = #tpu.dot_dimension_numbers<[1], [0], [0], [1], [0, 0, 1, 1], [], []>} : vector<72x648xf32>, vector<648x128xf32>, vector<72x128xf32> -> vector<72x128xf32>
    %c0_228 = arith.constant 0 : index
    %c0_229 = arith.constant 0 : index
    %508 = vector.load %arg19[%c0_228, %c0_229] : memref<72x1xf32, #tpu.memory_space<vmem>>, vector<72x1xf32>
    %509 = vector.broadcast %508 : vector<72x1xf32> to vector<72x128xf32>
    %510 = arith.addf %507, %509 : vector<72x128xf32>
    %cst_230 = arith.constant dense<0.000000e+00> : vector<72xf32>
    %511 = vector.multi_reduction <add>, %510, %cst_230 [1] : vector<72x128xf32> to vector<72xf32>
    %512 = vector.shape_cast %511 : vector<72xf32> to vector<72x1xf32>
    %cst_231 = arith.constant 7.812500e-03 : f32
    %513 = vector.broadcast %cst_231 : f32 to vector<72x1xf32>
    %514 = arith.mulf %512, %513 : vector<72x1xf32>
    %515 = arith.mulf %510, %510 : vector<72x128xf32>
    %cst_232 = arith.constant dense<0.000000e+00> : vector<72xf32>
    %516 = vector.multi_reduction <add>, %515, %cst_232 [1] : vector<72x128xf32> to vector<72xf32>
    %517 = vector.shape_cast %516 : vector<72xf32> to vector<72x1xf32>
    %cst_233 = arith.constant 7.812500e-03 : f32
    %518 = vector.broadcast %cst_233 : f32 to vector<72x1xf32>
    %519 = arith.mulf %517, %518 : vector<72x1xf32>
    %520 = arith.mulf %514, %514 : vector<72x1xf32>
    %521 = arith.subf %519, %520 : vector<72x1xf32>
    %cst_234 = arith.constant 0.000000e+00 : f32
    %522 = vector.broadcast %cst_234 : f32 to vector<72x1xf32>
    %523 = arith.maximumf %521, %522 : vector<72x1xf32>
    %524 = vector.broadcast %514 : vector<72x1xf32> to vector<72x128xf32>
    %525 = arith.subf %510, %524 : vector<72x128xf32>
    %cst_235 = arith.constant 9.99999974E-6 : f32
    %526 = vector.broadcast %cst_235 : f32 to vector<72x1xf32>
    %527 = arith.addf %523, %526 : vector<72x1xf32>
    %528 = math.rsqrt %527 : vector<72x1xf32>
    %529 = vector.broadcast %528 : vector<72x1xf32> to vector<72x128xf32>
    %530 = arith.mulf %525, %529 : vector<72x128xf32>
    %cst_236 = arith.constant 0.000000e+00 : f32
    %531 = vector.broadcast %cst_236 : f32 to vector<72x128xf32>
    %532 = arith.cmpf ogt, %530, %531 : vector<72x128xf32>
    %533 = vector.broadcast %444 : f32 to vector<72x128xf32>
    %534 = arith.mulf %530, %533 : vector<72x128xf32>
    %535 = arith.select %532, %530, %534 : vector<72x128xi1>, vector<72x128xf32>
    %c2_i32_237 = arith.constant 2 : i32
    %536 = tpu.dynamic_rotate %535 by %c2_i32_237 dim 1 : vector<72x128xf32>, i32 -> vector<72x128xf32>
    %c2_i32_238 = arith.constant 2 : i32
    %537 = vector.broadcast %c2_i32_238 : i32 to vector<72x128xi32>
    %538 = arith.cmpi sge, %7, %537 : vector<72x128xi32>
    %cst_239 = arith.constant 0.000000e+00 : f32
    %539 = vector.broadcast %cst_239 : f32 to vector<72x128xf32>
    %540 = arith.select %538, %536, %539 : vector<72x128xi1>, vector<72x128xf32>
    %c1_i32_240 = arith.constant 1 : i32
    %541 = tpu.dynamic_rotate %535 by %c1_i32_240 dim 1 : vector<72x128xf32>, i32 -> vector<72x128xf32>
    %c1_i32_241 = arith.constant 1 : i32
    %542 = vector.broadcast %c1_i32_241 : i32 to vector<72x128xi32>
    %543 = arith.cmpi sge, %7, %542 : vector<72x128xi32>
    %cst_242 = arith.constant 0.000000e+00 : f32
    %544 = vector.broadcast %cst_242 : f32 to vector<72x128xf32>
    %545 = arith.select %543, %541, %544 : vector<72x128xi1>, vector<72x128xf32>
    %c127_i32_243 = arith.constant 127 : i32
    %546 = tpu.dynamic_rotate %535 by %c127_i32_243 dim 1 : vector<72x128xf32>, i32 -> vector<72x128xf32>
    %c127_i32_244 = arith.constant 127 : i32
    %547 = vector.broadcast %c127_i32_244 : i32 to vector<72x128xi32>
    %548 = arith.cmpi slt, %7, %547 : vector<72x128xi32>
    %cst_245 = arith.constant 0.000000e+00 : f32
    %549 = vector.broadcast %cst_245 : f32 to vector<72x128xf32>
    %550 = arith.select %548, %546, %549 : vector<72x128xi1>, vector<72x128xf32>
    %c126_i32_246 = arith.constant 126 : i32
    %551 = tpu.dynamic_rotate %535 by %c126_i32_246 dim 1 : vector<72x128xf32>, i32 -> vector<72x128xf32>
    %c126_i32_247 = arith.constant 126 : i32
    %552 = vector.broadcast %c126_i32_247 : i32 to vector<72x128xi32>
    %553 = arith.cmpi slt, %7, %552 : vector<72x128xi32>
    %cst_248 = arith.constant 0.000000e+00 : f32
    %554 = vector.broadcast %cst_248 : f32 to vector<72x128xf32>
    %555 = arith.select %553, %551, %554 : vector<72x128xi1>, vector<72x128xf32>
    %556 = tpu.concatenate %540, %545, %535, %550, %555 in 0 : vector<72x128xf32>, vector<72x128xf32>, vector<72x128xf32>, vector<72x128xf32>, vector<72x128xf32> -> vector<360x128xf32>
    %c0_249 = arith.constant 0 : index
    %c0_250 = arith.constant 0 : index
    %557 = vector.load %arg20[%c0_249, %c0_250] : memref<72x360xf32, #tpu.memory_space<vmem>>, vector<72x360xf32>
    %cst_251 = arith.constant dense<0.000000e+00> : vector<72x128xf32>
    %558 = tpu.matmul %557, %556, %cst_251 {dimension_numbers = #tpu.dot_dimension_numbers<[1], [0], [0], [1], [0, 0, 1, 1], [], []>} : vector<72x360xf32>, vector<360x128xf32>, vector<72x128xf32> -> vector<72x128xf32>
    %c0_252 = arith.constant 0 : index
    %c0_253 = arith.constant 0 : index
    %559 = vector.load %arg21[%c0_252, %c0_253] : memref<72x1xf32, #tpu.memory_space<vmem>>, vector<72x1xf32>
    %560 = vector.broadcast %559 : vector<72x1xf32> to vector<72x128xf32>
    %561 = arith.addf %558, %560 : vector<72x128xf32>
    %cst_254 = arith.constant dense<0.000000e+00> : vector<72xf32>
    %562 = vector.multi_reduction <add>, %561, %cst_254 [1] : vector<72x128xf32> to vector<72xf32>
    %563 = vector.shape_cast %562 : vector<72xf32> to vector<72x1xf32>
    %cst_255 = arith.constant 7.812500e-03 : f32
    %564 = vector.broadcast %cst_255 : f32 to vector<72x1xf32>
    %565 = arith.mulf %563, %564 : vector<72x1xf32>
    %566 = arith.mulf %561, %561 : vector<72x128xf32>
    %cst_256 = arith.constant dense<0.000000e+00> : vector<72xf32>
    %567 = vector.multi_reduction <add>, %566, %cst_256 [1] : vector<72x128xf32> to vector<72xf32>
    %568 = vector.shape_cast %567 : vector<72xf32> to vector<72x1xf32>
    %cst_257 = arith.constant 7.812500e-03 : f32
    %569 = vector.broadcast %cst_257 : f32 to vector<72x1xf32>
    %570 = arith.mulf %568, %569 : vector<72x1xf32>
    %571 = arith.mulf %565, %565 : vector<72x1xf32>
    %572 = arith.subf %570, %571 : vector<72x1xf32>
    %cst_258 = arith.constant 0.000000e+00 : f32
    %573 = vector.broadcast %cst_258 : f32 to vector<72x1xf32>
    %574 = arith.maximumf %572, %573 : vector<72x1xf32>
    %575 = vector.broadcast %565 : vector<72x1xf32> to vector<72x128xf32>
    %576 = arith.subf %561, %575 : vector<72x128xf32>
    %cst_259 = arith.constant 9.99999974E-6 : f32
    %577 = vector.broadcast %cst_259 : f32 to vector<72x1xf32>
    %578 = arith.addf %574, %577 : vector<72x1xf32>
    %579 = math.rsqrt %578 : vector<72x1xf32>
    %580 = vector.broadcast %579 : vector<72x1xf32> to vector<72x128xf32>
    %581 = arith.mulf %576, %580 : vector<72x128xf32>
    %cst_260 = arith.constant 0.000000e+00 : f32
    %582 = vector.broadcast %cst_260 : f32 to vector<72x128xf32>
    %583 = arith.cmpf ogt, %581, %582 : vector<72x128xf32>
    %584 = vector.broadcast %444 : f32 to vector<72x128xf32>
    %585 = arith.mulf %581, %584 : vector<72x128xf32>
    %586 = arith.select %583, %581, %585 : vector<72x128xi1>, vector<72x128xf32>
    %c1_i32_261 = arith.constant 1 : i32
    %587 = tpu.dynamic_rotate %586 by %c1_i32_261 dim 1 : vector<72x128xf32>, i32 -> vector<72x128xf32>
    %c1_i32_262 = arith.constant 1 : i32
    %588 = vector.broadcast %c1_i32_262 : i32 to vector<72x128xi32>
    %589 = arith.cmpi sge, %7, %588 : vector<72x128xi32>
    %cst_263 = arith.constant 0.000000e+00 : f32
    %590 = vector.broadcast %cst_263 : f32 to vector<72x128xf32>
    %591 = arith.select %589, %587, %590 : vector<72x128xi1>, vector<72x128xf32>
    %c127_i32_264 = arith.constant 127 : i32
    %592 = tpu.dynamic_rotate %586 by %c127_i32_264 dim 1 : vector<72x128xf32>, i32 -> vector<72x128xf32>
    %c127_i32_265 = arith.constant 127 : i32
    %593 = vector.broadcast %c127_i32_265 : i32 to vector<72x128xi32>
    %594 = arith.cmpi slt, %7, %593 : vector<72x128xi32>
    %cst_266 = arith.constant 0.000000e+00 : f32
    %595 = vector.broadcast %cst_266 : f32 to vector<72x128xf32>
    %596 = arith.select %594, %592, %595 : vector<72x128xi1>, vector<72x128xf32>
    %597 = tpu.concatenate %591, %586, %596 in 0 : vector<72x128xf32>, vector<72x128xf32>, vector<72x128xf32> -> vector<216x128xf32>
    %c0_267 = arith.constant 0 : index
    %c0_268 = arith.constant 0 : index
    %598 = vector.load %arg22[%c0_267, %c0_268] : memref<72x216xf32, #tpu.memory_space<vmem>>, vector<72x216xf32>
    %cst_269 = arith.constant dense<0.000000e+00> : vector<72x128xf32>
    %599 = tpu.matmul %598, %597, %cst_269 {dimension_numbers = #tpu.dot_dimension_numbers<[1], [0], [0], [1], [0, 0, 1, 1], [], []>} : vector<72x216xf32>, vector<216x128xf32>, vector<72x128xf32> -> vector<72x128xf32>
    %c0_270 = arith.constant 0 : index
    %c0_271 = arith.constant 0 : index
    %600 = vector.load %arg23[%c0_270, %c0_271] : memref<72x1xf32, #tpu.memory_space<vmem>>, vector<72x1xf32>
    %601 = vector.broadcast %600 : vector<72x1xf32> to vector<72x128xf32>
    %602 = arith.addf %599, %601 : vector<72x128xf32>
    %cst_272 = arith.constant dense<0.000000e+00> : vector<72xf32>
    %603 = vector.multi_reduction <add>, %602, %cst_272 [1] : vector<72x128xf32> to vector<72xf32>
    %604 = vector.shape_cast %603 : vector<72xf32> to vector<72x1xf32>
    %cst_273 = arith.constant 7.812500e-03 : f32
    %605 = vector.broadcast %cst_273 : f32 to vector<72x1xf32>
    %606 = arith.mulf %604, %605 : vector<72x1xf32>
    %607 = arith.mulf %602, %602 : vector<72x128xf32>
    %cst_274 = arith.constant dense<0.000000e+00> : vector<72xf32>
    %608 = vector.multi_reduction <add>, %607, %cst_274 [1] : vector<72x128xf32> to vector<72xf32>
    %609 = vector.shape_cast %608 : vector<72xf32> to vector<72x1xf32>
    %cst_275 = arith.constant 7.812500e-03 : f32
    %610 = vector.broadcast %cst_275 : f32 to vector<72x1xf32>
    %611 = arith.mulf %609, %610 : vector<72x1xf32>
    %612 = arith.mulf %606, %606 : vector<72x1xf32>
    %613 = arith.subf %611, %612 : vector<72x1xf32>
    %cst_276 = arith.constant 0.000000e+00 : f32
    %614 = vector.broadcast %cst_276 : f32 to vector<72x1xf32>
    %615 = arith.maximumf %613, %614 : vector<72x1xf32>
    %616 = vector.broadcast %606 : vector<72x1xf32> to vector<72x128xf32>
    %617 = arith.subf %602, %616 : vector<72x128xf32>
    %cst_277 = arith.constant 9.99999974E-6 : f32
    %618 = vector.broadcast %cst_277 : f32 to vector<72x1xf32>
    %619 = arith.addf %615, %618 : vector<72x1xf32>
    %620 = math.rsqrt %619 : vector<72x1xf32>
    %621 = vector.broadcast %620 : vector<72x1xf32> to vector<72x128xf32>
    %622 = arith.mulf %617, %621 : vector<72x128xf32>
    %623 = arith.addf %622, %464 : vector<72x128xf32>
    %cst_278 = arith.constant 0.000000e+00 : f32
    %624 = vector.broadcast %cst_278 : f32 to vector<72x128xf32>
    %625 = arith.maximumf %623, %624 : vector<72x128xf32>
    %c0_279 = arith.constant 0 : index
    %c0_280 = arith.constant 0 : index
    %626 = vector.load %arg24[%c0_279, %c0_280] : memref<8x72xf32, #tpu.memory_space<vmem>>, vector<8x72xf32>
    %cst_281 = arith.constant dense<0.000000e+00> : vector<8x128xf32>
    %627 = tpu.matmul %626, %625, %cst_281 {dimension_numbers = #tpu.dot_dimension_numbers<[1], [0], [0], [1], [0, 0, 1, 1], [], []>} : vector<8x72xf32>, vector<72x128xf32>, vector<8x128xf32> -> vector<8x128xf32>
    %cst_282 = arith.constant dense<0.000000e+00> : vector<8xf32>
    %628 = vector.multi_reduction <add>, %627, %cst_282 [1] : vector<8x128xf32> to vector<8xf32>
    %629 = vector.shape_cast %628 : vector<8xf32> to vector<8x1xf32>
    %cst_283 = arith.constant 7.812500e-03 : f32
    %630 = vector.broadcast %cst_283 : f32 to vector<8x1xf32>
    %631 = arith.mulf %629, %630 : vector<8x1xf32>
    %c0_284 = arith.constant 0 : index
    %c0_285 = arith.constant 0 : index
    %632 = vector.load %arg25[%c0_284, %c0_285] : memref<8x1xf32, #tpu.memory_space<vmem>>, vector<8x1xf32>
    %633 = arith.addf %631, %632 : vector<8x1xf32>
    %c0_286 = arith.constant 0 : index
    %c0_287 = arith.constant 0 : index
    %c0_288 = arith.constant 0 : index
    %634 = vector.load %arg26[%c0_286, %c0_287, %c0_288] : memref<1x8x1xf32, #tpu.memory_space<vmem>>, vector<1x8x1xf32>
    %635 = vector.shape_cast %634 : vector<1x8x1xf32> to vector<8x1xf32>
    %636 = vector.shape_cast %633 : vector<8x1xf32> to vector<1x8x1xf32>
    tpu.vector_store %arg26[%c0_286, %c0_287, %c0_288], %636 {strides = array<i32>} : memref<1x8x1xf32, #tpu.memory_space<vmem>>, vector<1x8x1xf32>,
    return
  }
  func.func @transform_0(%arg0: i32) -> i32 {
    %c0_i32 = arith.constant 0 : i32
    %c0_i32_0 = arith.constant 0 : i32
    return %c0_i32 : i32
  }
  func.func @transform_1(%arg0: i32) -> (i32, i32, i32) {
    %c0_i32 = arith.constant 0 : i32
    %c0_i32_0 = arith.constant 0 : i32
    %c0_i32_1 = arith.constant 0 : i32
    return %arg0, %c0_i32, %c0_i32_0 : i32, i32, i32
  }
  func.func @transform_2(%arg0: i32) -> (i32, i32, i32) {
    %c0_i32 = arith.constant 0 : i32
    %c0_i32_0 = arith.constant 0 : i32
    %c0_i32_1 = arith.constant 0 : i32
    return %arg0, %c0_i32, %c0_i32_0 : i32, i32, i32
  }
  func.func @transform_3(%arg0: i32) -> (i32, i32) {
    %c0_i32 = arith.constant 0 : i32
    %c0_i32_0 = arith.constant 0 : i32
    %c0_i32_1 = arith.constant 0 : i32
    return %c0_i32, %c0_i32_0 : i32, i32
  }
  func.func @transform_4(%arg0: i32) -> (i32, i32) {
    %c0_i32 = arith.constant 0 : i32
    %c0_i32_0 = arith.constant 0 : i32
    %c0_i32_1 = arith.constant 0 : i32
    return %c0_i32, %c0_i32_0 : i32, i32
  }
  func.func @transform_5(%arg0: i32) -> (i32, i32) {
    %c0_i32 = arith.constant 0 : i32
    %c0_i32_0 = arith.constant 0 : i32
    %c0_i32_1 = arith.constant 0 : i32
    return %c0_i32, %c0_i32_0 : i32, i32
  }
  func.func @transform_6(%arg0: i32) -> (i32, i32) {
    %c0_i32 = arith.constant 0 : i32
    %c0_i32_0 = arith.constant 0 : i32
    %c0_i32_1 = arith.constant 0 : i32
    return %c0_i32, %c0_i32_0 : i32, i32
  }
  func.func @transform_7(%arg0: i32) -> (i32, i32) {
    %c0_i32 = arith.constant 0 : i32
    %c0_i32_0 = arith.constant 0 : i32
    %c0_i32_1 = arith.constant 0 : i32
    return %c0_i32, %c0_i32_0 : i32, i32
  }
  func.func @transform_8(%arg0: i32) -> (i32, i32) {
    %c0_i32 = arith.constant 0 : i32
    %c0_i32_0 = arith.constant 0 : i32
    %c0_i32_1 = arith.constant 0 : i32
    return %c0_i32, %c0_i32_0 : i32, i32
  }
  func.func @transform_9(%arg0: i32) -> (i32, i32) {
    %c0_i32 = arith.constant 0 : i32
    %c0_i32_0 = arith.constant 0 : i32
    %c0_i32_1 = arith.constant 0 : i32
    return %c0_i32, %c0_i32_0 : i32, i32
  }
  func.func @transform_10(%arg0: i32) -> (i32, i32) {
    %c0_i32 = arith.constant 0 : i32
    %c0_i32_0 = arith.constant 0 : i32
    %c0_i32_1 = arith.constant 0 : i32
    return %c0_i32, %c0_i32_0 : i32, i32
  }
  func.func @transform_11(%arg0: i32) -> (i32, i32) {
    %c0_i32 = arith.constant 0 : i32
    %c0_i32_0 = arith.constant 0 : i32
    %c0_i32_1 = arith.constant 0 : i32
    return %c0_i32, %c0_i32_0 : i32, i32
  }
  func.func @transform_12(%arg0: i32) -> (i32, i32) {
    %c0_i32 = arith.constant 0 : i32
    %c0_i32_0 = arith.constant 0 : i32
    %c0_i32_1 = arith.constant 0 : i32
    return %c0_i32, %c0_i32_0 : i32, i32
  }
  func.func @transform_13(%arg0: i32) -> (i32, i32) {
    %c0_i32 = arith.constant 0 : i32
    %c0_i32_0 = arith.constant 0 : i32
    %c0_i32_1 = arith.constant 0 : i32
    return %c0_i32, %c0_i32_0 : i32, i32
  }
  func.func @transform_14(%arg0: i32) -> (i32, i32) {
    %c0_i32 = arith.constant 0 : i32
    %c0_i32_0 = arith.constant 0 : i32
    %c0_i32_1 = arith.constant 0 : i32
    return %c0_i32, %c0_i32_0 : i32, i32
  }
  func.func @transform_15(%arg0: i32) -> (i32, i32) {
    %c0_i32 = arith.constant 0 : i32
    %c0_i32_0 = arith.constant 0 : i32
    %c0_i32_1 = arith.constant 0 : i32
    return %c0_i32, %c0_i32_0 : i32, i32
  }
  func.func @transform_16(%arg0: i32) -> (i32, i32) {
    %c0_i32 = arith.constant 0 : i32
    %c0_i32_0 = arith.constant 0 : i32
    %c0_i32_1 = arith.constant 0 : i32
    return %c0_i32, %c0_i32_0 : i32, i32
  }
  func.func @transform_17(%arg0: i32) -> (i32, i32) {
    %c0_i32 = arith.constant 0 : i32
    %c0_i32_0 = arith.constant 0 : i32
    %c0_i32_1 = arith.constant 0 : i32
    return %c0_i32, %c0_i32_0 : i32, i32
  }
  func.func @transform_18(%arg0: i32) -> (i32, i32) {
    %c0_i32 = arith.constant 0 : i32
    %c0_i32_0 = arith.constant 0 : i32
    %c0_i32_1 = arith.constant 0 : i32
    return %c0_i32, %c0_i32_0 : i32, i32
  }
  func.func @transform_19(%arg0: i32) -> (i32, i32) {
    %c0_i32 = arith.constant 0 : i32
    %c0_i32_0 = arith.constant 0 : i32
    %c0_i32_1 = arith.constant 0 : i32
    return %c0_i32, %c0_i32_0 : i32, i32
  }
  func.func @transform_20(%arg0: i32) -> (i32, i32) {
    %c0_i32 = arith.constant 0 : i32
    %c0_i32_0 = arith.constant 0 : i32
    %c0_i32_1 = arith.constant 0 : i32
    return %c0_i32, %c0_i32_0 : i32, i32
  }
  func.func @transform_21(%arg0: i32) -> (i32, i32) {
    %c0_i32 = arith.constant 0 : i32
    %c0_i32_0 = arith.constant 0 : i32
    %c0_i32_1 = arith.constant 0 : i32
    return %c0_i32, %c0_i32_0 : i32, i32
  }
  func.func @transform_22(%arg0: i32) -> (i32, i32) {
    %c0_i32 = arith.constant 0 : i32
    %c0_i32_0 = arith.constant 0 : i32
    %c0_i32_1 = arith.constant 0 : i32
    return %c0_i32, %c0_i32_0 : i32, i32
  }
  func.func @transform_23(%arg0: i32) -> (i32, i32) {
    %c0_i32 = arith.constant 0 : i32
    %c0_i32_0 = arith.constant 0 : i32
    %c0_i32_1 = arith.constant 0 : i32
    return %c0_i32, %c0_i32_0 : i32, i32
  }
  func.func @transform_24(%arg0: i32) -> (i32, i32) {
    %c0_i32 = arith.constant 0 : i32
    %c0_i32_0 = arith.constant 0 : i32
    %c0_i32_1 = arith.constant 0 : i32
    return %c0_i32, %c0_i32_0 : i32, i32
  }
  func.func @transform_25(%arg0: i32) -> (i32, i32, i32) {
    %c0_i32 = arith.constant 0 : i32
    %c0_i32_0 = arith.constant 0 : i32
    %c0_i32_1 = arith.constant 0 : i32
    return %arg0, %c0_i32, %c0_i32_0 : i32, i32, i32
  }
}

</mosaic_0001>

<llo_original>
// kernel: resnet_forward.1
$region0: #{resnet_forward.1}
  #allocation0 [shape = 'u32[]', space=smem, size = 0x4, offset = 0x4, fixed_abs, tag = 'smem constant byte address 0x4 - core index']
  #allocation1 [shape = 'u32[144,128]{1,0:T(1,128)}', space=vmem, size = 0x12000, scoped, tag = 'internal scratch']
  %s0 = inlined_call_operand.vmem [shape: f32[4], index: 0, kind: input, shape index: {}]
  %s1 = inlined_call_operand.vmem [shape: f32[2,8,128], index: 1, kind: input, shape index: {}]
  %s2 = inlined_call_operand.vmem [shape: f32[2,1,128], index: 2, kind: input, shape index: {}]
  %s3 = inlined_call_operand.vmem [shape: f32[72,56], index: 3, kind: input, shape index: {}]
  %s4 = inlined_call_operand.vmem [shape: f32[72,1], index: 4, kind: input, shape index: {}]
  %s5 = inlined_call_operand.vmem [shape: f32[72,648], index: 5, kind: input, shape index: {}]
  %s6 = inlined_call_operand.vmem [shape: f32[72,1], index: 6, kind: input, shape index: {}]
  %s7 = inlined_call_operand.vmem [shape: f32[72,360], index: 7, kind: input, shape index: {}]
  %s8 = inlined_call_operand.vmem [shape: f32[72,1], index: 8, kind: input, shape index: {}]
  %s9 = inlined_call_operand.vmem [shape: f32[72,216], index: 9, kind: input, shape index: {}]
  %s10 = inlined_call_operand.vmem [shape: f32[72,1], index: 10, kind: input, shape index: {}]
  %s11 = inlined_call_operand.vmem [shape: f32[72,648], index: 11, kind: input, shape index: {}]
  %s12 = inlined_call_operand.vmem [shape: f32[72,1], index: 12, kind: input, shape index: {}]
  %s13 = inlined_call_operand.vmem [shape: f32[72,360], index: 13, kind: input, shape index: {}]
  %s14 = inlined_call_operand.vmem [shape: f32[72,1], index: 14, kind: input, shape index: {}]
  %s15 = inlined_call_operand.vmem [shape: f32[72,216], index: 15, kind: input, shape index: {}]
  %s16 = inlined_call_operand.vmem [shape: f32[72,1], index: 16, kind: input, shape index: {}]
  %s17 = inlined_call_operand.vmem [shape: f32[72,648], index: 17, kind: input, shape index: {}]
  %s18 = inlined_call_operand.vmem [shape: f32[72,1], index: 18, kind: input, shape index: {}]
  %s19 = inlined_call_operand.vmem [shape: f32[72,360], index: 19, kind: input, shape index: {}]
  %s20 = inlined_call_operand.vmem [shape: f32[72,1], index: 20, kind: input, shape index: {}]
  %s21 = inlined_call_operand.vmem [shape: f32[72,216], index: 21, kind: input, shape index: {}]
  %s22 = inlined_call_operand.vmem [shape: f32[72,1], index: 22, kind: input, shape index: {}]
  %s23 = inlined_call_operand.vmem [shape: f32[8,72], index: 23, kind: input, shape index: {}]
  %s24 = inlined_call_operand.vmem [shape: f32[8,1], index: 24, kind: input, shape index: {}]
  %s25 = inlined_call_operand.vmem [shape: f32[2,8,1], index: 25, kind: output, shape index: {}]
  %s26 = sld [smem:[#allocation0]]
  $region137: #{resnet_forward.1} parent=0
    _
  %s28 = ssub.s32 1, %s26
  %s29 = scalar_select 0, %s28, %s26
  $region1: #{resnet_forward.1} parent=0
    #allocation2 [shape = 'u8[512]{0}', space=smem, size = 0x200, scoped, tag = 'input window, operand 0, single buffered']
    #allocation3 [shape = 's32[2]{0}', space=sflag, size = 0x8, scoped, tag = 'scoped memory for resnet_forward.1']
    %30 = vsyncpa [#allocation3], 0
    loop: start=0, step=1, limit=4
    $region2: #{resnet_forward.1} parent=1 // loop_pre_header
      _
    $region3: #{resnet_forward.1} parent=1 // loop_header
      %s32 = sphi 0, %s36
      %p33 = scmp.ge.s32.totalorder %s32, 4
      %s40 = sphi 0, %s40
      %s42 = sphi 0, %s40
      %s43 = sphi 0, %s42
      %s57 = sphi 0, %s43
      %s63 = sphi 0, %s65
      %s66 = sphi 0, %s63
      %s67 = sphi 0, %s66
      %s83 = sphi 0, %s67
      %s89 = sphi 0, %s91
      %s92 = sphi 0, %s89
      %s93 = sphi 0, %s92
      %s109 = sphi 0, %s93
      %s113 = sphi 0, %s113
      %s115 = sphi 0, %s113
      %s116 = sphi 0, %s115
      %s130 = sphi 0, %s116
      %s134 = sphi 0, %s134
      %s136 = sphi 0, %s134
      %s137 = sphi 0, %s136
      %s151 = sphi 0, %s137
      %s155 = sphi 0, %s155
      %s157 = sphi 0, %s155
      %s158 = sphi 0, %s157
      %s172 = sphi 0, %s158
      %s176 = sphi 0, %s176
      %s178 = sphi 0, %s176
      %s179 = sphi 0, %s178
      %s193 = sphi 0, %s179
      %s197 = sphi 0, %s197
      %s199 = sphi 0, %s197
      %s200 = sphi 0, %s199
      %s214 = sphi 0, %s200
      %s218 = sphi 0, %s218
      %s220 = sphi 0, %s218
      %s221 = sphi 0, %s220
      %s235 = sphi 0, %s221
      %s239 = sphi 0, %s239
      %s241 = sphi 0, %s239
      %s242 = sphi 0, %s241
      %s256 = sphi 0, %s242
      %s260 = sphi 0, %s260
      %s262 = sphi 0, %s260
      %s263 = sphi 0, %s262
      %s277 = sphi 0, %s263
      %s281 = sphi 0, %s281
      %s283 = sphi 0, %s281
      %s284 = sphi 0, %s283
      %s298 = sphi 0, %s284
      %s302 = sphi 0, %s302
      %s304 = sphi 0, %s302
      %s305 = sphi 0, %s304
      %s319 = sphi 0, %s305
      %s323 = sphi 0, %s323
      %s325 = sphi 0, %s323
      %s326 = sphi 0, %s325
      %s340 = sphi 0, %s326
      %s344 = sphi 0, %s344
      %s346 = sphi 0, %s344
      %s347 = sphi 0, %s346
      %s361 = sphi 0, %s347
      %s365 = sphi 0, %s365
      %s367 = sphi 0, %s365
      %s368 = sphi 0, %s367
      %s382 = sphi 0, %s368
      %s386 = sphi 0, %s386
      %s388 = sphi 0, %s386
      %s389 = sphi 0, %s388
      %s403 = sphi 0, %s389
      %s407 = sphi 0, %s407
      %s409 = sphi 0, %s407
      %s410 = sphi 0, %s409
      %s424 = sphi 0, %s410
      %s428 = sphi 0, %s428
      %s430 = sphi 0, %s428
      %s431 = sphi 0, %s430
      %s445 = sphi 0, %s431
      %s449 = sphi 0, %s449
      %s451 = sphi 0, %s449
      %s452 = sphi 0, %s451
      %s466 = sphi 0, %s452
      %s470 = sphi 0, %s470
      %s472 = sphi 0, %s470
      %s473 = sphi 0, %s472
      %s487 = sphi 0, %s473
      %s491 = sphi 0, %s491
      %s493 = sphi 0, %s491
      %s494 = sphi 0, %s493
      %s508 = sphi 0, %s494
      %s512 = sphi 0, %s512
      %s514 = sphi 0, %s512
      %s515 = sphi 0, %s514
      %s529 = sphi 0, %s515
      %s533 = sphi 0, %s533
      %s535 = sphi 0, %s533
      %s536 = sphi 0, %s535
      %s550 = sphi 0, %s536
      %s554 = sphi 0, %s554
      %s556 = sphi 0, %s554
      %s557 = sphi 0, %s556
      %s571 = sphi 0, %s557
      %s577 = sphi 0, %s579
      %s580 = sphi 0, %s577
      %s581 = sphi 0, %s580
      %s597 = sphi 0, %s581
    $region4: #{resnet_forward.1} parent=1 // loop_header_branch
      %35 = sbr.rel (%p33) target = $region8
    $region5: #{resnet_forward.1} parent=1 // loop_body
      %s37 = ssub.s32 %s32, 1
      %s38 = ssub.s32 %s32, 2
      %s39 = sadd.s32 %s32, 1
      %s41 = sadd.s32 %s40, 1
      %p44 = scmp.eq.s32.totalorder %s32, 1
      %p45 = scmp.ne.s32.totalorder %s40, %s42
      %p46 = scmp.eq.s32.totalorder %s32, 0
      %p47 = por %p45, %p46
      %p48 = scmp.ne.s32.totalorder %s40, %s42
      %p49 = scmp.eq.s32.totalorder %s37, 1
      %p50 = por %p48, %p49
      %p51 = scmp.ne.s32.totalorder %s42, %s43
      %p52 = scmp.eq.s32.totalorder %s37, 0
      %p53 = por %p51, %p52
      %p54 = scmp.ne.s32.totalorder %s42, %s43
      %p55 = scmp.eq.s32.totalorder %s38, 1
      %p56 = por %p54, %p55
      %p58 = scmp.ne.s32.totalorder %s43, %s57
      %p59 = scmp.eq.s32.totalorder %s38, 0
      %p60 = por %p58, %p59
      %s61 = ssub.s32 %s32, %s39
      %p62 = scmp.eq.s32.totalorder %s61, 0
      %s64 = sadd.s32 %s63, 1
      %s65 = scalar_select %p62, %s63, %s64
      %p68 = pneg %p62
      %p69 = scmp.eq.s32.totalorder %s32, 1
      %p70 = por %p68, %p69
      %p71 = scmp.ne.s32.totalorder %s63, %s66
      %p72 = scmp.eq.s32.totalorder %s32, 0
      %p73 = por %p71, %p72
      %p74 = scmp.ne.s32.totalorder %s63, %s66
      %p75 = scmp.eq.s32.totalorder %s37, 1
      %p76 = por %p74, %p75
      %p77 = scmp.ne.s32.totalorder %s66, %s67
      %p78 = scmp.eq.s32.totalorder %s37, 0
      %p79 = por %p77, %p78
      %p80 = scmp.ne.s32.totalorder %s66, %s67
      %p81 = scmp.eq.s32.totalorder %s38, 1
      %p82 = por %p80, %p81
      %p84 = scmp.ne.s32.totalorder %s67, %s83
      %p85 = scmp.eq.s32.totalorder %s38, 0
      %p86 = por %p84, %p85
      %s87 = ssub.s32 %s32, %s39
      %p88 = scmp.eq.s32.totalorder %s87, 0
      %s90 = sadd.s32 %s89, 1
      %s91 = scalar_select %p88, %s89, %s90
      %p94 = pneg %p88
      %p95 = scmp.eq.s32.totalorder %s32, 1
      %p96 = por %p94, %p95
      %p97 = scmp.ne.s32.totalorder %s89, %s92
      %p98 = scmp.eq.s32.totalorder %s32, 0
      %p99 = por %p97, %p98
      %p100 = scmp.ne.s32.totalorder %s89, %s92
      %p101 = scmp.eq.s32.totalorder %s37, 1
      %p102 = por %p100, %p101
      %p103 = scmp.ne.s32.totalorder %s92, %s93
      %p104 = scmp.eq.s32.totalorder %s37, 0
      %p105 = por %p103, %p104
      %p106 = scmp.ne.s32.totalorder %s92, %s93
      %p107 = scmp.eq.s32.totalorder %s38, 1
      %p108 = por %p106, %p107
      %p110 = scmp.ne.s32.totalorder %s93, %s109
      %p111 = scmp.eq.s32.totalorder %s38, 0
      %p112 = por %p110, %p111
      %s114 = sadd.s32 %s113, 1
      %p117 = scmp.eq.s32.totalorder %s32, 1
      %p118 = scmp.ne.s32.totalorder %s113, %s115
      %p119 = scmp.eq.s32.totalorder %s32, 0
      %p120 = por %p118, %p119
      %p121 = scmp.ne.s32.totalorder %s113, %s115
      %p122 = scmp.eq.s32.totalorder %s37, 1
      %p123 = por %p121, %p122
      %p124 = scmp.ne.s32.totalorder %s115, %s116
      %p125 = scmp.eq.s32.totalorder %s37, 0
      %p126 = por %p124, %p125
      %p127 = scmp.ne.s32.totalorder %s115, %s116
      %p128 = scmp.eq.s32.totalorder %s38, 1
      %p129 = por %p127, %p128
      %p131 = scmp.ne.s32.totalorder %s116, %s130
      %p132 = scmp.eq.s32.totalorder %s38, 0
      %p133 = por %p131, %p132
      %s135 = sadd.s32 %s134, 1
      %p138 = scmp.eq.s32.totalorder %s32, 1
      %p139 = scmp.ne.s32.totalorder %s134, %s136
      %p140 = scmp.eq.s32.totalorder %s32, 0
      %p141 = por %p139, %p140
      %p142 = scmp.ne.s32.totalorder %s134, %s136
      %p143 = scmp.eq.s32.totalorder %s37, 1
      %p144 = por %p142, %p143
      %p145 = scmp.ne.s32.totalorder %s136, %s137
      %p146 = scmp.eq.s32.totalorder %s37, 0
      %p147 = por %p145, %p146
      %p148 = scmp.ne.s32.totalorder %s136, %s137
      %p149 = scmp.eq.s32.totalorder %s38, 1
      %p150 = por %p148, %p149
      %p152 = scmp.ne.s32.totalorder %s137, %s151
      %p153 = scmp.eq.s32.totalorder %s38, 0
      %p154 = por %p152, %p153
      %s156 = sadd.s32 %s155, 1
      %p159 = scmp.eq.s32.totalorder %s32, 1
      %p160 = scmp.ne.s32.totalorder %s155, %s157
      %p161 = scmp.eq.s32.totalorder %s32, 0
      %p162 = por %p160, %p161
      %p163 = scmp.ne.s32.totalorder %s155, %s157
      %p164 = scmp.eq.s32.totalorder %s37, 1
      %p165 = por %p163, %p164
      %p166 = scmp.ne.s32.totalorder %s157, %s158
      %p167 = scmp.eq.s32.totalorder %s37, 0
      %p168 = por %p166, %p167
      %p169 = scmp.ne.s32.totalorder %s157, %s158
      %p170 = scmp.eq.s32.totalorder %s38, 1
      %p171 = por %p169, %p170
      %p173 = scmp.ne.s32.totalorder %s158, %s172
      %p174 = scmp.eq.s32.totalorder %s38, 0
      %p175 = por %p173, %p174
      %s177 = sadd.s32 %s176, 1
      %p180 = scmp.eq.s32.totalorder %s32, 1
      %p181 = scmp.ne.s32.totalorder %s176, %s178
      %p182 = scmp.eq.s32.totalorder %s32, 0
      %p183 = por %p181, %p182
      %p184 = scmp.ne.s32.totalorder %s176, %s178
      %p185 = scmp.eq.s32.totalorder %s37, 1
      %p186 = por %p184, %p185
      %p187 = scmp.ne.s32.totalorder %s178, %s179
      %p188 = scmp.eq.s32.totalorder %s37, 0
      %p189 = por %p187, %p188
      %p190 = scmp.ne.s32.totalorder %s178, %s179
      %p191 = scmp.eq.s32.totalorder %s38, 1
      %p192 = por %p190, %p191
      %p194 = scmp.ne.s32.totalorder %s179, %s193
      %p195 = scmp.eq.s32.totalorder %s38, 0
      %p196 = por %p194, %p195
      %s198 = sadd.s32 %s197, 1
      %p201 = scmp.eq.s32.totalorder %s32, 1
      %p202 = scmp.ne.s32.totalorder %s197, %s199
      %p203 = scmp.eq.s32.totalorder %s32, 0
      %p204 = por %p202, %p203
      %p205 = scmp.ne.s32.totalorder %s197, %s199
      %p206 = scmp.eq.s32.totalorder %s37, 1
      %p207 = por %p205, %p206
      %p208 = scmp.ne.s32.totalorder %s199, %s200
      %p209 = scmp.eq.s32.totalorder %s37, 0
      %p210 = por %p208, %p209
      %p211 = scmp.ne.s32.totalorder %s199, %s200
      %p212 = scmp.eq.s32.totalorder %s38, 1
      %p213 = por %p211, %p212
      %p215 = scmp.ne.s32.totalorder %s200, %s214
      %p216 = scmp.eq.s32.totalorder %s38, 0
      %p217 = por %p215, %p216
      %s219 = sadd.s32 %s218, 1
      %p222 = scmp.eq.s32.totalorder %s32, 1
      %p223 = scmp.ne.s32.totalorder %s218, %s220
      %p224 = scmp.eq.s32.totalorder %s32, 0
      %p225 = por %p223, %p224
      %p226 = scmp.ne.s32.totalorder %s218, %s220
      %p227 = scmp.eq.s32.totalorder %s37, 1
      %p228 = por %p226, %p227
      %p229 = scmp.ne.s32.totalorder %s220, %s221
      %p230 = scmp.eq.s32.totalorder %s37, 0
      %p231 = por %p229, %p230
      %p232 = scmp.ne.s32.totalorder %s220, %s221
      %p233 = scmp.eq.s32.totalorder %s38, 1
      %p234 = por %p232, %p233
      %p236 = scmp.ne.s32.totalorder %s221, %s235
      %p237 = scmp.eq.s32.totalorder %s38, 0
      %p238 = por %p236, %p237
      %s240 = sadd.s32 %s239, 1
      %p243 = scmp.eq.s32.totalorder %s32, 1
      %p244 = scmp.ne.s32.totalorder %s239, %s241
      %p245 = scmp.eq.s32.totalorder %s32, 0
      %p246 = por %p244, %p245
      %p247 = scmp.ne.s32.totalorder %s239, %s241
      %p248 = scmp.eq.s32.totalorder %s37, 1
      %p249 = por %p247, %p248
      %p250 = scmp.ne.s32.totalorder %s241, %s242
      %p251 = scmp.eq.s32.totalorder %s37, 0
      %p252 = por %p250, %p251
      %p253 = scmp.ne.s32.totalorder %s241, %s242
      %p254 = scmp.eq.s32.totalorder %s38, 1
      %p255 = por %p253, %p254
      %p257 = scmp.ne.s32.totalorder %s242, %s256
      %p258 = scmp.eq.s32.totalorder %s38, 0
      %p259 = por %p257, %p258
      %s261 = sadd.s32 %s260, 1
      %p264 = scmp.eq.s32.totalorder %s32, 1
      %p265 = scmp.ne.s32.totalorder %s260, %s262
      %p266 = scmp.eq.s32.totalorder %s32, 0
      %p267 = por %p265, %p266
      %p268 = scmp.ne.s32.totalorder %s260, %s262
      %p269 = scmp.eq.s32.totalorder %s37, 1
      %p270 = por %p268, %p269
      %p271 = scmp.ne.s32.totalorder %s262, %s263
      %p272 = scmp.eq.s32.totalorder %s37, 0
      %p273 = por %p271, %p272
      %p274 = scmp.ne.s32.totalorder %s262, %s263
      %p275 = scmp.eq.s32.totalorder %s38, 1
      %p276 = por %p274, %p275
      %p278 = scmp.ne.s32.totalorder %s263, %s277
      %p279 = scmp.eq.s32.totalorder %s38, 0
      %p280 = por %p278, %p279
      %s282 = sadd.s32 %s281, 1
      %p285 = scmp.eq.s32.totalorder %s32, 1
      %p286 = scmp.ne.s32.totalorder %s281, %s283
      %p287 = scmp.eq.s32.totalorder %s32, 0
      %p288 = por %p286, %p287
      %p289 = scmp.ne.s32.totalorder %s281, %s283
      %p290 = scmp.eq.s32.totalorder %s37, 1
      %p291 = por %p289, %p290
      %p292 = scmp.ne.s32.totalorder %s283, %s284
      %p293 = scmp.eq.s32.totalorder %s37, 0
      %p294 = por %p292, %p293
      %p295 = scmp.ne.s32.totalorder %s283, %s284
      %p296 = scmp.eq.s32.totalorder %s38, 1
      %p297 = por %p295, %p296
      %p299 = scmp.ne.s32.totalorder %s284, %s298
      %p300 = scmp.eq.s32.totalorder %s38, 0
      %p301 = por %p299, %p300
      %s303 = sadd.s32 %s302, 1
      %p306 = scmp.eq.s32.totalorder %s32, 1
      %p307 = scmp.ne.s32.totalorder %s302, %s304
      %p308 = scmp.eq.s32.totalorder %s32, 0
      %p309 = por %p307, %p308
      %p310 = scmp.ne.s32.totalorder %s302, %s304
      %p311 = scmp.eq.s32.totalorder %s37, 1
      %p312 = por %p310, %p311
      %p313 = scmp.ne.s32.totalorder %s304, %s305
      %p314 = scmp.eq.s32.totalorder %s37, 0
      %p315 = por %p313, %p314
      %p316 = scmp.ne.s32.totalorder %s304, %s305
      %p317 = scmp.eq.s32.totalorder %s38, 1
      %p318 = por %p316, %p317
      %p320 = scmp.ne.s32.totalorder %s305, %s319
      %p321 = scmp.eq.s32.totalorder %s38, 0
      %p322 = por %p320, %p321
      %s324 = sadd.s32 %s323, 1
      %p327 = scmp.eq.s32.totalorder %s32, 1
      %p328 = scmp.ne.s32.totalorder %s323, %s325
      %p329 = scmp.eq.s32.totalorder %s32, 0
      %p330 = por %p328, %p329
      %p331 = scmp.ne.s32.totalorder %s323, %s325
      %p332 = scmp.eq.s32.totalorder %s37, 1
      %p333 = por %p331, %p332
      %p334 = scmp.ne.s32.totalorder %s325, %s326
      %p335 = scmp.eq.s32.totalorder %s37, 0
      %p336 = por %p334, %p335
      %p337 = scmp.ne.s32.totalorder %s325, %s326
      %p338 = scmp.eq.s32.totalorder %s38, 1
      %p339 = por %p337, %p338
      %p341 = scmp.ne.s32.totalorder %s326, %s340
      %p342 = scmp.eq.s32.totalorder %s38, 0
      %p343 = por %p341, %p342
      %s345 = sadd.s32 %s344, 1
      %p348 = scmp.eq.s32.totalorder %s32, 1
      %p349 = scmp.ne.s32.totalorder %s344, %s346
      %p350 = scmp.eq.s32.totalorder %s32, 0
      %p351 = por %p349, %p350
      %p352 = scmp.ne.s32.totalorder %s344, %s346
      %p353 = scmp.eq.s32.totalorder %s37, 1
      %p354 = por %p352, %p353
      %p355 = scmp.ne.s32.totalorder %s346, %s347
      %p356 = scmp.eq.s32.totalorder %s37, 0
      %p357 = por %p355, %p356
      %p358 = scmp.ne.s32.totalorder %s346, %s347
      %p359 = scmp.eq.s32.totalorder %s38, 1
      %p360 = por %p358, %p359
      %p362 = scmp.ne.s32.totalorder %s347, %s361
      %p363 = scmp.eq.s32.totalorder %s38, 0
      %p364 = por %p362, %p363
      %s366 = sadd.s32 %s365, 1
      %p369 = scmp.eq.s32.totalorder %s32, 1
      %p370 = scmp.ne.s32.totalorder %s365, %s367
      %p371 = scmp.eq.s32.totalorder %s32, 0
      %p372 = por %p370, %p371
      %p373 = scmp.ne.s32.totalorder %s365, %s367
      %p374 = scmp.eq.s32.totalorder %s37, 1
      %p375 = por %p373, %p374
      %p376 = scmp.ne.s32.totalorder %s367, %s368
      %p377 = scmp.eq.s32.totalorder %s37, 0
      %p378 = por %p376, %p377
      %p379 = scmp.ne.s32.totalorder %s367, %s368
      %p380 = scmp.eq.s32.totalorder %s38, 1
      %p381 = por %p379, %p380
      %p383 = scmp.ne.s32.totalorder %s368, %s382
      %p384 = scmp.eq.s32.totalorder %s38, 0
      %p385 = por %p383, %p384
      %s387 = sadd.s32 %s386, 1
      %p390 = scmp.eq.s32.totalorder %s32, 1
      %p391 = scmp.ne.s32.totalorder %s386, %s388
      %p392 = scmp.eq.s32.totalorder %s32, 0
      %p393 = por %p391, %p392
      %p394 = scmp.ne.s32.totalorder %s386, %s388
      %p395 = scmp.eq.s32.totalorder %s37, 1
      %p396 = por %p394, %p395
      %p397 = scmp.ne.s32.totalorder %s388, %s389
      %p398 = scmp.eq.s32.totalorder %s37, 0
      %p399 = por %p397, %p398
      %p400 = scmp.ne.s32.totalorder %s388, %s389
      %p401 = scmp.eq.s32.totalorder %s38, 1
      %p402 = por %p400, %p401
      %p404 = scmp.ne.s32.totalorder %s389, %s403
      %p405 = scmp.eq.s32.totalorder %s38, 0
      %p406 = por %p404, %p405
      %s408 = sadd.s32 %s407, 1
      %p411 = scmp.eq.s32.totalorder %s32, 1
      %p412 = scmp.ne.s32.totalorder %s407, %s409
      %p413 = scmp.eq.s32.totalorder %s32, 0
      %p414 = por %p412, %p413
      %p415 = scmp.ne.s32.totalorder %s407, %s409
      %p416 = scmp.eq.s32.totalorder %s37, 1
      %p417 = por %p415, %p416
      %p418 = scmp.ne.s32.totalorder %s409, %s410
      %p419 = scmp.eq.s32.totalorder %s37, 0
      %p420 = por %p418, %p419
      %p421 = scmp.ne.s32.totalorder %s409, %s410
      %p422 = scmp.eq.s32.totalorder %s38, 1
      %p423 = por %p421, %p422
      %p425 = scmp.ne.s32.totalorder %s410, %s424
      %p426 = scmp.eq.s32.totalorder %s38, 0
      %p427 = por %p425, %p426
      %s429 = sadd.s32 %s428, 1
      %p432 = scmp.eq.s32.totalorder %s32, 1
      %p433 = scmp.ne.s32.totalorder %s428, %s430
      %p434 = scmp.eq.s32.totalorder %s32, 0
      %p435 = por %p433, %p434
      %p436 = scmp.ne.s32.totalorder %s428, %s430
      %p437 = scmp.eq.s32.totalorder %s37, 1
      %p438 = por %p436, %p437
      %p439 = scmp.ne.s32.totalorder %s430, %s431
      %p440 = scmp.eq.s32.totalorder %s37, 0
      %p441 = por %p439, %p440
      %p442 = scmp.ne.s32.totalorder %s430, %s431
      %p443 = scmp.eq.s32.totalorder %s38, 1
      %p444 = por %p442, %p443
      %p446 = scmp.ne.s32.totalorder %s431, %s445
      %p447 = scmp.eq.s32.totalorder %s38, 0
      %p448 = por %p446, %p447
      %s450 = sadd.s32 %s449, 1
      %p453 = scmp.eq.s32.totalorder %s32, 1
      %p454 = scmp.ne.s32.totalorder %s449, %s451
      %p455 = scmp.eq.s32.totalorder %s32, 0
      %p456 = por %p454, %p455
      %p457 = scmp.ne.s32.totalorder %s449, %s451
      %p458 = scmp.eq.s32.totalorder %s37, 1
      %p459 = por %p457, %p458
      %p460 = scmp.ne.s32.totalorder %s451, %s452
      %p461 = scmp.eq.s32.totalorder %s37, 0
      %p462 = por %p460, %p461
      %p463 = scmp.ne.s32.totalorder %s451, %s452
      %p464 = scmp.eq.s32.totalorder %s38, 1
      %p465 = por %p463, %p464
      %p467 = scmp.ne.s32.totalorder %s452, %s466
      %p468 = scmp.eq.s32.totalorder %s38, 0
      %p469 = por %p467, %p468
      %s471 = sadd.s32 %s470, 1
      %p474 = scmp.eq.s32.totalorder %s32, 1
      %p475 = scmp.ne.s32.totalorder %s470, %s472
      %p476 = scmp.eq.s32.totalorder %s32, 0
      %p477 = por %p475, %p476
      %p478 = scmp.ne.s32.totalorder %s470, %s472
      %p479 = scmp.eq.s32.totalorder %s37, 1
      %p480 = por %p478, %p479
      %p481 = scmp.ne.s32.totalorder %s472, %s473
      %p482 = scmp.eq.s32.totalorder %s37, 0
      %p483 = por %p481, %p482
      %p484 = scmp.ne.s32.totalorder %s472, %s473
      %p485 = scmp.eq.s32.totalorder %s38, 1
      %p486 = por %p484, %p485
      %p488 = scmp.ne.s32.totalorder %s473, %s487
      %p489 = scmp.eq.s32.totalorder %s38, 0
      %p490 = por %p488, %p489
      %s492 = sadd.s32 %s491, 1
      %p495 = scmp.eq.s32.totalorder %s32, 1
      %p496 = scmp.ne.s32.totalorder %s491, %s493
      %p497 = scmp.eq.s32.totalorder %s32, 0
      %p498 = por %p496, %p497
      %p499 = scmp.ne.s32.totalorder %s491, %s493
      %p500 = scmp.eq.s32.totalorder %s37, 1
      %p501 = por %p499, %p500
      %p502 = scmp.ne.s32.totalorder %s493, %s494
      %p503 = scmp.eq.s32.totalorder %s37, 0
      %p504 = por %p502, %p503
      %p505 = scmp.ne.s32.totalorder %s493, %s494
      %p506 = scmp.eq.s32.totalorder %s38, 1
      %p507 = por %p505, %p506
      %p509 = scmp.ne.s32.totalorder %s494, %s508
      %p510 = scmp.eq.s32.totalorder %s38, 0
      %p511 = por %p509, %p510
      %s513 = sadd.s32 %s512, 1
      %p516 = scmp.eq.s32.totalorder %s32, 1
      %p517 = scmp.ne.s32.totalorder %s512, %s514
      %p518 = scmp.eq.s32.totalorder %s32, 0
      %p519 = por %p517, %p518
      %p520 = scmp.ne.s32.totalorder %s512, %s514
      %p521 = scmp.eq.s32.totalorder %s37, 1
      %p522 = por %p520, %p521
      %p523 = scmp.ne.s32.totalorder %s514, %s515
      %p524 = scmp.eq.s32.totalorder %s37, 0
      %p525 = por %p523, %p524
      %p526 = scmp.ne.s32.totalorder %s514, %s515
      %p527 = scmp.eq.s32.totalorder %s38, 1
      %p528 = por %p526, %p527
      %p530 = scmp.ne.s32.totalorder %s515, %s529
      %p531 = scmp.eq.s32.totalorder %s38, 0
      %p532 = por %p530, %p531
      %s534 = sadd.s32 %s533, 1
      %p537 = scmp.eq.s32.totalorder %s32, 1
      %p538 = scmp.ne.s32.totalorder %s533, %s535
      %p539 = scmp.eq.s32.totalorder %s32, 0
      %p540 = por %p538, %p539
      %p541 = scmp.ne.s32.totalorder %s533, %s535
      %p542 = scmp.eq.s32.totalorder %s37, 1
      %p543 = por %p541, %p542
      %p544 = scmp.ne.s32.totalorder %s535, %s536
      %p545 = scmp.eq.s32.totalorder %s37, 0
      %p546 = por %p544, %p545
      %p547 = scmp.ne.s32.totalorder %s535, %s536
      %p548 = scmp.eq.s32.totalorder %s38, 1
      %p549 = por %p547, %p548
      %p551 = scmp.ne.s32.totalorder %s536, %s550
      %p552 = scmp.eq.s32.totalorder %s38, 0
      %p553 = por %p551, %p552
      %s555 = sadd.s32 %s554, 1
      %p558 = scmp.eq.s32.totalorder %s32, 1
      %p559 = scmp.ne.s32.totalorder %s554, %s556
      %p560 = scmp.eq.s32.totalorder %s32, 0
      %p561 = por %p559, %p560
      %p562 = scmp.ne.s32.totalorder %s554, %s556
      %p563 = scmp.eq.s32.totalorder %s37, 1
      %p564 = por %p562, %p563
      %p565 = scmp.ne.s32.totalorder %s556, %s557
      %p566 = scmp.eq.s32.totalorder %s37, 0
      %p567 = por %p565, %p566
      %p568 = scmp.ne.s32.totalorder %s556, %s557
      %p569 = scmp.eq.s32.totalorder %s38, 1
      %p570 = por %p568, %p569
      %p572 = scmp.ne.s32.totalorder %s557, %s571
      %p573 = scmp.eq.s32.totalorder %s38, 0
      %p574 = por %p572, %p573
      %s575 = ssub.s32 %s32, %s39
      %p576 = scmp.eq.s32.totalorder %s575, 0
      %s578 = sadd.s32 %s577, 1
      %s579 = scalar_select %p576, %s577, %s578
      %p582 = pneg %p576
      %p583 = scmp.eq.s32.totalorder %s32, 1
      %p584 = por %p582, %p583
      %p585 = scmp.ne.s32.totalorder %s577, %s580
      %p586 = scmp.eq.s32.totalorder %s32, 0
      %p587 = por %p585, %p586
      %p588 = scmp.ne.s32.totalorder %s577, %s580
      %p589 = scmp.eq.s32.totalorder %s37, 1
      %p590 = por %p588, %p589
      %p591 = scmp.ne.s32.totalorder %s580, %s581
      %p592 = scmp.eq.s32.totalorder %s37, 0
      %p593 = por %p591, %p592
      %p594 = scmp.ne.s32.totalorder %s580, %s581
      %p595 = scmp.eq.s32.totalorder %s38, 1
      %p596 = por %p594, %p595
      %p598 = scmp.ne.s32.totalorder %s581, %s597
      %p599 = scmp.eq.s32.totalorder %s38, 0
      %p600 = por %p598, %p599
      %p601 = scmp.le.s32.totalorder 1, %s32
      %p602 = scmp.lt.s32.totalorder %s32, 3
      %p603 = pnand %p601, %p602
      %p604 = pneg %p603
      // Predicated region
      $region9: #{resnet_forward.1} parent=5 // pred_check
        _
      $region10: #{resnet_forward.1} parent=5 // pred_check_branch
        %606 = sbr.rel (%p603) target = $region12
      $region11: #{resnet_forward.1} parent=5 // pred_region
        %s607 = ssub.s32 %s32, 1
        // Predicated region
        $region13: #{resnet_forward.1} parent=11 // pred_check
          %p608 = pneg %p53
        $region14: #{resnet_forward.1} parent=11 // pred_check_branch
          %610 = sbr.rel (%p608) target = $region16
        $region15: #{resnet_forward.1} parent=11 // pred_region
          %s612 = ssub.s32 16, 16
          %613 = vsyncadd [#allocation3], %s612
          %s615 = sshll.u32 %s0, 4
          %s616 = int_to_ptr.vmem [resolvable:$true] %s615
          %618 = dma.vmem_to_smem %s616, 16, [#allocation2], [#allocation3]
        $region16: #{resnet_forward.1} parent=11 // pred_fallthru
          _
        // Predicated region
        $region17: #{resnet_forward.1} parent=11 // pred_check
          %p619 = pneg %p126
        $region18: #{resnet_forward.1} parent=11 // pred_check_branch
          %621 = sbr.rel (%p619) target = $region20
        $region19: #{resnet_forward.1} parent=11 // pred_region
          _
        $region20: #{resnet_forward.1} parent=11 // pred_fallthru
          _
        // Predicated region
        $region21: #{resnet_forward.1} parent=11 // pred_check
          %p622 = pneg %p147
        $region22: #{resnet_forward.1} parent=11 // pred_check_branch
          %624 = sbr.rel (%p622) target = $region24
        $region23: #{resnet_forward.1} parent=11 // pred_region
          _
        $region24: #{resnet_forward.1} parent=11 // pred_fallthru
          _
        // Predicated region
        $region25: #{resnet_forward.1} parent=11 // pred_check
          %p625 = pneg %p168
        $region26: #{resnet_forward.1} parent=11 // pred_check_branch
          %627 = sbr.rel (%p625) target = $region28
        $region27: #{resnet_forward.1} parent=11 // pred_region
          _
        $region28: #{resnet_forward.1} parent=11 // pred_fallthru
          _
        // Predicated region
        $region29: #{resnet_forward.1} parent=11 // pred_check
          %p628 = pneg %p189
        $region30: #{resnet_forward.1} parent=11 // pred_check_branch
          %630 = sbr.rel (%p628) target = $region32
        $region31: #{resnet_forward.1} parent=11 // pred_region
          _
        $region32: #{resnet_forward.1} parent=11 // pred_fallthru
          _
        // Predicated region
        $region33: #{resnet_forward.1} parent=11 // pred_check
          %p631 = pneg %p210
        $region34: #{resnet_forward.1} parent=11 // pred_check_branch
          %633 = sbr.rel (%p631) target = $region36
        $region35: #{resnet_forward.1} parent=11 // pred_region
          _
        $region36: #{resnet_forward.1} parent=11 // pred_fallthru
          _
        // Predicated region
        $region37: #{resnet_forward.1} parent=11 // pred_check
          %p634 = pneg %p231
        $region38: #{resnet_forward.1} parent=11 // pred_check_branch
          %636 = sbr.rel (%p634) target = $region40
        $region39: #{resnet_forward.1} parent=11 // pred_region
          _
        $region40: #{resnet_forward.1} parent=11 // pred_fallthru
          _
        // Predicated region
        $region41: #{resnet_forward.1} parent=11 // pred_check
          %p637 = pneg %p252
        $region42: #{resnet_forward.1} parent=11 // pred_check_branch
          %639 = sbr.rel (%p637) target = $region44
        $region43: #{resnet_forward.1} parent=11 // pred_region
          _
        $region44: #{resnet_forward.1} parent=11 // pred_fallthru
          _
        // Predicated region
        $region45: #{resnet_forward.1} parent=11 // pred_check
          %p640 = pneg %p273
        $region46: #{resnet_forward.1} parent=11 // pred_check_branch
          %642 = sbr.rel (%p640) target = $region48
        $region47: #{resnet_forward.1} parent=11 // pred_region
          _
        $region48: #{resnet_forward.1} parent=11 // pred_fallthru
          _
        // Predicated region
        $region49: #{resnet_forward.1} parent=11 // pred_check
          %p643 = pneg %p294
        $region50: #{resnet_forward.1} parent=11 // pred_check_branch
          %645 = sbr.rel (%p643) target = $region52
        $region51: #{resnet_forward.1} parent=11 // pred_region
          _
        $region52: #{resnet_forward.1} parent=11 // pred_fallthru
          _
        // Predicated region
        $region53: #{resnet_forward.1} parent=11 // pred_check
          %p646 = pneg %p315
        $region54: #{resnet_forward.1} parent=11 // pred_check_branch
          %648 = sbr.rel (%p646) target = $region56
        $region55: #{resnet_forward.1} parent=11 // pred_region
          _
        $region56: #{resnet_forward.1} parent=11 // pred_fallthru
          _
        // Predicated region
        $region57: #{resnet_forward.1} parent=11 // pred_check
          %p649 = pneg %p336
        $region58: #{resnet_forward.1} parent=11 // pred_check_branch
          %651 = sbr.rel (%p649) target = $region60
        $region59: #{resnet_forward.1} parent=11 // pred_region
          _
        $region60: #{resnet_forward.1} parent=11 // pred_fallthru
          _
        // Predicated region
        $region61: #{resnet_forward.1} parent=11 // pred_check
          %p652 = pneg %p357
        $region62: #{resnet_forward.1} parent=11 // pred_check_branch
          %654 = sbr.rel (%p652) target = $region64
        $region63: #{resnet_forward.1} parent=11 // pred_region
          _
        $region64: #{resnet_forward.1} parent=11 // pred_fallthru
          _
        // Predicated region
        $region65: #{resnet_forward.1} parent=11 // pred_check
          %p655 = pneg %p378
        $region66: #{resnet_forward.1} parent=11 // pred_check_branch
          %657 = sbr.rel (%p655) target = $region68
        $region67: #{resnet_forward.1} parent=11 // pred_region
          _
        $region68: #{resnet_forward.1} parent=11 // pred_fallthru
          _
        // Predicated region
        $region69: #{resnet_forward.1} parent=11 // pred_check
          %p658 = pneg %p399
        $region70: #{resnet_forward.1} parent=11 // pred_check_branch
          %660 = sbr.rel (%p658) target = $region72
        $region71: #{resnet_forward.1} parent=11 // pred_region
          _
        $region72: #{resnet_forward.1} parent=11 // pred_fallthru
          _
        // Predicated region
        $region73: #{resnet_forward.1} parent=11 // pred_check
          %p661 = pneg %p420
        $region74: #{resnet_forward.1} parent=11 // pred_check_branch
          %663 = sbr.rel (%p661) target = $region76
        $region75: #{resnet_forward.1} parent=11 // pred_region
          _
        $region76: #{resnet_forward.1} parent=11 // pred_fallthru
          _
        // Predicated region
        $region77: #{resnet_forward.1} parent=11 // pred_check
          %p664 = pneg %p441
        $region78: #{resnet_forward.1} parent=11 // pred_check_branch
          %666 = sbr.rel (%p664) target = $region80
        $region79: #{resnet_forward.1} parent=11 // pred_region
          _
        $region80: #{resnet_forward.1} parent=11 // pred_fallthru
          _
        // Predicated region
        $region81: #{resnet_forward.1} parent=11 // pred_check
          %p667 = pneg %p462
        $region82: #{resnet_forward.1} parent=11 // pred_check_branch
          %669 = sbr.rel (%p667) target = $region84
        $region83: #{resnet_forward.1} parent=11 // pred_region
          _
        $region84: #{resnet_forward.1} parent=11 // pred_fallthru
          _
        // Predicated region
        $region85: #{resnet_forward.1} parent=11 // pred_check
          %p670 = pneg %p483
        $region86: #{resnet_forward.1} parent=11 // pred_check_branch
          %672 = sbr.rel (%p670) target = $region88
        $region87: #{resnet_forward.1} parent=11 // pred_region
          _
        $region88: #{resnet_forward.1} parent=11 // pred_fallthru
          _
        // Predicated region
        $region89: #{resnet_forward.1} parent=11 // pred_check
          %p673 = pneg %p504
        $region90: #{resnet_forward.1} parent=11 // pred_check_branch
          %675 = sbr.rel (%p673) target = $region92
        $region91: #{resnet_forward.1} parent=11 // pred_region
          _
        $region92: #{resnet_forward.1} parent=11 // pred_fallthru
          _
        // Predicated region
        $region93: #{resnet_forward.1} parent=11 // pred_check
          %p676 = pneg %p525
        $region94: #{resnet_forward.1} parent=11 // pred_check_branch
          %678 = sbr.rel (%p676) target = $region96
        $region95: #{resnet_forward.1} parent=11 // pred_region
          _
        $region96: #{resnet_forward.1} parent=11 // pred_fallthru
          _
        // Predicated region
        $region97: #{resnet_forward.1} parent=11 // pred_check
          %p679 = pneg %p546
        $region98: #{resnet_forward.1} parent=11 // pred_check_branch
          %681 = sbr.rel (%p679) target = $region100
        $region99: #{resnet_forward.1} parent=11 // pred_region
          _
        $region100: #{resnet_forward.1} parent=11 // pred_fallthru
          _
        // Predicated region
        $region101: #{resnet_forward.1} parent=11 // pred_check
          %p682 = pneg %p567
        $region102: #{resnet_forward.1} parent=11 // pred_check_branch
          %684 = sbr.rel (%p682) target = $region104
        $region103: #{resnet_forward.1} parent=11 // pred_region
          _
        $region104: #{resnet_forward.1} parent=11 // pred_fallthru
          _
      $region12: #{resnet_forward.1} parent=5 // pred_fallthru
        _
      %p685 = scmp.lt.s32.totalorder %s32, 2
      // Predicated region
      $region105: #{resnet_forward.1} parent=5 // pred_check
        %p686 = pneg %p685
      $region106: #{resnet_forward.1} parent=5 // pred_check_branch
        %688 = sbr.rel (%p686) target = $region108
      $region107: #{resnet_forward.1} parent=5 // pred_region
        // Predicated region
        $region109: #{resnet_forward.1} parent=107 // pred_check
          %p689 = pneg %p73
        $region110: #{resnet_forward.1} parent=107 // pred_check_branch
          %691 = sbr.rel (%p689) target = $region112
        $region111: #{resnet_forward.1} parent=107 // pred_region
          %p692 = scmp.lt.s32.totalorder %s32, 1
          %s693 = scalar_select %p692, %s32, 1
          %s694 = smul.addr %s693, 8
          %s695 = scalar_lea.vmem %s1, %s694
        $region112: #{resnet_forward.1} parent=107 // pred_fallthru
          _
        // Predicated region
        $region113: #{resnet_forward.1} parent=107 // pred_check
          %p696 = pneg %p99
        $region114: #{resnet_forward.1} parent=107 // pred_check_branch
          %698 = sbr.rel (%p696) target = $region116
        $region115: #{resnet_forward.1} parent=107 // pred_region
          %p699 = scmp.lt.s32.totalorder %s32, 1
          %s700 = scalar_select %p699, %s32, 1
          %s701 = scalar_lea.vmem %s2, %s700
        $region116: #{resnet_forward.1} parent=107 // pred_fallthru
          _
      $region108: #{resnet_forward.1} parent=5 // pred_fallthru
        _
      %p702 = scmp.le.s32.totalorder 1, %s32
      %p703 = scmp.lt.s32.totalorder %s32, 3
      %p704 = pnand %p702, %p703
      %p705 = pneg %p704
      // Predicated region
      $region117: #{resnet_forward.1} parent=5 // pred_check
        _
      $region118: #{resnet_forward.1} parent=5 // pred_check_branch
        %707 = sbr.rel (%p704) target = $region120
      $region119: #{resnet_forward.1} parent=5 // pred_region
        %s708 = ssub.s32 %s32, 1
        // Predicated region
        $region121: #{resnet_forward.1} parent=119 // pred_check
          %p709 = pneg %p53
        $region122: #{resnet_forward.1} parent=119 // pred_check_branch
          %711 = sbr.rel (%p709) target = $region124
        $region123: #{resnet_forward.1} parent=119 // pred_region
          %712 = dma.done [#allocation3], 16
        $region124: #{resnet_forward.1} parent=119 // pred_fallthru
          _
        %713 = sfence
        %p714 = pneg %p53
        %p715 = pneg %p50
        %p716 = scmp.lt.s32.totalorder %s37, 1
        %s717 = scalar_select %p716, %s37, 1
        %s718 = smul.addr %s717, 8
        %s719 = scalar_lea.vmem %s1, %s718
        %p720 = pneg %p79
        %p721 = pneg %p76
        %p722 = scmp.lt.s32.totalorder %s37, 1
        %s723 = scalar_select %p722, %s37, 1
        %s724 = scalar_lea.vmem %s2, %s723
        %p725 = pneg %p105
        %p726 = pneg %p102
        %p727 = pneg %p126
        %p728 = pneg %p123
        %p729 = pneg %p147
        %p730 = pneg %p144
        %p731 = pneg %p168
        %p732 = pneg %p165
        %p733 = pneg %p189
        %p734 = pneg %p186
        %p735 = pneg %p210
        %p736 = pneg %p207
        %p737 = pneg %p231
        %p738 = pneg %p228
        %p739 = pneg %p252
        %p740 = pneg %p249
        %p741 = pneg %p273
        %p742 = pneg %p270
        %p743 = pneg %p294
        %p744 = pneg %p291
        %p745 = pneg %p315
        %p746 = pneg %p312
        %p747 = pneg %p336
        %p748 = pneg %p333
        %p749 = pneg %p357
        %p750 = pneg %p354
        %p751 = pneg %p378
        %p752 = pneg %p375
        %p753 = pneg %p399
        %p754 = pneg %p396
        %p755 = pneg %p420
        %p756 = pneg %p417
        %p757 = pneg %p441
        %p758 = pneg %p438
        %p759 = pneg %p462
        %p760 = pneg %p459
        %p761 = pneg %p483
        %p762 = pneg %p480
        %p763 = pneg %p504
        %p764 = pneg %p501
        %p765 = pneg %p525
        %p766 = pneg %p522
        %p767 = pneg %p546
        %p768 = pneg %p543
        %p769 = pneg %p567
        %p770 = pneg %p564
        %p771 = pneg %p593
        %p772 = pneg %p590
        %p773 = scmp.lt.s32.totalorder %s37, 1
        %s774 = scalar_select %p773, %s37, 1
        %s775 = smul.addr %s774, 8
        %s776 = scalar_lea.vmem %s25, %s775
        %p777 = scmp.lt.s32.totalorder %s37, 1
        %s778 = scalar_select %p777, %s37, 1
        %s779 = smul.addr %s778, 8
        %s780 = scalar_lea.vmem %s1, %s779
        %p781 = scmp.lt.s32.totalorder %s37, 1
        %s782 = scalar_select %p781, %s37, 1
        %s783 = scalar_lea.vmem %s2, %s782
        %p784 = scmp.lt.s32.totalorder %s37, 1
        %s785 = scalar_select %p784, %s37, 1
        %s786 = smul.addr %s785, 8
        %s787 = scalar_lea.vmem %s25, %s786
        %v788 = vld [vmem:[%s780] sm:$0xff]
        %v789 = vld [vmem:[%s783] sm:$0x1]
        %v791 = vlaneseq
        %v792 = vshrl.u32 %v791, 7
        %v793 = vsub.s32 0, %v792
        %v794 = vrot.slane %v789, %v793
        %v796 = vlaneseq
        %v797 = vand.u32 %v796, 127
        %v798 = vlaneseq
        %v799 = vshrl.u32 %v798, 7
        %v800 = vadd.s32 %v799, 8
        %v801 = vadd.s32 %v799, 16
        %v802 = vadd.s32 %v799, 24
        %v803 = vadd.s32 %v799, 32
        %v804 = vadd.s32 %v799, 40
        %v805 = vadd.s32 %v799, 48
        %v806 = vadd.s32 %v799, 56
        %v807 = vadd.s32 %v799, 64
        %808 = vrot.lane.b32.xlu0 %v788, 3
        %v809 = vpop.permute.xlu0 %808
        %vm810 = vcmp.ge.s32.totalorder %v797, 3
        %v811 = vsel %vm810, %v809, 0.0
        %812 = vrot.lane.b32.xlu0 %v788, 2
        %v813 = vpop.permute.xlu0 %812
        %vm814 = vcmp.ge.s32.totalorder %v797, 2
        %v815 = vsel %vm814, %v813, 0.0
        %816 = vrot.lane.b32.xlu0 %v788, 1
        %v817 = vpop.permute.xlu0 %816
        %vm818 = vcmp.ge.s32.totalorder %v797, 1
        %v819 = vsel %vm818, %v817, 0.0
        %820 = vrot.lane.b32.xlu0 %v788, 127
        %v821 = vpop.permute.xlu0 %820
        %vm822 = vcmp.lt.s32.totalorder %v797, 127
        %v823 = vsel %vm822, %v821, 0.0
        %824 = vrot.lane.b32.xlu0 %v788, 126
        %v825 = vpop.permute.xlu0 %824
        %vm826 = vcmp.lt.s32.totalorder %v797, 126
        %v827 = vsel %vm826, %v825, 0.0
        %828 = vrot.lane.b32.xlu0 %v788, 125
        %v829 = vpop.permute.xlu0 %828
        %vm830 = vcmp.lt.s32.totalorder %v797, 125
        %v831 = vsel %vm830, %v829, 0.0
        %v832 = vld [vmem:[%s3] sm:$0xff]
        %v833 = vld [vmem:[%s3 + $0x8] sm:$0xff]
        %v834 = vld [vmem:[%s3 + $0x10] sm:$0xff]
        %v835 = vld [vmem:[%s3 + $0x18] sm:$0xff]
        %v836 = vld [vmem:[%s3 + $0x20] sm:$0xff]
        %v837 = vld [vmem:[%s3 + $0x28] sm:$0xff]
        %v838 = vld [vmem:[%s3 + $0x30] sm:$0xff]
        %v839 = vld [vmem:[%s3 + $0x38] sm:$0xff]
        %v840 = vld [vmem:[%s3 + $0x40] sm:$0xff]
        %v841 = vld [vmem:[%s4] sm:$0xff]
        %v842 = vld [vmem:[%s4 + $0x8] sm:$0xff]
        %v843 = vld [vmem:[%s4 + $0x10] sm:$0xff]
        %v844 = vld [vmem:[%s4 + $0x18] sm:$0xff]
        %v845 = vld [vmem:[%s4 + $0x20] sm:$0xff]
        %v846 = vld [vmem:[%s4 + $0x28] sm:$0xff]
        %v847 = vld [vmem:[%s4 + $0x30] sm:$0xff]
        %v848 = vld [vmem:[%s4 + $0x38] sm:$0xff]
        %v849 = vld [vmem:[%s4 + $0x40] sm:$0xff]
        %851 = vset.pattern.permute.xlu0 0
        %852 = vperm.xlu0 %851, %v841
        %v853 = vpop.permute.xlu0 %852
        %856 = vset.pattern.permute.xlu0 0
        %857 = vperm.xlu0 %856, %v842
        %v858 = vpop.permute.xlu0 %857
        %861 = vset.pattern.permute.xlu0 0
        %862 = vperm.xlu0 %861, %v843
        %v863 = vpop.permute.xlu0 %862
        %866 = vset.pattern.permute.xlu0 0
        %867 = vperm.xlu0 %866, %v844
        %v868 = vpop.permute.xlu0 %867
        %871 = vset.pattern.permute.xlu0 0
        %872 = vperm.xlu0 %871, %v845
        %v873 = vpop.permute.xlu0 %872
        %876 = vset.pattern.permute.xlu0 0
        %877 = vperm.xlu0 %876, %v846
        %v878 = vpop.permute.xlu0 %877
        %881 = vset.pattern.permute.xlu0 0
        %882 = vperm.xlu0 %881, %v847
        %v883 = vpop.permute.xlu0 %882
        %886 = vset.pattern.permute.xlu0 0
        %887 = vperm.xlu0 %886, %v848
        %v888 = vpop.permute.xlu0 %887
        %891 = vset.pattern.permute.xlu0 0
        %892 = vperm.xlu0 %891, %v849
        %v893 = vpop.permute.xlu0 %892
        %vm895 = vcmask 457728
        %v897 = vsel %vm895, %v832, 0
        %v900 = vsel %vm895, %v833, 0
        %v903 = vsel %vm895, %v834, 0
        %v906 = vsel %vm895, %v835, 0
        %v909 = vsel %vm895, %v836, 0
        %v912 = vsel %vm895, %v837, 0
        %v915 = vsel %vm895, %v838, 0
        %v918 = vsel %vm895, %v839, 0
        %v921 = vsel %vm895, %v840, 0
        %923 = vmatprep.subr.mxu0 0.0
        %924 = vmatpush1.msra.mxu0 0.0
        %925 = vmatprep.subr.mxu0 0.0
        %926 = vmatpush1.msra.mxu0 0.0
        %927 = vmatprep.subr.mxu0 0.0
        %928 = vmatpush1.msra.mxu0 0.0
        %929 = vmatprep.subr.mxu0 0.0
        %930 = vmatpush1.msra.mxu0 0.0
        %931 = vmatprep.subr.mxu0 0.0
        %932 = vmatpush1.msra.mxu0 0.0
        %933 = vmatprep.subr.mxu0 0.0
        %934 = vmatpush1.msra.mxu0 0.0
        %935 = vmatprep.subr.mxu0 0.0
        %936 = vmatpush1.msra.mxu0 0.0
        %937 = vmatprep.subr.mxu0 0.0
        %938 = vmatpush1.msra.mxu0 0.0
        %939 = vmatprep.subr.mxu0 0.0
        %940 = vmatpush1.msra.mxu0 0.0
        %941 = vmatprep.subr.mxu0 0.0
        %942 = vmatpush1.msra.mxu0 %v831
        %943 = vmatprep.subr.mxu0 0.0
        %944 = vmatpush1.msra.mxu0 %v827
        %945 = vmatprep.subr.mxu0 0.0
        %946 = vmatpush1.msra.mxu0 %v823
        %947 = vmatprep.subr.mxu0 0.0
        %948 = vmatpush1.msra.mxu0 %v788
        %949 = vmatprep.subr.mxu0 0.0
        %950 = vmatpush1.msra.mxu0 %v819
        %951 = vmatprep.subr.mxu0 0.0
        %952 = vmatpush1.msra.mxu0 %v815
        %953 = vmatprep.subr.mxu0 0.0
        %954 = vmatpush1.msra.mxu0 %v811
        %955 = vmatprep.subr.mxu0 0.0
        %956 = vmatpush2.msra.mxu0 0.0
        %957 = vmatprep.subr.mxu0 0.0
        %958 = vmatpush2.msra.mxu0 0.0
        %959 = vmatprep.subr.mxu0 0.0
        %960 = vmatpush2.msra.mxu0 0.0
        %961 = vmatprep.subr.mxu0 0.0
        %962 = vmatpush2.msra.mxu0 0.0
        %963 = vmatprep.subr.mxu0 0.0
        %964 = vmatpush2.msra.mxu0 0.0
        %965 = vmatprep.subr.mxu0 0.0
        %966 = vmatpush2.msra.mxu0 0.0
        %967 = vmatprep.subr.mxu0 0.0
        %968 = vmatpush2.msra.mxu0 0.0
        %969 = vmatprep.subr.mxu0 0.0
        %970 = vmatpush2.msra.mxu0 0.0
        %971 = vmatprep.subr.mxu0 0.0
        %972 = vmatpush2.msra.mxu0 0.0
        %973 = vmatprep.subr.mxu0 0.0
        %974 = vmatpush2.msra.mxu0 0.0
        %975 = vmatprep.subr.mxu0 0.0
        %976 = vmatpush2.msra.mxu0 0.0
        %977 = vmatprep.subr.mxu0 0.0
        %978 = vmatpush2.msra.mxu0 0.0
        %979 = vmatprep.subr.mxu0 0.0
        %980 = vmatpush2.msra.mxu0 0.0
        %981 = vmatprep.subr.mxu0 0.0
        %982 = vmatpush2.msra.mxu0 0.0
        %983 = vmatprep.subr.mxu0 0.0
        %984 = vmatpush2.msra.mxu0 0.0
        %985 = vmatprep.subr.mxu0 0.0
        %986 = vmatpush2.msra.mxu0 0.0
        %987 = vmatprep.mubr.f32.mxu0 0.0
        %988 = vmatmul.mubr.f32.gmra.mxu0 %v897
        %v989 = vpop.f32.mrf.mxu0
        %v990 = vadd.f32 %v853, %v989
        %v991 = vpop.f32.mrf.mxu0
        %992 = vmatprep.mubr.f32.mxu0 0.0
        %993 = vmatmul.mubr.f32.gmra.mxu0 %v900
        %v994 = vpop.f32.mrf.mxu0
        %v995 = vadd.f32 %v858, %v994
        %v996 = vpop.f32.mrf.mxu0
        %997 = vmatprep.mubr.f32.mxu0 0.0
        %998 = vmatmul.mubr.f32.gmra.mxu0 %v903
        %v999 = vpop.f32.mrf.mxu0
        %v1000 = vadd.f32 %v863, %v999
        %v1001 = vpop.f32.mrf.mxu0
        %1002 = vmatprep.mubr.f32.mxu0 0.0
        %1003 = vmatmul.mubr.f32.gmra.mxu0 %v906
        %v1004 = vpop.f32.mrf.mxu0
        %v1005 = vadd.f32 %v868, %v1004
        %v1006 = vpop.f32.mrf.mxu0
        %1007 = vmatprep.mubr.f32.mxu0 0.0
        %1008 = vmatmul.mubr.f32.gmra.mxu0 %v909
        %v1009 = vpop.f32.mrf.mxu0
        %v1010 = vadd.f32 %v873, %v1009
        %v1011 = vpop.f32.mrf.mxu0
        %1012 = vmatprep.mubr.f32.mxu0 0.0
        %1013 = vmatmul.mubr.f32.gmra.mxu0 %v912
        %v1014 = vpop.f32.mrf.mxu0
        %v1015 = vadd.f32 %v878, %v1014
        %v1016 = vpop.f32.mrf.mxu0
        %1017 = vmatprep.mubr.f32.mxu0 0.0
        %1018 = vmatmul.mubr.f32.gmra.mxu0 %v915
        %v1019 = vpop.f32.mrf.mxu0
        %v1020 = vadd.f32 %v883, %v1019
        %v1021 = vpop.f32.mrf.mxu0
        %1022 = vmatprep.mubr.f32.mxu0 0.0
        %1023 = vmatmul.mubr.f32.gmra.mxu0 %v918
        %v1024 = vpop.f32.mrf.mxu0
        %v1025 = vadd.f32 %v888, %v1024
        %v1026 = vpop.f32.mrf.mxu0
        %1027 = vmatprep.mubr.f32.mxu0 0.0
        %1028 = vmatmul.mubr.f32.gmra.mxu0 %v921
        %v1029 = vpop.f32.mrf.mxu0
        %v1030 = vadd.f32 %v893, %v1029
        %v1031 = vpop.f32.mrf.mxu0
        %1032 = vdwg.mxu0
        %1033 = vadd.xlane.f32.xlu0 %v990
        %v1034 = vpop.xlane.xlu0 %1033
        %1035 = vadd.xlane.f32.xlu0 %v995
        %v1036 = vpop.xlane.xlu0 %1035
        %1037 = vadd.xlane.f32.xlu0 %v1000
        %v1038 = vpop.xlane.xlu0 %1037
        %1039 = vadd.xlane.f32.xlu0 %v1005
        %v1040 = vpop.xlane.xlu0 %1039
        %1041 = vadd.xlane.f32.xlu0 %v1010
        %v1042 = vpop.xlane.xlu0 %1041
        %1043 = vadd.xlane.f32.xlu0 %v1015
        %v1044 = vpop.xlane.xlu0 %1043
        %1045 = vadd.xlane.f32.xlu0 %v1020
        %v1046 = vpop.xlane.xlu0 %1045
        %1047 = vadd.xlane.f32.xlu0 %v1025
        %v1048 = vpop.xlane.xlu0 %1047
        %1049 = vadd.xlane.f32.xlu0 %v1030
        %v1050 = vpop.xlane.xlu0 %1049
        %v1051 = vmul.f32 %v1034, 0.0078125
        %v1052 = vmul.f32 %v1036, 0.0078125
        %v1053 = vmul.f32 %v1038, 0.0078125
        %v1054 = vmul.f32 %v1040, 0.0078125
        %v1055 = vmul.f32 %v1042, 0.0078125
        %v1056 = vmul.f32 %v1044, 0.0078125
        %v1057 = vmul.f32 %v1046, 0.0078125
        %v1058 = vmul.f32 %v1048, 0.0078125
        %v1059 = vmul.f32 %v1050, 0.0078125
        %v1060 = vmul.f32 %v990, %v990
        %v1061 = vmul.f32 %v995, %v995
        %v1062 = vmul.f32 %v1000, %v1000
        %v1063 = vmul.f32 %v1005, %v1005
        %v1064 = vmul.f32 %v1010, %v1010
        %v1065 = vmul.f32 %v1015, %v1015
        %v1066 = vmul.f32 %v1020, %v1020
        %v1067 = vmul.f32 %v1025, %v1025
        %v1068 = vmul.f32 %v1030, %v1030
        %1069 = vadd.xlane.f32.xlu0 %v1060
        %v1070 = vpop.xlane.xlu0 %1069
        %1071 = vadd.xlane.f32.xlu0 %v1061
        %v1072 = vpop.xlane.xlu0 %1071
        %1073 = vadd.xlane.f32.xlu0 %v1062
        %v1074 = vpop.xlane.xlu0 %1073
        %1075 = vadd.xlane.f32.xlu0 %v1063
        %v1076 = vpop.xlane.xlu0 %1075
        %1077 = vadd.xlane.f32.xlu0 %v1064
        %v1078 = vpop.xlane.xlu0 %1077
        %1079 = vadd.xlane.f32.xlu0 %v1065
        %v1080 = vpop.xlane.xlu0 %1079
        %1081 = vadd.xlane.f32.xlu0 %v1066
        %v1082 = vpop.xlane.xlu0 %1081
        %1083 = vadd.xlane.f32.xlu0 %v1067
        %v1084 = vpop.xlane.xlu0 %1083
        %1085 = vadd.xlane.f32.xlu0 %v1068
        %v1086 = vpop.xlane.xlu0 %1085
        %v1087 = vmul.f32 %v1070, 0.0078125
        %v1088 = vmul.f32 %v1072, 0.0078125
        %v1089 = vmul.f32 %v1074, 0.0078125
        %v1090 = vmul.f32 %v1076, 0.0078125
        %v1091 = vmul.f32 %v1078, 0.0078125
        %v1092 = vmul.f32 %v1080, 0.0078125
        %v1093 = vmul.f32 %v1082, 0.0078125
        %v1094 = vmul.f32 %v1084, 0.0078125
        %v1095 = vmul.f32 %v1086, 0.0078125
        %v1096 = vmul.f32 %v1051, %v1051
        %v1097 = vmul.f32 %v1052, %v1052
        %v1098 = vmul.f32 %v1053, %v1053
        %v1099 = vmul.f32 %v1054, %v1054
        %v1100 = vmul.f32 %v1055, %v1055
        %v1101 = vmul.f32 %v1056, %v1056
        %v1102 = vmul.f32 %v1057, %v1057
        %v1103 = vmul.f32 %v1058, %v1058
        %v1104 = vmul.f32 %v1059, %v1059
        %v1105 = vsub.f32 %v1087, %v1096
        %v1106 = vsub.f32 %v1088, %v1097
        %v1107 = vsub.f32 %v1089, %v1098
        %v1108 = vsub.f32 %v1090, %v1099
        %v1109 = vsub.f32 %v1091, %v1100
        %v1110 = vsub.f32 %v1092, %v1101
        %v1111 = vsub.f32 %v1093, %v1102
        %v1112 = vsub.f32 %v1094, %v1103
        %v1113 = vsub.f32 %v1095, %v1104
        %v1114 = vmax.f32 %v1105, 0.0
        %v1115 = vmax.f32 %v1106, 0.0
        %v1116 = vmax.f32 %v1107, 0.0
        %v1117 = vmax.f32 %v1108, 0.0
        %v1118 = vmax.f32 %v1109, 0.0
        %v1119 = vmax.f32 %v1110, 0.0
        %v1120 = vmax.f32 %v1111, 0.0
        %v1121 = vmax.f32 %v1112, 0.0
        %v1122 = vmax.f32 %v1113, 0.0
        %v1123 = vsub.f32 %v990, %v1051
        %v1124 = vsub.f32 %v995, %v1052
        %v1125 = vsub.f32 %v1000, %v1053
        %v1126 = vsub.f32 %v1005, %v1054
        %v1127 = vsub.f32 %v1010, %v1055
        %v1128 = vsub.f32 %v1015, %v1056
        %v1129 = vsub.f32 %v1020, %v1057
        %v1130 = vsub.f32 %v1025, %v1058
        %v1131 = vsub.f32 %v1030, %v1059
        %v1132 = vadd.f32 %v1114, 1e-05
        %v1133 = vadd.f32 %v1115, 1e-05
        %v1134 = vadd.f32 %v1116, 1e-05
        %v1135 = vadd.f32 %v1117, 1e-05
        %v1136 = vadd.f32 %v1118, 1e-05
        %v1137 = vadd.f32 %v1119, 1e-05
        %v1138 = vadd.f32 %v1120, 1e-05
        %v1139 = vadd.f32 %v1121, 1e-05
        %v1140 = vadd.f32 %v1122, 1e-05
        %v1141 = vrsqrt.pop %v1132
        %v1142 = vrsqrt.pop %v1133
        %v1143 = vrsqrt.pop %v1134
        %v1144 = vrsqrt.pop %v1135
        %v1145 = vrsqrt.pop %v1136
        %v1146 = vrsqrt.pop %v1137
        %v1147 = vrsqrt.pop %v1138
        %v1148 = vrsqrt.pop %v1139
        %v1149 = vrsqrt.pop %v1140
        %v1150 = vmul.f32 %v1123, %v1141
        %v1151 = vmul.f32 %v1124, %v1142
        %v1152 = vmul.f32 %v1125, %v1143
        %v1153 = vmul.f32 %v1126, %v1144
        %v1154 = vmul.f32 %v1127, %v1145
        %v1155 = vmul.f32 %v1128, %v1146
        %v1156 = vmul.f32 %v1129, %v1147
        %v1157 = vmul.f32 %v1130, %v1148
        %v1158 = vmul.f32 %v1131, %v1149
        %s1159 = sld [smem:[#allocation2]]
        %vm1160 = vcmp.gt.f32.partialorder %v1150, 0.0
        %vm1161 = vcmp.gt.f32.partialorder %v1151, 0.0
        %vm1162 = vcmp.gt.f32.partialorder %v1152, 0.0
        %vm1163 = vcmp.gt.f32.partialorder %v1153, 0.0
        %vm1164 = vcmp.gt.f32.partialorder %v1154, 0.0
        %vm1165 = vcmp.gt.f32.partialorder %v1155, 0.0
        %vm1166 = vcmp.gt.f32.partialorder %v1156, 0.0
        %vm1167 = vcmp.gt.f32.partialorder %v1157, 0.0
        %vm1168 = vcmp.gt.f32.partialorder %v1158, 0.0
        %v1169 = vstv %s1159
        %v1170 = vmul.f32 %v1150, %v1169
        %v1171 = vmul.f32 %v1151, %v1169
        %v1172 = vmul.f32 %v1152, %v1169
        %v1173 = vmul.f32 %v1153, %v1169
        %v1174 = vmul.f32 %v1154, %v1169
        %v1175 = vmul.f32 %v1155, %v1169
        %v1176 = vmul.f32 %v1156, %v1169
        %v1177 = vmul.f32 %v1157, %v1169
        %v1178 = vmul.f32 %v1158, %v1169
        %v1179 = vsel %vm1160, %v1150, %v1170
        %v1180 = vsel %vm1161, %v1151, %v1171
        %v1181 = vsel %vm1162, %v1152, %v1172
        %v1182 = vsel %vm1163, %v1153, %v1173
        %v1183 = vsel %vm1164, %v1154, %v1174
        %v1184 = vsel %vm1165, %v1155, %v1175
        %v1185 = vsel %vm1166, %v1156, %v1176
        %v1186 = vsel %vm1167, %v1157, %v1177
        %v1187 = vsel %vm1168, %v1158, %v1178
        %vm1188 = vcmp.eq.s32.totalorder %v799, 64
        %vm1189 = vcmp.eq.s32.totalorder %v800, 64
        %vm1190 = vcmp.eq.s32.totalorder %v801, 64
        %vm1191 = vcmp.eq.s32.totalorder %v802, 64
        %vm1192 = vcmp.eq.s32.totalorder %v803, 64
        %vm1193 = vcmp.eq.s32.totalorder %v804, 64
        %vm1194 = vcmp.eq.s32.totalorder %v805, 64
        %vm1195 = vcmp.eq.s32.totalorder %v806, 64
        %vm1196 = vcmp.eq.s32.totalorder %v807, 64
        %v1197 = vsel %vm1188, %v794, %v1179
        %v1198 = vsel %vm1189, %v794, %v1180
        %v1199 = vsel %vm1190, %v794, %v1181
        %v1200 = vsel %vm1191, %v794, %v1182
        %v1201 = vsel %vm1192, %v794, %v1183
        %v1202 = vsel %vm1193, %v794, %v1184
        %v1203 = vsel %vm1194, %v794, %v1185
        %v1204 = vsel %vm1195, %v794, %v1186
        %v1205 = vsel %vm1196, %v794, %v1187
        %s1206 = sld [smem:[#allocation2 + $0x1]]
        %1207 = vadd.xlane.f32.xlu0 %v1197
        %v1208 = vpop.xlane.xlu0 %1207
        %1209 = vadd.xlane.f32.xlu0 %v1198
        %v1210 = vpop.xlane.xlu0 %1209
        %1211 = vadd.xlane.f32.xlu0 %v1199
        %v1212 = vpop.xlane.xlu0 %1211
        %1213 = vadd.xlane.f32.xlu0 %v1200
        %v1214 = vpop.xlane.xlu0 %1213
        %1215 = vadd.xlane.f32.xlu0 %v1201
        %v1216 = vpop.xlane.xlu0 %1215
        %1217 = vadd.xlane.f32.xlu0 %v1202
        %v1218 = vpop.xlane.xlu0 %1217
        %1219 = vadd.xlane.f32.xlu0 %v1203
        %v1220 = vpop.xlane.xlu0 %1219
        %1221 = vadd.xlane.f32.xlu0 %v1204
        %v1222 = vpop.xlane.xlu0 %1221
        %1223 = vadd.xlane.f32.xlu0 %v1205
        %v1224 = vpop.xlane.xlu0 %1223
        %v1225 = vmul.f32 %v1208, 0.0078125
        %v1226 = vmul.f32 %v1210, 0.0078125
        %v1227 = vmul.f32 %v1212, 0.0078125
        %v1228 = vmul.f32 %v1214, 0.0078125
        %v1229 = vmul.f32 %v1216, 0.0078125
        %v1230 = vmul.f32 %v1218, 0.0078125
        %v1231 = vmul.f32 %v1220, 0.0078125
        %v1232 = vmul.f32 %v1222, 0.0078125
        %v1233 = vmul.f32 %v1224, 0.0078125
        %v1234 = vmul.f32 %v1197, %v1197
        %v1235 = vmul.f32 %v1198, %v1198
        %v1236 = vmul.f32 %v1199, %v1199
        %v1237 = vmul.f32 %v1200, %v1200
        %v1238 = vmul.f32 %v1201, %v1201
        %v1239 = vmul.f32 %v1202, %v1202
        %v1240 = vmul.f32 %v1203, %v1203
        %v1241 = vmul.f32 %v1204, %v1204
        %v1242 = vmul.f32 %v1205, %v1205
        %1243 = vadd.xlane.f32.xlu0 %v1234
        %v1244 = vpop.xlane.xlu0 %1243
        %1245 = vadd.xlane.f32.xlu0 %v1235
        %v1246 = vpop.xlane.xlu0 %1245
        %1247 = vadd.xlane.f32.xlu0 %v1236
        %v1248 = vpop.xlane.xlu0 %1247
        %1249 = vadd.xlane.f32.xlu0 %v1237
        %v1250 = vpop.xlane.xlu0 %1249
        %1251 = vadd.xlane.f32.xlu0 %v1238
        %v1252 = vpop.xlane.xlu0 %1251
        %1253 = vadd.xlane.f32.xlu0 %v1239
        %v1254 = vpop.xlane.xlu0 %1253
        %1255 = vadd.xlane.f32.xlu0 %v1240
        %v1256 = vpop.xlane.xlu0 %1255
        %1257 = vadd.xlane.f32.xlu0 %v1241
        %v1258 = vpop.xlane.xlu0 %1257
        %1259 = vadd.xlane.f32.xlu0 %v1242
        %v1260 = vpop.xlane.xlu0 %1259
        %v1261 = vmul.f32 %v1244, 0.0078125
        %v1262 = vmul.f32 %v1246, 0.0078125
        %v1263 = vmul.f32 %v1248, 0.0078125
        %v1264 = vmul.f32 %v1250, 0.0078125
        %v1265 = vmul.f32 %v1252, 0.0078125
        %v1266 = vmul.f32 %v1254, 0.0078125
        %v1267 = vmul.f32 %v1256, 0.0078125
        %v1268 = vmul.f32 %v1258, 0.0078125
        %v1269 = vmul.f32 %v1260, 0.0078125
        %v1270 = vmul.f32 %v1225, %v1225
        %v1271 = vmul.f32 %v1226, %v1226
        %v1272 = vmul.f32 %v1227, %v1227
        %v1273 = vmul.f32 %v1228, %v1228
        %v1274 = vmul.f32 %v1229, %v1229
        %v1275 = vmul.f32 %v1230, %v1230
        %v1276 = vmul.f32 %v1231, %v1231
        %v1277 = vmul.f32 %v1232, %v1232
        %v1278 = vmul.f32 %v1233, %v1233
        %v1279 = vsub.f32 %v1261, %v1270
        %v1280 = vsub.f32 %v1262, %v1271
        %v1281 = vsub.f32 %v1263, %v1272
        %v1282 = vsub.f32 %v1264, %v1273
        %v1283 = vsub.f32 %v1265, %v1274
        %v1284 = vsub.f32 %v1266, %v1275
        %v1285 = vsub.f32 %v1267, %v1276
        %v1286 = vsub.f32 %v1268, %v1277
        %v1287 = vsub.f32 %v1269, %v1278
        %v1288 = vmax.f32 %v1279, 0.0
        %v1289 = vmax.f32 %v1280, 0.0
        %v1290 = vmax.f32 %v1281, 0.0
        %v1291 = vmax.f32 %v1282, 0.0
        %v1292 = vmax.f32 %v1283, 0.0
        %v1293 = vmax.f32 %v1284, 0.0
        %v1294 = vmax.f32 %v1285, 0.0
        %v1295 = vmax.f32 %v1286, 0.0
        %v1296 = vmax.f32 %v1287, 0.0
        %v1297 = vsub.f32 %v1197, %v1225
        %v1298 = vsub.f32 %v1198, %v1226
        %v1299 = vsub.f32 %v1199, %v1227
        %v1300 = vsub.f32 %v1200, %v1228
        %v1301 = vsub.f32 %v1201, %v1229
        %v1302 = vsub.f32 %v1202, %v1230
        %v1303 = vsub.f32 %v1203, %v1231
        %v1304 = vsub.f32 %v1204, %v1232
        %v1305 = vsub.f32 %v1205, %v1233
        %v1306 = vadd.f32 %v1288, 1e-05
        %v1307 = vadd.f32 %v1289, 1e-05
        %v1308 = vadd.f32 %v1290, 1e-05
        %v1309 = vadd.f32 %v1291, 1e-05
        %v1310 = vadd.f32 %v1292, 1e-05
        %v1311 = vadd.f32 %v1293, 1e-05
        %v1312 = vadd.f32 %v1294, 1e-05
        %v1313 = vadd.f32 %v1295, 1e-05
        %v1314 = vadd.f32 %v1296, 1e-05
        %v1315 = vrsqrt.pop %v1306
        %v1316 = vrsqrt.pop %v1307
        %v1317 = vrsqrt.pop %v1308
        %v1318 = vrsqrt.pop %v1309
        %v1319 = vrsqrt.pop %v1310
        %v1320 = vrsqrt.pop %v1311
        %v1321 = vrsqrt.pop %v1312
        %v1322 = vrsqrt.pop %v1313
        %v1323 = vrsqrt.pop %v1314
        %v1324 = vmul.f32 %v1297, %v1315
        %v1325 = vmul.f32 %v1298, %v1316
        %v1326 = vmul.f32 %v1299, %v1317
        %v1327 = vmul.f32 %v1300, %v1318
        %v1328 = vmul.f32 %v1301, %v1319
        %v1329 = vmul.f32 %v1302, %v1320
        %v1330 = vmul.f32 %v1303, %v1321
        %v1331 = vmul.f32 %v1304, %v1322
        %v1332 = vmul.f32 %v1305, %v1323
        %1333 = vrot.lane.b32.xlu0 %v1197, 4
        %v1334 = vpop.permute.xlu0 %1333
        %1335 = vrot.lane.b32.xlu0 %v1198, 4
        %v1336 = vpop.permute.xlu0 %1335
        %1337 = vrot.lane.b32.xlu0 %v1199, 4
        %v1338 = vpop.permute.xlu0 %1337
        %1339 = vrot.lane.b32.xlu0 %v1200, 4
        %v1340 = vpop.permute.xlu0 %1339
        %1341 = vrot.lane.b32.xlu0 %v1201, 4
        %v1342 = vpop.permute.xlu0 %1341
        %1343 = vrot.lane.b32.xlu0 %v1202, 4
        %v1344 = vpop.permute.xlu0 %1343
        %1345 = vrot.lane.b32.xlu0 %v1203, 4
        %v1346 = vpop.permute.xlu0 %1345
        %1347 = vrot.lane.b32.xlu0 %v1204, 4
        %v1348 = vpop.permute.xlu0 %1347
        %1349 = vrot.lane.b32.xlu0 %v1205, 4
        %v1350 = vpop.permute.xlu0 %1349
        %vm1351 = vcmp.ge.s32.totalorder %v797, 4
        %v1352 = vsel %vm1351, %v1334, 0.0
        %v1353 = vsel %vm1351, %v1336, 0.0
        %v1354 = vsel %vm1351, %v1338, 0.0
        %v1355 = vsel %vm1351, %v1340, 0.0
        %v1356 = vsel %vm1351, %v1342, 0.0
        %v1357 = vsel %vm1351, %v1344, 0.0
        %v1358 = vsel %vm1351, %v1346, 0.0
        %v1359 = vsel %vm1351, %v1348, 0.0
        %v1360 = vsel %vm1351, %v1350, 0.0
        %1361 = vrot.lane.b32.xlu0 %v1197, 3
        %v1362 = vpop.permute.xlu0 %1361
        %1363 = vrot.lane.b32.xlu0 %v1198, 3
        %v1364 = vpop.permute.xlu0 %1363
        %1365 = vrot.lane.b32.xlu0 %v1199, 3
        %v1366 = vpop.permute.xlu0 %1365
        %1367 = vrot.lane.b32.xlu0 %v1200, 3
        %v1368 = vpop.permute.xlu0 %1367
        %1369 = vrot.lane.b32.xlu0 %v1201, 3
        %v1370 = vpop.permute.xlu0 %1369
        %1371 = vrot.lane.b32.xlu0 %v1202, 3
        %v1372 = vpop.permute.xlu0 %1371
        %1373 = vrot.lane.b32.xlu0 %v1203, 3
        %v1374 = vpop.permute.xlu0 %1373
        %1375 = vrot.lane.b32.xlu0 %v1204, 3
        %v1376 = vpop.permute.xlu0 %1375
        %1377 = vrot.lane.b32.xlu0 %v1205, 3
        %v1378 = vpop.permute.xlu0 %1377
        %v1379 = vsel %vm810, %v1362, 0.0
        %v1380 = vsel %vm810, %v1364, 0.0
        %v1381 = vsel %vm810, %v1366, 0.0
        %v1382 = vsel %vm810, %v1368, 0.0
        %v1383 = vsel %vm810, %v1370, 0.0
        %v1384 = vsel %vm810, %v1372, 0.0
        %v1385 = vsel %vm810, %v1374, 0.0
        %v1386 = vsel %vm810, %v1376, 0.0
        %v1387 = vsel %vm810, %v1378, 0.0
        %1388 = vrot.lane.b32.xlu0 %v1197, 2
        %v1389 = vpop.permute.xlu0 %1388
        %1390 = vrot.lane.b32.xlu0 %v1198, 2
        %v1391 = vpop.permute.xlu0 %1390
        %1392 = vrot.lane.b32.xlu0 %v1199, 2
        %v1393 = vpop.permute.xlu0 %1392
        %1394 = vrot.lane.b32.xlu0 %v1200, 2
        %v1395 = vpop.permute.xlu0 %1394
        %1396 = vrot.lane.b32.xlu0 %v1201, 2
        %v1397 = vpop.permute.xlu0 %1396
        %1398 = vrot.lane.b32.xlu0 %v1202, 2
        %v1399 = vpop.permute.xlu0 %1398
        %1400 = vrot.lane.b32.xlu0 %v1203, 2
        %v1401 = vpop.permute.xlu0 %1400
        %1402 = vrot.lane.b32.xlu0 %v1204, 2
        %v1403 = vpop.permute.xlu0 %1402
        %1404 = vrot.lane.b32.xlu0 %v1205, 2
        %v1405 = vpop.permute.xlu0 %1404
        %v1406 = vsel %vm814, %v1389, 0.0
        %v1407 = vsel %vm814, %v1391, 0.0
        %v1408 = vsel %vm814, %v1393, 0.0
        %v1409 = vsel %vm814, %v1395, 0.0
        %v1410 = vsel %vm814, %v1397, 0.0
        %v1411 = vsel %vm814, %v1399, 0.0
        %v1412 = vsel %vm814, %v1401, 0.0
        %v1413 = vsel %vm814, %v1403, 0.0
        %v1414 = vsel %vm814, %v1405, 0.0
        %1415 = vrot.lane.b32.xlu0 %v1197, 1
        %v1416 = vpop.permute.xlu0 %1415
        %1417 = vrot.lane.b32.xlu0 %v1198, 1
        %v1418 = vpop.permute.xlu0 %1417
        %1419 = vrot.lane.b32.xlu0 %v1199, 1
        %v1420 = vpop.permute.xlu0 %1419
        %1421 = vrot.lane.b32.xlu0 %v1200, 1
        %v1422 = vpop.permute.xlu0 %1421
        %1423 = vrot.lane.b32.xlu0 %v1201, 1
        %v1424 = vpop.permute.xlu0 %1423
        %1425 = vrot.lane.b32.xlu0 %v1202, 1
        %v1426 = vpop.permute.xlu0 %1425
        %1427 = vrot.lane.b32.xlu0 %v1203, 1
        %v1428 = vpop.permute.xlu0 %1427
        %1429 = vrot.lane.b32.xlu0 %v1204, 1
        %v1430 = vpop.permute.xlu0 %1429
        %1431 = vrot.lane.b32.xlu0 %v1205, 1
        %v1432 = vpop.permute.xlu0 %1431
        %v1433 = vsel %vm818, %v1416, 0.0
        %v1434 = vsel %vm818, %v1418, 0.0
        %v1435 = vsel %vm818, %v1420, 0.0
        %v1436 = vsel %vm818, %v1422, 0.0
        %v1437 = vsel %vm818, %v1424, 0.0
        %v1438 = vsel %vm818, %v1426, 0.0
        %v1439 = vsel %vm818, %v1428, 0.0
        %v1440 = vsel %vm818, %v1430, 0.0
        %v1441 = vsel %vm818, %v1432, 0.0
        %1442 = vrot.lane.b32.xlu0 %v1197, 127
        %v1443 = vpop.permute.xlu0 %1442
        %1444 = vrot.lane.b32.xlu0 %v1198, 127
        %v1445 = vpop.permute.xlu0 %1444
        %1446 = vrot.lane.b32.xlu0 %v1199, 127
        %v1447 = vpop.permute.xlu0 %1446
        %1448 = vrot.lane.b32.xlu0 %v1200, 127
        %v1449 = vpop.permute.xlu0 %1448
        %1450 = vrot.lane.b32.xlu0 %v1201, 127
        %v1451 = vpop.permute.xlu0 %1450
        %1452 = vrot.lane.b32.xlu0 %v1202, 127
        %v1453 = vpop.permute.xlu0 %1452
        %1454 = vrot.lane.b32.xlu0 %v1203, 127
        %v1455 = vpop.permute.xlu0 %1454
        %1456 = vrot.lane.b32.xlu0 %v1204, 127
        %v1457 = vpop.permute.xlu0 %1456
        %1458 = vrot.lane.b32.xlu0 %v1205, 127
        %v1459 = vpop.permute.xlu0 %1458
        %v1460 = vsel %vm822, %v1443, 0.0
        %v1461 = vsel %vm822, %v1445, 0.0
        %v1462 = vsel %vm822, %v1447, 0.0
        %v1463 = vsel %vm822, %v1449, 0.0
        %v1464 = vsel %vm822, %v1451, 0.0
        %v1465 = vsel %vm822, %v1453, 0.0
        %v1466 = vsel %vm822, %v1455, 0.0
        %v1467 = vsel %vm822, %v1457, 0.0
        %v1468 = vsel %vm822, %v1459, 0.0
        %1469 = vrot.lane.b32.xlu0 %v1197, 126
        %v1470 = vpop.permute.xlu0 %1469
        %1471 = vrot.lane.b32.xlu0 %v1198, 126
        %v1472 = vpop.permute.xlu0 %1471
        %1473 = vrot.lane.b32.xlu0 %v1199, 126
        %v1474 = vpop.permute.xlu0 %1473
        %1475 = vrot.lane.b32.xlu0 %v1200, 126
        %v1476 = vpop.permute.xlu0 %1475
        %1477 = vrot.lane.b32.xlu0 %v1201, 126
        %v1478 = vpop.permute.xlu0 %1477
        %1479 = vrot.lane.b32.xlu0 %v1202, 126
        %v1480 = vpop.permute.xlu0 %1479
        %1481 = vrot.lane.b32.xlu0 %v1203, 126
        %v1482 = vpop.permute.xlu0 %1481
        %1483 = vrot.lane.b32.xlu0 %v1204, 126
        %v1484 = vpop.permute.xlu0 %1483
        %1485 = vrot.lane.b32.xlu0 %v1205, 126
        %v1486 = vpop.permute.xlu0 %1485
        %v1487 = vsel %vm826, %v1470, 0.0
        %v1488 = vsel %vm826, %v1472, 0.0
        %v1489 = vsel %vm826, %v1474, 0.0
        %v1490 = vsel %vm826, %v1476, 0.0
        %v1491 = vsel %vm826, %v1478, 0.0
        %v1492 = vsel %vm826, %v1480, 0.0
        %v1493 = vsel %vm826, %v1482, 0.0
        %v1494 = vsel %vm826, %v1484, 0.0
        %v1495 = vsel %vm826, %v1486, 0.0
        %1496 = vrot.lane.b32.xlu0 %v1197, 125
        %v1497 = vpop.permute.xlu0 %1496
        %1498 = vrot.lane.b32.xlu0 %v1198, 125
        %v1499 = vpop.permute.xlu0 %1498
        %1500 = vrot.lane.b32.xlu0 %v1199, 125
        %v1501 = vpop.permute.xlu0 %1500
        %1502 = vrot.lane.b32.xlu0 %v1200, 125
        %v1503 = vpop.permute.xlu0 %1502
        %1504 = vrot.lane.b32.xlu0 %v1201, 125
        %v1505 = vpop.permute.xlu0 %1504
        %1506 = vrot.lane.b32.xlu0 %v1202, 125
        %v1507 = vpop.permute.xlu0 %1506
        %1508 = vrot.lane.b32.xlu0 %v1203, 125
        %v1509 = vpop.permute.xlu0 %1508
        %1510 = vrot.lane.b32.xlu0 %v1204, 125
        %v1511 = vpop.permute.xlu0 %1510
        %1512 = vrot.lane.b32.xlu0 %v1205, 125
        %v1513 = vpop.permute.xlu0 %1512
        %v1514 = vsel %vm830, %v1497, 0.0
        %v1515 = vsel %vm830, %v1499, 0.0
        %v1516 = vsel %vm830, %v1501, 0.0
        %v1517 = vsel %vm830, %v1503, 0.0
        %v1518 = vsel %vm830, %v1505, 0.0
        %v1519 = vsel %vm830, %v1507, 0.0
        %v1520 = vsel %vm830, %v1509, 0.0
        %v1521 = vsel %vm830, %v1511, 0.0
        %v1522 = vsel %vm830, %v1513, 0.0
        %1523 = vrot.lane.b32.xlu0 %v1197, 124
        %v1524 = vpop.permute.xlu0 %1523
        %1525 = vrot.lane.b32.xlu0 %v1198, 124
        %v1526 = vpop.permute.xlu0 %1525
        %1527 = vrot.lane.b32.xlu0 %v1199, 124
        %v1528 = vpop.permute.xlu0 %1527
        %1529 = vrot.lane.b32.xlu0 %v1200, 124
        %v1530 = vpop.permute.xlu0 %1529
        %1531 = vrot.lane.b32.xlu0 %v1201, 124
        %v1532 = vpop.permute.xlu0 %1531
        %1533 = vrot.lane.b32.xlu0 %v1202, 124
        %v1534 = vpop.permute.xlu0 %1533
        %1535 = vrot.lane.b32.xlu0 %v1203, 124
        %v1536 = vpop.permute.xlu0 %1535
        %1537 = vrot.lane.b32.xlu0 %v1204, 124
        %v1538 = vpop.permute.xlu0 %1537
        %1539 = vrot.lane.b32.xlu0 %v1205, 124
        %v1540 = vpop.permute.xlu0 %1539
        %vm1541 = vcmp.lt.s32.totalorder %v797, 124
        %v1542 = vsel %vm1541, %v1524, 0.0
        %v1543 = vsel %vm1541, %v1526, 0.0
        %v1544 = vsel %vm1541, %v1528, 0.0
        %v1545 = vsel %vm1541, %v1530, 0.0
        %v1546 = vsel %vm1541, %v1532, 0.0
        %v1547 = vsel %vm1541, %v1534, 0.0
        %v1548 = vsel %vm1541, %v1536, 0.0
        %v1549 = vsel %vm1541, %v1538, 0.0
        %v1550 = vsel %vm1541, %v1540, 0.0
        %v1551 = vld [vmem:[%s5] sm:$0xff]
        %v1552 = vld [vmem:[%s5 + $0x8] sm:$0xff]
        %v1553 = vld [vmem:[%s5 + $0x10] sm:$0xff]
        %v1554 = vld [vmem:[%s5 + $0x18] sm:$0xff]
        %v1555 = vld [vmem:[%s5 + $0x20] sm:$0xff]
        %v1556 = vld [vmem:[%s5 + $0x28] sm:$0xff]
        %v1557 = vld [vmem:[%s5 + $0x30] sm:$0xff]
        %v1558 = vld [vmem:[%s5 + $0x38] sm:$0xff]
        %v1559 = vld [vmem:[%s5 + $0x40] sm:$0xff]
        %v1560 = vld [vmem:[%s5 + $0x48] sm:$0xff]
        %v1561 = vld [vmem:[%s5 + $0x50] sm:$0xff]
        %v1562 = vld [vmem:[%s5 + $0x58] sm:$0xff]
        %v1563 = vld [vmem:[%s5 + $0x60] sm:$0xff]
        %v1564 = vld [vmem:[%s5 + $0x68] sm:$0xff]
        %v1565 = vld [vmem:[%s5 + $0x70] sm:$0xff]
        %v1566 = vld [vmem:[%s5 + $0x78] sm:$0xff]
        %v1567 = vld [vmem:[%s5 + $0x80] sm:$0xff]
        %v1568 = vld [vmem:[%s5 + $0x88] sm:$0xff]
        %v1569 = vld [vmem:[%s5 + $0x90] sm:$0xff]
        %v1570 = vld [vmem:[%s5 + $0x98] sm:$0xff]
        %v1571 = vld [vmem:[%s5 + $0xa0] sm:$0xff]
        %v1572 = vld [vmem:[%s5 + $0xa8] sm:$0xff]
        %v1573 = vld [vmem:[%s5 + $0xb0] sm:$0xff]
        %v1574 = vld [vmem:[%s5 + $0xb8] sm:$0xff]
        %v1575 = vld [vmem:[%s5 + $0xc0] sm:$0xff]
        %v1576 = vld [vmem:[%s5 + $0xc8] sm:$0xff]
        %v1577 = vld [vmem:[%s5 + $0xd0] sm:$0xff]
        %v1578 = vld [vmem:[%s5 + $0xd8] sm:$0xff]
        %v1579 = vld [vmem:[%s5 + $0xe0] sm:$0xff]
        %v1580 = vld [vmem:[%s5 + $0xe8] sm:$0xff]
        %v1581 = vld [vmem:[%s5 + $0xf0] sm:$0xff]
        %v1582 = vld [vmem:[%s5 + $0xf8] sm:$0xff]
        %v1583 = vld [vmem:[%s5 + $0x100] sm:$0xff]
        %v1584 = vld [vmem:[%s5 + $0x108] sm:$0xff]
        %v1585 = vld [vmem:[%s5 + $0x110] sm:$0xff]
        %v1586 = vld [vmem:[%s5 + $0x118] sm:$0xff]
        %v1587 = vld [vmem:[%s5 + $0x120] sm:$0xff]
        %v1588 = vld [vmem:[%s5 + $0x128] sm:$0xff]
        %v1589 = vld [vmem:[%s5 + $0x130] sm:$0xff]
        %v1590 = vld [vmem:[%s5 + $0x138] sm:$0xff]
        %v1591 = vld [vmem:[%s5 + $0x140] sm:$0xff]
        %v1592 = vld [vmem:[%s5 + $0x148] sm:$0xff]
        %v1593 = vld [vmem:[%s5 + $0x150] sm:$0xff]
        %v1594 = vld [vmem:[%s5 + $0x158] sm:$0xff]
        %v1595 = vld [vmem:[%s5 + $0x160] sm:$0xff]
        %v1596 = vld [vmem:[%s5 + $0x168] sm:$0xff]
        %v1597 = vld [vmem:[%s5 + $0x170] sm:$0xff]
        %v1598 = vld [vmem:[%s5 + $0x178] sm:$0xff]
        %v1599 = vld [vmem:[%s5 + $0x180] sm:$0xff]
        %v1600 = vld [vmem:[%s5 + $0x188] sm:$0xff]
        %v1601 = vld [vmem:[%s5 + $0x190] sm:$0xff]
        %v1602 = vld [vmem:[%s5 + $0x198] sm:$0xff]
        %v1603 = vld [vmem:[%s5 + $0x1a0] sm:$0xff]
        %v1604 = vld [vmem:[%s5 + $0x1a8] sm:$0xff]
        %v1605 = vld [vmem:[%s6] sm:$0xff]
        %v1606 = vld [vmem:[%s6 + $0x8] sm:$0xff]
        %v1607 = vld [vmem:[%s6 + $0x10] sm:$0xff]
        %v1608 = vld [vmem:[%s6 + $0x18] sm:$0xff]
        %v1609 = vld [vmem:[%s6 + $0x20] sm:$0xff]
        %v1610 = vld [vmem:[%s6 + $0x28] sm:$0xff]
        %v1611 = vld [vmem:[%s6 + $0x30] sm:$0xff]
        %v1612 = vld [vmem:[%s6 + $0x38] sm:$0xff]
        %v1613 = vld [vmem:[%s6 + $0x40] sm:$0xff]
        %1615 = vset.pattern.permute.xlu0 0
        %1616 = vperm.xlu0 %1615, %v1605
        %v1617 = vpop.permute.xlu0 %1616
        %1620 = vset.pattern.permute.xlu0 0
        %1621 = vperm.xlu0 %1620, %v1606
        %v1622 = vpop.permute.xlu0 %1621
        %1625 = vset.pattern.permute.xlu0 0
        %1626 = vperm.xlu0 %1625, %v1607
        %v1627 = vpop.permute.xlu0 %1626
        %1630 = vset.pattern.permute.xlu0 0
        %1631 = vperm.xlu0 %1630, %v1608
        %v1632 = vpop.permute.xlu0 %1631
        %1635 = vset.pattern.permute.xlu0 0
        %1636 = vperm.xlu0 %1635, %v1609
        %v1637 = vpop.permute.xlu0 %1636
        %1640 = vset.pattern.permute.xlu0 0
        %1641 = vperm.xlu0 %1640, %v1610
        %v1642 = vpop.permute.xlu0 %1641
        %1645 = vset.pattern.permute.xlu0 0
        %1646 = vperm.xlu0 %1645, %v1611
        %v1647 = vpop.permute.xlu0 %1646
        %1650 = vset.pattern.permute.xlu0 0
        %1651 = vperm.xlu0 %1650, %v1612
        %v1652 = vpop.permute.xlu0 %1651
        %1655 = vset.pattern.permute.xlu0 0
        %1656 = vperm.xlu0 %1655, %v1613
        %v1657 = vpop.permute.xlu0 %1656
        %vm1659 = vcmask 64512
        %v1661 = vsel %vm1659, %v1556, 0
        %v1664 = vsel %vm1659, %v1562, 0
        %v1667 = vsel %vm1659, %v1568, 0
        %v1670 = vsel %vm1659, %v1574, 0
        %v1673 = vsel %vm1659, %v1580, 0
        %v1676 = vsel %vm1659, %v1586, 0
        %v1679 = vsel %vm1659, %v1592, 0
        %v1682 = vsel %vm1659, %v1598, 0
        %v1685 = vsel %vm1659, %v1604, 0
        %1687 = vmatprep.subr.mxu0 0.0
        %1688 = vmatpush1.msra.mxu0 %v1385
        %1689 = vmatprep.subr.mxu0 0.0
        %1690 = vmatpush1.msra.mxu0 %v1384
        %1691 = vmatprep.subr.mxu0 0.0
        %1692 = vmatpush1.msra.mxu0 %v1383
        %1693 = vmatprep.subr.mxu0 0.0
        %1694 = vmatpush1.msra.mxu0 %v1382
        %1695 = vmatprep.subr.mxu0 0.0
        %1696 = vmatpush1.msra.mxu0 %v1381
        %1697 = vmatprep.subr.mxu0 0.0
        %1698 = vmatpush1.msra.mxu0 %v1380
        %1699 = vmatprep.subr.mxu0 0.0
        %1700 = vmatpush1.msra.mxu0 %v1379
        %1701 = vmatprep.subr.mxu0 0.0
        %1702 = vmatpush1.msra.mxu0 %v1360
        %1703 = vmatprep.subr.mxu0 0.0
        %1704 = vmatpush1.msra.mxu0 %v1359
        %1705 = vmatprep.subr.mxu0 0.0
        %1706 = vmatpush1.msra.mxu0 %v1358
        %1707 = vmatprep.subr.mxu0 0.0
        %1708 = vmatpush1.msra.mxu0 %v1357
        %1709 = vmatprep.subr.mxu0 0.0
        %1710 = vmatpush1.msra.mxu0 %v1356
        %1711 = vmatprep.subr.mxu0 0.0
        %1712 = vmatpush1.msra.mxu0 %v1355
        %1713 = vmatprep.subr.mxu0 0.0
        %1714 = vmatpush1.msra.mxu0 %v1354
        %1715 = vmatprep.subr.mxu0 0.0
        %1716 = vmatpush1.msra.mxu0 %v1353
        %1717 = vmatprep.subr.mxu0 0.0
        %1718 = vmatpush1.msra.mxu0 %v1352
        %1719 = vmatprep.subr.mxu0 0.0
        %1720 = vmatpush2.msra.mxu0 %v1437
        %1721 = vmatprep.subr.mxu0 0.0
        %1722 = vmatpush2.msra.mxu0 %v1436
        %1723 = vmatprep.subr.mxu0 0.0
        %1724 = vmatpush2.msra.mxu0 %v1435
        %1725 = vmatprep.subr.mxu0 0.0
        %1726 = vmatpush2.msra.mxu0 %v1434
        %1727 = vmatprep.subr.mxu0 0.0
        %1728 = vmatpush2.msra.mxu0 %v1433
        %1729 = vmatprep.subr.mxu0 0.0
        %1730 = vmatpush2.msra.mxu0 %v1414
        %1731 = vmatprep.subr.mxu0 0.0
        %1732 = vmatpush2.msra.mxu0 %v1413
        %1733 = vmatprep.subr.mxu0 0.0
        %1734 = vmatpush2.msra.mxu0 %v1412
        %1735 = vmatprep.subr.mxu0 0.0
        %1736 = vmatpush2.msra.mxu0 %v1411
        %1737 = vmatprep.subr.mxu0 0.0
        %1738 = vmatpush2.msra.mxu0 %v1410
        %1739 = vmatprep.subr.mxu0 0.0
        %1740 = vmatpush2.msra.mxu0 %v1409
        %1741 = vmatprep.subr.mxu0 0.0
        %1742 = vmatpush2.msra.mxu0 %v1408
        %1743 = vmatprep.subr.mxu0 0.0
        %1744 = vmatpush2.msra.mxu0 %v1407
        %1745 = vmatprep.subr.mxu0 0.0
        %1746 = vmatpush2.msra.mxu0 %v1406
        %1747 = vmatprep.subr.mxu0 0.0
        %1748 = vmatpush2.msra.mxu0 %v1387
        %1749 = vmatprep.subr.mxu0 0.0
        %1750 = vmatpush2.msra.mxu0 %v1386
        %1751 = vmatprep.mubr.f32.mxu0 %v1552
        %1752 = vmatmul.mubr.f32.gmra.mxu0 %v1551
        %v1753 = vpop.f32.mrf.mxu0
        %v1754 = vadd.f32 %v1617, %v1753
        %v1755 = vpop.f32.mrf.mxu0
        %1756 = vmatprep.mubr.f32.mxu0 %v1558
        %1757 = vmatmul.mubr.f32.gmra.mxu0 %v1557
        %v1758 = vpop.f32.mrf.mxu0
        %v1759 = vadd.f32 %v1622, %v1758
        %v1760 = vpop.f32.mrf.mxu0
        %1761 = vmatprep.mubr.f32.mxu0 %v1564
        %1762 = vmatmul.mubr.f32.gmra.mxu0 %v1563
        %v1763 = vpop.f32.mrf.mxu0
        %v1764 = vadd.f32 %v1627, %v1763
        %v1765 = vpop.f32.mrf.mxu0
        %1766 = vmatprep.mubr.f32.mxu0 %v1570
        %1767 = vmatmul.mubr.f32.gmra.mxu0 %v1569
        %v1768 = vpop.f32.mrf.mxu0
        %v1769 = vadd.f32 %v1632, %v1768
        %v1770 = vpop.f32.mrf.mxu0
        %1771 = vmatprep.mubr.f32.mxu0 %v1576
        %1772 = vmatmul.mubr.f32.gmra.mxu0 %v1575
        %v1773 = vpop.f32.mrf.mxu0
        %v1774 = vadd.f32 %v1637, %v1773
        %v1775 = vpop.f32.mrf.mxu0
        %1776 = vmatprep.mubr.f32.mxu0 %v1582
        %1777 = vmatmul.mubr.f32.gmra.mxu0 %v1581
        %v1778 = vpop.f32.mrf.mxu0
        %v1779 = vadd.f32 %v1642, %v1778
        %v1780 = vpop.f32.mrf.mxu0
        %1781 = vmatprep.mubr.f32.mxu0 %v1588
        %1782 = vmatmul.mubr.f32.gmra.mxu0 %v1587
        %v1783 = vpop.f32.mrf.mxu0
        %v1784 = vadd.f32 %v1647, %v1783
        %v1785 = vpop.f32.mrf.mxu0
        %1786 = vmatprep.mubr.f32.mxu0 %v1594
        %1787 = vmatmul.mubr.f32.gmra.mxu0 %v1593
        %v1788 = vpop.f32.mrf.mxu0
        %v1789 = vadd.f32 %v1652, %v1788
        %v1790 = vpop.f32.mrf.mxu0
        %1791 = vmatprep.mubr.f32.mxu0 %v1600
        %1792 = vmatmul.mubr.f32.gmra.mxu0 %v1599
        %v1793 = vpop.f32.mrf.mxu0
        %v1794 = vadd.f32 %v1657, %v1793
        %v1795 = vpop.f32.mrf.mxu0
        %1796 = vdwg.mxu0
        %1797 = vmatprep.subr.mxu0 0.0
        %1798 = vmatpush1.msra.mxu0 %v1462
        %1799 = vmatprep.subr.mxu0 0.0
        %1800 = vmatpush1.msra.mxu0 %v1461
        %1801 = vmatprep.subr.mxu0 0.0
        %1802 = vmatpush1.msra.mxu0 %v1460
        %1803 = vmatprep.subr.mxu0 0.0
        %1804 = vmatpush1.msra.mxu0 %v1205
        %1805 = vmatprep.subr.mxu0 0.0
        %1806 = vmatpush1.msra.mxu0 %v1204
        %1807 = vmatprep.subr.mxu0 0.0
        %1808 = vmatpush1.msra.mxu0 %v1203
        %1809 = vmatprep.subr.mxu0 0.0
        %1810 = vmatpush1.msra.mxu0 %v1202
        %1811 = vmatprep.subr.mxu0 0.0
        %1812 = vmatpush1.msra.mxu0 %v1201
        %1813 = vmatprep.subr.mxu0 0.0
        %1814 = vmatpush1.msra.mxu0 %v1200
        %1815 = vmatprep.subr.mxu0 0.0
        %1816 = vmatpush1.msra.mxu0 %v1199
        %1817 = vmatprep.subr.mxu0 0.0
        %1818 = vmatpush1.msra.mxu0 %v1198
        %1819 = vmatprep.subr.mxu0 0.0
        %1820 = vmatpush1.msra.mxu0 %v1197
        %1821 = vmatprep.subr.mxu0 0.0
        %1822 = vmatpush1.msra.mxu0 %v1441
        %1823 = vmatprep.subr.mxu0 0.0
        %1824 = vmatpush1.msra.mxu0 %v1440
        %1825 = vmatprep.subr.mxu0 0.0
        %1826 = vmatpush1.msra.mxu0 %v1439
        %1827 = vmatprep.subr.mxu0 0.0
        %1828 = vmatpush1.msra.mxu0 %v1438
        %1829 = vmatprep.subr.mxu0 0.0
        %1830 = vmatpush2.msra.mxu0 %v1514
        %1831 = vmatprep.subr.mxu0 0.0
        %1832 = vmatpush2.msra.mxu0 %v1495
        %1833 = vmatprep.subr.mxu0 0.0
        %1834 = vmatpush2.msra.mxu0 %v1494
        %1835 = vmatprep.subr.mxu0 0.0
        %1836 = vmatpush2.msra.mxu0 %v1493
        %1837 = vmatprep.subr.mxu0 0.0
        %1838 = vmatpush2.msra.mxu0 %v1492
        %1839 = vmatprep.subr.mxu0 0.0
        %1840 = vmatpush2.msra.mxu0 %v1491
        %1841 = vmatprep.subr.mxu0 0.0
        %1842 = vmatpush2.msra.mxu0 %v1490
        %1843 = vmatprep.subr.mxu0 0.0
        %1844 = vmatpush2.msra.mxu0 %v1489
        %1845 = vmatprep.subr.mxu0 0.0
        %1846 = vmatpush2.msra.mxu0 %v1488
        %1847 = vmatprep.subr.mxu0 0.0
        %1848 = vmatpush2.msra.mxu0 %v1487
        %1849 = vmatprep.subr.mxu0 0.0
        %1850 = vmatpush2.msra.mxu0 %v1468
        %1851 = vmatprep.subr.mxu0 0.0
        %1852 = vmatpush2.msra.mxu0 %v1467
        %1853 = vmatprep.subr.mxu0 0.0
        %1854 = vmatpush2.msra.mxu0 %v1466
        %1855 = vmatprep.subr.mxu0 0.0
        %1856 = vmatpush2.msra.mxu0 %v1465
        %1857 = vmatprep.subr.mxu0 0.0
        %1858 = vmatpush2.msra.mxu0 %v1464
        %1859 = vmatprep.subr.mxu0 0.0
        %1860 = vmatpush2.msra.mxu0 %v1463
        %1861 = vmatprep.mubr.f32.mxu0 %v1554
        %1862 = vmatmul.mubr.f32.gmra.mxu0 %v1553
        %v1863 = vpop.f32.mrf.mxu0
        %v1864 = vadd.f32 %v1754, %v1863
        %v1865 = vpop.f32.mrf.mxu0
        %1866 = vmatprep.mubr.f32.mxu0 %v1560
        %1867 = vmatmul.mubr.f32.gmra.mxu0 %v1559
        %v1868 = vpop.f32.mrf.mxu0
        %v1869 = vadd.f32 %v1759, %v1868
        %v1870 = vpop.f32.mrf.mxu0
        %1871 = vmatprep.mubr.f32.mxu0 %v1566
        %1872 = vmatmul.mubr.f32.gmra.mxu0 %v1565
        %v1873 = vpop.f32.mrf.mxu0
        %v1874 = vadd.f32 %v1764, %v1873
        %v1875 = vpop.f32.mrf.mxu0
        %1876 = vmatprep.mubr.f32.mxu0 %v1572
        %1877 = vmatmul.mubr.f32.gmra.mxu0 %v1571
        %v1878 = vpop.f32.mrf.mxu0
        %v1879 = vadd.f32 %v1769, %v1878
        %v1880 = vpop.f32.mrf.mxu0
        %1881 = vmatprep.mubr.f32.mxu0 %v1578
        %1882 = vmatmul.mubr.f32.gmra.mxu0 %v1577
        %v1883 = vpop.f32.mrf.mxu0
        %v1884 = vadd.f32 %v1774, %v1883
        %v1885 = vpop.f32.mrf.mxu0
        %1886 = vmatprep.mubr.f32.mxu0 %v1584
        %1887 = vmatmul.mubr.f32.gmra.mxu0 %v1583
        %v1888 = vpop.f32.mrf.mxu0
        %v1889 = vadd.f32 %v1779, %v1888
        %v1890 = vpop.f32.mrf.mxu0
        %1891 = vmatprep.mubr.f32.mxu0 %v1590
        %1892 = vmatmul.mubr.f32.gmra.mxu0 %v1589
        %v1893 = vpop.f32.mrf.mxu0
        %v1894 = vadd.f32 %v1784, %v1893
        %v1895 = vpop.f32.mrf.mxu0
        %1896 = vmatprep.mubr.f32.mxu0 %v1596
        %1897 = vmatmul.mubr.f32.gmra.mxu0 %v1595
        %v1898 = vpop.f32.mrf.mxu0
        %v1899 = vadd.f32 %v1789, %v1898
        %v1900 = vpop.f32.mrf.mxu0
        %1901 = vmatprep.mubr.f32.mxu0 %v1602
        %1902 = vmatmul.mubr.f32.gmra.mxu0 %v1601
        %v1903 = vpop.f32.mrf.mxu0
        %v1904 = vadd.f32 %v1794, %v1903
        %v1905 = vpop.f32.mrf.mxu0
        %1906 = vdwg.mxu0
        %1907 = vmatprep.subr.mxu0 0.0
        %1908 = vmatpush1.msra.mxu0 %v1549
        %1909 = vmatprep.subr.mxu0 0.0
        %1910 = vmatpush1.msra.mxu0 %v1548
        %1911 = vmatprep.subr.mxu0 0.0
        %1912 = vmatpush1.msra.mxu0 %v1547
        %1913 = vmatprep.subr.mxu0 0.0
        %1914 = vmatpush1.msra.mxu0 %v1546
        %1915 = vmatprep.subr.mxu0 0.0
        %1916 = vmatpush1.msra.mxu0 %v1545
        %1917 = vmatprep.subr.mxu0 0.0
        %1918 = vmatpush1.msra.mxu0 %v1544
        %1919 = vmatprep.subr.mxu0 0.0
        %1920 = vmatpush1.msra.mxu0 %v1543
        %1921 = vmatprep.subr.mxu0 0.0
        %1922 = vmatpush1.msra.mxu0 %v1542
        %1923 = vmatprep.subr.mxu0 0.0
        %1924 = vmatpush1.msra.mxu0 %v1522
        %1925 = vmatprep.subr.mxu0 0.0
        %1926 = vmatpush1.msra.mxu0 %v1521
        %1927 = vmatprep.subr.mxu0 0.0
        %1928 = vmatpush1.msra.mxu0 %v1520
        %1929 = vmatprep.subr.mxu0 0.0
        %1930 = vmatpush1.msra.mxu0 %v1519
        %1931 = vmatprep.subr.mxu0 0.0
        %1932 = vmatpush1.msra.mxu0 %v1518
        %1933 = vmatprep.subr.mxu0 0.0
        %1934 = vmatpush1.msra.mxu0 %v1517
        %1935 = vmatprep.subr.mxu0 0.0
        %1936 = vmatpush1.msra.mxu0 %v1516
        %1937 = vmatprep.subr.mxu0 0.0
        %1938 = vmatpush1.msra.mxu0 %v1515
        %1939 = vmatprep.subr.mxu0 0.0
        %1940 = vmatpush2.msra.mxu0 0.0
        %1941 = vmatprep.subr.mxu0 0.0
        %1942 = vmatpush2.msra.mxu0 0.0
        %1943 = vmatprep.subr.mxu0 0.0
        %1944 = vmatpush2.msra.mxu0 0.0
        %1945 = vmatprep.subr.mxu0 0.0
        %1946 = vmatpush2.msra.mxu0 0.0
        %1947 = vmatprep.subr.mxu0 0.0
        %1948 = vmatpush2.msra.mxu0 0.0
        %1949 = vmatprep.subr.mxu0 0.0
        %1950 = vmatpush2.msra.mxu0 0.0
        %1951 = vmatprep.subr.mxu0 0.0
        %1952 = vmatpush2.msra.mxu0 0.0
        %1953 = vmatprep.subr.mxu0 0.0
        %1954 = vmatpush2.msra.mxu0 0.0
        %1955 = vmatprep.subr.mxu0 0.0
        %1956 = vmatpush2.msra.mxu0 0.0
        %1957 = vmatprep.subr.mxu0 0.0
        %1958 = vmatpush2.msra.mxu0 0.0
        %1959 = vmatprep.subr.mxu0 0.0
        %1960 = vmatpush2.msra.mxu0 0.0
        %1961 = vmatprep.subr.mxu0 0.0
        %1962 = vmatpush2.msra.mxu0 0.0
        %1963 = vmatprep.subr.mxu0 0.0
        %1964 = vmatpush2.msra.mxu0 0.0
        %1965 = vmatprep.subr.mxu0 0.0
        %1966 = vmatpush2.msra.mxu0 0.0
        %1967 = vmatprep.subr.mxu0 0.0
        %1968 = vmatpush2.msra.mxu0 0.0
        %1969 = vmatprep.subr.mxu0 0.0
        %1970 = vmatpush2.msra.mxu0 %v1550
        %1971 = vmatprep.mubr.f32.mxu0 %v1661
        %1972 = vmatmul.mubr.f32.gmra.mxu0 %v1555
        %v1973 = vpop.f32.mrf.mxu0
        %v1974 = vadd.f32 %v1864, %v1973
        %v1975 = vpop.f32.mrf.mxu0
        %1976 = vmatprep.mubr.f32.mxu0 %v1664
        %1977 = vmatmul.mubr.f32.gmra.mxu0 %v1561
        %v1978 = vpop.f32.mrf.mxu0
        %v1979 = vadd.f32 %v1869, %v1978
        %v1980 = vpop.f32.mrf.mxu0
        %1981 = vmatprep.mubr.f32.mxu0 %v1667
        %1982 = vmatmul.mubr.f32.gmra.mxu0 %v1567
        %v1983 = vpop.f32.mrf.mxu0
        %v1984 = vadd.f32 %v1874, %v1983
        %v1985 = vpop.f32.mrf.mxu0
        %1986 = vmatprep.mubr.f32.mxu0 %v1670
        %1987 = vmatmul.mubr.f32.gmra.mxu0 %v1573
        %v1988 = vpop.f32.mrf.mxu0
        %v1989 = vadd.f32 %v1879, %v1988
        %v1990 = vpop.f32.mrf.mxu0
        %1991 = vmatprep.mubr.f32.mxu0 %v1673
        %1992 = vmatmul.mubr.f32.gmra.mxu0 %v1579
        %v1993 = vpop.f32.mrf.mxu0
        %v1994 = vadd.f32 %v1884, %v1993
        %v1995 = vpop.f32.mrf.mxu0
        %1996 = vmatprep.mubr.f32.mxu0 %v1676
        %1997 = vmatmul.mubr.f32.gmra.mxu0 %v1585
        %v1998 = vpop.f32.mrf.mxu0
        %v1999 = vadd.f32 %v1889, %v1998
        %v2000 = vpop.f32.mrf.mxu0
        %2001 = vmatprep.mubr.f32.mxu0 %v1679
        %2002 = vmatmul.mubr.f32.gmra.mxu0 %v1591
        %v2003 = vpop.f32.mrf.mxu0
        %v2004 = vadd.f32 %v1894, %v2003
        %v2005 = vpop.f32.mrf.mxu0
        %2006 = vmatprep.mubr.f32.mxu0 %v1682
        %2007 = vmatmul.mubr.f32.gmra.mxu0 %v1597
        %v2008 = vpop.f32.mrf.mxu0
        %v2009 = vadd.f32 %v1899, %v2008
        %v2010 = vpop.f32.mrf.mxu0
        %2011 = vmatprep.mubr.f32.mxu0 %v1685
        %2012 = vmatmul.mubr.f32.gmra.mxu0 %v1603
        %v2013 = vpop.f32.mrf.mxu0
        %v2014 = vadd.f32 %v1904, %v2013
        %v2015 = vpop.f32.mrf.mxu0
        %2016 = vdwg.mxu0
        %2017 = vadd.xlane.f32.xlu0 %v1974
        %v2018 = vpop.xlane.xlu0 %2017
        %2019 = vadd.xlane.f32.xlu0 %v1979
        %v2020 = vpop.xlane.xlu0 %2019
        %2021 = vadd.xlane.f32.xlu0 %v1984
        %v2022 = vpop.xlane.xlu0 %2021
        %2023 = vadd.xlane.f32.xlu0 %v1989
        %v2024 = vpop.xlane.xlu0 %2023
        %2025 = vadd.xlane.f32.xlu0 %v1994
        %v2026 = vpop.xlane.xlu0 %2025
        %2027 = vadd.xlane.f32.xlu0 %v1999
        %v2028 = vpop.xlane.xlu0 %2027
        %2029 = vadd.xlane.f32.xlu0 %v2004
        %v2030 = vpop.xlane.xlu0 %2029
        %2031 = vadd.xlane.f32.xlu0 %v2009
        %v2032 = vpop.xlane.xlu0 %2031
        %2033 = vadd.xlane.f32.xlu0 %v2014
        %v2034 = vpop.xlane.xlu0 %2033
        %v2035 = vmul.f32 %v2018, 0.0078125
        %v2036 = vmul.f32 %v2020, 0.0078125
        %v2037 = vmul.f32 %v2022, 0.0078125
        %v2038 = vmul.f32 %v2024, 0.0078125
        %v2039 = vmul.f32 %v2026, 0.0078125
        %v2040 = vmul.f32 %v2028, 0.0078125
        %v2041 = vmul.f32 %v2030, 0.0078125
        %v2042 = vmul.f32 %v2032, 0.0078125
        %v2043 = vmul.f32 %v2034, 0.0078125
        %v2044 = vmul.f32 %v1974, %v1974
        %v2045 = vmul.f32 %v1979, %v1979
        %v2046 = vmul.f32 %v1984, %v1984
        %v2047 = vmul.f32 %v1989, %v1989
        %v2048 = vmul.f32 %v1994, %v1994
        %v2049 = vmul.f32 %v1999, %v1999
        %v2050 = vmul.f32 %v2004, %v2004
        %v2051 = vmul.f32 %v2009, %v2009
        %v2052 = vmul.f32 %v2014, %v2014
        %2053 = vadd.xlane.f32.xlu0 %v2044
        %v2054 = vpop.xlane.xlu0 %2053
        %2055 = vadd.xlane.f32.xlu0 %v2045
        %v2056 = vpop.xlane.xlu0 %2055
        %2057 = vadd.xlane.f32.xlu0 %v2046
        %v2058 = vpop.xlane.xlu0 %2057
        %2059 = vadd.xlane.f32.xlu0 %v2047
        %v2060 = vpop.xlane.xlu0 %2059
        %2061 = vadd.xlane.f32.xlu0 %v2048
        %v2062 = vpop.xlane.xlu0 %2061
        %2063 = vadd.xlane.f32.xlu0 %v2049
        %v2064 = vpop.xlane.xlu0 %2063
        %2065 = vadd.xlane.f32.xlu0 %v2050
        %v2066 = vpop.xlane.xlu0 %2065
        %2067 = vadd.xlane.f32.xlu0 %v2051
        %v2068 = vpop.xlane.xlu0 %2067
        %2069 = vadd.xlane.f32.xlu0 %v2052
        %v2070 = vpop.xlane.xlu0 %2069
        %v2071 = vmul.f32 %v2054, 0.0078125
        %v2072 = vmul.f32 %v2056, 0.0078125
        %v2073 = vmul.f32 %v2058, 0.0078125
        %v2074 = vmul.f32 %v2060, 0.0078125
        %v2075 = vmul.f32 %v2062, 0.0078125
        %v2076 = vmul.f32 %v2064, 0.0078125
        %v2077 = vmul.f32 %v2066, 0.0078125
        %v2078 = vmul.f32 %v2068, 0.0078125
        %v2079 = vmul.f32 %v2070, 0.0078125
        %v2080 = vmul.f32 %v2035, %v2035
        %v2081 = vmul.f32 %v2036, %v2036
        %v2082 = vmul.f32 %v2037, %v2037
        %v2083 = vmul.f32 %v2038, %v2038
        %v2084 = vmul.f32 %v2039, %v2039
        %v2085 = vmul.f32 %v2040, %v2040
        %v2086 = vmul.f32 %v2041, %v2041
        %v2087 = vmul.f32 %v2042, %v2042
        %v2088 = vmul.f32 %v2043, %v2043
        %v2089 = vsub.f32 %v2071, %v2080
        %v2090 = vsub.f32 %v2072, %v2081
        %v2091 = vsub.f32 %v2073, %v2082
        %v2092 = vsub.f32 %v2074, %v2083
        %v2093 = vsub.f32 %v2075, %v2084
        %v2094 = vsub.f32 %v2076, %v2085
        %v2095 = vsub.f32 %v2077, %v2086
        %v2096 = vsub.f32 %v2078, %v2087
        %v2097 = vsub.f32 %v2079, %v2088
        %v2098 = vmax.f32 %v2089, 0.0
        %v2099 = vmax.f32 %v2090, 0.0
        %v2100 = vmax.f32 %v2091, 0.0
        %v2101 = vmax.f32 %v2092, 0.0
        %v2102 = vmax.f32 %v2093, 0.0
        %v2103 = vmax.f32 %v2094, 0.0
        %v2104 = vmax.f32 %v2095, 0.0
        %v2105 = vmax.f32 %v2096, 0.0
        %v2106 = vmax.f32 %v2097, 0.0
        %v2107 = vsub.f32 %v1974, %v2035
        %v2108 = vsub.f32 %v1979, %v2036
        %v2109 = vsub.f32 %v1984, %v2037
        %v2110 = vsub.f32 %v1989, %v2038
        %v2111 = vsub.f32 %v1994, %v2039
        %v2112 = vsub.f32 %v1999, %v2040
        %v2113 = vsub.f32 %v2004, %v2041
        %v2114 = vsub.f32 %v2009, %v2042
        %v2115 = vsub.f32 %v2014, %v2043
        %v2116 = vadd.f32 %v2098, 1e-05
        %v2117 = vadd.f32 %v2099, 1e-05
        %v2118 = vadd.f32 %v2100, 1e-05
        %v2119 = vadd.f32 %v2101, 1e-05
        %v2120 = vadd.f32 %v2102, 1e-05
        %v2121 = vadd.f32 %v2103, 1e-05
        %v2122 = vadd.f32 %v2104, 1e-05
        %v2123 = vadd.f32 %v2105, 1e-05
        %v2124 = vadd.f32 %v2106, 1e-05
        %v2125 = vrsqrt.pop %v2116
        %v2126 = vrsqrt.pop %v2117
        %v2127 = vrsqrt.pop %v2118
        %v2128 = vrsqrt.pop %v2119
        %v2129 = vrsqrt.pop %v2120
        %v2130 = vrsqrt.pop %v2121
        %v2131 = vrsqrt.pop %v2122
        %v2132 = vrsqrt.pop %v2123
        %v2133 = vrsqrt.pop %v2124
        %v2134 = vmul.f32 %v2107, %v2125
        %v2135 = vmul.f32 %v2108, %v2126
        %v2136 = vmul.f32 %v2109, %v2127
        %v2137 = vmul.f32 %v2110, %v2128
        %v2138 = vmul.f32 %v2111, %v2129
        %v2139 = vmul.f32 %v2112, %v2130
        %v2140 = vmul.f32 %v2113, %v2131
        %v2141 = vmul.f32 %v2114, %v2132
        %v2142 = vmul.f32 %v2115, %v2133
        %vm2143 = vcmp.gt.f32.partialorder %v2134, 0.0
        %vm2144 = vcmp.gt.f32.partialorder %v2135, 0.0
        %vm2145 = vcmp.gt.f32.partialorder %v2136, 0.0
        %vm2146 = vcmp.gt.f32.partialorder %v2137, 0.0
        %vm2147 = vcmp.gt.f32.partialorder %v2138, 0.0
        %vm2148 = vcmp.gt.f32.partialorder %v2139, 0.0
        %vm2149 = vcmp.gt.f32.partialorder %v2140, 0.0
        %vm2150 = vcmp.gt.f32.partialorder %v2141, 0.0
        %vm2151 = vcmp.gt.f32.partialorder %v2142, 0.0
        %v2152 = vstv %s1206
        %v2153 = vmul.f32 %v2134, %v2152
        %v2154 = vmul.f32 %v2135, %v2152
        %v2155 = vmul.f32 %v2136, %v2152
        %v2156 = vmul.f32 %v2137, %v2152
        %v2157 = vmul.f32 %v2138, %v2152
        %v2158 = vmul.f32 %v2139, %v2152
        %v2159 = vmul.f32 %v2140, %v2152
        %v2160 = vmul.f32 %v2141, %v2152
        %v2161 = vmul.f32 %v2142, %v2152
        %v2162 = vsel %vm2143, %v2134, %v2153
        %v2163 = vsel %vm2144, %v2135, %v2154
        %v2164 = vsel %vm2145, %v2136, %v2155
        %v2165 = vsel %vm2146, %v2137, %v2156
        %v2166 = vsel %vm2147, %v2138, %v2157
        %v2167 = vsel %vm2148, %v2139, %v2158
        %v2168 = vsel %vm2149, %v2140, %v2159
        %v2169 = vsel %vm2150, %v2141, %v2160
        %v2170 = vsel %vm2151, %v2142, %v2161
        %2171 = vrot.lane.b32.xlu0 %v2162, 2
        %v2172 = vpop.permute.xlu0 %2171
        %2173 = vrot.lane.b32.xlu0 %v2163, 2
        %v2174 = vpop.permute.xlu0 %2173
        %2175 = vrot.lane.b32.xlu0 %v2164, 2
        %v2176 = vpop.permute.xlu0 %2175
        %2177 = vrot.lane.b32.xlu0 %v2165, 2
        %v2178 = vpop.permute.xlu0 %2177
        %2179 = vrot.lane.b32.xlu0 %v2166, 2
        %v2180 = vpop.permute.xlu0 %2179
        %2181 = vrot.lane.b32.xlu0 %v2167, 2
        %v2182 = vpop.permute.xlu0 %2181
        %2183 = vrot.lane.b32.xlu0 %v2168, 2
        %v2184 = vpop.permute.xlu0 %2183
        %2185 = vrot.lane.b32.xlu0 %v2169, 2
        %v2186 = vpop.permute.xlu0 %2185
        %2187 = vrot.lane.b32.xlu0 %v2170, 2
        %v2188 = vpop.permute.xlu0 %2187
        %v2189 = vsel %vm814, %v2172, 0.0
        %v2190 = vsel %vm814, %v2174, 0.0
        %v2191 = vsel %vm814, %v2176, 0.0
        %v2192 = vsel %vm814, %v2178, 0.0
        %v2193 = vsel %vm814, %v2180, 0.0
        %v2194 = vsel %vm814, %v2182, 0.0
        %v2195 = vsel %vm814, %v2184, 0.0
        %v2196 = vsel %vm814, %v2186, 0.0
        %v2197 = vsel %vm814, %v2188, 0.0
        %2198 = vrot.lane.b32.xlu0 %v2162, 1
        %v2199 = vpop.permute.xlu0 %2198
        %2200 = vrot.lane.b32.xlu0 %v2163, 1
        %v2201 = vpop.permute.xlu0 %2200
        %2202 = vrot.lane.b32.xlu0 %v2164, 1
        %v2203 = vpop.permute.xlu0 %2202
        %2204 = vrot.lane.b32.xlu0 %v2165, 1
        %v2205 = vpop.permute.xlu0 %2204
        %2206 = vrot.lane.b32.xlu0 %v2166, 1
        %v2207 = vpop.permute.xlu0 %2206
        %2208 = vrot.lane.b32.xlu0 %v2167, 1
        %v2209 = vpop.permute.xlu0 %2208
        %2210 = vrot.lane.b32.xlu0 %v2168, 1
        %v2211 = vpop.permute.xlu0 %2210
        %2212 = vrot.lane.b32.xlu0 %v2169, 1
        %v2213 = vpop.permute.xlu0 %2212
        %2214 = vrot.lane.b32.xlu0 %v2170, 1
        %v2215 = vpop.permute.xlu0 %2214
        %v2216 = vsel %vm818, %v2199, 0.0
        %v2217 = vsel %vm818, %v2201, 0.0
        %v2218 = vsel %vm818, %v2203, 0.0
        %v2219 = vsel %vm818, %v2205, 0.0
        %v2220 = vsel %vm818, %v2207, 0.0
        %v2221 = vsel %vm818, %v2209, 0.0
        %v2222 = vsel %vm818, %v2211, 0.0
        %v2223 = vsel %vm818, %v2213, 0.0
        %v2224 = vsel %vm818, %v2215, 0.0
        %2225 = vrot.lane.b32.xlu0 %v2162, 127
        %v2226 = vpop.permute.xlu0 %2225
        %2227 = vrot.lane.b32.xlu0 %v2163, 127
        %v2228 = vpop.permute.xlu0 %2227
        %2229 = vrot.lane.b32.xlu0 %v2164, 127
        %v2230 = vpop.permute.xlu0 %2229
        %2231 = vrot.lane.b32.xlu0 %v2165, 127
        %v2232 = vpop.permute.xlu0 %2231
        %2233 = vrot.lane.b32.xlu0 %v2166, 127
        %v2234 = vpop.permute.xlu0 %2233
        %2235 = vrot.lane.b32.xlu0 %v2167, 127
        %v2236 = vpop.permute.xlu0 %2235
        %2237 = vrot.lane.b32.xlu0 %v2168, 127
        %v2238 = vpop.permute.xlu0 %2237
        %2239 = vrot.lane.b32.xlu0 %v2169, 127
        %v2240 = vpop.permute.xlu0 %2239
        %2241 = vrot.lane.b32.xlu0 %v2170, 127
        %v2242 = vpop.permute.xlu0 %2241
        %v2243 = vsel %vm822, %v2226, 0.0
        %v2244 = vsel %vm822, %v2228, 0.0
        %v2245 = vsel %vm822, %v2230, 0.0
        %v2246 = vsel %vm822, %v2232, 0.0
        %v2247 = vsel %vm822, %v2234, 0.0
        %v2248 = vsel %vm822, %v2236, 0.0
        %v2249 = vsel %vm822, %v2238, 0.0
        %v2250 = vsel %vm822, %v2240, 0.0
        %v2251 = vsel %vm822, %v2242, 0.0
        %2252 = vrot.lane.b32.xlu0 %v2162, 126
        %v2253 = vpop.permute.xlu0 %2252
        %2254 = vrot.lane.b32.xlu0 %v2163, 126
        %v2255 = vpop.permute.xlu0 %2254
        %2256 = vrot.lane.b32.xlu0 %v2164, 126
        %v2257 = vpop.permute.xlu0 %2256
        %2258 = vrot.lane.b32.xlu0 %v2165, 126
        %v2259 = vpop.permute.xlu0 %2258
        %2260 = vrot.lane.b32.xlu0 %v2166, 126
        %v2261 = vpop.permute.xlu0 %2260
        %2262 = vrot.lane.b32.xlu0 %v2167, 126
        %v2263 = vpop.permute.xlu0 %2262
        %2264 = vrot.lane.b32.xlu0 %v2168, 126
        %v2265 = vpop.permute.xlu0 %2264
        %2266 = vrot.lane.b32.xlu0 %v2169, 126
        %v2267 = vpop.permute.xlu0 %2266
        %2268 = vrot.lane.b32.xlu0 %v2170, 126
        %v2269 = vpop.permute.xlu0 %2268
        %v2270 = vsel %vm826, %v2253, 0.0
        %v2271 = vsel %vm826, %v2255, 0.0
        %v2272 = vsel %vm826, %v2257, 0.0
        %v2273 = vsel %vm826, %v2259, 0.0
        %v2274 = vsel %vm826, %v2261, 0.0
        %v2275 = vsel %vm826, %v2263, 0.0
        %v2276 = vsel %vm826, %v2265, 0.0
        %v2277 = vsel %vm826, %v2267, 0.0
        %v2278 = vsel %vm826, %v2269, 0.0
        %v2279 = vld [vmem:[%s7] sm:$0xff]
        %v2280 = vld [vmem:[%s7 + $0x8] sm:$0xff]
        %v2281 = vld [vmem:[%s7 + $0x10] sm:$0xff]
        %v2282 = vld [vmem:[%s7 + $0x18] sm:$0xff]
        %v2283 = vld [vmem:[%s7 + $0x20] sm:$0xff]
        %v2284 = vld [vmem:[%s7 + $0x28] sm:$0xff]
        %v2285 = vld [vmem:[%s7 + $0x30] sm:$0xff]
        %v2286 = vld [vmem:[%s7 + $0x38] sm:$0xff]
        %v2287 = vld [vmem:[%s7 + $0x40] sm:$0xff]
        %v2288 = vld [vmem:[%s7 + $0x48] sm:$0xff]
        %v2289 = vld [vmem:[%s7 + $0x50] sm:$0xff]
        %v2290 = vld [vmem:[%s7 + $0x58] sm:$0xff]
        %v2291 = vld [vmem:[%s7 + $0x60] sm:$0xff]
        %v2292 = vld [vmem:[%s7 + $0x68] sm:$0xff]
        %v2293 = vld [vmem:[%s7 + $0x70] sm:$0xff]
        %v2294 = vld [vmem:[%s7 + $0x78] sm:$0xff]
        %v2295 = vld [vmem:[%s7 + $0x80] sm:$0xff]
        %v2296 = vld [vmem:[%s7 + $0x88] sm:$0xff]
        %v2297 = vld [vmem:[%s7 + $0x90] sm:$0xff]
        %v2298 = vld [vmem:[%s7 + $0x98] sm:$0xff]
        %v2299 = vld [vmem:[%s7 + $0xa0] sm:$0xff]
        %v2300 = vld [vmem:[%s7 + $0xa8] sm:$0xff]
        %v2301 = vld [vmem:[%s7 + $0xb0] sm:$0xff]
        %v2302 = vld [vmem:[%s7 + $0xb8] sm:$0xff]
        %v2303 = vld [vmem:[%s7 + $0xc0] sm:$0xff]
        %v2304 = vld [vmem:[%s7 + $0xc8] sm:$0xff]
        %v2305 = vld [vmem:[%s7 + $0xd0] sm:$0xff]
        %v2306 = vld [vmem:[%s8] sm:$0xff]
        %v2307 = vld [vmem:[%s8 + $0x8] sm:$0xff]
        %v2308 = vld [vmem:[%s8 + $0x10] sm:$0xff]
        %v2309 = vld [vmem:[%s8 + $0x18] sm:$0xff]
        %v2310 = vld [vmem:[%s8 + $0x20] sm:$0xff]
        %v2311 = vld [vmem:[%s8 + $0x28] sm:$0xff]
        %v2312 = vld [vmem:[%s8 + $0x30] sm:$0xff]
        %v2313 = vld [vmem:[%s8 + $0x38] sm:$0xff]
        %v2314 = vld [vmem:[%s8 + $0x40] sm:$0xff]
        %2316 = vset.pattern.permute.xlu0 0
        %2317 = vperm.xlu0 %2316, %v2306
        %v2318 = vpop.permute.xlu0 %2317
        %2321 = vset.pattern.permute.xlu0 0
        %2322 = vperm.xlu0 %2321, %v2307
        %v2323 = vpop.permute.xlu0 %2322
        %2326 = vset.pattern.permute.xlu0 0
        %2327 = vperm.xlu0 %2326, %v2308
        %v2328 = vpop.permute.xlu0 %2327
        %2331 = vset.pattern.permute.xlu0 0
        %2332 = vperm.xlu0 %2331, %v2309
        %v2333 = vpop.permute.xlu0 %2332
        %2336 = vset.pattern.permute.xlu0 0
        %2337 = vperm.xlu0 %2336, %v2310
        %v2338 = vpop.permute.xlu0 %2337
        %2341 = vset.pattern.permute.xlu0 0
        %2342 = vperm.xlu0 %2341, %v2311
        %v2343 = vpop.permute.xlu0 %2342
        %2346 = vset.pattern.permute.xlu0 0
        %2347 = vperm.xlu0 %2346, %v2312
        %v2348 = vpop.permute.xlu0 %2347
        %2351 = vset.pattern.permute.xlu0 0
        %2352 = vperm.xlu0 %2351, %v2313
        %v2353 = vpop.permute.xlu0 %2352
        %2356 = vset.pattern.permute.xlu0 0
        %2357 = vperm.xlu0 %2356, %v2314
        %v2358 = vpop.permute.xlu0 %2357
        %vm2360 = vcmask 850944
        %v2362 = vsel %vm2360, %v2281, 0
        %v2365 = vsel %vm2360, %v2284, 0
        %v2368 = vsel %vm2360, %v2287, 0
        %v2371 = vsel %vm2360, %v2290, 0
        %v2374 = vsel %vm2360, %v2293, 0
        %v2377 = vsel %vm2360, %v2296, 0
        %v2380 = vsel %vm2360, %v2299, 0
        %v2383 = vsel %vm2360, %v2302, 0
        %v2386 = vsel %vm2360, %v2305, 0
        %2388 = vmatprep.subr.mxu0 0.0
        %2389 = vmatpush1.msra.mxu0 %v2222
        %2390 = vmatprep.subr.mxu0 0.0
        %2391 = vmatpush1.msra.mxu0 %v2221
        %2392 = vmatprep.subr.mxu0 0.0
        %2393 = vmatpush1.msra.mxu0 %v2220
        %2394 = vmatprep.subr.mxu0 0.0
        %2395 = vmatpush1.msra.mxu0 %v2219
        %2396 = vmatprep.subr.mxu0 0.0
        %2397 = vmatpush1.msra.mxu0 %v2218
        %2398 = vmatprep.subr.mxu0 0.0
        %2399 = vmatpush1.msra.mxu0 %v2217
        %2400 = vmatprep.subr.mxu0 0.0
        %2401 = vmatpush1.msra.mxu0 %v2216
        %2402 = vmatprep.subr.mxu0 0.0
        %2403 = vmatpush1.msra.mxu0 %v2197
        %2404 = vmatprep.subr.mxu0 0.0
        %2405 = vmatpush1.msra.mxu0 %v2196
        %2406 = vmatprep.subr.mxu0 0.0
        %2407 = vmatpush1.msra.mxu0 %v2195
        %2408 = vmatprep.subr.mxu0 0.0
        %2409 = vmatpush1.msra.mxu0 %v2194
        %2410 = vmatprep.subr.mxu0 0.0
        %2411 = vmatpush1.msra.mxu0 %v2193
        %2412 = vmatprep.subr.mxu0 0.0
        %2413 = vmatpush1.msra.mxu0 %v2192
        %2414 = vmatprep.subr.mxu0 0.0
        %2415 = vmatpush1.msra.mxu0 %v2191
        %2416 = vmatprep.subr.mxu0 0.0
        %2417 = vmatpush1.msra.mxu0 %v2190
        %2418 = vmatprep.subr.mxu0 0.0
        %2419 = vmatpush1.msra.mxu0 %v2189
        %2420 = vmatprep.subr.mxu0 0.0
        %2421 = vmatpush2.msra.mxu0 %v2247
        %2422 = vmatprep.subr.mxu0 0.0
        %2423 = vmatpush2.msra.mxu0 %v2246
        %2424 = vmatprep.subr.mxu0 0.0
        %2425 = vmatpush2.msra.mxu0 %v2245
        %2426 = vmatprep.subr.mxu0 0.0
        %2427 = vmatpush2.msra.mxu0 %v2244
        %2428 = vmatprep.subr.mxu0 0.0
        %2429 = vmatpush2.msra.mxu0 %v2243
        %2430 = vmatprep.subr.mxu0 0.0
        %2431 = vmatpush2.msra.mxu0 %v2170
        %2432 = vmatprep.subr.mxu0 0.0
        %2433 = vmatpush2.msra.mxu0 %v2169
        %2434 = vmatprep.subr.mxu0 0.0
        %2435 = vmatpush2.msra.mxu0 %v2168
        %2436 = vmatprep.subr.mxu0 0.0
        %2437 = vmatpush2.msra.mxu0 %v2167
        %2438 = vmatprep.subr.mxu0 0.0
        %2439 = vmatpush2.msra.mxu0 %v2166
        %2440 = vmatprep.subr.mxu0 0.0
        %2441 = vmatpush2.msra.mxu0 %v2165
        %2442 = vmatprep.subr.mxu0 0.0
        %2443 = vmatpush2.msra.mxu0 %v2164
        %2444 = vmatprep.subr.mxu0 0.0
        %2445 = vmatpush2.msra.mxu0 %v2163
        %2446 = vmatprep.subr.mxu0 0.0
        %2447 = vmatpush2.msra.mxu0 %v2162
        %2448 = vmatprep.subr.mxu0 0.0
        %2449 = vmatpush2.msra.mxu0 %v2224
        %2450 = vmatprep.subr.mxu0 0.0
        %2451 = vmatpush2.msra.mxu0 %v2223
        %2452 = vmatprep.mubr.f32.mxu0 %v2280
        %2453 = vmatmul.mubr.f32.gmra.mxu0 %v2279
        %v2454 = vpop.f32.mrf.mxu0
        %v2455 = vadd.f32 %v2318, %v2454
        %v2456 = vpop.f32.mrf.mxu0
        %2457 = vmatprep.mubr.f32.mxu0 %v2283
        %2458 = vmatmul.mubr.f32.gmra.mxu0 %v2282
        %v2459 = vpop.f32.mrf.mxu0
        %v2460 = vadd.f32 %v2323, %v2459
        %v2461 = vpop.f32.mrf.mxu0
        %2462 = vmatprep.mubr.f32.mxu0 %v2286
        %2463 = vmatmul.mubr.f32.gmra.mxu0 %v2285
        %v2464 = vpop.f32.mrf.mxu0
        %v2465 = vadd.f32 %v2328, %v2464
        %v2466 = vpop.f32.mrf.mxu0
        %2467 = vmatprep.mubr.f32.mxu0 %v2289
        %2468 = vmatmul.mubr.f32.gmra.mxu0 %v2288
        %v2469 = vpop.f32.mrf.mxu0
        %v2470 = vadd.f32 %v2333, %v2469
        %v2471 = vpop.f32.mrf.mxu0
        %2472 = vmatprep.mubr.f32.mxu0 %v2292
        %2473 = vmatmul.mubr.f32.gmra.mxu0 %v2291
        %v2474 = vpop.f32.mrf.mxu0
        %v2475 = vadd.f32 %v2338, %v2474
        %v2476 = vpop.f32.mrf.mxu0
        %2477 = vmatprep.mubr.f32.mxu0 %v2295
        %2478 = vmatmul.mubr.f32.gmra.mxu0 %v2294
        %v2479 = vpop.f32.mrf.mxu0
        %v2480 = vadd.f32 %v2343, %v2479
        %v2481 = vpop.f32.mrf.mxu0
        %2482 = vmatprep.mubr.f32.mxu0 %v2298
        %2483 = vmatmul.mubr.f32.gmra.mxu0 %v2297
        %v2484 = vpop.f32.mrf.mxu0
        %v2485 = vadd.f32 %v2348, %v2484
        %v2486 = vpop.f32.mrf.mxu0
        %2487 = vmatprep.mubr.f32.mxu0 %v2301
        %2488 = vmatmul.mubr.f32.gmra.mxu0 %v2300
        %v2489 = vpop.f32.mrf.mxu0
        %v2490 = vadd.f32 %v2353, %v2489
        %v2491 = vpop.f32.mrf.mxu0
        %2492 = vmatprep.mubr.f32.mxu0 %v2304
        %2493 = vmatmul.mubr.f32.gmra.mxu0 %v2303
        %v2494 = vpop.f32.mrf.mxu0
        %v2495 = vadd.f32 %v2358, %v2494
        %v2496 = vpop.f32.mrf.mxu0
        %2497 = vdwg.mxu0
        %2498 = vmatprep.subr.mxu0 0.0
        %2499 = vmatpush1.msra.mxu0 0.0
        %2500 = vmatprep.subr.mxu0 0.0
        %2501 = vmatpush1.msra.mxu0 0.0
        %2502 = vmatprep.subr.mxu0 0.0
        %2503 = vmatpush1.msra.mxu0 0.0
        %2504 = vmatprep.subr.mxu0 0.0
        %2505 = vmatpush1.msra.mxu0 %v2278
        %2506 = vmatprep.subr.mxu0 0.0
        %2507 = vmatpush1.msra.mxu0 %v2277
        %2508 = vmatprep.subr.mxu0 0.0
        %2509 = vmatpush1.msra.mxu0 %v2276
        %2510 = vmatprep.subr.mxu0 0.0
        %2511 = vmatpush1.msra.mxu0 %v2275
        %2512 = vmatprep.subr.mxu0 0.0
        %2513 = vmatpush1.msra.mxu0 %v2274
        %2514 = vmatprep.subr.mxu0 0.0
        %2515 = vmatpush1.msra.mxu0 %v2273
        %2516 = vmatprep.subr.mxu0 0.0
        %2517 = vmatpush1.msra.mxu0 %v2272
        %2518 = vmatprep.subr.mxu0 0.0
        %2519 = vmatpush1.msra.mxu0 %v2271
        %2520 = vmatprep.subr.mxu0 0.0
        %2521 = vmatpush1.msra.mxu0 %v2270
        %2522 = vmatprep.subr.mxu0 0.0
        %2523 = vmatpush1.msra.mxu0 %v2251
        %2524 = vmatprep.subr.mxu0 0.0
        %2525 = vmatpush1.msra.mxu0 %v2250
        %2526 = vmatprep.subr.mxu0 0.0
        %2527 = vmatpush1.msra.mxu0 %v2249
        %2528 = vmatprep.subr.mxu0 0.0
        %2529 = vmatpush1.msra.mxu0 %v2248
        %2530 = vmatprep.subr.mxu0 0.0
        %2531 = vmatpush2.msra.mxu0 0.0
        %2532 = vmatprep.subr.mxu0 0.0
        %2533 = vmatpush2.msra.mxu0 0.0
        %2534 = vmatprep.subr.mxu0 0.0
        %2535 = vmatpush2.msra.mxu0 0.0
        %2536 = vmatprep.subr.mxu0 0.0
        %2537 = vmatpush2.msra.mxu0 0.0
        %2538 = vmatprep.subr.mxu0 0.0
        %2539 = vmatpush2.msra.mxu0 0.0
        %2540 = vmatprep.subr.mxu0 0.0
        %2541 = vmatpush2.msra.mxu0 0.0
        %2542 = vmatprep.subr.mxu0 0.0
        %2543 = vmatpush2.msra.mxu0 0.0
        %2544 = vmatprep.subr.mxu0 0.0
        %2545 = vmatpush2.msra.mxu0 0.0
        %2546 = vmatprep.subr.mxu0 0.0
        %2547 = vmatpush2.msra.mxu0 0.0
        %2548 = vmatprep.subr.mxu0 0.0
        %2549 = vmatpush2.msra.mxu0 0.0
        %2550 = vmatprep.subr.mxu0 0.0
        %2551 = vmatpush2.msra.mxu0 0.0
        %2552 = vmatprep.subr.mxu0 0.0
        %2553 = vmatpush2.msra.mxu0 0.0
        %2554 = vmatprep.subr.mxu0 0.0
        %2555 = vmatpush2.msra.mxu0 0.0
        %2556 = vmatprep.subr.mxu0 0.0
        %2557 = vmatpush2.msra.mxu0 0.0
        %2558 = vmatprep.subr.mxu0 0.0
        %2559 = vmatpush2.msra.mxu0 0.0
        %2560 = vmatprep.subr.mxu0 0.0
        %2561 = vmatpush2.msra.mxu0 0.0
        %2562 = vmatprep.mubr.f32.mxu0 0.0
        %2563 = vmatmul.mubr.f32.gmra.mxu0 %v2362
        %v2564 = vpop.f32.mrf.mxu0
        %v2565 = vadd.f32 %v2455, %v2564
        %v2566 = vpop.f32.mrf.mxu0
        %2567 = vmatprep.mubr.f32.mxu0 0.0
        %2568 = vmatmul.mubr.f32.gmra.mxu0 %v2365
        %v2569 = vpop.f32.mrf.mxu0
        %v2570 = vadd.f32 %v2460, %v2569
        %v2571 = vpop.f32.mrf.mxu0
        %2572 = vmatprep.mubr.f32.mxu0 0.0
        %2573 = vmatmul.mubr.f32.gmra.mxu0 %v2368
        %v2574 = vpop.f32.mrf.mxu0
        %v2575 = vadd.f32 %v2465, %v2574
        %v2576 = vpop.f32.mrf.mxu0
        %2577 = vmatprep.mubr.f32.mxu0 0.0
        %2578 = vmatmul.mubr.f32.gmra.mxu0 %v2371
        %v2579 = vpop.f32.mrf.mxu0
        %v2580 = vadd.f32 %v2470, %v2579
        %v2581 = vpop.f32.mrf.mxu0
        %2582 = vmatprep.mubr.f32.mxu0 0.0
        %2583 = vmatmul.mubr.f32.gmra.mxu0 %v2374
        %v2584 = vpop.f32.mrf.mxu0
        %v2585 = vadd.f32 %v2475, %v2584
        %v2586 = vpop.f32.mrf.mxu0
        %2587 = vmatprep.mubr.f32.mxu0 0.0
        %2588 = vmatmul.mubr.f32.gmra.mxu0 %v2377
        %v2589 = vpop.f32.mrf.mxu0
        %v2590 = vadd.f32 %v2480, %v2589
        %v2591 = vpop.f32.mrf.mxu0
        %2592 = vmatprep.mubr.f32.mxu0 0.0
        %2593 = vmatmul.mubr.f32.gmra.mxu0 %v2380
        %v2594 = vpop.f32.mrf.mxu0
        %v2595 = vadd.f32 %v2485, %v2594
        %v2596 = vpop.f32.mrf.mxu0
        %2597 = vmatprep.mubr.f32.mxu0 0.0
        %2598 = vmatmul.mubr.f32.gmra.mxu0 %v2383
        %v2599 = vpop.f32.mrf.mxu0
        %v2600 = vadd.f32 %v2490, %v2599
        %v2601 = vpop.f32.mrf.mxu0
        %2602 = vmatprep.mubr.f32.mxu0 0.0
        %2603 = vmatmul.mubr.f32.gmra.mxu0 %v2386
        %v2604 = vpop.f32.mrf.mxu0
        %v2605 = vadd.f32 %v2495, %v2604
        %v2606 = vpop.f32.mrf.mxu0
        %2607 = vdwg.mxu0
        %2608 = vadd.xlane.f32.xlu0 %v2565
        %v2609 = vpop.xlane.xlu0 %2608
        %2610 = vadd.xlane.f32.xlu0 %v2570
        %v2611 = vpop.xlane.xlu0 %2610
        %2612 = vadd.xlane.f32.xlu0 %v2575
        %v2613 = vpop.xlane.xlu0 %2612
        %2614 = vadd.xlane.f32.xlu0 %v2580
        %v2615 = vpop.xlane.xlu0 %2614
        %2616 = vadd.xlane.f32.xlu0 %v2585
        %v2617 = vpop.xlane.xlu0 %2616
        %2618 = vadd.xlane.f32.xlu0 %v2590
        %v2619 = vpop.xlane.xlu0 %2618
        %2620 = vadd.xlane.f32.xlu0 %v2595
        %v2621 = vpop.xlane.xlu0 %2620
        %2622 = vadd.xlane.f32.xlu0 %v2600
        %v2623 = vpop.xlane.xlu0 %2622
        %2624 = vadd.xlane.f32.xlu0 %v2605
        %v2625 = vpop.xlane.xlu0 %2624
        %v2626 = vmul.f32 %v2609, 0.0078125
        %v2627 = vmul.f32 %v2611, 0.0078125
        %v2628 = vmul.f32 %v2613, 0.0078125
        %v2629 = vmul.f32 %v2615, 0.0078125
        %v2630 = vmul.f32 %v2617, 0.0078125
        %v2631 = vmul.f32 %v2619, 0.0078125
        %v2632 = vmul.f32 %v2621, 0.0078125
        %v2633 = vmul.f32 %v2623, 0.0078125
        %v2634 = vmul.f32 %v2625, 0.0078125
        %v2635 = vmul.f32 %v2565, %v2565
        %v2636 = vmul.f32 %v2570, %v2570
        %v2637 = vmul.f32 %v2575, %v2575
        %v2638 = vmul.f32 %v2580, %v2580
        %v2639 = vmul.f32 %v2585, %v2585
        %v2640 = vmul.f32 %v2590, %v2590
        %v2641 = vmul.f32 %v2595, %v2595
        %v2642 = vmul.f32 %v2600, %v2600
        %v2643 = vmul.f32 %v2605, %v2605
        %2644 = vadd.xlane.f32.xlu0 %v2635
        %v2645 = vpop.xlane.xlu0 %2644
        %2646 = vadd.xlane.f32.xlu0 %v2636
        %v2647 = vpop.xlane.xlu0 %2646
        %2648 = vadd.xlane.f32.xlu0 %v2637
        %v2649 = vpop.xlane.xlu0 %2648
        %2650 = vadd.xlane.f32.xlu0 %v2638
        %v2651 = vpop.xlane.xlu0 %2650
        %2652 = vadd.xlane.f32.xlu0 %v2639
        %v2653 = vpop.xlane.xlu0 %2652
        %2654 = vadd.xlane.f32.xlu0 %v2640
        %v2655 = vpop.xlane.xlu0 %2654
        %2656 = vadd.xlane.f32.xlu0 %v2641
        %v2657 = vpop.xlane.xlu0 %2656
        %2658 = vadd.xlane.f32.xlu0 %v2642
        %v2659 = vpop.xlane.xlu0 %2658
        %2660 = vadd.xlane.f32.xlu0 %v2643
        %v2661 = vpop.xlane.xlu0 %2660
        %v2662 = vmul.f32 %v2645, 0.0078125
        %v2663 = vmul.f32 %v2647, 0.0078125
        %v2664 = vmul.f32 %v2649, 0.0078125
        %v2665 = vmul.f32 %v2651, 0.0078125
        %v2666 = vmul.f32 %v2653, 0.0078125
        %v2667 = vmul.f32 %v2655, 0.0078125
        %v2668 = vmul.f32 %v2657, 0.0078125
        %v2669 = vmul.f32 %v2659, 0.0078125
        %v2670 = vmul.f32 %v2661, 0.0078125
        %v2671 = vmul.f32 %v2626, %v2626
        %v2672 = vmul.f32 %v2627, %v2627
        %v2673 = vmul.f32 %v2628, %v2628
        %v2674 = vmul.f32 %v2629, %v2629
        %v2675 = vmul.f32 %v2630, %v2630
        %v2676 = vmul.f32 %v2631, %v2631
        %v2677 = vmul.f32 %v2632, %v2632
        %v2678 = vmul.f32 %v2633, %v2633
        %v2679 = vmul.f32 %v2634, %v2634
        %v2680 = vsub.f32 %v2662, %v2671
        %v2681 = vsub.f32 %v2663, %v2672
        %v2682 = vsub.f32 %v2664, %v2673
        %v2683 = vsub.f32 %v2665, %v2674
        %v2684 = vsub.f32 %v2666, %v2675
        %v2685 = vsub.f32 %v2667, %v2676
        %v2686 = vsub.f32 %v2668, %v2677
        %v2687 = vsub.f32 %v2669, %v2678
        %v2688 = vsub.f32 %v2670, %v2679
        %v2689 = vmax.f32 %v2680, 0.0
        %v2690 = vmax.f32 %v2681, 0.0
        %v2691 = vmax.f32 %v2682, 0.0
        %v2692 = vmax.f32 %v2683, 0.0
        %v2693 = vmax.f32 %v2684, 0.0
        %v2694 = vmax.f32 %v2685, 0.0
        %v2695 = vmax.f32 %v2686, 0.0
        %v2696 = vmax.f32 %v2687, 0.0
        %v2697 = vmax.f32 %v2688, 0.0
        %v2698 = vsub.f32 %v2565, %v2626
        %v2699 = vsub.f32 %v2570, %v2627
        %v2700 = vsub.f32 %v2575, %v2628
        %v2701 = vsub.f32 %v2580, %v2629
        %v2702 = vsub.f32 %v2585, %v2630
        %v2703 = vsub.f32 %v2590, %v2631
        %v2704 = vsub.f32 %v2595, %v2632
        %v2705 = vsub.f32 %v2600, %v2633
        %v2706 = vsub.f32 %v2605, %v2634
        %v2707 = vadd.f32 %v2689, 1e-05
        %v2708 = vadd.f32 %v2690, 1e-05
        %v2709 = vadd.f32 %v2691, 1e-05
        %v2710 = vadd.f32 %v2692, 1e-05
        %v2711 = vadd.f32 %v2693, 1e-05
        %v2712 = vadd.f32 %v2694, 1e-05
        %v2713 = vadd.f32 %v2695, 1e-05
        %v2714 = vadd.f32 %v2696, 1e-05
        %v2715 = vadd.f32 %v2697, 1e-05
        %v2716 = vrsqrt.pop %v2707
        %v2717 = vrsqrt.pop %v2708
        %v2718 = vrsqrt.pop %v2709
        %v2719 = vrsqrt.pop %v2710
        %v2720 = vrsqrt.pop %v2711
        %v2721 = vrsqrt.pop %v2712
        %v2722 = vrsqrt.pop %v2713
        %v2723 = vrsqrt.pop %v2714
        %v2724 = vrsqrt.pop %v2715
        %v2725 = vmul.f32 %v2698, %v2716
        %v2726 = vmul.f32 %v2699, %v2717
        %v2727 = vmul.f32 %v2700, %v2718
        %v2728 = vmul.f32 %v2701, %v2719
        %v2729 = vmul.f32 %v2702, %v2720
        %v2730 = vmul.f32 %v2703, %v2721
        %v2731 = vmul.f32 %v2704, %v2722
        %v2732 = vmul.f32 %v2705, %v2723
        %v2733 = vmul.f32 %v2706, %v2724
        %vm2734 = vcmp.gt.f32.partialorder %v2725, 0.0
        %vm2735 = vcmp.gt.f32.partialorder %v2726, 0.0
        %vm2736 = vcmp.gt.f32.partialorder %v2727, 0.0
        %vm2737 = vcmp.gt.f32.partialorder %v2728, 0.0
        %vm2738 = vcmp.gt.f32.partialorder %v2729, 0.0
        %vm2739 = vcmp.gt.f32.partialorder %v2730, 0.0
        %vm2740 = vcmp.gt.f32.partialorder %v2731, 0.0
        %vm2741 = vcmp.gt.f32.partialorder %v2732, 0.0
        %vm2742 = vcmp.gt.f32.partialorder %v2733, 0.0
        %v2743 = vmul.f32 %v2725, %v2152
        %v2744 = vmul.f32 %v2726, %v2152
        %v2745 = vmul.f32 %v2727, %v2152
        %v2746 = vmul.f32 %v2728, %v2152
        %v2747 = vmul.f32 %v2729, %v2152
        %v2748 = vmul.f32 %v2730, %v2152
        %v2749 = vmul.f32 %v2731, %v2152
        %v2750 = vmul.f32 %v2732, %v2152
        %v2751 = vmul.f32 %v2733, %v2152
        %v2752 = vsel %vm2734, %v2725, %v2743
        %v2753 = vsel %vm2735, %v2726, %v2744
        %v2754 = vsel %vm2736, %v2727, %v2745
        %v2755 = vsel %vm2737, %v2728, %v2746
        %v2756 = vsel %vm2738, %v2729, %v2747
        %v2757 = vsel %vm2739, %v2730, %v2748
        %v2758 = vsel %vm2740, %v2731, %v2749
        %v2759 = vsel %vm2741, %v2732, %v2750
        %v2760 = vsel %vm2742, %v2733, %v2751
        %2761 = vrot.lane.b32.xlu0 %v2752, 1
        %v2762 = vpop.permute.xlu0 %2761
        %2763 = vrot.lane.b32.xlu0 %v2753, 1
        %v2764 = vpop.permute.xlu0 %2763
        %2765 = vrot.lane.b32.xlu0 %v2754, 1
        %v2766 = vpop.permute.xlu0 %2765
        %2767 = vrot.lane.b32.xlu0 %v2755, 1
        %v2768 = vpop.permute.xlu0 %2767
        %2769 = vrot.lane.b32.xlu0 %v2756, 1
        %v2770 = vpop.permute.xlu0 %2769
        %2771 = vrot.lane.b32.xlu0 %v2757, 1
        %v2772 = vpop.permute.xlu0 %2771
        %2773 = vrot.lane.b32.xlu0 %v2758, 1
        %v2774 = vpop.permute.xlu0 %2773
        %2775 = vrot.lane.b32.xlu0 %v2759, 1
        %v2776 = vpop.permute.xlu0 %2775
        %2777 = vrot.lane.b32.xlu0 %v2760, 1
        %v2778 = vpop.permute.xlu0 %2777
        %v2779 = vsel %vm818, %v2762, 0.0
        %v2780 = vsel %vm818, %v2764, 0.0
        %v2781 = vsel %vm818, %v2766, 0.0
        %v2782 = vsel %vm818, %v2768, 0.0
        %v2783 = vsel %vm818, %v2770, 0.0
        %v2784 = vsel %vm818, %v2772, 0.0
        %v2785 = vsel %vm818, %v2774, 0.0
        %v2786 = vsel %vm818, %v2776, 0.0
        %v2787 = vsel %vm818, %v2778, 0.0
        %2788 = vrot.lane.b32.xlu0 %v2752, 127
        %v2789 = vpop.permute.xlu0 %2788
        %2790 = vrot.lane.b32.xlu0 %v2753, 127
        %v2791 = vpop.permute.xlu0 %2790
        %2792 = vrot.lane.b32.xlu0 %v2754, 127
        %v2793 = vpop.permute.xlu0 %2792
        %2794 = vrot.lane.b32.xlu0 %v2755, 127
        %v2795 = vpop.permute.xlu0 %2794
        %2796 = vrot.lane.b32.xlu0 %v2756, 127
        %v2797 = vpop.permute.xlu0 %2796
        %2798 = vrot.lane.b32.xlu0 %v2757, 127
        %v2799 = vpop.permute.xlu0 %2798
        %2800 = vrot.lane.b32.xlu0 %v2758, 127
        %v2801 = vpop.permute.xlu0 %2800
        %2802 = vrot.lane.b32.xlu0 %v2759, 127
        %v2803 = vpop.permute.xlu0 %2802
        %2804 = vrot.lane.b32.xlu0 %v2760, 127
        %v2805 = vpop.permute.xlu0 %2804
        %v2806 = vsel %vm822, %v2789, 0.0
        %v2807 = vsel %vm822, %v2791, 0.0
        %v2808 = vsel %vm822, %v2793, 0.0
        %v2809 = vsel %vm822, %v2795, 0.0
        %v2810 = vsel %vm822, %v2797, 0.0
        %v2811 = vsel %vm822, %v2799, 0.0
        %v2812 = vsel %vm822, %v2801, 0.0
        %v2813 = vsel %vm822, %v2803, 0.0
        %v2814 = vsel %vm822, %v2805, 0.0
        %v2815 = vld [vmem:[%s9] sm:$0xff]
        %v2816 = vld [vmem:[%s9 + $0x8] sm:$0xff]
        %v2817 = vld [vmem:[%s9 + $0x10] sm:$0xff]
        %v2818 = vld [vmem:[%s9 + $0x18] sm:$0xff]
        %v2819 = vld [vmem:[%s9 + $0x20] sm:$0xff]
        %v2820 = vld [vmem:[%s9 + $0x28] sm:$0xff]
        %v2821 = vld [vmem:[%s9 + $0x30] sm:$0xff]
        %v2822 = vld [vmem:[%s9 + $0x38] sm:$0xff]
        %v2823 = vld [vmem:[%s9 + $0x40] sm:$0xff]
        %v2824 = vld [vmem:[%s9 + $0x48] sm:$0xff]
        %v2825 = vld [vmem:[%s9 + $0x50] sm:$0xff]
        %v2826 = vld [vmem:[%s9 + $0x58] sm:$0xff]
        %v2827 = vld [vmem:[%s9 + $0x60] sm:$0xff]
        %v2828 = vld [vmem:[%s9 + $0x68] sm:$0xff]
        %v2829 = vld [vmem:[%s9 + $0x70] sm:$0xff]
        %v2830 = vld [vmem:[%s9 + $0x78] sm:$0xff]
        %v2831 = vld [vmem:[%s9 + $0x80] sm:$0xff]
        %v2832 = vld [vmem:[%s9 + $0x88] sm:$0xff]
        %v2833 = vld [vmem:[%s10] sm:$0xff]
        %v2834 = vld [vmem:[%s10 + $0x8] sm:$0xff]
        %v2835 = vld [vmem:[%s10 + $0x10] sm:$0xff]
        %v2836 = vld [vmem:[%s10 + $0x18] sm:$0xff]
        %v2837 = vld [vmem:[%s10 + $0x20] sm:$0xff]
        %v2838 = vld [vmem:[%s10 + $0x28] sm:$0xff]
        %v2839 = vld [vmem:[%s10 + $0x30] sm:$0xff]
        %v2840 = vld [vmem:[%s10 + $0x38] sm:$0xff]
        %v2841 = vld [vmem:[%s10 + $0x40] sm:$0xff]
        %2843 = vset.pattern.permute.xlu0 0
        %2844 = vperm.xlu0 %2843, %v2833
        %v2845 = vpop.permute.xlu0 %2844
        %2848 = vset.pattern.permute.xlu0 0
        %2849 = vperm.xlu0 %2848, %v2834
        %v2850 = vpop.permute.xlu0 %2849
        %2853 = vset.pattern.permute.xlu0 0
        %2854 = vperm.xlu0 %2853, %v2835
        %v2855 = vpop.permute.xlu0 %2854
        %2858 = vset.pattern.permute.xlu0 0
        %2859 = vperm.xlu0 %2858, %v2836
        %v2860 = vpop.permute.xlu0 %2859
        %2863 = vset.pattern.permute.xlu0 0
        %2864 = vperm.xlu0 %2863, %v2837
        %v2865 = vpop.permute.xlu0 %2864
        %2868 = vset.pattern.permute.xlu0 0
        %2869 = vperm.xlu0 %2868, %v2838
        %v2870 = vpop.permute.xlu0 %2869
        %2873 = vset.pattern.permute.xlu0 0
        %2874 = vperm.xlu0 %2873, %v2839
        %v2875 = vpop.permute.xlu0 %2874
        %2878 = vset.pattern.permute.xlu0 0
        %2879 = vperm.xlu0 %2878, %v2840
        %v2880 = vpop.permute.xlu0 %2879
        %2883 = vset.pattern.permute.xlu0 0
        %2884 = vperm.xlu0 %2883, %v2841
        %v2885 = vpop.permute.xlu0 %2884
        %vm2887 = vcmask 719872
        %v2889 = vsel %vm2887, %v2816, 0
        %v2892 = vsel %vm2887, %v2818, 0
        %v2895 = vsel %vm2887, %v2820, 0
        %v2898 = vsel %vm2887, %v2822, 0
        %v2901 = vsel %vm2887, %v2824, 0
        %v2904 = vsel %vm2887, %v2826, 0
        %v2907 = vsel %vm2887, %v2828, 0
        %v2910 = vsel %vm2887, %v2830, 0
        %v2913 = vsel %vm2887, %v2832, 0
        %2915 = vmatprep.subr.mxu0 0.0
        %2916 = vmatpush1.msra.mxu0 %v2758
        %2917 = vmatprep.subr.mxu0 0.0
        %2918 = vmatpush1.msra.mxu0 %v2757
        %2919 = vmatprep.subr.mxu0 0.0
        %2920 = vmatpush1.msra.mxu0 %v2756
        %2921 = vmatprep.subr.mxu0 0.0
        %2922 = vmatpush1.msra.mxu0 %v2755
        %2923 = vmatprep.subr.mxu0 0.0
        %2924 = vmatpush1.msra.mxu0 %v2754
        %2925 = vmatprep.subr.mxu0 0.0
        %2926 = vmatpush1.msra.mxu0 %v2753
        %2927 = vmatprep.subr.mxu0 0.0
        %2928 = vmatpush1.msra.mxu0 %v2752
        %2929 = vmatprep.subr.mxu0 0.0
        %2930 = vmatpush1.msra.mxu0 %v2787
        %2931 = vmatprep.subr.mxu0 0.0
        %2932 = vmatpush1.msra.mxu0 %v2786
        %2933 = vmatprep.subr.mxu0 0.0
        %2934 = vmatpush1.msra.mxu0 %v2785
        %2935 = vmatprep.subr.mxu0 0.0
        %2936 = vmatpush1.msra.mxu0 %v2784
        %2937 = vmatprep.subr.mxu0 0.0
        %2938 = vmatpush1.msra.mxu0 %v2783
        %2939 = vmatprep.subr.mxu0 0.0
        %2940 = vmatpush1.msra.mxu0 %v2782
        %2941 = vmatprep.subr.mxu0 0.0
        %2942 = vmatpush1.msra.mxu0 %v2781
        %2943 = vmatprep.subr.mxu0 0.0
        %2944 = vmatpush1.msra.mxu0 %v2780
        %2945 = vmatprep.subr.mxu0 0.0
        %2946 = vmatpush1.msra.mxu0 %v2779
        %2947 = vmatprep.subr.mxu0 0.0
        %2948 = vmatpush2.msra.mxu0 0.0
        %2949 = vmatprep.subr.mxu0 0.0
        %2950 = vmatpush2.msra.mxu0 0.0
        %2951 = vmatprep.subr.mxu0 0.0
        %2952 = vmatpush2.msra.mxu0 0.0
        %2953 = vmatprep.subr.mxu0 0.0
        %2954 = vmatpush2.msra.mxu0 0.0
        %2955 = vmatprep.subr.mxu0 0.0
        %2956 = vmatpush2.msra.mxu0 0.0
        %2957 = vmatprep.subr.mxu0 0.0
        %2958 = vmatpush2.msra.mxu0 %v2814
        %2959 = vmatprep.subr.mxu0 0.0
        %2960 = vmatpush2.msra.mxu0 %v2813
        %2961 = vmatprep.subr.mxu0 0.0
        %2962 = vmatpush2.msra.mxu0 %v2812
        %2963 = vmatprep.subr.mxu0 0.0
        %2964 = vmatpush2.msra.mxu0 %v2811
        %2965 = vmatprep.subr.mxu0 0.0
        %2966 = vmatpush2.msra.mxu0 %v2810
        %2967 = vmatprep.subr.mxu0 0.0
        %2968 = vmatpush2.msra.mxu0 %v2809
        %2969 = vmatprep.subr.mxu0 0.0
        %2970 = vmatpush2.msra.mxu0 %v2808
        %2971 = vmatprep.subr.mxu0 0.0
        %2972 = vmatpush2.msra.mxu0 %v2807
        %2973 = vmatprep.subr.mxu0 0.0
        %2974 = vmatpush2.msra.mxu0 %v2806
        %2975 = vmatprep.subr.mxu0 0.0
        %2976 = vmatpush2.msra.mxu0 %v2760
        %2977 = vmatprep.subr.mxu0 0.0
        %2978 = vmatpush2.msra.mxu0 %v2759
        %2979 = vmatprep.mubr.f32.mxu0 %v2889
        %2980 = vmatmul.mubr.f32.gmra.mxu0 %v2815
        %v2981 = vpop.f32.mrf.mxu0
        %v2982 = vadd.f32 %v2845, %v2981
        %v2983 = vpop.f32.mrf.mxu0
        %2984 = vmatprep.mubr.f32.mxu0 %v2892
        %2985 = vmatmul.mubr.f32.gmra.mxu0 %v2817
        %v2986 = vpop.f32.mrf.mxu0
        %v2987 = vadd.f32 %v2850, %v2986
        %v2988 = vpop.f32.mrf.mxu0
        %2989 = vmatprep.mubr.f32.mxu0 %v2895
        %2990 = vmatmul.mubr.f32.gmra.mxu0 %v2819
        %v2991 = vpop.f32.mrf.mxu0
        %v2992 = vadd.f32 %v2855, %v2991
        %v2993 = vpop.f32.mrf.mxu0
        %2994 = vmatprep.mubr.f32.mxu0 %v2898
        %2995 = vmatmul.mubr.f32.gmra.mxu0 %v2821
        %v2996 = vpop.f32.mrf.mxu0
        %v2997 = vadd.f32 %v2860, %v2996
        %v2998 = vpop.f32.mrf.mxu0
        %2999 = vmatprep.mubr.f32.mxu0 %v2901
        %3000 = vmatmul.mubr.f32.gmra.mxu0 %v2823
        %v3001 = vpop.f32.mrf.mxu0
        %v3002 = vadd.f32 %v2865, %v3001
        %v3003 = vpop.f32.mrf.mxu0
        %3004 = vmatprep.mubr.f32.mxu0 %v2904
        %3005 = vmatmul.mubr.f32.gmra.mxu0 %v2825
        %v3006 = vpop.f32.mrf.mxu0
        %v3007 = vadd.f32 %v2870, %v3006
        %v3008 = vpop.f32.mrf.mxu0
        %3009 = vmatprep.mubr.f32.mxu0 %v2907
        %3010 = vmatmul.mubr.f32.gmra.mxu0 %v2827
        %v3011 = vpop.f32.mrf.mxu0
        %v3012 = vadd.f32 %v2875, %v3011
        %v3013 = vpop.f32.mrf.mxu0
        %3014 = vmatprep.mubr.f32.mxu0 %v2910
        %3015 = vmatmul.mubr.f32.gmra.mxu0 %v2829
        %v3016 = vpop.f32.mrf.mxu0
        %v3017 = vadd.f32 %v2880, %v3016
        %v3018 = vpop.f32.mrf.mxu0
        %3019 = vmatprep.mubr.f32.mxu0 %v2913
        %3020 = vmatmul.mubr.f32.gmra.mxu0 %v2831
        %v3021 = vpop.f32.mrf.mxu0
        %v3022 = vadd.f32 %v2885, %v3021
        %v3023 = vpop.f32.mrf.mxu0
        %3024 = vdwg.mxu0
        %3025 = vadd.xlane.f32.xlu0 %v2982
        %v3026 = vpop.xlane.xlu0 %3025
        %3027 = vadd.xlane.f32.xlu0 %v2987
        %v3028 = vpop.xlane.xlu0 %3027
        %3029 = vadd.xlane.f32.xlu0 %v2992
        %v3030 = vpop.xlane.xlu0 %3029
        %3031 = vadd.xlane.f32.xlu0 %v2997
        %v3032 = vpop.xlane.xlu0 %3031
        %3033 = vadd.xlane.f32.xlu0 %v3002
        %v3034 = vpop.xlane.xlu0 %3033
        %3035 = vadd.xlane.f32.xlu0 %v3007
        %v3036 = vpop.xlane.xlu0 %3035
        %3037 = vadd.xlane.f32.xlu0 %v3012
        %v3038 = vpop.xlane.xlu0 %3037
        %3039 = vadd.xlane.f32.xlu0 %v3017
        %v3040 = vpop.xlane.xlu0 %3039
        %3041 = vadd.xlane.f32.xlu0 %v3022
        %v3042 = vpop.xlane.xlu0 %3041
        %v3043 = vmul.f32 %v3026, 0.0078125
        %v3044 = vmul.f32 %v3028, 0.0078125
        %v3045 = vmul.f32 %v3030, 0.0078125
        %v3046 = vmul.f32 %v3032, 0.0078125
        %v3047 = vmul.f32 %v3034, 0.0078125
        %v3048 = vmul.f32 %v3036, 0.0078125
        %v3049 = vmul.f32 %v3038, 0.0078125
        %v3050 = vmul.f32 %v3040, 0.0078125
        %v3051 = vmul.f32 %v3042, 0.0078125
        %v3052 = vmul.f32 %v2982, %v2982
        %v3053 = vmul.f32 %v2987, %v2987
        %v3054 = vmul.f32 %v2992, %v2992
        %v3055 = vmul.f32 %v2997, %v2997
        %v3056 = vmul.f32 %v3002, %v3002
        %v3057 = vmul.f32 %v3007, %v3007
        %v3058 = vmul.f32 %v3012, %v3012
        %v3059 = vmul.f32 %v3017, %v3017
        %v3060 = vmul.f32 %v3022, %v3022
        %3061 = vadd.xlane.f32.xlu0 %v3052
        %v3062 = vpop.xlane.xlu0 %3061
        %3063 = vadd.xlane.f32.xlu0 %v3053
        %v3064 = vpop.xlane.xlu0 %3063
        %3065 = vadd.xlane.f32.xlu0 %v3054
        %v3066 = vpop.xlane.xlu0 %3065
        %3067 = vadd.xlane.f32.xlu0 %v3055
        %v3068 = vpop.xlane.xlu0 %3067
        %3069 = vadd.xlane.f32.xlu0 %v3056
        %v3070 = vpop.xlane.xlu0 %3069
        %3071 = vadd.xlane.f32.xlu0 %v3057
        %v3072 = vpop.xlane.xlu0 %3071
        %3073 = vadd.xlane.f32.xlu0 %v3058
        %v3074 = vpop.xlane.xlu0 %3073
        %3075 = vadd.xlane.f32.xlu0 %v3059
        %v3076 = vpop.xlane.xlu0 %3075
        %3077 = vadd.xlane.f32.xlu0 %v3060
        %v3078 = vpop.xlane.xlu0 %3077
        %v3079 = vmul.f32 %v3062, 0.0078125
        %v3080 = vmul.f32 %v3064, 0.0078125
        %v3081 = vmul.f32 %v3066, 0.0078125
        %v3082 = vmul.f32 %v3068, 0.0078125
        %v3083 = vmul.f32 %v3070, 0.0078125
        %v3084 = vmul.f32 %v3072, 0.0078125
        %v3085 = vmul.f32 %v3074, 0.0078125
        %v3086 = vmul.f32 %v3076, 0.0078125
        %v3087 = vmul.f32 %v3078, 0.0078125
        %v3088 = vmul.f32 %v3043, %v3043
        %v3089 = vmul.f32 %v3044, %v3044
        %v3090 = vmul.f32 %v3045, %v3045
        %v3091 = vmul.f32 %v3046, %v3046
        %v3092 = vmul.f32 %v3047, %v3047
        %v3093 = vmul.f32 %v3048, %v3048
        %v3094 = vmul.f32 %v3049, %v3049
        %v3095 = vmul.f32 %v3050, %v3050
        %v3096 = vmul.f32 %v3051, %v3051
        %v3097 = vsub.f32 %v3079, %v3088
        %v3098 = vsub.f32 %v3080, %v3089
        %v3099 = vsub.f32 %v3081, %v3090
        %v3100 = vsub.f32 %v3082, %v3091
        %v3101 = vsub.f32 %v3083, %v3092
        %v3102 = vsub.f32 %v3084, %v3093
        %v3103 = vsub.f32 %v3085, %v3094
        %v3104 = vsub.f32 %v3086, %v3095
        %v3105 = vsub.f32 %v3087, %v3096
        %v3106 = vmax.f32 %v3097, 0.0
        %v3107 = vmax.f32 %v3098, 0.0
        %v3108 = vmax.f32 %v3099, 0.0
        %v3109 = vmax.f32 %v3100, 0.0
        %v3110 = vmax.f32 %v3101, 0.0
        %v3111 = vmax.f32 %v3102, 0.0
        %v3112 = vmax.f32 %v3103, 0.0
        %v3113 = vmax.f32 %v3104, 0.0
        %v3114 = vmax.f32 %v3105, 0.0
        %v3115 = vsub.f32 %v2982, %v3043
        %v3116 = vsub.f32 %v2987, %v3044
        %v3117 = vsub.f32 %v2992, %v3045
        %v3118 = vsub.f32 %v2997, %v3046
        %v3119 = vsub.f32 %v3002, %v3047
        %v3120 = vsub.f32 %v3007, %v3048
        %v3121 = vsub.f32 %v3012, %v3049
        %v3122 = vsub.f32 %v3017, %v3050
        %v3123 = vsub.f32 %v3022, %v3051
        %v3124 = vadd.f32 %v3106, 1e-05
        %v3125 = vadd.f32 %v3107, 1e-05
        %v3126 = vadd.f32 %v3108, 1e-05
        %v3127 = vadd.f32 %v3109, 1e-05
        %v3128 = vadd.f32 %v3110, 1e-05
        %v3129 = vadd.f32 %v3111, 1e-05
        %v3130 = vadd.f32 %v3112, 1e-05
        %v3131 = vadd.f32 %v3113, 1e-05
        %v3132 = vadd.f32 %v3114, 1e-05
        %v3133 = vrsqrt.pop %v3124
        %v3134 = vrsqrt.pop %v3125
        %v3135 = vrsqrt.pop %v3126
        %v3136 = vrsqrt.pop %v3127
        %v3137 = vrsqrt.pop %v3128
        %v3138 = vrsqrt.pop %v3129
        %v3139 = vrsqrt.pop %v3130
        %v3140 = vrsqrt.pop %v3131
        %v3141 = vrsqrt.pop %v3132
        %v3142 = vmul.f32 %v3115, %v3133
        %v3143 = vmul.f32 %v3116, %v3134
        %v3144 = vmul.f32 %v3117, %v3135
        %v3145 = vmul.f32 %v3118, %v3136
        %v3146 = vmul.f32 %v3119, %v3137
        %v3147 = vmul.f32 %v3120, %v3138
        %v3148 = vmul.f32 %v3121, %v3139
        %v3149 = vmul.f32 %v3122, %v3140
        %v3150 = vmul.f32 %v3123, %v3141
        %v3151 = vadd.f32 %v3142, %v1324
        %v3152 = vadd.f32 %v3143, %v1325
        %v3153 = vadd.f32 %v3144, %v1326
        %v3154 = vadd.f32 %v3145, %v1327
        %v3155 = vadd.f32 %v3146, %v1328
        %v3156 = vadd.f32 %v3147, %v1329
        %v3157 = vadd.f32 %v3148, %v1330
        %v3158 = vadd.f32 %v3149, %v1331
        %v3159 = vadd.f32 %v3150, %v1332
        %v3160 = vmax.f32 %v3151, 0.0
        %v3161 = vmax.f32 %v3152, 0.0
        %v3162 = vmax.f32 %v3153, 0.0
        %v3163 = vmax.f32 %v3154, 0.0
        %v3164 = vmax.f32 %v3155, 0.0
        %v3165 = vmax.f32 %v3156, 0.0
        %v3166 = vmax.f32 %v3157, 0.0
        %v3167 = vmax.f32 %v3158, 0.0
        %v3168 = vmax.f32 %v3159, 0.0
        %vm3169 = vcmp.eq.s32.totalorder %v799, 65
        %vm3170 = vcmp.eq.s32.totalorder %v800, 65
        %vm3171 = vcmp.eq.s32.totalorder %v801, 65
        %vm3172 = vcmp.eq.s32.totalorder %v802, 65
        %vm3173 = vcmp.eq.s32.totalorder %v803, 65
        %vm3174 = vcmp.eq.s32.totalorder %v804, 65
        %vm3175 = vcmp.eq.s32.totalorder %v805, 65
        %vm3176 = vcmp.eq.s32.totalorder %v806, 65
        %vm3177 = vcmp.eq.s32.totalorder %v807, 65
        %v3178 = vsel %vm3169, %v794, %v3160
        %v3179 = vsel %vm3170, %v794, %v3161
        %v3180 = vsel %vm3171, %v794, %v3162
        %v3181 = vsel %vm3172, %v794, %v3163
        %v3182 = vsel %vm3173, %v794, %v3164
        %v3183 = vsel %vm3174, %v794, %v3165
        %v3184 = vsel %vm3175, %v794, %v3166
        %v3185 = vsel %vm3176, %v794, %v3167
        %v3186 = vsel %vm3177, %v794, %v3168
        %s3187 = sld [smem:[#allocation2 + $0x2]]
        %3188 = vadd.xlane.f32.xlu0 %v3178
        %v3189 = vpop.xlane.xlu0 %3188
        %3190 = vadd.xlane.f32.xlu0 %v3179
        %v3191 = vpop.xlane.xlu0 %3190
        %3192 = vadd.xlane.f32.xlu0 %v3180
        %v3193 = vpop.xlane.xlu0 %3192
        %3194 = vadd.xlane.f32.xlu0 %v3181
        %v3195 = vpop.xlane.xlu0 %3194
        %3196 = vadd.xlane.f32.xlu0 %v3182
        %v3197 = vpop.xlane.xlu0 %3196
        %3198 = vadd.xlane.f32.xlu0 %v3183
        %v3199 = vpop.xlane.xlu0 %3198
        %3200 = vadd.xlane.f32.xlu0 %v3184
        %v3201 = vpop.xlane.xlu0 %3200
        %3202 = vadd.xlane.f32.xlu0 %v3185
        %v3203 = vpop.xlane.xlu0 %3202
        %3204 = vadd.xlane.f32.xlu0 %v3186
        %v3205 = vpop.xlane.xlu0 %3204
        %v3206 = vmul.f32 %v3189, 0.0078125
        %v3207 = vmul.f32 %v3191, 0.0078125
        %v3208 = vmul.f32 %v3193, 0.0078125
        %v3209 = vmul.f32 %v3195, 0.0078125
        %v3210 = vmul.f32 %v3197, 0.0078125
        %v3211 = vmul.f32 %v3199, 0.0078125
        %v3212 = vmul.f32 %v3201, 0.0078125
        %v3213 = vmul.f32 %v3203, 0.0078125
        %v3214 = vmul.f32 %v3205, 0.0078125
        %v3215 = vmul.f32 %v3178, %v3178
        %v3216 = vmul.f32 %v3179, %v3179
        %v3217 = vmul.f32 %v3180, %v3180
        %v3218 = vmul.f32 %v3181, %v3181
        %v3219 = vmul.f32 %v3182, %v3182
        %v3220 = vmul.f32 %v3183, %v3183
        %v3221 = vmul.f32 %v3184, %v3184
        %v3222 = vmul.f32 %v3185, %v3185
        %v3223 = vmul.f32 %v3186, %v3186
        %3224 = vadd.xlane.f32.xlu0 %v3215
        %v3225 = vpop.xlane.xlu0 %3224
        %3226 = vadd.xlane.f32.xlu0 %v3216
        %v3227 = vpop.xlane.xlu0 %3226
        %3228 = vadd.xlane.f32.xlu0 %v3217
        %v3229 = vpop.xlane.xlu0 %3228
        %3230 = vadd.xlane.f32.xlu0 %v3218
        %v3231 = vpop.xlane.xlu0 %3230
        %3232 = vadd.xlane.f32.xlu0 %v3219
        %v3233 = vpop.xlane.xlu0 %3232
        %3234 = vadd.xlane.f32.xlu0 %v3220
        %v3235 = vpop.xlane.xlu0 %3234
        %3236 = vadd.xlane.f32.xlu0 %v3221
        %v3237 = vpop.xlane.xlu0 %3236
        %3238 = vadd.xlane.f32.xlu0 %v3222
        %v3239 = vpop.xlane.xlu0 %3238
        %3240 = vadd.xlane.f32.xlu0 %v3223
        %v3241 = vpop.xlane.xlu0 %3240
        %v3242 = vmul.f32 %v3225, 0.0078125
        %v3243 = vmul.f32 %v3227, 0.0078125
        %v3244 = vmul.f32 %v3229, 0.0078125
        %v3245 = vmul.f32 %v3231, 0.0078125
        %v3246 = vmul.f32 %v3233, 0.0078125
        %v3247 = vmul.f32 %v3235, 0.0078125
        %v3248 = vmul.f32 %v3237, 0.0078125
        %v3249 = vmul.f32 %v3239, 0.0078125
        %v3250 = vmul.f32 %v3241, 0.0078125
        %v3251 = vmul.f32 %v3206, %v3206
        %v3252 = vmul.f32 %v3207, %v3207
        %v3253 = vmul.f32 %v3208, %v3208
        %v3254 = vmul.f32 %v3209, %v3209
        %v3255 = vmul.f32 %v3210, %v3210
        %v3256 = vmul.f32 %v3211, %v3211
        %v3257 = vmul.f32 %v3212, %v3212
        %v3258 = vmul.f32 %v3213, %v3213
        %v3259 = vmul.f32 %v3214, %v3214
        %v3260 = vsub.f32 %v3242, %v3251
        %v3261 = vsub.f32 %v3243, %v3252
        %v3262 = vsub.f32 %v3244, %v3253
        %v3263 = vsub.f32 %v3245, %v3254
        %v3264 = vsub.f32 %v3246, %v3255
        %v3265 = vsub.f32 %v3247, %v3256
        %v3266 = vsub.f32 %v3248, %v3257
        %v3267 = vsub.f32 %v3249, %v3258
        %v3268 = vsub.f32 %v3250, %v3259
        %v3269 = vmax.f32 %v3260, 0.0
        %v3270 = vmax.f32 %v3261, 0.0
        %v3271 = vmax.f32 %v3262, 0.0
        %v3272 = vmax.f32 %v3263, 0.0
        %v3273 = vmax.f32 %v3264, 0.0
        %v3274 = vmax.f32 %v3265, 0.0
        %v3275 = vmax.f32 %v3266, 0.0
        %v3276 = vmax.f32 %v3267, 0.0
        %v3277 = vmax.f32 %v3268, 0.0
        %v3278 = vsub.f32 %v3178, %v3206
        %v3279 = vsub.f32 %v3179, %v3207
        %v3280 = vsub.f32 %v3180, %v3208
        %v3281 = vsub.f32 %v3181, %v3209
        %v3282 = vsub.f32 %v3182, %v3210
        %v3283 = vsub.f32 %v3183, %v3211
        %v3284 = vsub.f32 %v3184, %v3212
        %v3285 = vsub.f32 %v3185, %v3213
        %v3286 = vsub.f32 %v3186, %v3214
        %v3287 = vadd.f32 %v3269, 1e-05
        %v3288 = vadd.f32 %v3270, 1e-05
        %v3289 = vadd.f32 %v3271, 1e-05
        %v3290 = vadd.f32 %v3272, 1e-05
        %v3291 = vadd.f32 %v3273, 1e-05
        %v3292 = vadd.f32 %v3274, 1e-05
        %v3293 = vadd.f32 %v3275, 1e-05
        %v3294 = vadd.f32 %v3276, 1e-05
        %v3295 = vadd.f32 %v3277, 1e-05
        %v3296 = vrsqrt.pop %v3287
        %v3297 = vrsqrt.pop %v3288
        %v3298 = vrsqrt.pop %v3289
        %v3299 = vrsqrt.pop %v3290
        %v3300 = vrsqrt.pop %v3291
        %v3301 = vrsqrt.pop %v3292
        %v3302 = vrsqrt.pop %v3293
        %v3303 = vrsqrt.pop %v3294
        %v3304 = vrsqrt.pop %v3295
        %v3305 = vmul.f32 %v3278, %v3296
        %v3306 = vmul.f32 %v3279, %v3297
        %v3307 = vmul.f32 %v3280, %v3298
        %v3308 = vmul.f32 %v3281, %v3299
        %v3309 = vmul.f32 %v3282, %v3300
        %v3310 = vmul.f32 %v3283, %v3301
        %v3311 = vmul.f32 %v3284, %v3302
        %v3312 = vmul.f32 %v3285, %v3303
        %v3313 = vmul.f32 %v3286, %v3304
        %3314 = vrot.lane.b32.xlu0 %v3178, 4
        %v3315 = vpop.permute.xlu0 %3314
        %3316 = vrot.lane.b32.xlu0 %v3179, 4
        %v3317 = vpop.permute.xlu0 %3316
        %3318 = vrot.lane.b32.xlu0 %v3180, 4
        %v3319 = vpop.permute.xlu0 %3318
        %3320 = vrot.lane.b32.xlu0 %v3181, 4
        %v3321 = vpop.permute.xlu0 %3320
        %3322 = vrot.lane.b32.xlu0 %v3182, 4
        %v3323 = vpop.permute.xlu0 %3322
        %3324 = vrot.lane.b32.xlu0 %v3183, 4
        %v3325 = vpop.permute.xlu0 %3324
        %3326 = vrot.lane.b32.xlu0 %v3184, 4
        %v3327 = vpop.permute.xlu0 %3326
        %3328 = vrot.lane.b32.xlu0 %v3185, 4
        %v3329 = vpop.permute.xlu0 %3328
        %3330 = vrot.lane.b32.xlu0 %v3186, 4
        %v3331 = vpop.permute.xlu0 %3330
        %v3332 = vsel %vm1351, %v3315, 0.0
        %v3333 = vsel %vm1351, %v3317, 0.0
        %v3334 = vsel %vm1351, %v3319, 0.0
        %v3335 = vsel %vm1351, %v3321, 0.0
        %v3336 = vsel %vm1351, %v3323, 0.0
        %v3337 = vsel %vm1351, %v3325, 0.0
        %v3338 = vsel %vm1351, %v3327, 0.0
        %v3339 = vsel %vm1351, %v3329, 0.0
        %v3340 = vsel %vm1351, %v3331, 0.0
        %3341 = vrot.lane.b32.xlu0 %v3178, 3
        %v3342 = vpop.permute.xlu0 %3341
        %3343 = vrot.lane.b32.xlu0 %v3179, 3
        %v3344 = vpop.permute.xlu0 %3343
        %3345 = vrot.lane.b32.xlu0 %v3180, 3
        %v3346 = vpop.permute.xlu0 %3345
        %3347 = vrot.lane.b32.xlu0 %v3181, 3
        %v3348 = vpop.permute.xlu0 %3347
        %3349 = vrot.lane.b32.xlu0 %v3182, 3
        %v3350 = vpop.permute.xlu0 %3349
        %3351 = vrot.lane.b32.xlu0 %v3183, 3
        %v3352 = vpop.permute.xlu0 %3351
        %3353 = vrot.lane.b32.xlu0 %v3184, 3
        %v3354 = vpop.permute.xlu0 %3353
        %3355 = vrot.lane.b32.xlu0 %v3185, 3
        %v3356 = vpop.permute.xlu0 %3355
        %3357 = vrot.lane.b32.xlu0 %v3186, 3
        %v3358 = vpop.permute.xlu0 %3357
        %v3359 = vsel %vm810, %v3342, 0.0
        %v3360 = vsel %vm810, %v3344, 0.0
        %v3361 = vsel %vm810, %v3346, 0.0
        %v3362 = vsel %vm810, %v3348, 0.0
        %v3363 = vsel %vm810, %v3350, 0.0
        %v3364 = vsel %vm810, %v3352, 0.0
        %v3365 = vsel %vm810, %v3354, 0.0
        %v3366 = vsel %vm810, %v3356, 0.0
        %v3367 = vsel %vm810, %v3358, 0.0
        %3368 = vrot.lane.b32.xlu0 %v3178, 2
        %v3369 = vpop.permute.xlu0 %3368
        %3370 = vrot.lane.b32.xlu0 %v3179, 2
        %v3371 = vpop.permute.xlu0 %3370
        %3372 = vrot.lane.b32.xlu0 %v3180, 2
        %v3373 = vpop.permute.xlu0 %3372
        %3374 = vrot.lane.b32.xlu0 %v3181, 2
        %v3375 = vpop.permute.xlu0 %3374
        %3376 = vrot.lane.b32.xlu0 %v3182, 2
        %v3377 = vpop.permute.xlu0 %3376
        %3378 = vrot.lane.b32.xlu0 %v3183, 2
        %v3379 = vpop.permute.xlu0 %3378
        %3380 = vrot.lane.b32.xlu0 %v3184, 2
        %v3381 = vpop.permute.xlu0 %3380
        %3382 = vrot.lane.b32.xlu0 %v3185, 2
        %v3383 = vpop.permute.xlu0 %3382
        %3384 = vrot.lane.b32.xlu0 %v3186, 2
        %v3385 = vpop.permute.xlu0 %3384
        %v3386 = vsel %vm814, %v3369, 0.0
        %v3387 = vsel %vm814, %v3371, 0.0
        %v3388 = vsel %vm814, %v3373, 0.0
        %v3389 = vsel %vm814, %v3375, 0.0
        %v3390 = vsel %vm814, %v3377, 0.0
        %v3391 = vsel %vm814, %v3379, 0.0
        %v3392 = vsel %vm814, %v3381, 0.0
        %v3393 = vsel %vm814, %v3383, 0.0
        %v3394 = vsel %vm814, %v3385, 0.0
        %3395 = vrot.lane.b32.xlu0 %v3178, 1
        %v3396 = vpop.permute.xlu0 %3395
        %3397 = vrot.lane.b32.xlu0 %v3179, 1
        %v3398 = vpop.permute.xlu0 %3397
        %3399 = vrot.lane.b32.xlu0 %v3180, 1
        %v3400 = vpop.permute.xlu0 %3399
        %3401 = vrot.lane.b32.xlu0 %v3181, 1
        %v3402 = vpop.permute.xlu0 %3401
        %3403 = vrot.lane.b32.xlu0 %v3182, 1
        %v3404 = vpop.permute.xlu0 %3403
        %3405 = vrot.lane.b32.xlu0 %v3183, 1
        %v3406 = vpop.permute.xlu0 %3405
        %3407 = vrot.lane.b32.xlu0 %v3184, 1
        %v3408 = vpop.permute.xlu0 %3407
        %3409 = vrot.lane.b32.xlu0 %v3185, 1
        %v3410 = vpop.permute.xlu0 %3409
        %3411 = vrot.lane.b32.xlu0 %v3186, 1
        %v3412 = vpop.permute.xlu0 %3411
        %v3413 = vsel %vm818, %v3396, 0.0
        %v3414 = vsel %vm818, %v3398, 0.0
        %v3415 = vsel %vm818, %v3400, 0.0
        %v3416 = vsel %vm818, %v3402, 0.0
        %v3417 = vsel %vm818, %v3404, 0.0
        %v3418 = vsel %vm818, %v3406, 0.0
        %v3419 = vsel %vm818, %v3408, 0.0
        %v3420 = vsel %vm818, %v3410, 0.0
        %v3421 = vsel %vm818, %v3412, 0.0
        %3422 = vrot.lane.b32.xlu0 %v3178, 127
        %v3423 = vpop.permute.xlu0 %3422
        %3424 = vrot.lane.b32.xlu0 %v3179, 127
        %v3425 = vpop.permute.xlu0 %3424
        %3426 = vrot.lane.b32.xlu0 %v3180, 127
        %v3427 = vpop.permute.xlu0 %3426
        %3428 = vrot.lane.b32.xlu0 %v3181, 127
        %v3429 = vpop.permute.xlu0 %3428
        %3430 = vrot.lane.b32.xlu0 %v3182, 127
        %v3431 = vpop.permute.xlu0 %3430
        %3432 = vrot.lane.b32.xlu0 %v3183, 127
        %v3433 = vpop.permute.xlu0 %3432
        %3434 = vrot.lane.b32.xlu0 %v3184, 127
        %v3435 = vpop.permute.xlu0 %3434
        %3436 = vrot.lane.b32.xlu0 %v3185, 127
        %v3437 = vpop.permute.xlu0 %3436
        %3438 = vrot.lane.b32.xlu0 %v3186, 127
        %v3439 = vpop.permute.xlu0 %3438
        %v3440 = vsel %vm822, %v3423, 0.0
        %v3441 = vsel %vm822, %v3425, 0.0
        %v3442 = vsel %vm822, %v3427, 0.0
        %v3443 = vsel %vm822, %v3429, 0.0
        %v3444 = vsel %vm822, %v3431, 0.0
        %v3445 = vsel %vm822, %v3433, 0.0
        %v3446 = vsel %vm822, %v3435, 0.0
        %v3447 = vsel %vm822, %v3437, 0.0
        %v3448 = vsel %vm822, %v3439, 0.0
        %3449 = vrot.lane.b32.xlu0 %v3178, 126
        %v3450 = vpop.permute.xlu0 %3449
        %3451 = vrot.lane.b32.xlu0 %v3179, 126
        %v3452 = vpop.permute.xlu0 %3451
        %3453 = vrot.lane.b32.xlu0 %v3180, 126
        %v3454 = vpop.permute.xlu0 %3453
        %3455 = vrot.lane.b32.xlu0 %v3181, 126
        %v3456 = vpop.permute.xlu0 %3455
        %3457 = vrot.lane.b32.xlu0 %v3182, 126
        %v3458 = vpop.permute.xlu0 %3457
        %3459 = vrot.lane.b32.xlu0 %v3183, 126
        %v3460 = vpop.permute.xlu0 %3459
        %3461 = vrot.lane.b32.xlu0 %v3184, 126
        %v3462 = vpop.permute.xlu0 %3461
        %3463 = vrot.lane.b32.xlu0 %v3185, 126
        %v3464 = vpop.permute.xlu0 %3463
        %3465 = vrot.lane.b32.xlu0 %v3186, 126
        %v3466 = vpop.permute.xlu0 %3465
        %v3467 = vsel %vm826, %v3450, 0.0
        %v3468 = vsel %vm826, %v3452, 0.0
        %v3469 = vsel %vm826, %v3454, 0.0
        %v3470 = vsel %vm826, %v3456, 0.0
        %v3471 = vsel %vm826, %v3458, 0.0
        %v3472 = vsel %vm826, %v3460, 0.0
        %v3473 = vsel %vm826, %v3462, 0.0
        %v3474 = vsel %vm826, %v3464, 0.0
        %v3475 = vsel %vm826, %v3466, 0.0
        %3476 = vrot.lane.b32.xlu0 %v3178, 125
        %v3477 = vpop.permute.xlu0 %3476
        %3478 = vrot.lane.b32.xlu0 %v3179, 125
        %v3479 = vpop.permute.xlu0 %3478
        %3480 = vrot.lane.b32.xlu0 %v3180, 125
        %v3481 = vpop.permute.xlu0 %3480
        %3482 = vrot.lane.b32.xlu0 %v3181, 125
        %v3483 = vpop.permute.xlu0 %3482
        %3484 = vrot.lane.b32.xlu0 %v3182, 125
        %v3485 = vpop.permute.xlu0 %3484
        %3486 = vrot.lane.b32.xlu0 %v3183, 125
        %v3487 = vpop.permute.xlu0 %3486
        %3488 = vrot.lane.b32.xlu0 %v3184, 125
        %v3489 = vpop.permute.xlu0 %3488
        %3490 = vrot.lane.b32.xlu0 %v3185, 125
        %v3491 = vpop.permute.xlu0 %3490
        %3492 = vrot.lane.b32.xlu0 %v3186, 125
        %v3493 = vpop.permute.xlu0 %3492
        %v3494 = vsel %vm830, %v3477, 0.0
        %v3495 = vsel %vm830, %v3479, 0.0
        %v3496 = vsel %vm830, %v3481, 0.0
        %v3497 = vsel %vm830, %v3483, 0.0
        %v3498 = vsel %vm830, %v3485, 0.0
        %v3499 = vsel %vm830, %v3487, 0.0
        %v3500 = vsel %vm830, %v3489, 0.0
        %v3501 = vsel %vm830, %v3491, 0.0
        %v3502 = vsel %vm830, %v3493, 0.0
        %3503 = vrot.lane.b32.xlu0 %v3178, 124
        %v3504 = vpop.permute.xlu0 %3503
        %3505 = vrot.lane.b32.xlu0 %v3179, 124
        %v3506 = vpop.permute.xlu0 %3505
        %3507 = vrot.lane.b32.xlu0 %v3180, 124
        %v3508 = vpop.permute.xlu0 %3507
        %3509 = vrot.lane.b32.xlu0 %v3181, 124
        %v3510 = vpop.permute.xlu0 %3509
        %3511 = vrot.lane.b32.xlu0 %v3182, 124
        %v3512 = vpop.permute.xlu0 %3511
        %3513 = vrot.lane.b32.xlu0 %v3183, 124
        %v3514 = vpop.permute.xlu0 %3513
        %3515 = vrot.lane.b32.xlu0 %v3184, 124
        %v3516 = vpop.permute.xlu0 %3515
        %3517 = vrot.lane.b32.xlu0 %v3185, 124
        %v3518 = vpop.permute.xlu0 %3517
        %3519 = vrot.lane.b32.xlu0 %v3186, 124
        %v3520 = vpop.permute.xlu0 %3519
        %v3521 = vsel %vm1541, %v3504, 0.0
        %v3522 = vsel %vm1541, %v3506, 0.0
        %v3523 = vsel %vm1541, %v3508, 0.0
        %v3524 = vsel %vm1541, %v3510, 0.0
        %v3525 = vsel %vm1541, %v3512, 0.0
        %v3526 = vsel %vm1541, %v3514, 0.0
        %v3527 = vsel %vm1541, %v3516, 0.0
        %v3528 = vsel %vm1541, %v3518, 0.0
        %v3529 = vsel %vm1541, %v3520, 0.0
        %v3530 = vld [vmem:[%s11] sm:$0xff]
        %v3531 = vld [vmem:[%s11 + $0x8] sm:$0xff]
        %v3532 = vld [vmem:[%s11 + $0x10] sm:$0xff]
        %v3533 = vld [vmem:[%s11 + $0x18] sm:$0xff]
        %v3534 = vld [vmem:[%s11 + $0x20] sm:$0xff]
        %v3535 = vld [vmem:[%s11 + $0x28] sm:$0xff]
        %v3536 = vld [vmem:[%s11 + $0x30] sm:$0xff]
        %v3537 = vld [vmem:[%s11 + $0x38] sm:$0xff]
        %v3538 = vld [vmem:[%s11 + $0x40] sm:$0xff]
        %v3539 = vld [vmem:[%s11 + $0x48] sm:$0xff]
        %v3540 = vld [vmem:[%s11 + $0x50] sm:$0xff]
        %v3541 = vld [vmem:[%s11 + $0x58] sm:$0xff]
        %v3542 = vld [vmem:[%s11 + $0x60] sm:$0xff]
        %v3543 = vld [vmem:[%s11 + $0x68] sm:$0xff]
        %v3544 = vld [vmem:[%s11 + $0x70] sm:$0xff]
        %v3545 = vld [vmem:[%s11 + $0x78] sm:$0xff]
        %v3546 = vld [vmem:[%s11 + $0x80] sm:$0xff]
        %v3547 = vld [vmem:[%s11 + $0x88] sm:$0xff]
        %v3548 = vld [vmem:[%s11 + $0x90] sm:$0xff]
        %v3549 = vld [vmem:[%s11 + $0x98] sm:$0xff]
        %v3550 = vld [vmem:[%s11 + $0xa0] sm:$0xff]
        %v3551 = vld [vmem:[%s11 + $0xa8] sm:$0xff]
        %v3552 = vld [vmem:[%s11 + $0xb0] sm:$0xff]
        %v3553 = vld [vmem:[%s11 + $0xb8] sm:$0xff]
        %v3554 = vld [vmem:[%s11 + $0xc0] sm:$0xff]
        %v3555 = vld [vmem:[%s11 + $0xc8] sm:$0xff]
        %v3556 = vld [vmem:[%s11 + $0xd0] sm:$0xff]
        %v3557 = vld [vmem:[%s11 + $0xd8] sm:$0xff]
        %v3558 = vld [vmem:[%s11 + $0xe0] sm:$0xff]
        %v3559 = vld [vmem:[%s11 + $0xe8] sm:$0xff]
        %v3560 = vld [vmem:[%s11 + $0xf0] sm:$0xff]
        %v3561 = vld [vmem:[%s11 + $0xf8] sm:$0xff]
        %v3562 = vld [vmem:[%s11 + $0x100] sm:$0xff]
        %v3563 = vld [vmem:[%s11 + $0x108] sm:$0xff]
        %v3564 = vld [vmem:[%s11 + $0x110] sm:$0xff]
        %v3565 = vld [vmem:[%s11 + $0x118] sm:$0xff]
        %v3566 = vld [vmem:[%s11 + $0x120] sm:$0xff]
        %v3567 = vld [vmem:[%s11 + $0x128] sm:$0xff]
        %v3568 = vld [vmem:[%s11 + $0x130] sm:$0xff]
        %v3569 = vld [vmem:[%s11 + $0x138] sm:$0xff]
        %v3570 = vld [vmem:[%s11 + $0x140] sm:$0xff]
        %v3571 = vld [vmem:[%s11 + $0x148] sm:$0xff]
        %v3572 = vld [vmem:[%s11 + $0x150] sm:$0xff]
        %v3573 = vld [vmem:[%s11 + $0x158] sm:$0xff]
        %v3574 = vld [vmem:[%s11 + $0x160] sm:$0xff]
        %v3575 = vld [vmem:[%s11 + $0x168] sm:$0xff]
        %v3576 = vld [vmem:[%s11 + $0x170] sm:$0xff]
        %v3577 = vld [vmem:[%s11 + $0x178] sm:$0xff]
        %v3578 = vld [vmem:[%s11 + $0x180] sm:$0xff]
        %v3579 = vld [vmem:[%s11 + $0x188] sm:$0xff]
        %v3580 = vld [vmem:[%s11 + $0x190] sm:$0xff]
        %v3581 = vld [vmem:[%s11 + $0x198] sm:$0xff]
        %v3582 = vld [vmem:[%s11 + $0x1a0] sm:$0xff]
        %v3583 = vld [vmem:[%s11 + $0x1a8] sm:$0xff]
        %v3584 = vld [vmem:[%s12] sm:$0xff]
        %v3585 = vld [vmem:[%s12 + $0x8] sm:$0xff]
        %v3586 = vld [vmem:[%s12 + $0x10] sm:$0xff]
        %v3587 = vld [vmem:[%s12 + $0x18] sm:$0xff]
        %v3588 = vld [vmem:[%s12 + $0x20] sm:$0xff]
        %v3589 = vld [vmem:[%s12 + $0x28] sm:$0xff]
        %v3590 = vld [vmem:[%s12 + $0x30] sm:$0xff]
        %v3591 = vld [vmem:[%s12 + $0x38] sm:$0xff]
        %v3592 = vld [vmem:[%s12 + $0x40] sm:$0xff]
        %3594 = vset.pattern.permute.xlu0 0
        %3595 = vperm.xlu0 %3594, %v3584
        %v3596 = vpop.permute.xlu0 %3595
        %3599 = vset.pattern.permute.xlu0 0
        %3600 = vperm.xlu0 %3599, %v3585
        %v3601 = vpop.permute.xlu0 %3600
        %3604 = vset.pattern.permute.xlu0 0
        %3605 = vperm.xlu0 %3604, %v3586
        %v3606 = vpop.permute.xlu0 %3605
        %3609 = vset.pattern.permute.xlu0 0
        %3610 = vperm.xlu0 %3609, %v3587
        %v3611 = vpop.permute.xlu0 %3610
        %3614 = vset.pattern.permute.xlu0 0
        %3615 = vperm.xlu0 %3614, %v3588
        %v3616 = vpop.permute.xlu0 %3615
        %3619 = vset.pattern.permute.xlu0 0
        %3620 = vperm.xlu0 %3619, %v3589
        %v3621 = vpop.permute.xlu0 %3620
        %3624 = vset.pattern.permute.xlu0 0
        %3625 = vperm.xlu0 %3624, %v3590
        %v3626 = vpop.permute.xlu0 %3625
        %3629 = vset.pattern.permute.xlu0 0
        %3630 = vperm.xlu0 %3629, %v3591
        %v3631 = vpop.permute.xlu0 %3630
        %3634 = vset.pattern.permute.xlu0 0
        %3635 = vperm.xlu0 %3634, %v3592
        %v3636 = vpop.permute.xlu0 %3635
        %v3639 = vsel %vm1659, %v3535, 0
        %v3642 = vsel %vm1659, %v3541, 0
        %v3645 = vsel %vm1659, %v3547, 0
        %v3648 = vsel %vm1659, %v3553, 0
        %v3651 = vsel %vm1659, %v3559, 0
        %v3654 = vsel %vm1659, %v3565, 0
        %v3657 = vsel %vm1659, %v3571, 0
        %v3660 = vsel %vm1659, %v3577, 0
        %v3663 = vsel %vm1659, %v3583, 0
        %3665 = vmatprep.subr.mxu0 0.0
        %3666 = vmatpush1.msra.mxu0 %v3365
        %3667 = vmatprep.subr.mxu0 0.0
        %3668 = vmatpush1.msra.mxu0 %v3364
        %3669 = vmatprep.subr.mxu0 0.0
        %3670 = vmatpush1.msra.mxu0 %v3363
        %3671 = vmatprep.subr.mxu0 0.0
        %3672 = vmatpush1.msra.mxu0 %v3362
        %3673 = vmatprep.subr.mxu0 0.0
        %3674 = vmatpush1.msra.mxu0 %v3361
        %3675 = vmatprep.subr.mxu0 0.0
        %3676 = vmatpush1.msra.mxu0 %v3360
        %3677 = vmatprep.subr.mxu0 0.0
        %3678 = vmatpush1.msra.mxu0 %v3359
        %3679 = vmatprep.subr.mxu0 0.0
        %3680 = vmatpush1.msra.mxu0 %v3340
        %3681 = vmatprep.subr.mxu0 0.0
        %3682 = vmatpush1.msra.mxu0 %v3339
        %3683 = vmatprep.subr.mxu0 0.0
        %3684 = vmatpush1.msra.mxu0 %v3338
        %3685 = vmatprep.subr.mxu0 0.0
        %3686 = vmatpush1.msra.mxu0 %v3337
        %3687 = vmatprep.subr.mxu0 0.0
        %3688 = vmatpush1.msra.mxu0 %v3336
        %3689 = vmatprep.subr.mxu0 0.0
        %3690 = vmatpush1.msra.mxu0 %v3335
        %3691 = vmatprep.subr.mxu0 0.0
        %3692 = vmatpush1.msra.mxu0 %v3334
        %3693 = vmatprep.subr.mxu0 0.0
        %3694 = vmatpush1.msra.mxu0 %v3333
        %3695 = vmatprep.subr.mxu0 0.0
        %3696 = vmatpush1.msra.mxu0 %v3332
        %3697 = vmatprep.subr.mxu0 0.0
        %3698 = vmatpush2.msra.mxu0 %v3417
        %3699 = vmatprep.subr.mxu0 0.0
        %3700 = vmatpush2.msra.mxu0 %v3416
        %3701 = vmatprep.subr.mxu0 0.0
        %3702 = vmatpush2.msra.mxu0 %v3415
        %3703 = vmatprep.subr.mxu0 0.0
        %3704 = vmatpush2.msra.mxu0 %v3414
        %3705 = vmatprep.subr.mxu0 0.0
        %3706 = vmatpush2.msra.mxu0 %v3413
        %3707 = vmatprep.subr.mxu0 0.0
        %3708 = vmatpush2.msra.mxu0 %v3394
        %3709 = vmatprep.subr.mxu0 0.0
        %3710 = vmatpush2.msra.mxu0 %v3393
        %3711 = vmatprep.subr.mxu0 0.0
        %3712 = vmatpush2.msra.mxu0 %v3392
        %3713 = vmatprep.subr.mxu0 0.0
        %3714 = vmatpush2.msra.mxu0 %v3391
        %3715 = vmatprep.subr.mxu0 0.0
        %3716 = vmatpush2.msra.mxu0 %v3390
        %3717 = vmatprep.subr.mxu0 0.0
        %3718 = vmatpush2.msra.mxu0 %v3389
        %3719 = vmatprep.subr.mxu0 0.0
        %3720 = vmatpush2.msra.mxu0 %v3388
        %3721 = vmatprep.subr.mxu0 0.0
        %3722 = vmatpush2.msra.mxu0 %v3387
        %3723 = vmatprep.subr.mxu0 0.0
        %3724 = vmatpush2.msra.mxu0 %v3386
        %3725 = vmatprep.subr.mxu0 0.0
        %3726 = vmatpush2.msra.mxu0 %v3367
        %3727 = vmatprep.subr.mxu0 0.0
        %3728 = vmatpush2.msra.mxu0 %v3366
        %3729 = vmatprep.mubr.f32.mxu0 %v3531
        %3730 = vmatmul.mubr.f32.gmra.mxu0 %v3530
        %v3731 = vpop.f32.mrf.mxu0
        %v3732 = vadd.f32 %v3596, %v3731
        %v3733 = vpop.f32.mrf.mxu0
        %3734 = vmatprep.mubr.f32.mxu0 %v3537
        %3735 = vmatmul.mubr.f32.gmra.mxu0 %v3536
        %v3736 = vpop.f32.mrf.mxu0
        %v3737 = vadd.f32 %v3601, %v3736
        %v3738 = vpop.f32.mrf.mxu0
        %3739 = vmatprep.mubr.f32.mxu0 %v3543
        %3740 = vmatmul.mubr.f32.gmra.mxu0 %v3542
        %v3741 = vpop.f32.mrf.mxu0
        %v3742 = vadd.f32 %v3606, %v3741
        %v3743 = vpop.f32.mrf.mxu0
        %3744 = vmatprep.mubr.f32.mxu0 %v3549
        %3745 = vmatmul.mubr.f32.gmra.mxu0 %v3548
        %v3746 = vpop.f32.mrf.mxu0
        %v3747 = vadd.f32 %v3611, %v3746
        %v3748 = vpop.f32.mrf.mxu0
        %3749 = vmatprep.mubr.f32.mxu0 %v3555
        %3750 = vmatmul.mubr.f32.gmra.mxu0 %v3554
        %v3751 = vpop.f32.mrf.mxu0
        %v3752 = vadd.f32 %v3616, %v3751
        %v3753 = vpop.f32.mrf.mxu0
        %3754 = vmatprep.mubr.f32.mxu0 %v3561
        %3755 = vmatmul.mubr.f32.gmra.mxu0 %v3560
        %v3756 = vpop.f32.mrf.mxu0
        %v3757 = vadd.f32 %v3621, %v3756
        %v3758 = vpop.f32.mrf.mxu0
        %3759 = vmatprep.mubr.f32.mxu0 %v3567
        %3760 = vmatmul.mubr.f32.gmra.mxu0 %v3566
        %v3761 = vpop.f32.mrf.mxu0
        %v3762 = vadd.f32 %v3626, %v3761
        %v3763 = vpop.f32.mrf.mxu0
        %3764 = vmatprep.mubr.f32.mxu0 %v3573
        %3765 = vmatmul.mubr.f32.gmra.mxu0 %v3572
        %v3766 = vpop.f32.mrf.mxu0
        %v3767 = vadd.f32 %v3631, %v3766
        %v3768 = vpop.f32.mrf.mxu0
        %3769 = vmatprep.mubr.f32.mxu0 %v3579
        %3770 = vmatmul.mubr.f32.gmra.mxu0 %v3578
        %v3771 = vpop.f32.mrf.mxu0
        %v3772 = vadd.f32 %v3636, %v3771
        %v3773 = vpop.f32.mrf.mxu0
        %3774 = vdwg.mxu0
        %3775 = vmatprep.subr.mxu0 0.0
        %3776 = vmatpush1.msra.mxu0 %v3442
        %3777 = vmatprep.subr.mxu0 0.0
        %3778 = vmatpush1.msra.mxu0 %v3441
        %3779 = vmatprep.subr.mxu0 0.0
        %3780 = vmatpush1.msra.mxu0 %v3440
        %3781 = vmatprep.subr.mxu0 0.0
        %3782 = vmatpush1.msra.mxu0 %v3186
        %3783 = vmatprep.subr.mxu0 0.0
        %3784 = vmatpush1.msra.mxu0 %v3185
        %3785 = vmatprep.subr.mxu0 0.0
        %3786 = vmatpush1.msra.mxu0 %v3184
        %3787 = vmatprep.subr.mxu0 0.0
        %3788 = vmatpush1.msra.mxu0 %v3183
        %3789 = vmatprep.subr.mxu0 0.0
        %3790 = vmatpush1.msra.mxu0 %v3182
        %3791 = vmatprep.subr.mxu0 0.0
        %3792 = vmatpush1.msra.mxu0 %v3181
        %3793 = vmatprep.subr.mxu0 0.0
        %3794 = vmatpush1.msra.mxu0 %v3180
        %3795 = vmatprep.subr.mxu0 0.0
        %3796 = vmatpush1.msra.mxu0 %v3179
        %3797 = vmatprep.subr.mxu0 0.0
        %3798 = vmatpush1.msra.mxu0 %v3178
        %3799 = vmatprep.subr.mxu0 0.0
        %3800 = vmatpush1.msra.mxu0 %v3421
        %3801 = vmatprep.subr.mxu0 0.0
        %3802 = vmatpush1.msra.mxu0 %v3420
        %3803 = vmatprep.subr.mxu0 0.0
        %3804 = vmatpush1.msra.mxu0 %v3419
        %3805 = vmatprep.subr.mxu0 0.0
        %3806 = vmatpush1.msra.mxu0 %v3418
        %3807 = vmatprep.subr.mxu0 0.0
        %3808 = vmatpush2.msra.mxu0 %v3494
        %3809 = vmatprep.subr.mxu0 0.0
        %3810 = vmatpush2.msra.mxu0 %v3475
        %3811 = vmatprep.subr.mxu0 0.0
        %3812 = vmatpush2.msra.mxu0 %v3474
        %3813 = vmatprep.subr.mxu0 0.0
        %3814 = vmatpush2.msra.mxu0 %v3473
        %3815 = vmatprep.subr.mxu0 0.0
        %3816 = vmatpush2.msra.mxu0 %v3472
        %3817 = vmatprep.subr.mxu0 0.0
        %3818 = vmatpush2.msra.mxu0 %v3471
        %3819 = vmatprep.subr.mxu0 0.0
        %3820 = vmatpush2.msra.mxu0 %v3470
        %3821 = vmatprep.subr.mxu0 0.0
        %3822 = vmatpush2.msra.mxu0 %v3469
        %3823 = vmatprep.subr.mxu0 0.0
        %3824 = vmatpush2.msra.mxu0 %v3468
        %3825 = vmatprep.subr.mxu0 0.0
        %3826 = vmatpush2.msra.mxu0 %v3467
        %3827 = vmatprep.subr.mxu0 0.0
        %3828 = vmatpush2.msra.mxu0 %v3448
        %3829 = vmatprep.subr.mxu0 0.0
        %3830 = vmatpush2.msra.mxu0 %v3447
        %3831 = vmatprep.subr.mxu0 0.0
        %3832 = vmatpush2.msra.mxu0 %v3446
        %3833 = vmatprep.subr.mxu0 0.0
        %3834 = vmatpush2.msra.mxu0 %v3445
        %3835 = vmatprep.subr.mxu0 0.0
        %3836 = vmatpush2.msra.mxu0 %v3444
        %3837 = vmatprep.subr.mxu0 0.0
        %3838 = vmatpush2.msra.mxu0 %v3443
        %3839 = vmatprep.mubr.f32.mxu0 %v3533
        %3840 = vmatmul.mubr.f32.gmra.mxu0 %v3532
        %v3841 = vpop.f32.mrf.mxu0
        %v3842 = vadd.f32 %v3732, %v3841
        %v3843 = vpop.f32.mrf.mxu0
        %3844 = vmatprep.mubr.f32.mxu0 %v3539
        %3845 = vmatmul.mubr.f32.gmra.mxu0 %v3538
        %v3846 = vpop.f32.mrf.mxu0
        %v3847 = vadd.f32 %v3737, %v3846
        %v3848 = vpop.f32.mrf.mxu0
        %3849 = vmatprep.mubr.f32.mxu0 %v3545
        %3850 = vmatmul.mubr.f32.gmra.mxu0 %v3544
        %v3851 = vpop.f32.mrf.mxu0
        %v3852 = vadd.f32 %v3742, %v3851
        %v3853 = vpop.f32.mrf.mxu0
        %3854 = vmatprep.mubr.f32.mxu0 %v3551
        %3855 = vmatmul.mubr.f32.gmra.mxu0 %v3550
        %v3856 = vpop.f32.mrf.mxu0
        %v3857 = vadd.f32 %v3747, %v3856
        %v3858 = vpop.f32.mrf.mxu0
        %3859 = vmatprep.mubr.f32.mxu0 %v3557
        %3860 = vmatmul.mubr.f32.gmra.mxu0 %v3556
        %v3861 = vpop.f32.mrf.mxu0
        %v3862 = vadd.f32 %v3752, %v3861
        %v3863 = vpop.f32.mrf.mxu0
        %3864 = vmatprep.mubr.f32.mxu0 %v3563
        %3865 = vmatmul.mubr.f32.gmra.mxu0 %v3562
        %v3866 = vpop.f32.mrf.mxu0
        %v3867 = vadd.f32 %v3757, %v3866
        %v3868 = vpop.f32.mrf.mxu0
        %3869 = vmatprep.mubr.f32.mxu0 %v3569
        %3870 = vmatmul.mubr.f32.gmra.mxu0 %v3568
        %v3871 = vpop.f32.mrf.mxu0
        %v3872 = vadd.f32 %v3762, %v3871
        %v3873 = vpop.f32.mrf.mxu0
        %3874 = vmatprep.mubr.f32.mxu0 %v3575
        %3875 = vmatmul.mubr.f32.gmra.mxu0 %v3574
        %v3876 = vpop.f32.mrf.mxu0
        %v3877 = vadd.f32 %v3767, %v3876
        %v3878 = vpop.f32.mrf.mxu0
        %3879 = vmatprep.mubr.f32.mxu0 %v3581
        %3880 = vmatmul.mubr.f32.gmra.mxu0 %v3580
        %v3881 = vpop.f32.mrf.mxu0
        %v3882 = vadd.f32 %v3772, %v3881
        %v3883 = vpop.f32.mrf.mxu0
        %3884 = vdwg.mxu0
        %3885 = vmatprep.subr.mxu0 0.0
        %3886 = vmatpush1.msra.mxu0 %v3528
        %3887 = vmatprep.subr.mxu0 0.0
        %3888 = vmatpush1.msra.mxu0 %v3527
        %3889 = vmatprep.subr.mxu0 0.0
        %3890 = vmatpush1.msra.mxu0 %v3526
        %3891 = vmatprep.subr.mxu0 0.0
        %3892 = vmatpush1.msra.mxu0 %v3525
        %3893 = vmatprep.subr.mxu0 0.0
        %3894 = vmatpush1.msra.mxu0 %v3524
        %3895 = vmatprep.subr.mxu0 0.0
        %3896 = vmatpush1.msra.mxu0 %v3523
        %3897 = vmatprep.subr.mxu0 0.0
        %3898 = vmatpush1.msra.mxu0 %v3522
        %3899 = vmatprep.subr.mxu0 0.0
        %3900 = vmatpush1.msra.mxu0 %v3521
        %3901 = vmatprep.subr.mxu0 0.0
        %3902 = vmatpush1.msra.mxu0 %v3502
        %3903 = vmatprep.subr.mxu0 0.0
        %3904 = vmatpush1.msra.mxu0 %v3501
        %3905 = vmatprep.subr.mxu0 0.0
        %3906 = vmatpush1.msra.mxu0 %v3500
        %3907 = vmatprep.subr.mxu0 0.0
        %3908 = vmatpush1.msra.mxu0 %v3499
        %3909 = vmatprep.subr.mxu0 0.0
        %3910 = vmatpush1.msra.mxu0 %v3498
        %3911 = vmatprep.subr.mxu0 0.0
        %3912 = vmatpush1.msra.mxu0 %v3497
        %3913 = vmatprep.subr.mxu0 0.0
        %3914 = vmatpush1.msra.mxu0 %v3496
        %3915 = vmatprep.subr.mxu0 0.0
        %3916 = vmatpush1.msra.mxu0 %v3495
        %3917 = vmatprep.subr.mxu0 0.0
        %3918 = vmatpush2.msra.mxu0 0.0
        %3919 = vmatprep.subr.mxu0 0.0
        %3920 = vmatpush2.msra.mxu0 0.0
        %3921 = vmatprep.subr.mxu0 0.0
        %3922 = vmatpush2.msra.mxu0 0.0
        %3923 = vmatprep.subr.mxu0 0.0
        %3924 = vmatpush2.msra.mxu0 0.0
        %3925 = vmatprep.subr.mxu0 0.0
        %3926 = vmatpush2.msra.mxu0 0.0
        %3927 = vmatprep.subr.mxu0 0.0
        %3928 = vmatpush2.msra.mxu0 0.0
        %3929 = vmatprep.subr.mxu0 0.0
        %3930 = vmatpush2.msra.mxu0 0.0
        %3931 = vmatprep.subr.mxu0 0.0
        %3932 = vmatpush2.msra.mxu0 0.0
        %3933 = vmatprep.subr.mxu0 0.0
        %3934 = vmatpush2.msra.mxu0 0.0
        %3935 = vmatprep.subr.mxu0 0.0
        %3936 = vmatpush2.msra.mxu0 0.0
        %3937 = vmatprep.subr.mxu0 0.0
        %3938 = vmatpush2.msra.mxu0 0.0
        %3939 = vmatprep.subr.mxu0 0.0
        %3940 = vmatpush2.msra.mxu0 0.0
        %3941 = vmatprep.subr.mxu0 0.0
        %3942 = vmatpush2.msra.mxu0 0.0
        %3943 = vmatprep.subr.mxu0 0.0
        %3944 = vmatpush2.msra.mxu0 0.0
        %3945 = vmatprep.subr.mxu0 0.0
        %3946 = vmatpush2.msra.mxu0 0.0
        %3947 = vmatprep.subr.mxu0 0.0
        %3948 = vmatpush2.msra.mxu0 %v3529
        %3949 = vmatprep.mubr.f32.mxu0 %v3639
        %3950 = vmatmul.mubr.f32.gmra.mxu0 %v3534
        %v3951 = vpop.f32.mrf.mxu0
        %v3952 = vadd.f32 %v3842, %v3951
        %v3953 = vpop.f32.mrf.mxu0
        %3954 = vmatprep.mubr.f32.mxu0 %v3642
        %3955 = vmatmul.mubr.f32.gmra.mxu0 %v3540
        %v3956 = vpop.f32.mrf.mxu0
        %v3957 = vadd.f32 %v3847, %v3956
        %v3958 = vpop.f32.mrf.mxu0
        %3959 = vmatprep.mubr.f32.mxu0 %v3645
        %3960 = vmatmul.mubr.f32.gmra.mxu0 %v3546
        %v3961 = vpop.f32.mrf.mxu0
        %v3962 = vadd.f32 %v3852, %v3961
        %v3963 = vpop.f32.mrf.mxu0
        %3964 = vmatprep.mubr.f32.mxu0 %v3648
        %3965 = vmatmul.mubr.f32.gmra.mxu0 %v3552
        %v3966 = vpop.f32.mrf.mxu0
        %v3967 = vadd.f32 %v3857, %v3966
        %v3968 = vpop.f32.mrf.mxu0
        %3969 = vmatprep.mubr.f32.mxu0 %v3651
        %3970 = vmatmul.mubr.f32.gmra.mxu0 %v3558
        %v3971 = vpop.f32.mrf.mxu0
        %v3972 = vadd.f32 %v3862, %v3971
        %v3973 = vpop.f32.mrf.mxu0
        %3974 = vmatprep.mubr.f32.mxu0 %v3654
        %3975 = vmatmul.mubr.f32.gmra.mxu0 %v3564
        %v3976 = vpop.f32.mrf.mxu0
        %v3977 = vadd.f32 %v3867, %v3976
        %v3978 = vpop.f32.mrf.mxu0
        %3979 = vmatprep.mubr.f32.mxu0 %v3657
        %3980 = vmatmul.mubr.f32.gmra.mxu0 %v3570
        %v3981 = vpop.f32.mrf.mxu0
        %v3982 = vadd.f32 %v3872, %v3981
        %v3983 = vpop.f32.mrf.mxu0
        %3984 = vmatprep.mubr.f32.mxu0 %v3660
        %3985 = vmatmul.mubr.f32.gmra.mxu0 %v3576
        %v3986 = vpop.f32.mrf.mxu0
        %v3987 = vadd.f32 %v3877, %v3986
        %v3988 = vpop.f32.mrf.mxu0
        %3989 = vmatprep.mubr.f32.mxu0 %v3663
        %3990 = vmatmul.mubr.f32.gmra.mxu0 %v3582
        %v3991 = vpop.f32.mrf.mxu0
        %v3992 = vadd.f32 %v3882, %v3991
        %v3993 = vpop.f32.mrf.mxu0
        %3994 = vdwg.mxu0
        %3995 = vadd.xlane.f32.xlu0 %v3952
        %v3996 = vpop.xlane.xlu0 %3995
        %3997 = vadd.xlane.f32.xlu0 %v3957
        %v3998 = vpop.xlane.xlu0 %3997
        %3999 = vadd.xlane.f32.xlu0 %v3962
        %v4000 = vpop.xlane.xlu0 %3999
        %4001 = vadd.xlane.f32.xlu0 %v3967
        %v4002 = vpop.xlane.xlu0 %4001
        %4003 = vadd.xlane.f32.xlu0 %v3972
        %v4004 = vpop.xlane.xlu0 %4003
        %4005 = vadd.xlane.f32.xlu0 %v3977
        %v4006 = vpop.xlane.xlu0 %4005
        %4007 = vadd.xlane.f32.xlu0 %v3982
        %v4008 = vpop.xlane.xlu0 %4007
        %4009 = vadd.xlane.f32.xlu0 %v3987
        %v4010 = vpop.xlane.xlu0 %4009
        %4011 = vadd.xlane.f32.xlu0 %v3992
        %v4012 = vpop.xlane.xlu0 %4011
        %v4013 = vmul.f32 %v3996, 0.0078125
        %v4014 = vmul.f32 %v3998, 0.0078125
        %v4015 = vmul.f32 %v4000, 0.0078125
        %v4016 = vmul.f32 %v4002, 0.0078125
        %v4017 = vmul.f32 %v4004, 0.0078125
        %v4018 = vmul.f32 %v4006, 0.0078125
        %v4019 = vmul.f32 %v4008, 0.0078125
        %v4020 = vmul.f32 %v4010, 0.0078125
        %v4021 = vmul.f32 %v4012, 0.0078125
        %v4022 = vmul.f32 %v3952, %v3952
        %v4023 = vmul.f32 %v3957, %v3957
        %v4024 = vmul.f32 %v3962, %v3962
        %v4025 = vmul.f32 %v3967, %v3967
        %v4026 = vmul.f32 %v3972, %v3972
        %v4027 = vmul.f32 %v3977, %v3977
        %v4028 = vmul.f32 %v3982, %v3982
        %v4029 = vmul.f32 %v3987, %v3987
        %v4030 = vmul.f32 %v3992, %v3992
        %4031 = vadd.xlane.f32.xlu0 %v4022
        %v4032 = vpop.xlane.xlu0 %4031
        %4033 = vadd.xlane.f32.xlu0 %v4023
        %v4034 = vpop.xlane.xlu0 %4033
        %4035 = vadd.xlane.f32.xlu0 %v4024
        %v4036 = vpop.xlane.xlu0 %4035
        %4037 = vadd.xlane.f32.xlu0 %v4025
        %v4038 = vpop.xlane.xlu0 %4037
        %4039 = vadd.xlane.f32.xlu0 %v4026
        %v4040 = vpop.xlane.xlu0 %4039
        %4041 = vadd.xlane.f32.xlu0 %v4027
        %v4042 = vpop.xlane.xlu0 %4041
        %4043 = vadd.xlane.f32.xlu0 %v4028
        %v4044 = vpop.xlane.xlu0 %4043
        %4045 = vadd.xlane.f32.xlu0 %v4029
        %v4046 = vpop.xlane.xlu0 %4045
        %4047 = vadd.xlane.f32.xlu0 %v4030
        %v4048 = vpop.xlane.xlu0 %4047
        %v4049 = vmul.f32 %v4032, 0.0078125
        %v4050 = vmul.f32 %v4034, 0.0078125
        %v4051 = vmul.f32 %v4036, 0.0078125
        %v4052 = vmul.f32 %v4038, 0.0078125
        %v4053 = vmul.f32 %v4040, 0.0078125
        %v4054 = vmul.f32 %v4042, 0.0078125
        %v4055 = vmul.f32 %v4044, 0.0078125
        %v4056 = vmul.f32 %v4046, 0.0078125
        %v4057 = vmul.f32 %v4048, 0.0078125
        %v4058 = vmul.f32 %v4013, %v4013
        %v4059 = vmul.f32 %v4014, %v4014
        %v4060 = vmul.f32 %v4015, %v4015
        %v4061 = vmul.f32 %v4016, %v4016
        %v4062 = vmul.f32 %v4017, %v4017
        %v4063 = vmul.f32 %v4018, %v4018
        %v4064 = vmul.f32 %v4019, %v4019
        %v4065 = vmul.f32 %v4020, %v4020
        %v4066 = vmul.f32 %v4021, %v4021
        %v4067 = vsub.f32 %v4049, %v4058
        %v4068 = vsub.f32 %v4050, %v4059
        %v4069 = vsub.f32 %v4051, %v4060
        %v4070 = vsub.f32 %v4052, %v4061
        %v4071 = vsub.f32 %v4053, %v4062
        %v4072 = vsub.f32 %v4054, %v4063
        %v4073 = vsub.f32 %v4055, %v4064
        %v4074 = vsub.f32 %v4056, %v4065
        %v4075 = vsub.f32 %v4057, %v4066
        %v4076 = vmax.f32 %v4067, 0.0
        %v4077 = vmax.f32 %v4068, 0.0
        %v4078 = vmax.f32 %v4069, 0.0
        %v4079 = vmax.f32 %v4070, 0.0
        %v4080 = vmax.f32 %v4071, 0.0
        %v4081 = vmax.f32 %v4072, 0.0
        %v4082 = vmax.f32 %v4073, 0.0
        %v4083 = vmax.f32 %v4074, 0.0
        %v4084 = vmax.f32 %v4075, 0.0
        %v4085 = vsub.f32 %v3952, %v4013
        %v4086 = vsub.f32 %v3957, %v4014
        %v4087 = vsub.f32 %v3962, %v4015
        %v4088 = vsub.f32 %v3967, %v4016
        %v4089 = vsub.f32 %v3972, %v4017
        %v4090 = vsub.f32 %v3977, %v4018
        %v4091 = vsub.f32 %v3982, %v4019
        %v4092 = vsub.f32 %v3987, %v4020
        %v4093 = vsub.f32 %v3992, %v4021
        %v4094 = vadd.f32 %v4076, 1e-05
        %v4095 = vadd.f32 %v4077, 1e-05
        %v4096 = vadd.f32 %v4078, 1e-05
        %v4097 = vadd.f32 %v4079, 1e-05
        %v4098 = vadd.f32 %v4080, 1e-05
        %v4099 = vadd.f32 %v4081, 1e-05
        %v4100 = vadd.f32 %v4082, 1e-05
        %v4101 = vadd.f32 %v4083, 1e-05
        %v4102 = vadd.f32 %v4084, 1e-05
        %v4103 = vrsqrt.pop %v4094
        %v4104 = vrsqrt.pop %v4095
        %v4105 = vrsqrt.pop %v4096
        %v4106 = vrsqrt.pop %v4097
        %v4107 = vrsqrt.pop %v4098
        %v4108 = vrsqrt.pop %v4099
        %v4109 = vrsqrt.pop %v4100
        %v4110 = vrsqrt.pop %v4101
        %v4111 = vrsqrt.pop %v4102
        %v4112 = vmul.f32 %v4085, %v4103
        %v4113 = vmul.f32 %v4086, %v4104
        %v4114 = vmul.f32 %v4087, %v4105
        %v4115 = vmul.f32 %v4088, %v4106
        %v4116 = vmul.f32 %v4089, %v4107
        %v4117 = vmul.f32 %v4090, %v4108
        %v4118 = vmul.f32 %v4091, %v4109
        %v4119 = vmul.f32 %v4092, %v4110
        %v4120 = vmul.f32 %v4093, %v4111
        %vm4121 = vcmp.gt.f32.partialorder %v4112, 0.0
        %vm4122 = vcmp.gt.f32.partialorder %v4113, 0.0
        %vm4123 = vcmp.gt.f32.partialorder %v4114, 0.0
        %vm4124 = vcmp.gt.f32.partialorder %v4115, 0.0
        %vm4125 = vcmp.gt.f32.partialorder %v4116, 0.0
        %vm4126 = vcmp.gt.f32.partialorder %v4117, 0.0
        %vm4127 = vcmp.gt.f32.partialorder %v4118, 0.0
        %vm4128 = vcmp.gt.f32.partialorder %v4119, 0.0
        %vm4129 = vcmp.gt.f32.partialorder %v4120, 0.0
        %v4130 = vstv %s3187
        %v4131 = vmul.f32 %v4112, %v4130
        %v4132 = vmul.f32 %v4113, %v4130
        %v4133 = vmul.f32 %v4114, %v4130
        %v4134 = vmul.f32 %v4115, %v4130
        %v4135 = vmul.f32 %v4116, %v4130
        %v4136 = vmul.f32 %v4117, %v4130
        %v4137 = vmul.f32 %v4118, %v4130
        %v4138 = vmul.f32 %v4119, %v4130
        %v4139 = vmul.f32 %v4120, %v4130
        %v4140 = vsel %vm4121, %v4112, %v4131
        %v4141 = vsel %vm4122, %v4113, %v4132
        %v4142 = vsel %vm4123, %v4114, %v4133
        %v4143 = vsel %vm4124, %v4115, %v4134
        %v4144 = vsel %vm4125, %v4116, %v4135
        %v4145 = vsel %vm4126, %v4117, %v4136
        %v4146 = vsel %vm4127, %v4118, %v4137
        %v4147 = vsel %vm4128, %v4119, %v4138
        %v4148 = vsel %vm4129, %v4120, %v4139
        %4149 = vrot.lane.b32.xlu0 %v4140, 2
        %v4150 = vpop.permute.xlu0 %4149
        %4151 = vrot.lane.b32.xlu0 %v4141, 2
        %v4152 = vpop.permute.xlu0 %4151
        %4153 = vrot.lane.b32.xlu0 %v4142, 2
        %v4154 = vpop.permute.xlu0 %4153
        %4155 = vrot.lane.b32.xlu0 %v4143, 2
        %v4156 = vpop.permute.xlu0 %4155
        %4157 = vrot.lane.b32.xlu0 %v4144, 2
        %v4158 = vpop.permute.xlu0 %4157
        %4159 = vrot.lane.b32.xlu0 %v4145, 2
        %v4160 = vpop.permute.xlu0 %4159
        %4161 = vrot.lane.b32.xlu0 %v4146, 2
        %v4162 = vpop.permute.xlu0 %4161
        %4163 = vrot.lane.b32.xlu0 %v4147, 2
        %v4164 = vpop.permute.xlu0 %4163
        %4165 = vrot.lane.b32.xlu0 %v4148, 2
        %v4166 = vpop.permute.xlu0 %4165
        %v4167 = vsel %vm814, %v4150, 0.0
        %v4168 = vsel %vm814, %v4152, 0.0
        %v4169 = vsel %vm814, %v4154, 0.0
        %v4170 = vsel %vm814, %v4156, 0.0
        %v4171 = vsel %vm814, %v4158, 0.0
        %v4172 = vsel %vm814, %v4160, 0.0
        %v4173 = vsel %vm814, %v4162, 0.0
        %v4174 = vsel %vm814, %v4164, 0.0
        %v4175 = vsel %vm814, %v4166, 0.0
        %4176 = vrot.lane.b32.xlu0 %v4140, 1
        %v4177 = vpop.permute.xlu0 %4176
        %4178 = vrot.lane.b32.xlu0 %v4141, 1
        %v4179 = vpop.permute.xlu0 %4178
        %4180 = vrot.lane.b32.xlu0 %v4142, 1
        %v4181 = vpop.permute.xlu0 %4180
        %4182 = vrot.lane.b32.xlu0 %v4143, 1
        %v4183 = vpop.permute.xlu0 %4182
        %4184 = vrot.lane.b32.xlu0 %v4144, 1
        %v4185 = vpop.permute.xlu0 %4184
        %4186 = vrot.lane.b32.xlu0 %v4145, 1
        %v4187 = vpop.permute.xlu0 %4186
        %4188 = vrot.lane.b32.xlu0 %v4146, 1
        %v4189 = vpop.permute.xlu0 %4188
        %4190 = vrot.lane.b32.xlu0 %v4147, 1
        %v4191 = vpop.permute.xlu0 %4190
        %4192 = vrot.lane.b32.xlu0 %v4148, 1
        %v4193 = vpop.permute.xlu0 %4192
        %v4194 = vsel %vm818, %v4177, 0.0
        %v4195 = vsel %vm818, %v4179, 0.0
        %v4196 = vsel %vm818, %v4181, 0.0
        %v4197 = vsel %vm818, %v4183, 0.0
        %v4198 = vsel %vm818, %v4185, 0.0
        %v4199 = vsel %vm818, %v4187, 0.0
        %v4200 = vsel %vm818, %v4189, 0.0
        %v4201 = vsel %vm818, %v4191, 0.0
        %v4202 = vsel %vm818, %v4193, 0.0
        %4203 = vrot.lane.b32.xlu0 %v4140, 127
        %v4204 = vpop.permute.xlu0 %4203
        %4205 = vrot.lane.b32.xlu0 %v4141, 127
        %v4206 = vpop.permute.xlu0 %4205
        %4207 = vrot.lane.b32.xlu0 %v4142, 127
        %v4208 = vpop.permute.xlu0 %4207
        %4209 = vrot.lane.b32.xlu0 %v4143, 127
        %v4210 = vpop.permute.xlu0 %4209
        %4211 = vrot.lane.b32.xlu0 %v4144, 127
        %v4212 = vpop.permute.xlu0 %4211
        %4213 = vrot.lane.b32.xlu0 %v4145, 127
        %v4214 = vpop.permute.xlu0 %4213
        %4215 = vrot.lane.b32.xlu0 %v4146, 127
        %v4216 = vpop.permute.xlu0 %4215
        %4217 = vrot.lane.b32.xlu0 %v4147, 127
        %v4218 = vpop.permute.xlu0 %4217
        %4219 = vrot.lane.b32.xlu0 %v4148, 127
        %v4220 = vpop.permute.xlu0 %4219
        %v4221 = vsel %vm822, %v4204, 0.0
        %v4222 = vsel %vm822, %v4206, 0.0
        %v4223 = vsel %vm822, %v4208, 0.0
        %v4224 = vsel %vm822, %v4210, 0.0
        %v4225 = vsel %vm822, %v4212, 0.0
        %v4226 = vsel %vm822, %v4214, 0.0
        %v4227 = vsel %vm822, %v4216, 0.0
        %v4228 = vsel %vm822, %v4218, 0.0
        %v4229 = vsel %vm822, %v4220, 0.0
        %4230 = vrot.lane.b32.xlu0 %v4140, 126
        %v4231 = vpop.permute.xlu0 %4230
        %4232 = vrot.lane.b32.xlu0 %v4141, 126
        %v4233 = vpop.permute.xlu0 %4232
        %4234 = vrot.lane.b32.xlu0 %v4142, 126
        %v4235 = vpop.permute.xlu0 %4234
        %4236 = vrot.lane.b32.xlu0 %v4143, 126
        %v4237 = vpop.permute.xlu0 %4236
        %4238 = vrot.lane.b32.xlu0 %v4144, 126
        %v4239 = vpop.permute.xlu0 %4238
        %4240 = vrot.lane.b32.xlu0 %v4145, 126
        %v4241 = vpop.permute.xlu0 %4240
        %4242 = vrot.lane.b32.xlu0 %v4146, 126
        %v4243 = vpop.permute.xlu0 %4242
        %4244 = vrot.lane.b32.xlu0 %v4147, 126
        %v4245 = vpop.permute.xlu0 %4244
        %4246 = vrot.lane.b32.xlu0 %v4148, 126
        %v4247 = vpop.permute.xlu0 %4246
        %v4248 = vsel %vm826, %v4231, 0.0
        %v4249 = vsel %vm826, %v4233, 0.0
        %v4250 = vsel %vm826, %v4235, 0.0
        %v4251 = vsel %vm826, %v4237, 0.0
        %v4252 = vsel %vm826, %v4239, 0.0
        %v4253 = vsel %vm826, %v4241, 0.0
        %v4254 = vsel %vm826, %v4243, 0.0
        %v4255 = vsel %vm826, %v4245, 0.0
        %v4256 = vsel %vm826, %v4247, 0.0
        %v4257 = vld [vmem:[%s13] sm:$0xff]
        %v4258 = vld [vmem:[%s13 + $0x8] sm:$0xff]
        %v4259 = vld [vmem:[%s13 + $0x10] sm:$0xff]
        %v4260 = vld [vmem:[%s13 + $0x18] sm:$0xff]
        %v4261 = vld [vmem:[%s13 + $0x20] sm:$0xff]
        %v4262 = vld [vmem:[%s13 + $0x28] sm:$0xff]
        %v4263 = vld [vmem:[%s13 + $0x30] sm:$0xff]
        %v4264 = vld [vmem:[%s13 + $0x38] sm:$0xff]
        %v4265 = vld [vmem:[%s13 + $0x40] sm:$0xff]
        %v4266 = vld [vmem:[%s13 + $0x48] sm:$0xff]
        %v4267 = vld [vmem:[%s13 + $0x50] sm:$0xff]
        %v4268 = vld [vmem:[%s13 + $0x58] sm:$0xff]
        %v4269 = vld [vmem:[%s13 + $0x60] sm:$0xff]
        %v4270 = vld [vmem:[%s13 + $0x68] sm:$0xff]
        %v4271 = vld [vmem:[%s13 + $0x70] sm:$0xff]
        %v4272 = vld [vmem:[%s13 + $0x78] sm:$0xff]
        %v4273 = vld [vmem:[%s13 + $0x80] sm:$0xff]
        %v4274 = vld [vmem:[%s13 + $0x88] sm:$0xff]
        %v4275 = vld [vmem:[%s13 + $0x90] sm:$0xff]
        %v4276 = vld [vmem:[%s13 + $0x98] sm:$0xff]
        %v4277 = vld [vmem:[%s13 + $0xa0] sm:$0xff]
        %v4278 = vld [vmem:[%s13 + $0xa8] sm:$0xff]
        %v4279 = vld [vmem:[%s13 + $0xb0] sm:$0xff]
        %v4280 = vld [vmem:[%s13 + $0xb8] sm:$0xff]
        %v4281 = vld [vmem:[%s13 + $0xc0] sm:$0xff]
        %v4282 = vld [vmem:[%s13 + $0xc8] sm:$0xff]
        %v4283 = vld [vmem:[%s13 + $0xd0] sm:$0xff]
        %v4284 = vld [vmem:[%s14] sm:$0xff]
        %v4285 = vld [vmem:[%s14 + $0x8] sm:$0xff]
        %v4286 = vld [vmem:[%s14 + $0x10] sm:$0xff]
        %v4287 = vld [vmem:[%s14 + $0x18] sm:$0xff]
        %v4288 = vld [vmem:[%s14 + $0x20] sm:$0xff]
        %v4289 = vld [vmem:[%s14 + $0x28] sm:$0xff]
        %v4290 = vld [vmem:[%s14 + $0x30] sm:$0xff]
        %v4291 = vld [vmem:[%s14 + $0x38] sm:$0xff]
        %v4292 = vld [vmem:[%s14 + $0x40] sm:$0xff]
        %4294 = vset.pattern.permute.xlu0 0
        %4295 = vperm.xlu0 %4294, %v4284
        %v4296 = vpop.permute.xlu0 %4295
        %4299 = vset.pattern.permute.xlu0 0
        %4300 = vperm.xlu0 %4299, %v4285
        %v4301 = vpop.permute.xlu0 %4300
        %4304 = vset.pattern.permute.xlu0 0
        %4305 = vperm.xlu0 %4304, %v4286
        %v4306 = vpop.permute.xlu0 %4305
        %4309 = vset.pattern.permute.xlu0 0
        %4310 = vperm.xlu0 %4309, %v4287
        %v4311 = vpop.permute.xlu0 %4310
        %4314 = vset.pattern.permute.xlu0 0
        %4315 = vperm.xlu0 %4314, %v4288
        %v4316 = vpop.permute.xlu0 %4315
        %4319 = vset.pattern.permute.xlu0 0
        %4320 = vperm.xlu0 %4319, %v4289
        %v4321 = vpop.permute.xlu0 %4320
        %4324 = vset.pattern.permute.xlu0 0
        %4325 = vperm.xlu0 %4324, %v4290
        %v4326 = vpop.permute.xlu0 %4325
        %4329 = vset.pattern.permute.xlu0 0
        %4330 = vperm.xlu0 %4329, %v4291
        %v4331 = vpop.permute.xlu0 %4330
        %4334 = vset.pattern.permute.xlu0 0
        %4335 = vperm.xlu0 %4334, %v4292
        %v4336 = vpop.permute.xlu0 %4335
        %v4339 = vsel %vm2360, %v4259, 0
        %v4342 = vsel %vm2360, %v4262, 0
        %v4345 = vsel %vm2360, %v4265, 0
        %v4348 = vsel %vm2360, %v4268, 0
        %v4351 = vsel %vm2360, %v4271, 0
        %v4354 = vsel %vm2360, %v4274, 0
        %v4357 = vsel %vm2360, %v4277, 0
        %v4360 = vsel %vm2360, %v4280, 0
        %v4363 = vsel %vm2360, %v4283, 0
        %4365 = vmatprep.subr.mxu0 0.0
        %4366 = vmatpush1.msra.mxu0 %v4200
        %4367 = vmatprep.subr.mxu0 0.0
        %4368 = vmatpush1.msra.mxu0 %v4199
        %4369 = vmatprep.subr.mxu0 0.0
        %4370 = vmatpush1.msra.mxu0 %v4198
        %4371 = vmatprep.subr.mxu0 0.0
        %4372 = vmatpush1.msra.mxu0 %v4197
        %4373 = vmatprep.subr.mxu0 0.0
        %4374 = vmatpush1.msra.mxu0 %v4196
        %4375 = vmatprep.subr.mxu0 0.0
        %4376 = vmatpush1.msra.mxu0 %v4195
        %4377 = vmatprep.subr.mxu0 0.0
        %4378 = vmatpush1.msra.mxu0 %v4194
        %4379 = vmatprep.subr.mxu0 0.0
        %4380 = vmatpush1.msra.mxu0 %v4175
        %4381 = vmatprep.subr.mxu0 0.0
        %4382 = vmatpush1.msra.mxu0 %v4174
        %4383 = vmatprep.subr.mxu0 0.0
        %4384 = vmatpush1.msra.mxu0 %v4173
        %4385 = vmatprep.subr.mxu0 0.0
        %4386 = vmatpush1.msra.mxu0 %v4172
        %4387 = vmatprep.subr.mxu0 0.0
        %4388 = vmatpush1.msra.mxu0 %v4171
        %4389 = vmatprep.subr.mxu0 0.0
        %4390 = vmatpush1.msra.mxu0 %v4170
        %4391 = vmatprep.subr.mxu0 0.0
        %4392 = vmatpush1.msra.mxu0 %v4169
        %4393 = vmatprep.subr.mxu0 0.0
        %4394 = vmatpush1.msra.mxu0 %v4168
        %4395 = vmatprep.subr.mxu0 0.0
        %4396 = vmatpush1.msra.mxu0 %v4167
        %4397 = vmatprep.subr.mxu0 0.0
        %4398 = vmatpush2.msra.mxu0 %v4225
        %4399 = vmatprep.subr.mxu0 0.0
        %4400 = vmatpush2.msra.mxu0 %v4224
        %4401 = vmatprep.subr.mxu0 0.0
        %4402 = vmatpush2.msra.mxu0 %v4223
        %4403 = vmatprep.subr.mxu0 0.0
        %4404 = vmatpush2.msra.mxu0 %v4222
        %4405 = vmatprep.subr.mxu0 0.0
        %4406 = vmatpush2.msra.mxu0 %v4221
        %4407 = vmatprep.subr.mxu0 0.0
        %4408 = vmatpush2.msra.mxu0 %v4148
        %4409 = vmatprep.subr.mxu0 0.0
        %4410 = vmatpush2.msra.mxu0 %v4147
        %4411 = vmatprep.subr.mxu0 0.0
        %4412 = vmatpush2.msra.mxu0 %v4146
        %4413 = vmatprep.subr.mxu0 0.0
        %4414 = vmatpush2.msra.mxu0 %v4145
        %4415 = vmatprep.subr.mxu0 0.0
        %4416 = vmatpush2.msra.mxu0 %v4144
        %4417 = vmatprep.subr.mxu0 0.0
        %4418 = vmatpush2.msra.mxu0 %v4143
        %4419 = vmatprep.subr.mxu0 0.0
        %4420 = vmatpush2.msra.mxu0 %v4142
        %4421 = vmatprep.subr.mxu0 0.0
        %4422 = vmatpush2.msra.mxu0 %v4141
        %4423 = vmatprep.subr.mxu0 0.0
        %4424 = vmatpush2.msra.mxu0 %v4140
        %4425 = vmatprep.subr.mxu0 0.0
        %4426 = vmatpush2.msra.mxu0 %v4202
        %4427 = vmatprep.subr.mxu0 0.0
        %4428 = vmatpush2.msra.mxu0 %v4201
        %4429 = vmatprep.mubr.f32.mxu0 %v4258
        %4430 = vmatmul.mubr.f32.gmra.mxu0 %v4257
        %v4431 = vpop.f32.mrf.mxu0
        %v4432 = vadd.f32 %v4296, %v4431
        %v4433 = vpop.f32.mrf.mxu0
        %4434 = vmatprep.mubr.f32.mxu0 %v4261
        %4435 = vmatmul.mubr.f32.gmra.mxu0 %v4260
        %v4436 = vpop.f32.mrf.mxu0
        %v4437 = vadd.f32 %v4301, %v4436
        %v4438 = vpop.f32.mrf.mxu0
        %4439 = vmatprep.mubr.f32.mxu0 %v4264
        %4440 = vmatmul.mubr.f32.gmra.mxu0 %v4263
        %v4441 = vpop.f32.mrf.mxu0
        %v4442 = vadd.f32 %v4306, %v4441
        %v4443 = vpop.f32.mrf.mxu0
        %4444 = vmatprep.mubr.f32.mxu0 %v4267
        %4445 = vmatmul.mubr.f32.gmra.mxu0 %v4266
        %v4446 = vpop.f32.mrf.mxu0
        %v4447 = vadd.f32 %v4311, %v4446
        %v4448 = vpop.f32.mrf.mxu0
        %4449 = vmatprep.mubr.f32.mxu0 %v4270
        %4450 = vmatmul.mubr.f32.gmra.mxu0 %v4269
        %v4451 = vpop.f32.mrf.mxu0
        %v4452 = vadd.f32 %v4316, %v4451
        %v4453 = vpop.f32.mrf.mxu0
        %4454 = vmatprep.mubr.f32.mxu0 %v4273
        %4455 = vmatmul.mubr.f32.gmra.mxu0 %v4272
        %v4456 = vpop.f32.mrf.mxu0
        %v4457 = vadd.f32 %v4321, %v4456
        %v4458 = vpop.f32.mrf.mxu0
        %4459 = vmatprep.mubr.f32.mxu0 %v4276
        %4460 = vmatmul.mubr.f32.gmra.mxu0 %v4275
        %v4461 = vpop.f32.mrf.mxu0
        %v4462 = vadd.f32 %v4326, %v4461
        %v4463 = vpop.f32.mrf.mxu0
        %4464 = vmatprep.mubr.f32.mxu0 %v4279
        %4465 = vmatmul.mubr.f32.gmra.mxu0 %v4278
        %v4466 = vpop.f32.mrf.mxu0
        %v4467 = vadd.f32 %v4331, %v4466
        %v4468 = vpop.f32.mrf.mxu0
        %4469 = vmatprep.mubr.f32.mxu0 %v4282
        %4470 = vmatmul.mubr.f32.gmra.mxu0 %v4281
        %v4471 = vpop.f32.mrf.mxu0
        %v4472 = vadd.f32 %v4336, %v4471
        %v4473 = vpop.f32.mrf.mxu0
        %4474 = vdwg.mxu0
        %4475 = vmatprep.subr.mxu0 0.0
        %4476 = vmatpush1.msra.mxu0 0.0
        %4477 = vmatprep.subr.mxu0 0.0
        %4478 = vmatpush1.msra.mxu0 0.0
        %4479 = vmatprep.subr.mxu0 0.0
        %4480 = vmatpush1.msra.mxu0 0.0
        %4481 = vmatprep.subr.mxu0 0.0
        %4482 = vmatpush1.msra.mxu0 %v4256
        %4483 = vmatprep.subr.mxu0 0.0
        %4484 = vmatpush1.msra.mxu0 %v4255
        %4485 = vmatprep.subr.mxu0 0.0
        %4486 = vmatpush1.msra.mxu0 %v4254
        %4487 = vmatprep.subr.mxu0 0.0
        %4488 = vmatpush1.msra.mxu0 %v4253
        %4489 = vmatprep.subr.mxu0 0.0
        %4490 = vmatpush1.msra.mxu0 %v4252
        %4491 = vmatprep.subr.mxu0 0.0
        %4492 = vmatpush1.msra.mxu0 %v4251
        %4493 = vmatprep.subr.mxu0 0.0
        %4494 = vmatpush1.msra.mxu0 %v4250
        %4495 = vmatprep.subr.mxu0 0.0
        %4496 = vmatpush1.msra.mxu0 %v4249
        %4497 = vmatprep.subr.mxu0 0.0
        %4498 = vmatpush1.msra.mxu0 %v4248
        %4499 = vmatprep.subr.mxu0 0.0
        %4500 = vmatpush1.msra.mxu0 %v4229
        %4501 = vmatprep.subr.mxu0 0.0
        %4502 = vmatpush1.msra.mxu0 %v4228
        %4503 = vmatprep.subr.mxu0 0.0
        %4504 = vmatpush1.msra.mxu0 %v4227
        %4505 = vmatprep.subr.mxu0 0.0
        %4506 = vmatpush1.msra.mxu0 %v4226
        %4507 = vmatprep.subr.mxu0 0.0
        %4508 = vmatpush2.msra.mxu0 0.0
        %4509 = vmatprep.subr.mxu0 0.0
        %4510 = vmatpush2.msra.mxu0 0.0
        %4511 = vmatprep.subr.mxu0 0.0
        %4512 = vmatpush2.msra.mxu0 0.0
        %4513 = vmatprep.subr.mxu0 0.0
        %4514 = vmatpush2.msra.mxu0 0.0
        %4515 = vmatprep.subr.mxu0 0.0
        %4516 = vmatpush2.msra.mxu0 0.0
        %4517 = vmatprep.subr.mxu0 0.0
        %4518 = vmatpush2.msra.mxu0 0.0
        %4519 = vmatprep.subr.mxu0 0.0
        %4520 = vmatpush2.msra.mxu0 0.0
        %4521 = vmatprep.subr.mxu0 0.0
        %4522 = vmatpush2.msra.mxu0 0.0
        %4523 = vmatprep.subr.mxu0 0.0
        %4524 = vmatpush2.msra.mxu0 0.0
        %4525 = vmatprep.subr.mxu0 0.0
        %4526 = vmatpush2.msra.mxu0 0.0
        %4527 = vmatprep.subr.mxu0 0.0
        %4528 = vmatpush2.msra.mxu0 0.0
        %4529 = vmatprep.subr.mxu0 0.0
        %4530 = vmatpush2.msra.mxu0 0.0
        %4531 = vmatprep.subr.mxu0 0.0
        %4532 = vmatpush2.msra.mxu0 0.0
        %4533 = vmatprep.subr.mxu0 0.0
        %4534 = vmatpush2.msra.mxu0 0.0
        %4535 = vmatprep.subr.mxu0 0.0
        %4536 = vmatpush2.msra.mxu0 0.0
        %4537 = vmatprep.subr.mxu0 0.0
        %4538 = vmatpush2.msra.mxu0 0.0
        %4539 = vmatprep.mubr.f32.mxu0 0.0
        %4540 = vmatmul.mubr.f32.gmra.mxu0 %v4339
        %v4541 = vpop.f32.mrf.mxu0
        %v4542 = vadd.f32 %v4432, %v4541
        %v4543 = vpop.f32.mrf.mxu0
        %4544 = vmatprep.mubr.f32.mxu0 0.0
        %4545 = vmatmul.mubr.f32.gmra.mxu0 %v4342
        %v4546 = vpop.f32.mrf.mxu0
        %v4547 = vadd.f32 %v4437, %v4546
        %v4548 = vpop.f32.mrf.mxu0
        %4549 = vmatprep.mubr.f32.mxu0 0.0
        %4550 = vmatmul.mubr.f32.gmra.mxu0 %v4345
        %v4551 = vpop.f32.mrf.mxu0
        %v4552 = vadd.f32 %v4442, %v4551
        %v4553 = vpop.f32.mrf.mxu0
        %4554 = vmatprep.mubr.f32.mxu0 0.0
        %4555 = vmatmul.mubr.f32.gmra.mxu0 %v4348
        %v4556 = vpop.f32.mrf.mxu0
        %v4557 = vadd.f32 %v4447, %v4556
        %v4558 = vpop.f32.mrf.mxu0
        %4559 = vmatprep.mubr.f32.mxu0 0.0
        %4560 = vmatmul.mubr.f32.gmra.mxu0 %v4351
        %v4561 = vpop.f32.mrf.mxu0
        %v4562 = vadd.f32 %v4452, %v4561
        %v4563 = vpop.f32.mrf.mxu0
        %4564 = vmatprep.mubr.f32.mxu0 0.0
        %4565 = vmatmul.mubr.f32.gmra.mxu0 %v4354
        %v4566 = vpop.f32.mrf.mxu0
        %v4567 = vadd.f32 %v4457, %v4566
        %v4568 = vpop.f32.mrf.mxu0
        %4569 = vmatprep.mubr.f32.mxu0 0.0
        %4570 = vmatmul.mubr.f32.gmra.mxu0 %v4357
        %v4571 = vpop.f32.mrf.mxu0
        %v4572 = vadd.f32 %v4462, %v4571
        %v4573 = vpop.f32.mrf.mxu0
        %4574 = vmatprep.mubr.f32.mxu0 0.0
        %4575 = vmatmul.mubr.f32.gmra.mxu0 %v4360
        %v4576 = vpop.f32.mrf.mxu0
        %v4577 = vadd.f32 %v4467, %v4576
        %v4578 = vpop.f32.mrf.mxu0
        %4579 = vmatprep.mubr.f32.mxu0 0.0
        %4580 = vmatmul.mubr.f32.gmra.mxu0 %v4363
        %v4581 = vpop.f32.mrf.mxu0
        %v4582 = vadd.f32 %v4472, %v4581
        %v4583 = vpop.f32.mrf.mxu0
        %4584 = vdwg.mxu0
        %4585 = vadd.xlane.f32.xlu0 %v4542
        %v4586 = vpop.xlane.xlu0 %4585
        %4587 = vadd.xlane.f32.xlu0 %v4547
        %v4588 = vpop.xlane.xlu0 %4587
        %4589 = vadd.xlane.f32.xlu0 %v4552
        %v4590 = vpop.xlane.xlu0 %4589
        %4591 = vadd.xlane.f32.xlu0 %v4557
        %v4592 = vpop.xlane.xlu0 %4591
        %4593 = vadd.xlane.f32.xlu0 %v4562
        %v4594 = vpop.xlane.xlu0 %4593
        %4595 = vadd.xlane.f32.xlu0 %v4567
        %v4596 = vpop.xlane.xlu0 %4595
        %4597 = vadd.xlane.f32.xlu0 %v4572
        %v4598 = vpop.xlane.xlu0 %4597
        %4599 = vadd.xlane.f32.xlu0 %v4577
        %v4600 = vpop.xlane.xlu0 %4599
        %4601 = vadd.xlane.f32.xlu0 %v4582
        %v4602 = vpop.xlane.xlu0 %4601
        %v4603 = vmul.f32 %v4586, 0.0078125
        %v4604 = vmul.f32 %v4588, 0.0078125
        %v4605 = vmul.f32 %v4590, 0.0078125
        %v4606 = vmul.f32 %v4592, 0.0078125
        %v4607 = vmul.f32 %v4594, 0.0078125
        %v4608 = vmul.f32 %v4596, 0.0078125
        %v4609 = vmul.f32 %v4598, 0.0078125
        %v4610 = vmul.f32 %v4600, 0.0078125
        %v4611 = vmul.f32 %v4602, 0.0078125
        %v4612 = vmul.f32 %v4542, %v4542
        %v4613 = vmul.f32 %v4547, %v4547
        %v4614 = vmul.f32 %v4552, %v4552
        %v4615 = vmul.f32 %v4557, %v4557
        %v4616 = vmul.f32 %v4562, %v4562
        %v4617 = vmul.f32 %v4567, %v4567
        %v4618 = vmul.f32 %v4572, %v4572
        %v4619 = vmul.f32 %v4577, %v4577
        %v4620 = vmul.f32 %v4582, %v4582
        %4621 = vadd.xlane.f32.xlu0 %v4612
        %v4622 = vpop.xlane.xlu0 %4621
        %4623 = vadd.xlane.f32.xlu0 %v4613
        %v4624 = vpop.xlane.xlu0 %4623
        %4625 = vadd.xlane.f32.xlu0 %v4614
        %v4626 = vpop.xlane.xlu0 %4625
        %4627 = vadd.xlane.f32.xlu0 %v4615
        %v4628 = vpop.xlane.xlu0 %4627
        %4629 = vadd.xlane.f32.xlu0 %v4616
        %v4630 = vpop.xlane.xlu0 %4629
        %4631 = vadd.xlane.f32.xlu0 %v4617
        %v4632 = vpop.xlane.xlu0 %4631
        %4633 = vadd.xlane.f32.xlu0 %v4618
        %v4634 = vpop.xlane.xlu0 %4633
        %4635 = vadd.xlane.f32.xlu0 %v4619
        %v4636 = vpop.xlane.xlu0 %4635
        %4637 = vadd.xlane.f32.xlu0 %v4620
        %v4638 = vpop.xlane.xlu0 %4637
        %v4639 = vmul.f32 %v4622, 0.0078125
        %v4640 = vmul.f32 %v4624, 0.0078125
        %v4641 = vmul.f32 %v4626, 0.0078125
        %v4642 = vmul.f32 %v4628, 0.0078125
        %v4643 = vmul.f32 %v4630, 0.0078125
        %v4644 = vmul.f32 %v4632, 0.0078125
        %v4645 = vmul.f32 %v4634, 0.0078125
        %v4646 = vmul.f32 %v4636, 0.0078125
        %v4647 = vmul.f32 %v4638, 0.0078125
        %v4648 = vmul.f32 %v4603, %v4603
        %v4649 = vmul.f32 %v4604, %v4604
        %v4650 = vmul.f32 %v4605, %v4605
        %v4651 = vmul.f32 %v4606, %v4606
        %v4652 = vmul.f32 %v4607, %v4607
        %v4653 = vmul.f32 %v4608, %v4608
        %v4654 = vmul.f32 %v4609, %v4609
        %v4655 = vmul.f32 %v4610, %v4610
        %v4656 = vmul.f32 %v4611, %v4611
        %v4657 = vsub.f32 %v4639, %v4648
        %v4658 = vsub.f32 %v4640, %v4649
        %v4659 = vsub.f32 %v4641, %v4650
        %v4660 = vsub.f32 %v4642, %v4651
        %v4661 = vsub.f32 %v4643, %v4652
        %v4662 = vsub.f32 %v4644, %v4653
        %v4663 = vsub.f32 %v4645, %v4654
        %v4664 = vsub.f32 %v4646, %v4655
        %v4665 = vsub.f32 %v4647, %v4656
        %v4666 = vmax.f32 %v4657, 0.0
        %v4667 = vmax.f32 %v4658, 0.0
        %v4668 = vmax.f32 %v4659, 0.0
        %v4669 = vmax.f32 %v4660, 0.0
        %v4670 = vmax.f32 %v4661, 0.0
        %v4671 = vmax.f32 %v4662, 0.0
        %v4672 = vmax.f32 %v4663, 0.0
        %v4673 = vmax.f32 %v4664, 0.0
        %v4674 = vmax.f32 %v4665, 0.0
        %v4675 = vsub.f32 %v4542, %v4603
        %v4676 = vsub.f32 %v4547, %v4604
        %v4677 = vsub.f32 %v4552, %v4605
        %v4678 = vsub.f32 %v4557, %v4606
        %v4679 = vsub.f32 %v4562, %v4607
        %v4680 = vsub.f32 %v4567, %v4608
        %v4681 = vsub.f32 %v4572, %v4609
        %v4682 = vsub.f32 %v4577, %v4610
        %v4683 = vsub.f32 %v4582, %v4611
        %v4684 = vadd.f32 %v4666, 1e-05
        %v4685 = vadd.f32 %v4667, 1e-05
        %v4686 = vadd.f32 %v4668, 1e-05
        %v4687 = vadd.f32 %v4669, 1e-05
        %v4688 = vadd.f32 %v4670, 1e-05
        %v4689 = vadd.f32 %v4671, 1e-05
        %v4690 = vadd.f32 %v4672, 1e-05
        %v4691 = vadd.f32 %v4673, 1e-05
        %v4692 = vadd.f32 %v4674, 1e-05
        %v4693 = vrsqrt.pop %v4684
        %v4694 = vrsqrt.pop %v4685
        %v4695 = vrsqrt.pop %v4686
        %v4696 = vrsqrt.pop %v4687
        %v4697 = vrsqrt.pop %v4688
        %v4698 = vrsqrt.pop %v4689
        %v4699 = vrsqrt.pop %v4690
        %v4700 = vrsqrt.pop %v4691
        %v4701 = vrsqrt.pop %v4692
        %v4702 = vmul.f32 %v4675, %v4693
        %v4703 = vmul.f32 %v4676, %v4694
        %v4704 = vmul.f32 %v4677, %v4695
        %v4705 = vmul.f32 %v4678, %v4696
        %v4706 = vmul.f32 %v4679, %v4697
        %v4707 = vmul.f32 %v4680, %v4698
        %v4708 = vmul.f32 %v4681, %v4699
        %v4709 = vmul.f32 %v4682, %v4700
        %v4710 = vmul.f32 %v4683, %v4701
        %vm4711 = vcmp.gt.f32.partialorder %v4702, 0.0
        %vm4712 = vcmp.gt.f32.partialorder %v4703, 0.0
        %vm4713 = vcmp.gt.f32.partialorder %v4704, 0.0
        %vm4714 = vcmp.gt.f32.partialorder %v4705, 0.0
        %vm4715 = vcmp.gt.f32.partialorder %v4706, 0.0
        %vm4716 = vcmp.gt.f32.partialorder %v4707, 0.0
        %vm4717 = vcmp.gt.f32.partialorder %v4708, 0.0
        %vm4718 = vcmp.gt.f32.partialorder %v4709, 0.0
        %vm4719 = vcmp.gt.f32.partialorder %v4710, 0.0
        %v4720 = vmul.f32 %v4702, %v4130
        %v4721 = vmul.f32 %v4703, %v4130
        %v4722 = vmul.f32 %v4704, %v4130
        %v4723 = vmul.f32 %v4705, %v4130
        %v4724 = vmul.f32 %v4706, %v4130
        %v4725 = vmul.f32 %v4707, %v4130
        %v4726 = vmul.f32 %v4708, %v4130
        %v4727 = vmul.f32 %v4709, %v4130
        %v4728 = vmul.f32 %v4710, %v4130
        %v4729 = vsel %vm4711, %v4702, %v4720
        %v4730 = vsel %vm4712, %v4703, %v4721
        %v4731 = vsel %vm4713, %v4704, %v4722
        %v4732 = vsel %vm4714, %v4705, %v4723
        %v4733 = vsel %vm4715, %v4706, %v4724
        %v4734 = vsel %vm4716, %v4707, %v4725
        %v4735 = vsel %vm4717, %v4708, %v4726
        %v4736 = vsel %vm4718, %v4709, %v4727
        %v4737 = vsel %vm4719, %v4710, %v4728
        %4738 = vrot.lane.b32.xlu0 %v4729, 1
        %v4739 = vpop.permute.xlu0 %4738
        %4740 = vrot.lane.b32.xlu0 %v4730, 1
        %v4741 = vpop.permute.xlu0 %4740
        %4742 = vrot.lane.b32.xlu0 %v4731, 1
        %v4743 = vpop.permute.xlu0 %4742
        %4744 = vrot.lane.b32.xlu0 %v4732, 1
        %v4745 = vpop.permute.xlu0 %4744
        %4746 = vrot.lane.b32.xlu0 %v4733, 1
        %v4747 = vpop.permute.xlu0 %4746
        %4748 = vrot.lane.b32.xlu0 %v4734, 1
        %v4749 = vpop.permute.xlu0 %4748
        %4750 = vrot.lane.b32.xlu0 %v4735, 1
        %v4751 = vpop.permute.xlu0 %4750
        %4752 = vrot.lane.b32.xlu0 %v4736, 1
        %v4753 = vpop.permute.xlu0 %4752
        %4754 = vrot.lane.b32.xlu0 %v4737, 1
        %v4755 = vpop.permute.xlu0 %4754
        %v4756 = vsel %vm818, %v4739, 0.0
        %v4757 = vsel %vm818, %v4741, 0.0
        %v4758 = vsel %vm818, %v4743, 0.0
        %v4759 = vsel %vm818, %v4745, 0.0
        %v4760 = vsel %vm818, %v4747, 0.0
        %v4761 = vsel %vm818, %v4749, 0.0
        %v4762 = vsel %vm818, %v4751, 0.0
        %v4763 = vsel %vm818, %v4753, 0.0
        %v4764 = vsel %vm818, %v4755, 0.0
        %4765 = vrot.lane.b32.xlu0 %v4729, 127
        %v4766 = vpop.permute.xlu0 %4765
        %4767 = vrot.lane.b32.xlu0 %v4730, 127
        %v4768 = vpop.permute.xlu0 %4767
        %4769 = vrot.lane.b32.xlu0 %v4731, 127
        %v4770 = vpop.permute.xlu0 %4769
        %4771 = vrot.lane.b32.xlu0 %v4732, 127
        %v4772 = vpop.permute.xlu0 %4771
        %4773 = vrot.lane.b32.xlu0 %v4733, 127
        %v4774 = vpop.permute.xlu0 %4773
        %4775 = vrot.lane.b32.xlu0 %v4734, 127
        %v4776 = vpop.permute.xlu0 %4775
        %4777 = vrot.lane.b32.xlu0 %v4735, 127
        %v4778 = vpop.permute.xlu0 %4777
        %4779 = vrot.lane.b32.xlu0 %v4736, 127
        %v4780 = vpop.permute.xlu0 %4779
        %4781 = vrot.lane.b32.xlu0 %v4737, 127
        %v4782 = vpop.permute.xlu0 %4781
        %v4783 = vsel %vm822, %v4766, 0.0
        %v4784 = vsel %vm822, %v4768, 0.0
        %v4785 = vsel %vm822, %v4770, 0.0
        %v4786 = vsel %vm822, %v4772, 0.0
        %v4787 = vsel %vm822, %v4774, 0.0
        %v4788 = vsel %vm822, %v4776, 0.0
        %v4789 = vsel %vm822, %v4778, 0.0
        %v4790 = vsel %vm822, %v4780, 0.0
        %v4791 = vsel %vm822, %v4782, 0.0
        %v4792 = vld [vmem:[%s15] sm:$0xff]
        %v4793 = vld [vmem:[%s15 + $0x8] sm:$0xff]
        %v4794 = vld [vmem:[%s15 + $0x10] sm:$0xff]
        %v4795 = vld [vmem:[%s15 + $0x18] sm:$0xff]
        %v4796 = vld [vmem:[%s15 + $0x20] sm:$0xff]
        %v4797 = vld [vmem:[%s15 + $0x28] sm:$0xff]
        %v4798 = vld [vmem:[%s15 + $0x30] sm:$0xff]
        %v4799 = vld [vmem:[%s15 + $0x38] sm:$0xff]
        %v4800 = vld [vmem:[%s15 + $0x40] sm:$0xff]
        %v4801 = vld [vmem:[%s15 + $0x48] sm:$0xff]
        %v4802 = vld [vmem:[%s15 + $0x50] sm:$0xff]
        %v4803 = vld [vmem:[%s15 + $0x58] sm:$0xff]
        %v4804 = vld [vmem:[%s15 + $0x60] sm:$0xff]
        %v4805 = vld [vmem:[%s15 + $0x68] sm:$0xff]
        %v4806 = vld [vmem:[%s15 + $0x70] sm:$0xff]
        %v4807 = vld [vmem:[%s15 + $0x78] sm:$0xff]
        %v4808 = vld [vmem:[%s15 + $0x80] sm:$0xff]
        %v4809 = vld [vmem:[%s15 + $0x88] sm:$0xff]
        %v4810 = vld [vmem:[%s16] sm:$0xff]
        %v4811 = vld [vmem:[%s16 + $0x8] sm:$0xff]
        %v4812 = vld [vmem:[%s16 + $0x10] sm:$0xff]
        %v4813 = vld [vmem:[%s16 + $0x18] sm:$0xff]
        %v4814 = vld [vmem:[%s16 + $0x20] sm:$0xff]
        %v4815 = vld [vmem:[%s16 + $0x28] sm:$0xff]
        %v4816 = vld [vmem:[%s16 + $0x30] sm:$0xff]
        %v4817 = vld [vmem:[%s16 + $0x38] sm:$0xff]
        %v4818 = vld [vmem:[%s16 + $0x40] sm:$0xff]
        %4820 = vset.pattern.permute.xlu0 0
        %4821 = vperm.xlu0 %4820, %v4810
        %v4822 = vpop.permute.xlu0 %4821
        %4825 = vset.pattern.permute.xlu0 0
        %4826 = vperm.xlu0 %4825, %v4811
        %v4827 = vpop.permute.xlu0 %4826
        %4830 = vset.pattern.permute.xlu0 0
        %4831 = vperm.xlu0 %4830, %v4812
        %v4832 = vpop.permute.xlu0 %4831
        %4835 = vset.pattern.permute.xlu0 0
        %4836 = vperm.xlu0 %4835, %v4813
        %v4837 = vpop.permute.xlu0 %4836
        %4840 = vset.pattern.permute.xlu0 0
        %4841 = vperm.xlu0 %4840, %v4814
        %v4842 = vpop.permute.xlu0 %4841
        %4845 = vset.pattern.permute.xlu0 0
        %4846 = vperm.xlu0 %4845, %v4815
        %v4847 = vpop.permute.xlu0 %4846
        %4850 = vset.pattern.permute.xlu0 0
        %4851 = vperm.xlu0 %4850, %v4816
        %v4852 = vpop.permute.xlu0 %4851
        %4855 = vset.pattern.permute.xlu0 0
        %4856 = vperm.xlu0 %4855, %v4817
        %v4857 = vpop.permute.xlu0 %4856
        %4860 = vset.pattern.permute.xlu0 0
        %4861 = vperm.xlu0 %4860, %v4818
        %v4862 = vpop.permute.xlu0 %4861
        %v4865 = vsel %vm2887, %v4793, 0
        %v4868 = vsel %vm2887, %v4795, 0
        %v4871 = vsel %vm2887, %v4797, 0
        %v4874 = vsel %vm2887, %v4799, 0
        %v4877 = vsel %vm2887, %v4801, 0
        %v4880 = vsel %vm2887, %v4803, 0
        %v4883 = vsel %vm2887, %v4805, 0
        %v4886 = vsel %vm2887, %v4807, 0
        %v4889 = vsel %vm2887, %v4809, 0
        %4891 = vmatprep.subr.mxu0 0.0
        %4892 = vmatpush1.msra.mxu0 %v4735
        %4893 = vmatprep.subr.mxu0 0.0
        %4894 = vmatpush1.msra.mxu0 %v4734
        %4895 = vmatprep.subr.mxu0 0.0
        %4896 = vmatpush1.msra.mxu0 %v4733
        %4897 = vmatprep.subr.mxu0 0.0
        %4898 = vmatpush1.msra.mxu0 %v4732
        %4899 = vmatprep.subr.mxu0 0.0
        %4900 = vmatpush1.msra.mxu0 %v4731
        %4901 = vmatprep.subr.mxu0 0.0
        %4902 = vmatpush1.msra.mxu0 %v4730
        %4903 = vmatprep.subr.mxu0 0.0
        %4904 = vmatpush1.msra.mxu0 %v4729
        %4905 = vmatprep.subr.mxu0 0.0
        %4906 = vmatpush1.msra.mxu0 %v4764
        %4907 = vmatprep.subr.mxu0 0.0
        %4908 = vmatpush1.msra.mxu0 %v4763
        %4909 = vmatprep.subr.mxu0 0.0
        %4910 = vmatpush1.msra.mxu0 %v4762
        %4911 = vmatprep.subr.mxu0 0.0
        %4912 = vmatpush1.msra.mxu0 %v4761
        %4913 = vmatprep.subr.mxu0 0.0
        %4914 = vmatpush1.msra.mxu0 %v4760
        %4915 = vmatprep.subr.mxu0 0.0
        %4916 = vmatpush1.msra.mxu0 %v4759
        %4917 = vmatprep.subr.mxu0 0.0
        %4918 = vmatpush1.msra.mxu0 %v4758
        %4919 = vmatprep.subr.mxu0 0.0
        %4920 = vmatpush1.msra.mxu0 %v4757
        %4921 = vmatprep.subr.mxu0 0.0
        %4922 = vmatpush1.msra.mxu0 %v4756
        %4923 = vmatprep.subr.mxu0 0.0
        %4924 = vmatpush2.msra.mxu0 0.0
        %4925 = vmatprep.subr.mxu0 0.0
        %4926 = vmatpush2.msra.mxu0 0.0
        %4927 = vmatprep.subr.mxu0 0.0
        %4928 = vmatpush2.msra.mxu0 0.0
        %4929 = vmatprep.subr.mxu0 0.0
        %4930 = vmatpush2.msra.mxu0 0.0
        %4931 = vmatprep.subr.mxu0 0.0
        %4932 = vmatpush2.msra.mxu0 0.0
        %4933 = vmatprep.subr.mxu0 0.0
        %4934 = vmatpush2.msra.mxu0 %v4791
        %4935 = vmatprep.subr.mxu0 0.0
        %4936 = vmatpush2.msra.mxu0 %v4790
        %4937 = vmatprep.subr.mxu0 0.0
        %4938 = vmatpush2.msra.mxu0 %v4789
        %4939 = vmatprep.subr.mxu0 0.0
        %4940 = vmatpush2.msra.mxu0 %v4788
        %4941 = vmatprep.subr.mxu0 0.0
        %4942 = vmatpush2.msra.mxu0 %v4787
        %4943 = vmatprep.subr.mxu0 0.0
        %4944 = vmatpush2.msra.mxu0 %v4786
        %4945 = vmatprep.subr.mxu0 0.0
        %4946 = vmatpush2.msra.mxu0 %v4785
        %4947 = vmatprep.subr.mxu0 0.0
        %4948 = vmatpush2.msra.mxu0 %v4784
        %4949 = vmatprep.subr.mxu0 0.0
        %4950 = vmatpush2.msra.mxu0 %v4783
        %4951 = vmatprep.subr.mxu0 0.0
        %4952 = vmatpush2.msra.mxu0 %v4737
        %4953 = vmatprep.subr.mxu0 0.0
        %4954 = vmatpush2.msra.mxu0 %v4736
        %4955 = vmatprep.mubr.f32.mxu0 %v4865
        %4956 = vmatmul.mubr.f32.gmra.mxu0 %v4792
        %v4957 = vpop.f32.mrf.mxu0
        %v4958 = vadd.f32 %v4822, %v4957
        %v4959 = vpop.f32.mrf.mxu0
        %4960 = vmatprep.mubr.f32.mxu0 %v4868
        %4961 = vmatmul.mubr.f32.gmra.mxu0 %v4794
        %v4962 = vpop.f32.mrf.mxu0
        %v4963 = vadd.f32 %v4827, %v4962
        %v4964 = vpop.f32.mrf.mxu0
        %4965 = vmatprep.mubr.f32.mxu0 %v4871
        %4966 = vmatmul.mubr.f32.gmra.mxu0 %v4796
        %v4967 = vpop.f32.mrf.mxu0
        %v4968 = vadd.f32 %v4832, %v4967
        %v4969 = vpop.f32.mrf.mxu0
        %4970 = vmatprep.mubr.f32.mxu0 %v4874
        %4971 = vmatmul.mubr.f32.gmra.mxu0 %v4798
        %v4972 = vpop.f32.mrf.mxu0
        %v4973 = vadd.f32 %v4837, %v4972
        %v4974 = vpop.f32.mrf.mxu0
        %4975 = vmatprep.mubr.f32.mxu0 %v4877
        %4976 = vmatmul.mubr.f32.gmra.mxu0 %v4800
        %v4977 = vpop.f32.mrf.mxu0
        %v4978 = vadd.f32 %v4842, %v4977
        %v4979 = vpop.f32.mrf.mxu0
        %4980 = vmatprep.mubr.f32.mxu0 %v4880
        %4981 = vmatmul.mubr.f32.gmra.mxu0 %v4802
        %v4982 = vpop.f32.mrf.mxu0
        %v4983 = vadd.f32 %v4847, %v4982
        %v4984 = vpop.f32.mrf.mxu0
        %4985 = vmatprep.mubr.f32.mxu0 %v4883
        %4986 = vmatmul.mubr.f32.gmra.mxu0 %v4804
        %v4987 = vpop.f32.mrf.mxu0
        %v4988 = vadd.f32 %v4852, %v4987
        %v4989 = vpop.f32.mrf.mxu0
        %4990 = vmatprep.mubr.f32.mxu0 %v4886
        %4991 = vmatmul.mubr.f32.gmra.mxu0 %v4806
        %v4992 = vpop.f32.mrf.mxu0
        %v4993 = vadd.f32 %v4857, %v4992
        %v4994 = vpop.f32.mrf.mxu0
        %4995 = vmatprep.mubr.f32.mxu0 %v4889
        %4996 = vmatmul.mubr.f32.gmra.mxu0 %v4808
        %v4997 = vpop.f32.mrf.mxu0
        %v4998 = vadd.f32 %v4862, %v4997
        %v4999 = vpop.f32.mrf.mxu0
        %5000 = vdwg.mxu0
        %5001 = vadd.xlane.f32.xlu0 %v4958
        %v5002 = vpop.xlane.xlu0 %5001
        %5003 = vadd.xlane.f32.xlu0 %v4963
        %v5004 = vpop.xlane.xlu0 %5003
        %5005 = vadd.xlane.f32.xlu0 %v4968
        %v5006 = vpop.xlane.xlu0 %5005
        %5007 = vadd.xlane.f32.xlu0 %v4973
        %v5008 = vpop.xlane.xlu0 %5007
        %5009 = vadd.xlane.f32.xlu0 %v4978
        %v5010 = vpop.xlane.xlu0 %5009
        %5011 = vadd.xlane.f32.xlu0 %v4983
        %v5012 = vpop.xlane.xlu0 %5011
        %5013 = vadd.xlane.f32.xlu0 %v4988
        %v5014 = vpop.xlane.xlu0 %5013
        %5015 = vadd.xlane.f32.xlu0 %v4993
        %v5016 = vpop.xlane.xlu0 %5015
        %5017 = vadd.xlane.f32.xlu0 %v4998
        %v5018 = vpop.xlane.xlu0 %5017
        %v5019 = vmul.f32 %v5002, 0.0078125
        %v5020 = vmul.f32 %v5004, 0.0078125
        %v5021 = vmul.f32 %v5006, 0.0078125
        %v5022 = vmul.f32 %v5008, 0.0078125
        %v5023 = vmul.f32 %v5010, 0.0078125
        %v5024 = vmul.f32 %v5012, 0.0078125
        %v5025 = vmul.f32 %v5014, 0.0078125
        %v5026 = vmul.f32 %v5016, 0.0078125
        %v5027 = vmul.f32 %v5018, 0.0078125
        %v5028 = vmul.f32 %v4958, %v4958
        %v5029 = vmul.f32 %v4963, %v4963
        %v5030 = vmul.f32 %v4968, %v4968
        %v5031 = vmul.f32 %v4973, %v4973
        %v5032 = vmul.f32 %v4978, %v4978
        %v5033 = vmul.f32 %v4983, %v4983
        %v5034 = vmul.f32 %v4988, %v4988
        %v5035 = vmul.f32 %v4993, %v4993
        %v5036 = vmul.f32 %v4998, %v4998
        %5037 = vadd.xlane.f32.xlu0 %v5028
        %v5038 = vpop.xlane.xlu0 %5037
        %5039 = vadd.xlane.f32.xlu0 %v5029
        %v5040 = vpop.xlane.xlu0 %5039
        %5041 = vadd.xlane.f32.xlu0 %v5030
        %v5042 = vpop.xlane.xlu0 %5041
        %5043 = vadd.xlane.f32.xlu0 %v5031
        %v5044 = vpop.xlane.xlu0 %5043
        %5045 = vadd.xlane.f32.xlu0 %v5032
        %v5046 = vpop.xlane.xlu0 %5045
        %5047 = vadd.xlane.f32.xlu0 %v5033
        %v5048 = vpop.xlane.xlu0 %5047
        %5049 = vadd.xlane.f32.xlu0 %v5034
        %v5050 = vpop.xlane.xlu0 %5049
        %5051 = vadd.xlane.f32.xlu0 %v5035
        %v5052 = vpop.xlane.xlu0 %5051
        %5053 = vadd.xlane.f32.xlu0 %v5036
        %v5054 = vpop.xlane.xlu0 %5053
        %v5055 = vmul.f32 %v5038, 0.0078125
        %v5056 = vmul.f32 %v5040, 0.0078125
        %v5057 = vmul.f32 %v5042, 0.0078125
        %v5058 = vmul.f32 %v5044, 0.0078125
        %v5059 = vmul.f32 %v5046, 0.0078125
        %v5060 = vmul.f32 %v5048, 0.0078125
        %v5061 = vmul.f32 %v5050, 0.0078125
        %v5062 = vmul.f32 %v5052, 0.0078125
        %v5063 = vmul.f32 %v5054, 0.0078125
        %v5064 = vmul.f32 %v5019, %v5019
        %v5065 = vmul.f32 %v5020, %v5020
        %v5066 = vmul.f32 %v5021, %v5021
        %v5067 = vmul.f32 %v5022, %v5022
        %v5068 = vmul.f32 %v5023, %v5023
        %v5069 = vmul.f32 %v5024, %v5024
        %v5070 = vmul.f32 %v5025, %v5025
        %v5071 = vmul.f32 %v5026, %v5026
        %v5072 = vmul.f32 %v5027, %v5027
        %v5073 = vsub.f32 %v5055, %v5064
        %v5074 = vsub.f32 %v5056, %v5065
        %v5075 = vsub.f32 %v5057, %v5066
        %v5076 = vsub.f32 %v5058, %v5067
        %v5077 = vsub.f32 %v5059, %v5068
        %v5078 = vsub.f32 %v5060, %v5069
        %v5079 = vsub.f32 %v5061, %v5070
        %v5080 = vsub.f32 %v5062, %v5071
        %v5081 = vsub.f32 %v5063, %v5072
        %v5082 = vmax.f32 %v5073, 0.0
        %v5083 = vmax.f32 %v5074, 0.0
        %v5084 = vmax.f32 %v5075, 0.0
        %v5085 = vmax.f32 %v5076, 0.0
        %v5086 = vmax.f32 %v5077, 0.0
        %v5087 = vmax.f32 %v5078, 0.0
        %v5088 = vmax.f32 %v5079, 0.0
        %v5089 = vmax.f32 %v5080, 0.0
        %v5090 = vmax.f32 %v5081, 0.0
        %v5091 = vsub.f32 %v4958, %v5019
        %v5092 = vsub.f32 %v4963, %v5020
        %v5093 = vsub.f32 %v4968, %v5021
        %v5094 = vsub.f32 %v4973, %v5022
        %v5095 = vsub.f32 %v4978, %v5023
        %v5096 = vsub.f32 %v4983, %v5024
        %v5097 = vsub.f32 %v4988, %v5025
        %v5098 = vsub.f32 %v4993, %v5026
        %v5099 = vsub.f32 %v4998, %v5027
        %v5100 = vadd.f32 %v5082, 1e-05
        %v5101 = vadd.f32 %v5083, 1e-05
        %v5102 = vadd.f32 %v5084, 1e-05
        %v5103 = vadd.f32 %v5085, 1e-05
        %v5104 = vadd.f32 %v5086, 1e-05
        %v5105 = vadd.f32 %v5087, 1e-05
        %v5106 = vadd.f32 %v5088, 1e-05
        %v5107 = vadd.f32 %v5089, 1e-05
        %v5108 = vadd.f32 %v5090, 1e-05
        %v5109 = vrsqrt.pop %v5100
        %v5110 = vrsqrt.pop %v5101
        %v5111 = vrsqrt.pop %v5102
        %v5112 = vrsqrt.pop %v5103
        %v5113 = vrsqrt.pop %v5104
        %v5114 = vrsqrt.pop %v5105
        %v5115 = vrsqrt.pop %v5106
        %v5116 = vrsqrt.pop %v5107
        %v5117 = vrsqrt.pop %v5108
        %v5118 = vmul.f32 %v5091, %v5109
        %v5119 = vmul.f32 %v5092, %v5110
        %v5120 = vmul.f32 %v5093, %v5111
        %v5121 = vmul.f32 %v5094, %v5112
        %v5122 = vmul.f32 %v5095, %v5113
        %v5123 = vmul.f32 %v5096, %v5114
        %v5124 = vmul.f32 %v5097, %v5115
        %v5125 = vmul.f32 %v5098, %v5116
        %v5126 = vmul.f32 %v5099, %v5117
        %v5127 = vadd.f32 %v5118, %v3305
        %v5128 = vadd.f32 %v5119, %v3306
        %v5129 = vadd.f32 %v5120, %v3307
        %v5130 = vadd.f32 %v5121, %v3308
        %v5131 = vadd.f32 %v5122, %v3309
        %v5132 = vadd.f32 %v5123, %v3310
        %v5133 = vadd.f32 %v5124, %v3311
        %v5134 = vadd.f32 %v5125, %v3312
        %v5135 = vadd.f32 %v5126, %v3313
        %v5136 = vmax.f32 %v5127, 0.0
        %v5137 = vmax.f32 %v5128, 0.0
        %v5138 = vmax.f32 %v5129, 0.0
        %v5139 = vmax.f32 %v5130, 0.0
        %v5140 = vmax.f32 %v5131, 0.0
        %v5141 = vmax.f32 %v5132, 0.0
        %v5142 = vmax.f32 %v5133, 0.0
        %v5143 = vmax.f32 %v5134, 0.0
        %v5144 = vmax.f32 %v5135, 0.0
        %vm5145 = vcmp.eq.s32.totalorder %v799, 66
        %vm5146 = vcmp.eq.s32.totalorder %v800, 66
        %vm5147 = vcmp.eq.s32.totalorder %v801, 66
        %vm5148 = vcmp.eq.s32.totalorder %v802, 66
        %vm5149 = vcmp.eq.s32.totalorder %v803, 66
        %vm5150 = vcmp.eq.s32.totalorder %v804, 66
        %vm5151 = vcmp.eq.s32.totalorder %v805, 66
        %vm5152 = vcmp.eq.s32.totalorder %v806, 66
        %vm5153 = vcmp.eq.s32.totalorder %v807, 66
        %v5154 = vsel %vm5145, %v794, %v5136
        %v5155 = vsel %vm5146, %v794, %v5137
        %v5156 = vsel %vm5147, %v794, %v5138
        %v5157 = vsel %vm5148, %v794, %v5139
        %v5158 = vsel %vm5149, %v794, %v5140
        %v5159 = vsel %vm5150, %v794, %v5141
        %v5160 = vsel %vm5151, %v794, %v5142
        %v5161 = vsel %vm5152, %v794, %v5143
        %v5162 = vsel %vm5153, %v794, %v5144
        %s5163 = sld [smem:[#allocation2 + $0x3]]
        %5164 = vadd.xlane.f32.xlu0 %v5154
        %v5165 = vpop.xlane.xlu0 %5164
        %5166 = vadd.xlane.f32.xlu0 %v5155
        %v5167 = vpop.xlane.xlu0 %5166
        %5168 = vadd.xlane.f32.xlu0 %v5156
        %v5169 = vpop.xlane.xlu0 %5168
        %5170 = vadd.xlane.f32.xlu0 %v5157
        %v5171 = vpop.xlane.xlu0 %5170
        %5172 = vadd.xlane.f32.xlu0 %v5158
        %v5173 = vpop.xlane.xlu0 %5172
        %5174 = vadd.xlane.f32.xlu0 %v5159
        %v5175 = vpop.xlane.xlu0 %5174
        %5176 = vadd.xlane.f32.xlu0 %v5160
        %v5177 = vpop.xlane.xlu0 %5176
        %5178 = vadd.xlane.f32.xlu0 %v5161
        %v5179 = vpop.xlane.xlu0 %5178
        %5180 = vadd.xlane.f32.xlu0 %v5162
        %v5181 = vpop.xlane.xlu0 %5180
        %v5182 = vmul.f32 %v5165, 0.0078125
        %v5183 = vmul.f32 %v5167, 0.0078125
        %v5184 = vmul.f32 %v5169, 0.0078125
        %v5185 = vmul.f32 %v5171, 0.0078125
        %v5186 = vmul.f32 %v5173, 0.0078125
        %v5187 = vmul.f32 %v5175, 0.0078125
        %v5188 = vmul.f32 %v5177, 0.0078125
        %v5189 = vmul.f32 %v5179, 0.0078125
        %v5190 = vmul.f32 %v5181, 0.0078125
        %v5191 = vmul.f32 %v5154, %v5154
        %v5192 = vmul.f32 %v5155, %v5155
        %v5193 = vmul.f32 %v5156, %v5156
        %v5194 = vmul.f32 %v5157, %v5157
        %v5195 = vmul.f32 %v5158, %v5158
        %v5196 = vmul.f32 %v5159, %v5159
        %v5197 = vmul.f32 %v5160, %v5160
        %v5198 = vmul.f32 %v5161, %v5161
        %v5199 = vmul.f32 %v5162, %v5162
        %5200 = vadd.xlane.f32.xlu0 %v5191
        %v5201 = vpop.xlane.xlu0 %5200
        %5202 = vadd.xlane.f32.xlu0 %v5192
        %v5203 = vpop.xlane.xlu0 %5202
        %5204 = vadd.xlane.f32.xlu0 %v5193
        %v5205 = vpop.xlane.xlu0 %5204
        %5206 = vadd.xlane.f32.xlu0 %v5194
        %v5207 = vpop.xlane.xlu0 %5206
        %5208 = vadd.xlane.f32.xlu0 %v5195
        %v5209 = vpop.xlane.xlu0 %5208
        %5210 = vadd.xlane.f32.xlu0 %v5196
        %v5211 = vpop.xlane.xlu0 %5210
        %5212 = vadd.xlane.f32.xlu0 %v5197
        %v5213 = vpop.xlane.xlu0 %5212
        %5214 = vadd.xlane.f32.xlu0 %v5198
        %v5215 = vpop.xlane.xlu0 %5214
        %5216 = vadd.xlane.f32.xlu0 %v5199
        %v5217 = vpop.xlane.xlu0 %5216
        %v5218 = vmul.f32 %v5201, 0.0078125
        %v5219 = vmul.f32 %v5203, 0.0078125
        %v5220 = vmul.f32 %v5205, 0.0078125
        %v5221 = vmul.f32 %v5207, 0.0078125
        %v5222 = vmul.f32 %v5209, 0.0078125
        %v5223 = vmul.f32 %v5211, 0.0078125
        %v5224 = vmul.f32 %v5213, 0.0078125
        %v5225 = vmul.f32 %v5215, 0.0078125
        %v5226 = vmul.f32 %v5217, 0.0078125
        %v5227 = vmul.f32 %v5182, %v5182
        %v5228 = vmul.f32 %v5183, %v5183
        %v5229 = vmul.f32 %v5184, %v5184
        %v5230 = vmul.f32 %v5185, %v5185
        %v5231 = vmul.f32 %v5186, %v5186
        %v5232 = vmul.f32 %v5187, %v5187
        %v5233 = vmul.f32 %v5188, %v5188
        %v5234 = vmul.f32 %v5189, %v5189
        %v5235 = vmul.f32 %v5190, %v5190
        %v5236 = vsub.f32 %v5218, %v5227
        %v5237 = vsub.f32 %v5219, %v5228
        %v5238 = vsub.f32 %v5220, %v5229
        %v5239 = vsub.f32 %v5221, %v5230
        %v5240 = vsub.f32 %v5222, %v5231
        %v5241 = vsub.f32 %v5223, %v5232
        %v5242 = vsub.f32 %v5224, %v5233
        %v5243 = vsub.f32 %v5225, %v5234
        %v5244 = vsub.f32 %v5226, %v5235
        %v5245 = vmax.f32 %v5236, 0.0
        %v5246 = vmax.f32 %v5237, 0.0
        %v5247 = vmax.f32 %v5238, 0.0
        %v5248 = vmax.f32 %v5239, 0.0
        %v5249 = vmax.f32 %v5240, 0.0
        %v5250 = vmax.f32 %v5241, 0.0
        %v5251 = vmax.f32 %v5242, 0.0
        %v5252 = vmax.f32 %v5243, 0.0
        %v5253 = vmax.f32 %v5244, 0.0
        %v5254 = vsub.f32 %v5154, %v5182
        %v5255 = vsub.f32 %v5155, %v5183
        %v5256 = vsub.f32 %v5156, %v5184
        %v5257 = vsub.f32 %v5157, %v5185
        %v5258 = vsub.f32 %v5158, %v5186
        %v5259 = vsub.f32 %v5159, %v5187
        %v5260 = vsub.f32 %v5160, %v5188
        %v5261 = vsub.f32 %v5161, %v5189
        %v5262 = vsub.f32 %v5162, %v5190
        %v5263 = vadd.f32 %v5245, 1e-05
        %v5264 = vadd.f32 %v5246, 1e-05
        %v5265 = vadd.f32 %v5247, 1e-05
        %v5266 = vadd.f32 %v5248, 1e-05
        %v5267 = vadd.f32 %v5249, 1e-05
        %v5268 = vadd.f32 %v5250, 1e-05
        %v5269 = vadd.f32 %v5251, 1e-05
        %v5270 = vadd.f32 %v5252, 1e-05
        %v5271 = vadd.f32 %v5253, 1e-05
        %v5272 = vrsqrt.pop %v5263
        %v5273 = vrsqrt.pop %v5264
        %v5274 = vrsqrt.pop %v5265
        %v5275 = vrsqrt.pop %v5266
        %v5276 = vrsqrt.pop %v5267
        %v5277 = vrsqrt.pop %v5268
        %v5278 = vrsqrt.pop %v5269
        %v5279 = vrsqrt.pop %v5270
        %v5280 = vrsqrt.pop %v5271
        %v5281 = vmul.f32 %v5254, %v5272
        %v5282 = vmul.f32 %v5255, %v5273
        %v5283 = vmul.f32 %v5256, %v5274
        %v5284 = vmul.f32 %v5257, %v5275
        %v5285 = vmul.f32 %v5258, %v5276
        %v5286 = vmul.f32 %v5259, %v5277
        %v5287 = vmul.f32 %v5260, %v5278
        %v5288 = vmul.f32 %v5261, %v5279
        %v5289 = vmul.f32 %v5262, %v5280
        %5290 = vrot.lane.b32.xlu0 %v5154, 4
        %v5291 = vpop.permute.xlu0 %5290
        %5292 = vrot.lane.b32.xlu0 %v5155, 4
        %v5293 = vpop.permute.xlu0 %5292
        %5294 = vrot.lane.b32.xlu0 %v5156, 4
        %v5295 = vpop.permute.xlu0 %5294
        %5296 = vrot.lane.b32.xlu0 %v5157, 4
        %v5297 = vpop.permute.xlu0 %5296
        %5298 = vrot.lane.b32.xlu0 %v5158, 4
        %v5299 = vpop.permute.xlu0 %5298
        %5300 = vrot.lane.b32.xlu0 %v5159, 4
        %v5301 = vpop.permute.xlu0 %5300
        %5302 = vrot.lane.b32.xlu0 %v5160, 4
        %v5303 = vpop.permute.xlu0 %5302
        %5304 = vrot.lane.b32.xlu0 %v5161, 4
        %v5305 = vpop.permute.xlu0 %5304
        %5306 = vrot.lane.b32.xlu0 %v5162, 4
        %v5307 = vpop.permute.xlu0 %5306
        %v5308 = vsel %vm1351, %v5291, 0.0
        %v5309 = vsel %vm1351, %v5293, 0.0
        %v5310 = vsel %vm1351, %v5295, 0.0
        %v5311 = vsel %vm1351, %v5297, 0.0
        %v5312 = vsel %vm1351, %v5299, 0.0
        %v5313 = vsel %vm1351, %v5301, 0.0
        %v5314 = vsel %vm1351, %v5303, 0.0
        %v5315 = vsel %vm1351, %v5305, 0.0
        %v5316 = vsel %vm1351, %v5307, 0.0
        %5317 = vrot.lane.b32.xlu0 %v5154, 3
        %v5318 = vpop.permute.xlu0 %5317
        %5319 = vrot.lane.b32.xlu0 %v5155, 3
        %v5320 = vpop.permute.xlu0 %5319
        %5321 = vrot.lane.b32.xlu0 %v5156, 3
        %v5322 = vpop.permute.xlu0 %5321
        %5323 = vrot.lane.b32.xlu0 %v5157, 3
        %v5324 = vpop.permute.xlu0 %5323
        %5325 = vrot.lane.b32.xlu0 %v5158, 3
        %v5326 = vpop.permute.xlu0 %5325
        %5327 = vrot.lane.b32.xlu0 %v5159, 3
        %v5328 = vpop.permute.xlu0 %5327
        %5329 = vrot.lane.b32.xlu0 %v5160, 3
        %v5330 = vpop.permute.xlu0 %5329
        %5331 = vrot.lane.b32.xlu0 %v5161, 3
        %v5332 = vpop.permute.xlu0 %5331
        %5333 = vrot.lane.b32.xlu0 %v5162, 3
        %v5334 = vpop.permute.xlu0 %5333
        %v5335 = vsel %vm810, %v5318, 0.0
        %v5336 = vsel %vm810, %v5320, 0.0
        %v5337 = vsel %vm810, %v5322, 0.0
        %v5338 = vsel %vm810, %v5324, 0.0
        %v5339 = vsel %vm810, %v5326, 0.0
        %v5340 = vsel %vm810, %v5328, 0.0
        %v5341 = vsel %vm810, %v5330, 0.0
        %v5342 = vsel %vm810, %v5332, 0.0
        %v5343 = vsel %vm810, %v5334, 0.0
        %5344 = vrot.lane.b32.xlu0 %v5154, 2
        %v5345 = vpop.permute.xlu0 %5344
        %5346 = vrot.lane.b32.xlu0 %v5155, 2
        %v5347 = vpop.permute.xlu0 %5346
        %5348 = vrot.lane.b32.xlu0 %v5156, 2
        %v5349 = vpop.permute.xlu0 %5348
        %5350 = vrot.lane.b32.xlu0 %v5157, 2
        %v5351 = vpop.permute.xlu0 %5350
        %5352 = vrot.lane.b32.xlu0 %v5158, 2
        %v5353 = vpop.permute.xlu0 %5352
        %5354 = vrot.lane.b32.xlu0 %v5159, 2
        %v5355 = vpop.permute.xlu0 %5354
        %5356 = vrot.lane.b32.xlu0 %v5160, 2
        %v5357 = vpop.permute.xlu0 %5356
        %5358 = vrot.lane.b32.xlu0 %v5161, 2
        %v5359 = vpop.permute.xlu0 %5358
        %5360 = vrot.lane.b32.xlu0 %v5162, 2
        %v5361 = vpop.permute.xlu0 %5360
        %v5362 = vsel %vm814, %v5345, 0.0
        %v5363 = vsel %vm814, %v5347, 0.0
        %v5364 = vsel %vm814, %v5349, 0.0
        %v5365 = vsel %vm814, %v5351, 0.0
        %v5366 = vsel %vm814, %v5353, 0.0
        %v5367 = vsel %vm814, %v5355, 0.0
        %v5368 = vsel %vm814, %v5357, 0.0
        %v5369 = vsel %vm814, %v5359, 0.0
        %v5370 = vsel %vm814, %v5361, 0.0
        %5371 = vrot.lane.b32.xlu0 %v5154, 1
        %v5372 = vpop.permute.xlu0 %5371
        %5373 = vrot.lane.b32.xlu0 %v5155, 1
        %v5374 = vpop.permute.xlu0 %5373
        %5375 = vrot.lane.b32.xlu0 %v5156, 1
        %v5376 = vpop.permute.xlu0 %5375
        %5377 = vrot.lane.b32.xlu0 %v5157, 1
        %v5378 = vpop.permute.xlu0 %5377
        %5379 = vrot.lane.b32.xlu0 %v5158, 1
        %v5380 = vpop.permute.xlu0 %5379
        %5381 = vrot.lane.b32.xlu0 %v5159, 1
        %v5382 = vpop.permute.xlu0 %5381
        %5383 = vrot.lane.b32.xlu0 %v5160, 1
        %v5384 = vpop.permute.xlu0 %5383
        %5385 = vrot.lane.b32.xlu0 %v5161, 1
        %v5386 = vpop.permute.xlu0 %5385
        %5387 = vrot.lane.b32.xlu0 %v5162, 1
        %v5388 = vpop.permute.xlu0 %5387
        %v5389 = vsel %vm818, %v5372, 0.0
        %v5390 = vsel %vm818, %v5374, 0.0
        %v5391 = vsel %vm818, %v5376, 0.0
        %v5392 = vsel %vm818, %v5378, 0.0
        %v5393 = vsel %vm818, %v5380, 0.0
        %v5394 = vsel %vm818, %v5382, 0.0
        %v5395 = vsel %vm818, %v5384, 0.0
        %v5396 = vsel %vm818, %v5386, 0.0
        %v5397 = vsel %vm818, %v5388, 0.0
        %5398 = vrot.lane.b32.xlu0 %v5154, 127
        %v5399 = vpop.permute.xlu0 %5398
        %5400 = vrot.lane.b32.xlu0 %v5155, 127
        %v5401 = vpop.permute.xlu0 %5400
        %5402 = vrot.lane.b32.xlu0 %v5156, 127
        %v5403 = vpop.permute.xlu0 %5402
        %5404 = vrot.lane.b32.xlu0 %v5157, 127
        %v5405 = vpop.permute.xlu0 %5404
        %5406 = vrot.lane.b32.xlu0 %v5158, 127
        %v5407 = vpop.permute.xlu0 %5406
        %5408 = vrot.lane.b32.xlu0 %v5159, 127
        %v5409 = vpop.permute.xlu0 %5408
        %5410 = vrot.lane.b32.xlu0 %v5160, 127
        %v5411 = vpop.permute.xlu0 %5410
        %5412 = vrot.lane.b32.xlu0 %v5161, 127
        %v5413 = vpop.permute.xlu0 %5412
        %5414 = vrot.lane.b32.xlu0 %v5162, 127
        %v5415 = vpop.permute.xlu0 %5414
        %v5416 = vsel %vm822, %v5399, 0.0
        %v5417 = vsel %vm822, %v5401, 0.0
        %v5418 = vsel %vm822, %v5403, 0.0
        %v5419 = vsel %vm822, %v5405, 0.0
        %v5420 = vsel %vm822, %v5407, 0.0
        %v5421 = vsel %vm822, %v5409, 0.0
        %v5422 = vsel %vm822, %v5411, 0.0
        %v5423 = vsel %vm822, %v5413, 0.0
        %v5424 = vsel %vm822, %v5415, 0.0
        %5425 = vrot.lane.b32.xlu0 %v5154, 126
        %v5426 = vpop.permute.xlu0 %5425
        %5427 = vrot.lane.b32.xlu0 %v5155, 126
        %v5428 = vpop.permute.xlu0 %5427
        %5429 = vrot.lane.b32.xlu0 %v5156, 126
        %v5430 = vpop.permute.xlu0 %5429
        %5431 = vrot.lane.b32.xlu0 %v5157, 126
        %v5432 = vpop.permute.xlu0 %5431
        %5433 = vrot.lane.b32.xlu0 %v5158, 126
        %v5434 = vpop.permute.xlu0 %5433
        %5435 = vrot.lane.b32.xlu0 %v5159, 126
        %v5436 = vpop.permute.xlu0 %5435
        %5437 = vrot.lane.b32.xlu0 %v5160, 126
        %v5438 = vpop.permute.xlu0 %5437
        %5439 = vrot.lane.b32.xlu0 %v5161, 126
        %v5440 = vpop.permute.xlu0 %5439
        %5441 = vrot.lane.b32.xlu0 %v5162, 126
        %v5442 = vpop.permute.xlu0 %5441
        %v5443 = vsel %vm826, %v5426, 0.0
        %v5444 = vsel %vm826, %v5428, 0.0
        %v5445 = vsel %vm826, %v5430, 0.0
        %v5446 = vsel %vm826, %v5432, 0.0
        %v5447 = vsel %vm826, %v5434, 0.0
        %v5448 = vsel %vm826, %v5436, 0.0
        %v5449 = vsel %vm826, %v5438, 0.0
        %v5450 = vsel %vm826, %v5440, 0.0
        %v5451 = vsel %vm826, %v5442, 0.0
        %5452 = vrot.lane.b32.xlu0 %v5154, 125
        %v5453 = vpop.permute.xlu0 %5452
        %5454 = vrot.lane.b32.xlu0 %v5155, 125
        %v5455 = vpop.permute.xlu0 %5454
        %5456 = vrot.lane.b32.xlu0 %v5156, 125
        %v5457 = vpop.permute.xlu0 %5456
        %5458 = vrot.lane.b32.xlu0 %v5157, 125
        %v5459 = vpop.permute.xlu0 %5458
        %5460 = vrot.lane.b32.xlu0 %v5158, 125
        %v5461 = vpop.permute.xlu0 %5460
        %5462 = vrot.lane.b32.xlu0 %v5159, 125
        %v5463 = vpop.permute.xlu0 %5462
        %5464 = vrot.lane.b32.xlu0 %v5160, 125
        %v5465 = vpop.permute.xlu0 %5464
        %5466 = vrot.lane.b32.xlu0 %v5161, 125
        %v5467 = vpop.permute.xlu0 %5466
        %5468 = vrot.lane.b32.xlu0 %v5162, 125
        %v5469 = vpop.permute.xlu0 %5468
        %v5470 = vsel %vm830, %v5453, 0.0
        %v5471 = vsel %vm830, %v5455, 0.0
        %v5472 = vsel %vm830, %v5457, 0.0
        %v5473 = vsel %vm830, %v5459, 0.0
        %v5474 = vsel %vm830, %v5461, 0.0
        %v5475 = vsel %vm830, %v5463, 0.0
        %v5476 = vsel %vm830, %v5465, 0.0
        %v5477 = vsel %vm830, %v5467, 0.0
        %v5478 = vsel %vm830, %v5469, 0.0
        %5479 = vrot.lane.b32.xlu0 %v5154, 124
        %v5480 = vpop.permute.xlu0 %5479
        %5481 = vrot.lane.b32.xlu0 %v5155, 124
        %v5482 = vpop.permute.xlu0 %5481
        %5483 = vrot.lane.b32.xlu0 %v5156, 124
        %v5484 = vpop.permute.xlu0 %5483
        %5485 = vrot.lane.b32.xlu0 %v5157, 124
        %v5486 = vpop.permute.xlu0 %5485
        %5487 = vrot.lane.b32.xlu0 %v5158, 124
        %v5488 = vpop.permute.xlu0 %5487
        %5489 = vrot.lane.b32.xlu0 %v5159, 124
        %v5490 = vpop.permute.xlu0 %5489
        %5491 = vrot.lane.b32.xlu0 %v5160, 124
        %v5492 = vpop.permute.xlu0 %5491
        %5493 = vrot.lane.b32.xlu0 %v5161, 124
        %v5494 = vpop.permute.xlu0 %5493
        %5495 = vrot.lane.b32.xlu0 %v5162, 124
        %v5496 = vpop.permute.xlu0 %5495
        %v5497 = vsel %vm1541, %v5480, 0.0
        %v5498 = vsel %vm1541, %v5482, 0.0
        %v5499 = vsel %vm1541, %v5484, 0.0
        %v5500 = vsel %vm1541, %v5486, 0.0
        %v5501 = vsel %vm1541, %v5488, 0.0
        %v5502 = vsel %vm1541, %v5490, 0.0
        %v5503 = vsel %vm1541, %v5492, 0.0
        %v5504 = vsel %vm1541, %v5494, 0.0
        %v5505 = vsel %vm1541, %v5496, 0.0
        %v5506 = vld [vmem:[%s17] sm:$0xff]
        %v5507 = vld [vmem:[%s17 + $0x8] sm:$0xff]
        %v5508 = vld [vmem:[%s17 + $0x10] sm:$0xff]
        %v5509 = vld [vmem:[%s17 + $0x18] sm:$0xff]
        %v5510 = vld [vmem:[%s17 + $0x20] sm:$0xff]
        %v5511 = vld [vmem:[%s17 + $0x28] sm:$0xff]
        %v5512 = vld [vmem:[%s17 + $0x30] sm:$0xff]
        %v5513 = vld [vmem:[%s17 + $0x38] sm:$0xff]
        %v5514 = vld [vmem:[%s17 + $0x40] sm:$0xff]
        %v5515 = vld [vmem:[%s17 + $0x48] sm:$0xff]
        %v5516 = vld [vmem:[%s17 + $0x50] sm:$0xff]
        %v5517 = vld [vmem:[%s17 + $0x58] sm:$0xff]
        %v5518 = vld [vmem:[%s17 + $0x60] sm:$0xff]
        %v5519 = vld [vmem:[%s17 + $0x68] sm:$0xff]
        %v5520 = vld [vmem:[%s17 + $0x70] sm:$0xff]
        %v5521 = vld [vmem:[%s17 + $0x78] sm:$0xff]
        %v5522 = vld [vmem:[%s17 + $0x80] sm:$0xff]
        %v5523 = vld [vmem:[%s17 + $0x88] sm:$0xff]
        %v5524 = vld [vmem:[%s17 + $0x90] sm:$0xff]
        %v5525 = vld [vmem:[%s17 + $0x98] sm:$0xff]
        %v5526 = vld [vmem:[%s17 + $0xa0] sm:$0xff]
        %v5527 = vld [vmem:[%s17 + $0xa8] sm:$0xff]
        %v5528 = vld [vmem:[%s17 + $0xb0] sm:$0xff]
        %v5529 = vld [vmem:[%s17 + $0xb8] sm:$0xff]
        %v5530 = vld [vmem:[%s17 + $0xc0] sm:$0xff]
        %v5531 = vld [vmem:[%s17 + $0xc8] sm:$0xff]
        %v5532 = vld [vmem:[%s17 + $0xd0] sm:$0xff]
        %v5533 = vld [vmem:[%s17 + $0xd8] sm:$0xff]
        %v5534 = vld [vmem:[%s17 + $0xe0] sm:$0xff]
        %v5535 = vld [vmem:[%s17 + $0xe8] sm:$0xff]
        %v5536 = vld [vmem:[%s17 + $0xf0] sm:$0xff]
        %v5537 = vld [vmem:[%s17 + $0xf8] sm:$0xff]
        %v5538 = vld [vmem:[%s17 + $0x100] sm:$0xff]
        %v5539 = vld [vmem:[%s17 + $0x108] sm:$0xff]
        %v5540 = vld [vmem:[%s17 + $0x110] sm:$0xff]
        %v5541 = vld [vmem:[%s17 + $0x118] sm:$0xff]
        %v5542 = vld [vmem:[%s17 + $0x120] sm:$0xff]
        %v5543 = vld [vmem:[%s17 + $0x128] sm:$0xff]
        %v5544 = vld [vmem:[%s17 + $0x130] sm:$0xff]
        %v5545 = vld [vmem:[%s17 + $0x138] sm:$0xff]
        %v5546 = vld [vmem:[%s17 + $0x140] sm:$0xff]
        %v5547 = vld [vmem:[%s17 + $0x148] sm:$0xff]
        %v5548 = vld [vmem:[%s17 + $0x150] sm:$0xff]
        %v5549 = vld [vmem:[%s17 + $0x158] sm:$0xff]
        %v5550 = vld [vmem:[%s17 + $0x160] sm:$0xff]
        %v5551 = vld [vmem:[%s17 + $0x168] sm:$0xff]
        %v5552 = vld [vmem:[%s17 + $0x170] sm:$0xff]
        %v5553 = vld [vmem:[%s17 + $0x178] sm:$0xff]
        %v5554 = vld [vmem:[%s17 + $0x180] sm:$0xff]
        %v5555 = vld [vmem:[%s17 + $0x188] sm:$0xff]
        %v5556 = vld [vmem:[%s17 + $0x190] sm:$0xff]
        %v5557 = vld [vmem:[%s17 + $0x198] sm:$0xff]
        %v5558 = vld [vmem:[%s17 + $0x1a0] sm:$0xff]
        %v5559 = vld [vmem:[%s17 + $0x1a8] sm:$0xff]
        %v5560 = vld [vmem:[%s18] sm:$0xff]
        %v5561 = vld [vmem:[%s18 + $0x8] sm:$0xff]
        %v5562 = vld [vmem:[%s18 + $0x10] sm:$0xff]
        %v5563 = vld [vmem:[%s18 + $0x18] sm:$0xff]
        %v5564 = vld [vmem:[%s18 + $0x20] sm:$0xff]
        %v5565 = vld [vmem:[%s18 + $0x28] sm:$0xff]
        %v5566 = vld [vmem:[%s18 + $0x30] sm:$0xff]
        %v5567 = vld [vmem:[%s18 + $0x38] sm:$0xff]
        %v5568 = vld [vmem:[%s18 + $0x40] sm:$0xff]
        %5570 = vset.pattern.permute.xlu0 0
        %5571 = vperm.xlu0 %5570, %v5560
        %v5572 = vpop.permute.xlu0 %5571
        %5575 = vset.pattern.permute.xlu0 0
        %5576 = vperm.xlu0 %5575, %v5561
        %v5577 = vpop.permute.xlu0 %5576
        %5580 = vset.pattern.permute.xlu0 0
        %5581 = vperm.xlu0 %5580, %v5562
        %v5582 = vpop.permute.xlu0 %5581
        %5585 = vset.pattern.permute.xlu0 0
        %5586 = vperm.xlu0 %5585, %v5563
        %v5587 = vpop.permute.xlu0 %5586
        %5590 = vset.pattern.permute.xlu0 0
        %5591 = vperm.xlu0 %5590, %v5564
        %v5592 = vpop.permute.xlu0 %5591
        %5595 = vset.pattern.permute.xlu0 0
        %5596 = vperm.xlu0 %5595, %v5565
        %v5597 = vpop.permute.xlu0 %5596
        %5600 = vset.pattern.permute.xlu0 0
        %5601 = vperm.xlu0 %5600, %v5566
        %v5602 = vpop.permute.xlu0 %5601
        %5605 = vset.pattern.permute.xlu0 0
        %5606 = vperm.xlu0 %5605, %v5567
        %v5607 = vpop.permute.xlu0 %5606
        %5610 = vset.pattern.permute.xlu0 0
        %5611 = vperm.xlu0 %5610, %v5568
        %v5612 = vpop.permute.xlu0 %5611
        %v5615 = vsel %vm1659, %v5511, 0
        %v5618 = vsel %vm1659, %v5517, 0
        %v5621 = vsel %vm1659, %v5523, 0
        %v5624 = vsel %vm1659, %v5529, 0
        %v5627 = vsel %vm1659, %v5535, 0
        %v5630 = vsel %vm1659, %v5541, 0
        %v5633 = vsel %vm1659, %v5547, 0
        %v5636 = vsel %vm1659, %v5553, 0
        %v5639 = vsel %vm1659, %v5559, 0
        %5641 = vmatprep.subr.mxu0 0.0
        %5642 = vmatpush1.msra.mxu0 %v5341
        %5643 = vmatprep.subr.mxu0 0.0
        %5644 = vmatpush1.msra.mxu0 %v5340
        %5645 = vmatprep.subr.mxu0 0.0
        %5646 = vmatpush1.msra.mxu0 %v5339
        %5647 = vmatprep.subr.mxu0 0.0
        %5648 = vmatpush1.msra.mxu0 %v5338
        %5649 = vmatprep.subr.mxu0 0.0
        %5650 = vmatpush1.msra.mxu0 %v5337
        %5651 = vmatprep.subr.mxu0 0.0
        %5652 = vmatpush1.msra.mxu0 %v5336
        %5653 = vmatprep.subr.mxu0 0.0
        %5654 = vmatpush1.msra.mxu0 %v5335
        %5655 = vmatprep.subr.mxu0 0.0
        %5656 = vmatpush1.msra.mxu0 %v5316
        %5657 = vmatprep.subr.mxu0 0.0
        %5658 = vmatpush1.msra.mxu0 %v5315
        %5659 = vmatprep.subr.mxu0 0.0
        %5660 = vmatpush1.msra.mxu0 %v5314
        %5661 = vmatprep.subr.mxu0 0.0
        %5662 = vmatpush1.msra.mxu0 %v5313
        %5663 = vmatprep.subr.mxu0 0.0
        %5664 = vmatpush1.msra.mxu0 %v5312
        %5665 = vmatprep.subr.mxu0 0.0
        %5666 = vmatpush1.msra.mxu0 %v5311
        %5667 = vmatprep.subr.mxu0 0.0
        %5668 = vmatpush1.msra.mxu0 %v5310
        %5669 = vmatprep.subr.mxu0 0.0
        %5670 = vmatpush1.msra.mxu0 %v5309
        %5671 = vmatprep.subr.mxu0 0.0
        %5672 = vmatpush1.msra.mxu0 %v5308
        %5673 = vmatprep.subr.mxu0 0.0
        %5674 = vmatpush2.msra.mxu0 %v5393
        %5675 = vmatprep.subr.mxu0 0.0
        %5676 = vmatpush2.msra.mxu0 %v5392
        %5677 = vmatprep.subr.mxu0 0.0
        %5678 = vmatpush2.msra.mxu0 %v5391
        %5679 = vmatprep.subr.mxu0 0.0
        %5680 = vmatpush2.msra.mxu0 %v5390
        %5681 = vmatprep.subr.mxu0 0.0
        %5682 = vmatpush2.msra.mxu0 %v5389
        %5683 = vmatprep.subr.mxu0 0.0
        %5684 = vmatpush2.msra.mxu0 %v5370
        %5685 = vmatprep.subr.mxu0 0.0
        %5686 = vmatpush2.msra.mxu0 %v5369
        %5687 = vmatprep.subr.mxu0 0.0
        %5688 = vmatpush2.msra.mxu0 %v5368
        %5689 = vmatprep.subr.mxu0 0.0
        %5690 = vmatpush2.msra.mxu0 %v5367
        %5691 = vmatprep.subr.mxu0 0.0
        %5692 = vmatpush2.msra.mxu0 %v5366
        %5693 = vmatprep.subr.mxu0 0.0
        %5694 = vmatpush2.msra.mxu0 %v5365
        %5695 = vmatprep.subr.mxu0 0.0
        %5696 = vmatpush2.msra.mxu0 %v5364
        %5697 = vmatprep.subr.mxu0 0.0
        %5698 = vmatpush2.msra.mxu0 %v5363
        %5699 = vmatprep.subr.mxu0 0.0
        %5700 = vmatpush2.msra.mxu0 %v5362
        %5701 = vmatprep.subr.mxu0 0.0
        %5702 = vmatpush2.msra.mxu0 %v5343
        %5703 = vmatprep.subr.mxu0 0.0
        %5704 = vmatpush2.msra.mxu0 %v5342
        %5705 = vmatprep.mubr.f32.mxu0 %v5507
        %5706 = vmatmul.mubr.f32.gmra.mxu0 %v5506
        %v5707 = vpop.f32.mrf.mxu0
        %v5708 = vadd.f32 %v5572, %v5707
        %v5709 = vpop.f32.mrf.mxu0
        %5710 = vmatprep.mubr.f32.mxu0 %v5513
        %5711 = vmatmul.mubr.f32.gmra.mxu0 %v5512
        %v5712 = vpop.f32.mrf.mxu0
        %v5713 = vadd.f32 %v5577, %v5712
        %v5714 = vpop.f32.mrf.mxu0
        %5715 = vmatprep.mubr.f32.mxu0 %v5519
        %5716 = vmatmul.mubr.f32.gmra.mxu0 %v5518
        %v5717 = vpop.f32.mrf.mxu0
        %v5718 = vadd.f32 %v5582, %v5717
        %v5719 = vpop.f32.mrf.mxu0
        %5720 = vmatprep.mubr.f32.mxu0 %v5525
        %5721 = vmatmul.mubr.f32.gmra.mxu0 %v5524
        %v5722 = vpop.f32.mrf.mxu0
        %v5723 = vadd.f32 %v5587, %v5722
        %v5724 = vpop.f32.mrf.mxu0
        %5725 = vmatprep.mubr.f32.mxu0 %v5531
        %5726 = vmatmul.mubr.f32.gmra.mxu0 %v5530
        %v5727 = vpop.f32.mrf.mxu0
        %v5728 = vadd.f32 %v5592, %v5727
        %v5729 = vpop.f32.mrf.mxu0
        %5730 = vmatprep.mubr.f32.mxu0 %v5537
        %5731 = vmatmul.mubr.f32.gmra.mxu0 %v5536
        %v5732 = vpop.f32.mrf.mxu0
        %v5733 = vadd.f32 %v5597, %v5732
        %v5734 = vpop.f32.mrf.mxu0
        %5735 = vmatprep.mubr.f32.mxu0 %v5543
        %5736 = vmatmul.mubr.f32.gmra.mxu0 %v5542
        %v5737 = vpop.f32.mrf.mxu0
        %v5738 = vadd.f32 %v5602, %v5737
        %v5739 = vpop.f32.mrf.mxu0
        %5740 = vmatprep.mubr.f32.mxu0 %v5549
        %5741 = vmatmul.mubr.f32.gmra.mxu0 %v5548
        %v5742 = vpop.f32.mrf.mxu0
        %v5743 = vadd.f32 %v5607, %v5742
        %v5744 = vpop.f32.mrf.mxu0
        %5745 = vmatprep.mubr.f32.mxu0 %v5555
        %5746 = vmatmul.mubr.f32.gmra.mxu0 %v5554
        %v5747 = vpop.f32.mrf.mxu0
        %v5748 = vadd.f32 %v5612, %v5747
        %v5749 = vpop.f32.mrf.mxu0
        %5750 = vdwg.mxu0
        %5751 = vmatprep.subr.mxu0 0.0
        %5752 = vmatpush1.msra.mxu0 %v5418
        %5753 = vmatprep.subr.mxu0 0.0
        %5754 = vmatpush1.msra.mxu0 %v5417
        %5755 = vmatprep.subr.mxu0 0.0
        %5756 = vmatpush1.msra.mxu0 %v5416
        %5757 = vmatprep.subr.mxu0 0.0
        %5758 = vmatpush1.msra.mxu0 %v5162
        %5759 = vmatprep.subr.mxu0 0.0
        %5760 = vmatpush1.msra.mxu0 %v5161
        %5761 = vmatprep.subr.mxu0 0.0
        %5762 = vmatpush1.msra.mxu0 %v5160
        %5763 = vmatprep.subr.mxu0 0.0
        %5764 = vmatpush1.msra.mxu0 %v5159
        %5765 = vmatprep.subr.mxu0 0.0
        %5766 = vmatpush1.msra.mxu0 %v5158
        %5767 = vmatprep.subr.mxu0 0.0
        %5768 = vmatpush1.msra.mxu0 %v5157
        %5769 = vmatprep.subr.mxu0 0.0
        %5770 = vmatpush1.msra.mxu0 %v5156
        %5771 = vmatprep.subr.mxu0 0.0
        %5772 = vmatpush1.msra.mxu0 %v5155
        %5773 = vmatprep.subr.mxu0 0.0
        %5774 = vmatpush1.msra.mxu0 %v5154
        %5775 = vmatprep.subr.mxu0 0.0
        %5776 = vmatpush1.msra.mxu0 %v5397
        %5777 = vmatprep.subr.mxu0 0.0
        %5778 = vmatpush1.msra.mxu0 %v5396
        %5779 = vmatprep.subr.mxu0 0.0
        %5780 = vmatpush1.msra.mxu0 %v5395
        %5781 = vmatprep.subr.mxu0 0.0
        %5782 = vmatpush1.msra.mxu0 %v5394
        %5783 = vmatprep.subr.mxu0 0.0
        %5784 = vmatpush2.msra.mxu0 %v5470
        %5785 = vmatprep.subr.mxu0 0.0
        %5786 = vmatpush2.msra.mxu0 %v5451
        %5787 = vmatprep.subr.mxu0 0.0
        %5788 = vmatpush2.msra.mxu0 %v5450
        %5789 = vmatprep.subr.mxu0 0.0
        %5790 = vmatpush2.msra.mxu0 %v5449
        %5791 = vmatprep.subr.mxu0 0.0
        %5792 = vmatpush2.msra.mxu0 %v5448
        %5793 = vmatprep.subr.mxu0 0.0
        %5794 = vmatpush2.msra.mxu0 %v5447
        %5795 = vmatprep.subr.mxu0 0.0
        %5796 = vmatpush2.msra.mxu0 %v5446
        %5797 = vmatprep.subr.mxu0 0.0
        %5798 = vmatpush2.msra.mxu0 %v5445
        %5799 = vmatprep.subr.mxu0 0.0
        %5800 = vmatpush2.msra.mxu0 %v5444
        %5801 = vmatprep.subr.mxu0 0.0
        %5802 = vmatpush2.msra.mxu0 %v5443
        %5803 = vmatprep.subr.mxu0 0.0
        %5804 = vmatpush2.msra.mxu0 %v5424
        %5805 = vmatprep.subr.mxu0 0.0
        %5806 = vmatpush2.msra.mxu0 %v5423
        %5807 = vmatprep.subr.mxu0 0.0
        %5808 = vmatpush2.msra.mxu0 %v5422
        %5809 = vmatprep.subr.mxu0 0.0
        %5810 = vmatpush2.msra.mxu0 %v5421
        %5811 = vmatprep.subr.mxu0 0.0
        %5812 = vmatpush2.msra.mxu0 %v5420
        %5813 = vmatprep.subr.mxu0 0.0
        %5814 = vmatpush2.msra.mxu0 %v5419
        %5815 = vmatprep.mubr.f32.mxu0 %v5509
        %5816 = vmatmul.mubr.f32.gmra.mxu0 %v5508
        %v5817 = vpop.f32.mrf.mxu0
        %v5818 = vadd.f32 %v5708, %v5817
        %v5819 = vpop.f32.mrf.mxu0
        %5820 = vmatprep.mubr.f32.mxu0 %v5515
        %5821 = vmatmul.mubr.f32.gmra.mxu0 %v5514
        %v5822 = vpop.f32.mrf.mxu0
        %v5823 = vadd.f32 %v5713, %v5822
        %v5824 = vpop.f32.mrf.mxu0
        %5825 = vmatprep.mubr.f32.mxu0 %v5521
        %5826 = vmatmul.mubr.f32.gmra.mxu0 %v5520
        %v5827 = vpop.f32.mrf.mxu0
        %v5828 = vadd.f32 %v5718, %v5827
        %v5829 = vpop.f32.mrf.mxu0
        %5830 = vmatprep.mubr.f32.mxu0 %v5527
        %5831 = vmatmul.mubr.f32.gmra.mxu0 %v5526
        %v5832 = vpop.f32.mrf.mxu0
        %v5833 = vadd.f32 %v5723, %v5832
        %v5834 = vpop.f32.mrf.mxu0
        %5835 = vmatprep.mubr.f32.mxu0 %v5533
        %5836 = vmatmul.mubr.f32.gmra.mxu0 %v5532
        %v5837 = vpop.f32.mrf.mxu0
        %v5838 = vadd.f32 %v5728, %v5837
        %v5839 = vpop.f32.mrf.mxu0
        %5840 = vmatprep.mubr.f32.mxu0 %v5539
        %5841 = vmatmul.mubr.f32.gmra.mxu0 %v5538
        %v5842 = vpop.f32.mrf.mxu0
        %v5843 = vadd.f32 %v5733, %v5842
        %v5844 = vpop.f32.mrf.mxu0
        %5845 = vmatprep.mubr.f32.mxu0 %v5545
        %5846 = vmatmul.mubr.f32.gmra.mxu0 %v5544
        %v5847 = vpop.f32.mrf.mxu0
        %v5848 = vadd.f32 %v5738, %v5847
        %v5849 = vpop.f32.mrf.mxu0
        %5850 = vmatprep.mubr.f32.mxu0 %v5551
        %5851 = vmatmul.mubr.f32.gmra.mxu0 %v5550
        %v5852 = vpop.f32.mrf.mxu0
        %v5853 = vadd.f32 %v5743, %v5852
        %v5854 = vpop.f32.mrf.mxu0
        %5855 = vmatprep.mubr.f32.mxu0 %v5557
        %5856 = vmatmul.mubr.f32.gmra.mxu0 %v5556
        %v5857 = vpop.f32.mrf.mxu0
        %v5858 = vadd.f32 %v5748, %v5857
        %v5859 = vpop.f32.mrf.mxu0
        %5860 = vdwg.mxu0
        %5861 = vmatprep.subr.mxu0 0.0
        %5862 = vmatpush1.msra.mxu0 %v5504
        %5863 = vmatprep.subr.mxu0 0.0
        %5864 = vmatpush1.msra.mxu0 %v5503
        %5865 = vmatprep.subr.mxu0 0.0
        %5866 = vmatpush1.msra.mxu0 %v5502
        %5867 = vmatprep.subr.mxu0 0.0
        %5868 = vmatpush1.msra.mxu0 %v5501
        %5869 = vmatprep.subr.mxu0 0.0
        %5870 = vmatpush1.msra.mxu0 %v5500
        %5871 = vmatprep.subr.mxu0 0.0
        %5872 = vmatpush1.msra.mxu0 %v5499
        %5873 = vmatprep.subr.mxu0 0.0
        %5874 = vmatpush1.msra.mxu0 %v5498
        %5875 = vmatprep.subr.mxu0 0.0
        %5876 = vmatpush1.msra.mxu0 %v5497
        %5877 = vmatprep.subr.mxu0 0.0
        %5878 = vmatpush1.msra.mxu0 %v5478
        %5879 = vmatprep.subr.mxu0 0.0
        %5880 = vmatpush1.msra.mxu0 %v5477
        %5881 = vmatprep.subr.mxu0 0.0
        %5882 = vmatpush1.msra.mxu0 %v5476
        %5883 = vmatprep.subr.mxu0 0.0
        %5884 = vmatpush1.msra.mxu0 %v5475
        %5885 = vmatprep.subr.mxu0 0.0
        %5886 = vmatpush1.msra.mxu0 %v5474
        %5887 = vmatprep.subr.mxu0 0.0
        %5888 = vmatpush1.msra.mxu0 %v5473
        %5889 = vmatprep.subr.mxu0 0.0
        %5890 = vmatpush1.msra.mxu0 %v5472
        %5891 = vmatprep.subr.mxu0 0.0
        %5892 = vmatpush1.msra.mxu0 %v5471
        %5893 = vmatprep.subr.mxu0 0.0
        %5894 = vmatpush2.msra.mxu0 0.0
        %5895 = vmatprep.subr.mxu0 0.0
        %5896 = vmatpush2.msra.mxu0 0.0
        %5897 = vmatprep.subr.mxu0 0.0
        %5898 = vmatpush2.msra.mxu0 0.0
        %5899 = vmatprep.subr.mxu0 0.0
        %5900 = vmatpush2.msra.mxu0 0.0
        %5901 = vmatprep.subr.mxu0 0.0
        %5902 = vmatpush2.msra.mxu0 0.0
        %5903 = vmatprep.subr.mxu0 0.0
        %5904 = vmatpush2.msra.mxu0 0.0
        %5905 = vmatprep.subr.mxu0 0.0
        %5906 = vmatpush2.msra.mxu0 0.0
        %5907 = vmatprep.subr.mxu0 0.0
        %5908 = vmatpush2.msra.mxu0 0.0
        %5909 = vmatprep.subr.mxu0 0.0
        %5910 = vmatpush2.msra.mxu0 0.0
        %5911 = vmatprep.subr.mxu0 0.0
        %5912 = vmatpush2.msra.mxu0 0.0
        %5913 = vmatprep.subr.mxu0 0.0
        %5914 = vmatpush2.msra.mxu0 0.0
        %5915 = vmatprep.subr.mxu0 0.0
        %5916 = vmatpush2.msra.mxu0 0.0
        %5917 = vmatprep.subr.mxu0 0.0
        %5918 = vmatpush2.msra.mxu0 0.0
        %5919 = vmatprep.subr.mxu0 0.0
        %5920 = vmatpush2.msra.mxu0 0.0
        %5921 = vmatprep.subr.mxu0 0.0
        %5922 = vmatpush2.msra.mxu0 0.0
        %5923 = vmatprep.subr.mxu0 0.0
        %5924 = vmatpush2.msra.mxu0 %v5505
        %5925 = vmatprep.mubr.f32.mxu0 %v5615
        %5926 = vmatmul.mubr.f32.gmra.mxu0 %v5510
        %v5927 = vpop.f32.mrf.mxu0
        %v5928 = vadd.f32 %v5818, %v5927
        %v5929 = vpop.f32.mrf.mxu0
        %5930 = vmatprep.mubr.f32.mxu0 %v5618
        %5931 = vmatmul.mubr.f32.gmra.mxu0 %v5516
        %v5932 = vpop.f32.mrf.mxu0
        %v5933 = vadd.f32 %v5823, %v5932
        %v5934 = vpop.f32.mrf.mxu0
        %5935 = vmatprep.mubr.f32.mxu0 %v5621
        %5936 = vmatmul.mubr.f32.gmra.mxu0 %v5522
        %v5937 = vpop.f32.mrf.mxu0
        %v5938 = vadd.f32 %v5828, %v5937
        %v5939 = vpop.f32.mrf.mxu0
        %5940 = vmatprep.mubr.f32.mxu0 %v5624
        %5941 = vmatmul.mubr.f32.gmra.mxu0 %v5528
        %v5942 = vpop.f32.mrf.mxu0
        %v5943 = vadd.f32 %v5833, %v5942
        %v5944 = vpop.f32.mrf.mxu0
        %5945 = vmatprep.mubr.f32.mxu0 %v5627
        %5946 = vmatmul.mubr.f32.gmra.mxu0 %v5534
        %v5947 = vpop.f32.mrf.mxu0
        %v5948 = vadd.f32 %v5838, %v5947
        %v5949 = vpop.f32.mrf.mxu0
        %5950 = vmatprep.mubr.f32.mxu0 %v5630
        %5951 = vmatmul.mubr.f32.gmra.mxu0 %v5540
        %v5952 = vpop.f32.mrf.mxu0
        %v5953 = vadd.f32 %v5843, %v5952
        %v5954 = vpop.f32.mrf.mxu0
        %5955 = vmatprep.mubr.f32.mxu0 %v5633
        %5956 = vmatmul.mubr.f32.gmra.mxu0 %v5546
        %v5957 = vpop.f32.mrf.mxu0
        %v5958 = vadd.f32 %v5848, %v5957
        %v5959 = vpop.f32.mrf.mxu0
        %5960 = vmatprep.mubr.f32.mxu0 %v5636
        %5961 = vmatmul.mubr.f32.gmra.mxu0 %v5552
        %v5962 = vpop.f32.mrf.mxu0
        %v5963 = vadd.f32 %v5853, %v5962
        %v5964 = vpop.f32.mrf.mxu0
        %5965 = vmatprep.mubr.f32.mxu0 %v5639
        %5966 = vmatmul.mubr.f32.gmra.mxu0 %v5558
        %v5967 = vpop.f32.mrf.mxu0
        %v5968 = vadd.f32 %v5858, %v5967
        %v5969 = vpop.f32.mrf.mxu0
        %5970 = vdwg.mxu0
        %5971 = vadd.xlane.f32.xlu0 %v5928
        %v5972 = vpop.xlane.xlu0 %5971
        %5973 = vadd.xlane.f32.xlu0 %v5933
        %v5974 = vpop.xlane.xlu0 %5973
        %5975 = vadd.xlane.f32.xlu0 %v5938
        %v5976 = vpop.xlane.xlu0 %5975
        %5977 = vadd.xlane.f32.xlu0 %v5943
        %v5978 = vpop.xlane.xlu0 %5977
        %5979 = vadd.xlane.f32.xlu0 %v5948
        %v5980 = vpop.xlane.xlu0 %5979
        %5981 = vadd.xlane.f32.xlu0 %v5953
        %v5982 = vpop.xlane.xlu0 %5981
        %5983 = vadd.xlane.f32.xlu0 %v5958
        %v5984 = vpop.xlane.xlu0 %5983
        %5985 = vadd.xlane.f32.xlu0 %v5963
        %v5986 = vpop.xlane.xlu0 %5985
        %5987 = vadd.xlane.f32.xlu0 %v5968
        %v5988 = vpop.xlane.xlu0 %5987
        %v5989 = vmul.f32 %v5972, 0.0078125
        %v5990 = vmul.f32 %v5974, 0.0078125
        %v5991 = vmul.f32 %v5976, 0.0078125
        %v5992 = vmul.f32 %v5978, 0.0078125
        %v5993 = vmul.f32 %v5980, 0.0078125
        %v5994 = vmul.f32 %v5982, 0.0078125
        %v5995 = vmul.f32 %v5984, 0.0078125
        %v5996 = vmul.f32 %v5986, 0.0078125
        %v5997 = vmul.f32 %v5988, 0.0078125
        %v5998 = vmul.f32 %v5928, %v5928
        %v5999 = vmul.f32 %v5933, %v5933
        %v6000 = vmul.f32 %v5938, %v5938
        %v6001 = vmul.f32 %v5943, %v5943
        %v6002 = vmul.f32 %v5948, %v5948
        %v6003 = vmul.f32 %v5953, %v5953
        %v6004 = vmul.f32 %v5958, %v5958
        %v6005 = vmul.f32 %v5963, %v5963
        %v6006 = vmul.f32 %v5968, %v5968
        %6007 = vadd.xlane.f32.xlu0 %v5998
        %v6008 = vpop.xlane.xlu0 %6007
        %6009 = vadd.xlane.f32.xlu0 %v5999
        %v6010 = vpop.xlane.xlu0 %6009
        %6011 = vadd.xlane.f32.xlu0 %v6000
        %v6012 = vpop.xlane.xlu0 %6011
        %6013 = vadd.xlane.f32.xlu0 %v6001
        %v6014 = vpop.xlane.xlu0 %6013
        %6015 = vadd.xlane.f32.xlu0 %v6002
        %v6016 = vpop.xlane.xlu0 %6015
        %6017 = vadd.xlane.f32.xlu0 %v6003
        %v6018 = vpop.xlane.xlu0 %6017
        %6019 = vadd.xlane.f32.xlu0 %v6004
        %v6020 = vpop.xlane.xlu0 %6019
        %6021 = vadd.xlane.f32.xlu0 %v6005
        %v6022 = vpop.xlane.xlu0 %6021
        %6023 = vadd.xlane.f32.xlu0 %v6006
        %v6024 = vpop.xlane.xlu0 %6023
        %v6025 = vmul.f32 %v6008, 0.0078125
        %v6026 = vmul.f32 %v6010, 0.0078125
        %v6027 = vmul.f32 %v6012, 0.0078125
        %v6028 = vmul.f32 %v6014, 0.0078125
        %v6029 = vmul.f32 %v6016, 0.0078125
        %v6030 = vmul.f32 %v6018, 0.0078125
        %v6031 = vmul.f32 %v6020, 0.0078125
        %v6032 = vmul.f32 %v6022, 0.0078125
        %v6033 = vmul.f32 %v6024, 0.0078125
        %v6034 = vmul.f32 %v5989, %v5989
        %v6035 = vmul.f32 %v5990, %v5990
        %v6036 = vmul.f32 %v5991, %v5991
        %v6037 = vmul.f32 %v5992, %v5992
        %v6038 = vmul.f32 %v5993, %v5993
        %v6039 = vmul.f32 %v5994, %v5994
        %v6040 = vmul.f32 %v5995, %v5995
        %v6041 = vmul.f32 %v5996, %v5996
        %v6042 = vmul.f32 %v5997, %v5997
        %v6043 = vsub.f32 %v6025, %v6034
        %v6044 = vsub.f32 %v6026, %v6035
        %v6045 = vsub.f32 %v6027, %v6036
        %v6046 = vsub.f32 %v6028, %v6037
        %v6047 = vsub.f32 %v6029, %v6038
        %v6048 = vsub.f32 %v6030, %v6039
        %v6049 = vsub.f32 %v6031, %v6040
        %v6050 = vsub.f32 %v6032, %v6041
        %v6051 = vsub.f32 %v6033, %v6042
        %v6052 = vmax.f32 %v6043, 0.0
        %v6053 = vmax.f32 %v6044, 0.0
        %v6054 = vmax.f32 %v6045, 0.0
        %v6055 = vmax.f32 %v6046, 0.0
        %v6056 = vmax.f32 %v6047, 0.0
        %v6057 = vmax.f32 %v6048, 0.0
        %v6058 = vmax.f32 %v6049, 0.0
        %v6059 = vmax.f32 %v6050, 0.0
        %v6060 = vmax.f32 %v6051, 0.0
        %v6061 = vsub.f32 %v5928, %v5989
        %v6062 = vsub.f32 %v5933, %v5990
        %v6063 = vsub.f32 %v5938, %v5991
        %v6064 = vsub.f32 %v5943, %v5992
        %v6065 = vsub.f32 %v5948, %v5993
        %v6066 = vsub.f32 %v5953, %v5994
        %v6067 = vsub.f32 %v5958, %v5995
        %v6068 = vsub.f32 %v5963, %v5996
        %v6069 = vsub.f32 %v5968, %v5997
        %v6070 = vadd.f32 %v6052, 1e-05
        %v6071 = vadd.f32 %v6053, 1e-05
        %v6072 = vadd.f32 %v6054, 1e-05
        %v6073 = vadd.f32 %v6055, 1e-05
        %v6074 = vadd.f32 %v6056, 1e-05
        %v6075 = vadd.f32 %v6057, 1e-05
        %v6076 = vadd.f32 %v6058, 1e-05
        %v6077 = vadd.f32 %v6059, 1e-05
        %v6078 = vadd.f32 %v6060, 1e-05
        %v6079 = vrsqrt.pop %v6070
        %v6080 = vrsqrt.pop %v6071
        %v6081 = vrsqrt.pop %v6072
        %v6082 = vrsqrt.pop %v6073
        %v6083 = vrsqrt.pop %v6074
        %v6084 = vrsqrt.pop %v6075
        %v6085 = vrsqrt.pop %v6076
        %v6086 = vrsqrt.pop %v6077
        %v6087 = vrsqrt.pop %v6078
        %v6088 = vmul.f32 %v6061, %v6079
        %v6089 = vmul.f32 %v6062, %v6080
        %v6090 = vmul.f32 %v6063, %v6081
        %v6091 = vmul.f32 %v6064, %v6082
        %v6092 = vmul.f32 %v6065, %v6083
        %v6093 = vmul.f32 %v6066, %v6084
        %v6094 = vmul.f32 %v6067, %v6085
        %v6095 = vmul.f32 %v6068, %v6086
        %v6096 = vmul.f32 %v6069, %v6087
        %vm6097 = vcmp.gt.f32.partialorder %v6088, 0.0
        %vm6098 = vcmp.gt.f32.partialorder %v6089, 0.0
        %vm6099 = vcmp.gt.f32.partialorder %v6090, 0.0
        %vm6100 = vcmp.gt.f32.partialorder %v6091, 0.0
        %vm6101 = vcmp.gt.f32.partialorder %v6092, 0.0
        %vm6102 = vcmp.gt.f32.partialorder %v6093, 0.0
        %vm6103 = vcmp.gt.f32.partialorder %v6094, 0.0
        %vm6104 = vcmp.gt.f32.partialorder %v6095, 0.0
        %vm6105 = vcmp.gt.f32.partialorder %v6096, 0.0
        %v6106 = vstv %s5163
        %v6107 = vmul.f32 %v6088, %v6106
        %v6108 = vmul.f32 %v6089, %v6106
        %v6109 = vmul.f32 %v6090, %v6106
        %v6110 = vmul.f32 %v6091, %v6106
        %v6111 = vmul.f32 %v6092, %v6106
        %v6112 = vmul.f32 %v6093, %v6106
        %v6113 = vmul.f32 %v6094, %v6106
        %v6114 = vmul.f32 %v6095, %v6106
        %v6115 = vmul.f32 %v6096, %v6106
        %v6116 = vsel %vm6097, %v6088, %v6107
        %v6117 = vsel %vm6098, %v6089, %v6108
        %v6118 = vsel %vm6099, %v6090, %v6109
        %v6119 = vsel %vm6100, %v6091, %v6110
        %v6120 = vsel %vm6101, %v6092, %v6111
        %v6121 = vsel %vm6102, %v6093, %v6112
        %v6122 = vsel %vm6103, %v6094, %v6113
        %v6123 = vsel %vm6104, %v6095, %v6114
        %v6124 = vsel %vm6105, %v6096, %v6115
        %6125 = vrot.lane.b32.xlu0 %v6116, 2
        %v6126 = vpop.permute.xlu0 %6125
        %6127 = vrot.lane.b32.xlu0 %v6117, 2
        %v6128 = vpop.permute.xlu0 %6127
        %6129 = vrot.lane.b32.xlu0 %v6118, 2
        %v6130 = vpop.permute.xlu0 %6129
        %6131 = vrot.lane.b32.xlu0 %v6119, 2
        %v6132 = vpop.permute.xlu0 %6131
        %6133 = vrot.lane.b32.xlu0 %v6120, 2
        %v6134 = vpop.permute.xlu0 %6133
        %6135 = vrot.lane.b32.xlu0 %v6121, 2
        %v6136 = vpop.permute.xlu0 %6135
        %6137 = vrot.lane.b32.xlu0 %v6122, 2
        %v6138 = vpop.permute.xlu0 %6137
        %6139 = vrot.lane.b32.xlu0 %v6123, 2
        %v6140 = vpop.permute.xlu0 %6139
        %6141 = vrot.lane.b32.xlu0 %v6124, 2
        %v6142 = vpop.permute.xlu0 %6141
        %v6143 = vsel %vm814, %v6126, 0.0
        %v6144 = vsel %vm814, %v6128, 0.0
        %v6145 = vsel %vm814, %v6130, 0.0
        %v6146 = vsel %vm814, %v6132, 0.0
        %v6147 = vsel %vm814, %v6134, 0.0
        %v6148 = vsel %vm814, %v6136, 0.0
        %v6149 = vsel %vm814, %v6138, 0.0
        %v6150 = vsel %vm814, %v6140, 0.0
        %v6151 = vsel %vm814, %v6142, 0.0
        %6152 = vrot.lane.b32.xlu0 %v6116, 1
        %v6153 = vpop.permute.xlu0 %6152
        %6154 = vrot.lane.b32.xlu0 %v6117, 1
        %v6155 = vpop.permute.xlu0 %6154
        %6156 = vrot.lane.b32.xlu0 %v6118, 1
        %v6157 = vpop.permute.xlu0 %6156
        %6158 = vrot.lane.b32.xlu0 %v6119, 1
        %v6159 = vpop.permute.xlu0 %6158
        %6160 = vrot.lane.b32.xlu0 %v6120, 1
        %v6161 = vpop.permute.xlu0 %6160
        %6162 = vrot.lane.b32.xlu0 %v6121, 1
        %v6163 = vpop.permute.xlu0 %6162
        %6164 = vrot.lane.b32.xlu0 %v6122, 1
        %v6165 = vpop.permute.xlu0 %6164
        %6166 = vrot.lane.b32.xlu0 %v6123, 1
        %v6167 = vpop.permute.xlu0 %6166
        %6168 = vrot.lane.b32.xlu0 %v6124, 1
        %v6169 = vpop.permute.xlu0 %6168
        %v6170 = vsel %vm818, %v6153, 0.0
        %v6171 = vsel %vm818, %v6155, 0.0
        %v6172 = vsel %vm818, %v6157, 0.0
        %v6173 = vsel %vm818, %v6159, 0.0
        %v6174 = vsel %vm818, %v6161, 0.0
        %v6175 = vsel %vm818, %v6163, 0.0
        %v6176 = vsel %vm818, %v6165, 0.0
        %v6177 = vsel %vm818, %v6167, 0.0
        %v6178 = vsel %vm818, %v6169, 0.0
        %6179 = vrot.lane.b32.xlu0 %v6116, 127
        %v6180 = vpop.permute.xlu0 %6179
        %6181 = vrot.lane.b32.xlu0 %v6117, 127
        %v6182 = vpop.permute.xlu0 %6181
        %6183 = vrot.lane.b32.xlu0 %v6118, 127
        %v6184 = vpop.permute.xlu0 %6183
        %6185 = vrot.lane.b32.xlu0 %v6119, 127
        %v6186 = vpop.permute.xlu0 %6185
        %6187 = vrot.lane.b32.xlu0 %v6120, 127
        %v6188 = vpop.permute.xlu0 %6187
        %6189 = vrot.lane.b32.xlu0 %v6121, 127
        %v6190 = vpop.permute.xlu0 %6189
        %6191 = vrot.lane.b32.xlu0 %v6122, 127
        %v6192 = vpop.permute.xlu0 %6191
        %6193 = vrot.lane.b32.xlu0 %v6123, 127
        %v6194 = vpop.permute.xlu0 %6193
        %6195 = vrot.lane.b32.xlu0 %v6124, 127
        %v6196 = vpop.permute.xlu0 %6195
        %v6197 = vsel %vm822, %v6180, 0.0
        %v6198 = vsel %vm822, %v6182, 0.0
        %v6199 = vsel %vm822, %v6184, 0.0
        %v6200 = vsel %vm822, %v6186, 0.0
        %v6201 = vsel %vm822, %v6188, 0.0
        %v6202 = vsel %vm822, %v6190, 0.0
        %v6203 = vsel %vm822, %v6192, 0.0
        %v6204 = vsel %vm822, %v6194, 0.0
        %v6205 = vsel %vm822, %v6196, 0.0
        %6206 = vrot.lane.b32.xlu0 %v6116, 126
        %v6207 = vpop.permute.xlu0 %6206
        %6208 = vrot.lane.b32.xlu0 %v6117, 126
        %v6209 = vpop.permute.xlu0 %6208
        %6210 = vrot.lane.b32.xlu0 %v6118, 126
        %v6211 = vpop.permute.xlu0 %6210
        %6212 = vrot.lane.b32.xlu0 %v6119, 126
        %v6213 = vpop.permute.xlu0 %6212
        %6214 = vrot.lane.b32.xlu0 %v6120, 126
        %v6215 = vpop.permute.xlu0 %6214
        %6216 = vrot.lane.b32.xlu0 %v6121, 126
        %v6217 = vpop.permute.xlu0 %6216
        %6218 = vrot.lane.b32.xlu0 %v6122, 126
        %v6219 = vpop.permute.xlu0 %6218
        %6220 = vrot.lane.b32.xlu0 %v6123, 126
        %v6221 = vpop.permute.xlu0 %6220
        %6222 = vrot.lane.b32.xlu0 %v6124, 126
        %v6223 = vpop.permute.xlu0 %6222
        %v6224 = vsel %vm826, %v6207, 0.0
        %v6225 = vsel %vm826, %v6209, 0.0
        %v6226 = vsel %vm826, %v6211, 0.0
        %v6227 = vsel %vm826, %v6213, 0.0
        %v6228 = vsel %vm826, %v6215, 0.0
        %v6229 = vsel %vm826, %v6217, 0.0
        %v6230 = vsel %vm826, %v6219, 0.0
        %v6231 = vsel %vm826, %v6221, 0.0
        %v6232 = vsel %vm826, %v6223, 0.0
        %v6233 = vld [vmem:[%s19] sm:$0xff]
        %v6234 = vld [vmem:[%s19 + $0x8] sm:$0xff]
        %v6235 = vld [vmem:[%s19 + $0x10] sm:$0xff]
        %v6236 = vld [vmem:[%s19 + $0x18] sm:$0xff]
        %v6237 = vld [vmem:[%s19 + $0x20] sm:$0xff]
        %v6238 = vld [vmem:[%s19 + $0x28] sm:$0xff]
        %v6239 = vld [vmem:[%s19 + $0x30] sm:$0xff]
        %v6240 = vld [vmem:[%s19 + $0x38] sm:$0xff]
        %v6241 = vld [vmem:[%s19 + $0x40] sm:$0xff]
        %v6242 = vld [vmem:[%s19 + $0x48] sm:$0xff]
        %v6243 = vld [vmem:[%s19 + $0x50] sm:$0xff]
        %v6244 = vld [vmem:[%s19 + $0x58] sm:$0xff]
        %v6245 = vld [vmem:[%s19 + $0x60] sm:$0xff]
        %v6246 = vld [vmem:[%s19 + $0x68] sm:$0xff]
        %v6247 = vld [vmem:[%s19 + $0x70] sm:$0xff]
        %v6248 = vld [vmem:[%s19 + $0x78] sm:$0xff]
        %v6249 = vld [vmem:[%s19 + $0x80] sm:$0xff]
        %v6250 = vld [vmem:[%s19 + $0x88] sm:$0xff]
        %v6251 = vld [vmem:[%s19 + $0x90] sm:$0xff]
        %v6252 = vld [vmem:[%s19 + $0x98] sm:$0xff]
        %v6253 = vld [vmem:[%s19 + $0xa0] sm:$0xff]
        %v6254 = vld [vmem:[%s19 + $0xa8] sm:$0xff]
        %v6255 = vld [vmem:[%s19 + $0xb0] sm:$0xff]
        %v6256 = vld [vmem:[%s19 + $0xb8] sm:$0xff]
        %v6257 = vld [vmem:[%s19 + $0xc0] sm:$0xff]
        %v6258 = vld [vmem:[%s19 + $0xc8] sm:$0xff]
        %v6259 = vld [vmem:[%s19 + $0xd0] sm:$0xff]
        %v6260 = vld [vmem:[%s20] sm:$0xff]
        %v6261 = vld [vmem:[%s20 + $0x8] sm:$0xff]
        %v6262 = vld [vmem:[%s20 + $0x10] sm:$0xff]
        %v6263 = vld [vmem:[%s20 + $0x18] sm:$0xff]
        %v6264 = vld [vmem:[%s20 + $0x20] sm:$0xff]
        %v6265 = vld [vmem:[%s20 + $0x28] sm:$0xff]
        %v6266 = vld [vmem:[%s20 + $0x30] sm:$0xff]
        %v6267 = vld [vmem:[%s20 + $0x38] sm:$0xff]
        %v6268 = vld [vmem:[%s20 + $0x40] sm:$0xff]
        %6270 = vset.pattern.permute.xlu0 0
        %6271 = vperm.xlu0 %6270, %v6260
        %v6272 = vpop.permute.xlu0 %6271
        %6275 = vset.pattern.permute.xlu0 0
        %6276 = vperm.xlu0 %6275, %v6261
        %v6277 = vpop.permute.xlu0 %6276
        %6280 = vset.pattern.permute.xlu0 0
        %6281 = vperm.xlu0 %6280, %v6262
        %v6282 = vpop.permute.xlu0 %6281
        %6285 = vset.pattern.permute.xlu0 0
        %6286 = vperm.xlu0 %6285, %v6263
        %v6287 = vpop.permute.xlu0 %6286
        %6290 = vset.pattern.permute.xlu0 0
        %6291 = vperm.xlu0 %6290, %v6264
        %v6292 = vpop.permute.xlu0 %6291
        %6295 = vset.pattern.permute.xlu0 0
        %6296 = vperm.xlu0 %6295, %v6265
        %v6297 = vpop.permute.xlu0 %6296
        %6300 = vset.pattern.permute.xlu0 0
        %6301 = vperm.xlu0 %6300, %v6266
        %v6302 = vpop.permute.xlu0 %6301
        %6305 = vset.pattern.permute.xlu0 0
        %6306 = vperm.xlu0 %6305, %v6267
        %v6307 = vpop.permute.xlu0 %6306
        %6310 = vset.pattern.permute.xlu0 0
        %6311 = vperm.xlu0 %6310, %v6268
        %v6312 = vpop.permute.xlu0 %6311
        %v6315 = vsel %vm2360, %v6235, 0
        %v6318 = vsel %vm2360, %v6238, 0
        %v6321 = vsel %vm2360, %v6241, 0
        %v6324 = vsel %vm2360, %v6244, 0
        %v6327 = vsel %vm2360, %v6247, 0
        %v6330 = vsel %vm2360, %v6250, 0
        %v6333 = vsel %vm2360, %v6253, 0
        %v6336 = vsel %vm2360, %v6256, 0
        %v6339 = vsel %vm2360, %v6259, 0
        %6341 = vmatprep.subr.mxu0 0.0
        %6342 = vmatpush1.msra.mxu0 %v6176
        %6343 = vmatprep.subr.mxu0 0.0
        %6344 = vmatpush1.msra.mxu0 %v6175
        %6345 = vmatprep.subr.mxu0 0.0
        %6346 = vmatpush1.msra.mxu0 %v6174
        %6347 = vmatprep.subr.mxu0 0.0
        %6348 = vmatpush1.msra.mxu0 %v6173
        %6349 = vmatprep.subr.mxu0 0.0
        %6350 = vmatpush1.msra.mxu0 %v6172
        %6351 = vmatprep.subr.mxu0 0.0
        %6352 = vmatpush1.msra.mxu0 %v6171
        %6353 = vmatprep.subr.mxu0 0.0
        %6354 = vmatpush1.msra.mxu0 %v6170
        %6355 = vmatprep.subr.mxu0 0.0
        %6356 = vmatpush1.msra.mxu0 %v6151
        %6357 = vmatprep.subr.mxu0 0.0
        %6358 = vmatpush1.msra.mxu0 %v6150
        %6359 = vmatprep.subr.mxu0 0.0
        %6360 = vmatpush1.msra.mxu0 %v6149
        %6361 = vmatprep.subr.mxu0 0.0
        %6362 = vmatpush1.msra.mxu0 %v6148
        %6363 = vmatprep.subr.mxu0 0.0
        %6364 = vmatpush1.msra.mxu0 %v6147
        %6365 = vmatprep.subr.mxu0 0.0
        %6366 = vmatpush1.msra.mxu0 %v6146
        %6367 = vmatprep.subr.mxu0 0.0
        %6368 = vmatpush1.msra.mxu0 %v6145
        %6369 = vmatprep.subr.mxu0 0.0
        %6370 = vmatpush1.msra.mxu0 %v6144
        %6371 = vmatprep.subr.mxu0 0.0
        %6372 = vmatpush1.msra.mxu0 %v6143
        %6373 = vmatprep.subr.mxu0 0.0
        %6374 = vmatpush2.msra.mxu0 %v6201
        %6375 = vmatprep.subr.mxu0 0.0
        %6376 = vmatpush2.msra.mxu0 %v6200
        %6377 = vmatprep.subr.mxu0 0.0
        %6378 = vmatpush2.msra.mxu0 %v6199
        %6379 = vmatprep.subr.mxu0 0.0
        %6380 = vmatpush2.msra.mxu0 %v6198
        %6381 = vmatprep.subr.mxu0 0.0
        %6382 = vmatpush2.msra.mxu0 %v6197
        %6383 = vmatprep.subr.mxu0 0.0
        %6384 = vmatpush2.msra.mxu0 %v6124
        %6385 = vmatprep.subr.mxu0 0.0
        %6386 = vmatpush2.msra.mxu0 %v6123
        %6387 = vmatprep.subr.mxu0 0.0
        %6388 = vmatpush2.msra.mxu0 %v6122
        %6389 = vmatprep.subr.mxu0 0.0
        %6390 = vmatpush2.msra.mxu0 %v6121
        %6391 = vmatprep.subr.mxu0 0.0
        %6392 = vmatpush2.msra.mxu0 %v6120
        %6393 = vmatprep.subr.mxu0 0.0
        %6394 = vmatpush2.msra.mxu0 %v6119
        %6395 = vmatprep.subr.mxu0 0.0
        %6396 = vmatpush2.msra.mxu0 %v6118
        %6397 = vmatprep.subr.mxu0 0.0
        %6398 = vmatpush2.msra.mxu0 %v6117
        %6399 = vmatprep.subr.mxu0 0.0
        %6400 = vmatpush2.msra.mxu0 %v6116
        %6401 = vmatprep.subr.mxu0 0.0
        %6402 = vmatpush2.msra.mxu0 %v6178
        %6403 = vmatprep.subr.mxu0 0.0
        %6404 = vmatpush2.msra.mxu0 %v6177
        %6405 = vmatprep.mubr.f32.mxu0 %v6234
        %6406 = vmatmul.mubr.f32.gmra.mxu0 %v6233
        %v6407 = vpop.f32.mrf.mxu0
        %v6408 = vadd.f32 %v6272, %v6407
        %v6409 = vpop.f32.mrf.mxu0
        %6410 = vmatprep.mubr.f32.mxu0 %v6237
        %6411 = vmatmul.mubr.f32.gmra.mxu0 %v6236
        %v6412 = vpop.f32.mrf.mxu0
        %v6413 = vadd.f32 %v6277, %v6412
        %v6414 = vpop.f32.mrf.mxu0
        %6415 = vmatprep.mubr.f32.mxu0 %v6240
        %6416 = vmatmul.mubr.f32.gmra.mxu0 %v6239
        %v6417 = vpop.f32.mrf.mxu0
        %v6418 = vadd.f32 %v6282, %v6417
        %v6419 = vpop.f32.mrf.mxu0
        %6420 = vmatprep.mubr.f32.mxu0 %v6243
        %6421 = vmatmul.mubr.f32.gmra.mxu0 %v6242
        %v6422 = vpop.f32.mrf.mxu0
        %v6423 = vadd.f32 %v6287, %v6422
        %v6424 = vpop.f32.mrf.mxu0
        %6425 = vmatprep.mubr.f32.mxu0 %v6246
        %6426 = vmatmul.mubr.f32.gmra.mxu0 %v6245
        %v6427 = vpop.f32.mrf.mxu0
        %v6428 = vadd.f32 %v6292, %v6427
        %v6429 = vpop.f32.mrf.mxu0
        %6430 = vmatprep.mubr.f32.mxu0 %v6249
        %6431 = vmatmul.mubr.f32.gmra.mxu0 %v6248
        %v6432 = vpop.f32.mrf.mxu0
        %v6433 = vadd.f32 %v6297, %v6432
        %v6434 = vpop.f32.mrf.mxu0
        %6435 = vmatprep.mubr.f32.mxu0 %v6252
        %6436 = vmatmul.mubr.f32.gmra.mxu0 %v6251
        %v6437 = vpop.f32.mrf.mxu0
        %v6438 = vadd.f32 %v6302, %v6437
        %v6439 = vpop.f32.mrf.mxu0
        %6440 = vmatprep.mubr.f32.mxu0 %v6255
        %6441 = vmatmul.mubr.f32.gmra.mxu0 %v6254
        %v6442 = vpop.f32.mrf.mxu0
        %v6443 = vadd.f32 %v6307, %v6442
        %v6444 = vpop.f32.mrf.mxu0
        %6445 = vmatprep.mubr.f32.mxu0 %v6258
        %6446 = vmatmul.mubr.f32.gmra.mxu0 %v6257
        %v6447 = vpop.f32.mrf.mxu0
        %v6448 = vadd.f32 %v6312, %v6447
        %v6449 = vpop.f32.mrf.mxu0
        %6450 = vdwg.mxu0
        %6451 = vmatprep.subr.mxu0 0.0
        %6452 = vmatpush1.msra.mxu0 0.0
        %6453 = vmatprep.subr.mxu0 0.0
        %6454 = vmatpush1.msra.mxu0 0.0
        %6455 = vmatprep.subr.mxu0 0.0
        %6456 = vmatpush1.msra.mxu0 0.0
        %6457 = vmatprep.subr.mxu0 0.0
        %6458 = vmatpush1.msra.mxu0 %v6232
        %6459 = vmatprep.subr.mxu0 0.0
        %6460 = vmatpush1.msra.mxu0 %v6231
        %6461 = vmatprep.subr.mxu0 0.0
        %6462 = vmatpush1.msra.mxu0 %v6230
        %6463 = vmatprep.subr.mxu0 0.0
        %6464 = vmatpush1.msra.mxu0 %v6229
        %6465 = vmatprep.subr.mxu0 0.0
        %6466 = vmatpush1.msra.mxu0 %v6228
        %6467 = vmatprep.subr.mxu0 0.0
        %6468 = vmatpush1.msra.mxu0 %v6227
        %6469 = vmatprep.subr.mxu0 0.0
        %6470 = vmatpush1.msra.mxu0 %v6226
        %6471 = vmatprep.subr.mxu0 0.0
        %6472 = vmatpush1.msra.mxu0 %v6225
        %6473 = vmatprep.subr.mxu0 0.0
        %6474 = vmatpush1.msra.mxu0 %v6224
        %6475 = vmatprep.subr.mxu0 0.0
        %6476 = vmatpush1.msra.mxu0 %v6205
        %6477 = vmatprep.subr.mxu0 0.0
        %6478 = vmatpush1.msra.mxu0 %v6204
        %6479 = vmatprep.subr.mxu0 0.0
        %6480 = vmatpush1.msra.mxu0 %v6203
        %6481 = vmatprep.subr.mxu0 0.0
        %6482 = vmatpush1.msra.mxu0 %v6202
        %6483 = vmatprep.subr.mxu0 0.0
        %6484 = vmatpush2.msra.mxu0 0.0
        %6485 = vmatprep.subr.mxu0 0.0
        %6486 = vmatpush2.msra.mxu0 0.0
        %6487 = vmatprep.subr.mxu0 0.0
        %6488 = vmatpush2.msra.mxu0 0.0
        %6489 = vmatprep.subr.mxu0 0.0
        %6490 = vmatpush2.msra.mxu0 0.0
        %6491 = vmatprep.subr.mxu0 0.0
        %6492 = vmatpush2.msra.mxu0 0.0
        %6493 = vmatprep.subr.mxu0 0.0
        %6494 = vmatpush2.msra.mxu0 0.0
        %6495 = vmatprep.subr.mxu0 0.0
        %6496 = vmatpush2.msra.mxu0 0.0
        %6497 = vmatprep.subr.mxu0 0.0
        %6498 = vmatpush2.msra.mxu0 0.0
        %6499 = vmatprep.subr.mxu0 0.0
        %6500 = vmatpush2.msra.mxu0 0.0
        %6501 = vmatprep.subr.mxu0 0.0
        %6502 = vmatpush2.msra.mxu0 0.0
        %6503 = vmatprep.subr.mxu0 0.0
        %6504 = vmatpush2.msra.mxu0 0.0
        %6505 = vmatprep.subr.mxu0 0.0
        %6506 = vmatpush2.msra.mxu0 0.0
        %6507 = vmatprep.subr.mxu0 0.0
        %6508 = vmatpush2.msra.mxu0 0.0
        %6509 = vmatprep.subr.mxu0 0.0
        %6510 = vmatpush2.msra.mxu0 0.0
        %6511 = vmatprep.subr.mxu0 0.0
        %6512 = vmatpush2.msra.mxu0 0.0
        %6513 = vmatprep.subr.mxu0 0.0
        %6514 = vmatpush2.msra.mxu0 0.0
        %6515 = vmatprep.mubr.f32.mxu0 0.0
        %6516 = vmatmul.mubr.f32.gmra.mxu0 %v6315
        %v6517 = vpop.f32.mrf.mxu0
        %v6518 = vadd.f32 %v6408, %v6517
        %v6519 = vpop.f32.mrf.mxu0
        %6520 = vmatprep.mubr.f32.mxu0 0.0
        %6521 = vmatmul.mubr.f32.gmra.mxu0 %v6318
        %v6522 = vpop.f32.mrf.mxu0
        %v6523 = vadd.f32 %v6413, %v6522
        %v6524 = vpop.f32.mrf.mxu0
        %6525 = vmatprep.mubr.f32.mxu0 0.0
        %6526 = vmatmul.mubr.f32.gmra.mxu0 %v6321
        %v6527 = vpop.f32.mrf.mxu0
        %v6528 = vadd.f32 %v6418, %v6527
        %v6529 = vpop.f32.mrf.mxu0
        %6530 = vmatprep.mubr.f32.mxu0 0.0
        %6531 = vmatmul.mubr.f32.gmra.mxu0 %v6324
        %v6532 = vpop.f32.mrf.mxu0
        %v6533 = vadd.f32 %v6423, %v6532
        %v6534 = vpop.f32.mrf.mxu0
        %6535 = vmatprep.mubr.f32.mxu0 0.0
        %6536 = vmatmul.mubr.f32.gmra.mxu0 %v6327
        %v6537 = vpop.f32.mrf.mxu0
        %v6538 = vadd.f32 %v6428, %v6537
        %v6539 = vpop.f32.mrf.mxu0
        %6540 = vmatprep.mubr.f32.mxu0 0.0
        %6541 = vmatmul.mubr.f32.gmra.mxu0 %v6330
        %v6542 = vpop.f32.mrf.mxu0
        %v6543 = vadd.f32 %v6433, %v6542
        %v6544 = vpop.f32.mrf.mxu0
        %6545 = vmatprep.mubr.f32.mxu0 0.0
        %6546 = vmatmul.mubr.f32.gmra.mxu0 %v6333
        %v6547 = vpop.f32.mrf.mxu0
        %v6548 = vadd.f32 %v6438, %v6547
        %v6549 = vpop.f32.mrf.mxu0
        %6550 = vmatprep.mubr.f32.mxu0 0.0
        %6551 = vmatmul.mubr.f32.gmra.mxu0 %v6336
        %v6552 = vpop.f32.mrf.mxu0
        %v6553 = vadd.f32 %v6443, %v6552
        %v6554 = vpop.f32.mrf.mxu0
        %6555 = vmatprep.mubr.f32.mxu0 0.0
        %6556 = vmatmul.mubr.f32.gmra.mxu0 %v6339
        %v6557 = vpop.f32.mrf.mxu0
        %v6558 = vadd.f32 %v6448, %v6557
        %v6559 = vpop.f32.mrf.mxu0
        %6560 = vdwg.mxu0
        %6561 = vadd.xlane.f32.xlu0 %v6518
        %v6562 = vpop.xlane.xlu0 %6561
        %6563 = vadd.xlane.f32.xlu0 %v6523
        %v6564 = vpop.xlane.xlu0 %6563
        %6565 = vadd.xlane.f32.xlu0 %v6528
        %v6566 = vpop.xlane.xlu0 %6565
        %6567 = vadd.xlane.f32.xlu0 %v6533
        %v6568 = vpop.xlane.xlu0 %6567
        %6569 = vadd.xlane.f32.xlu0 %v6538
        %v6570 = vpop.xlane.xlu0 %6569
        %6571 = vadd.xlane.f32.xlu0 %v6543
        %v6572 = vpop.xlane.xlu0 %6571
        %6573 = vadd.xlane.f32.xlu0 %v6548
        %v6574 = vpop.xlane.xlu0 %6573
        %6575 = vadd.xlane.f32.xlu0 %v6553
        %v6576 = vpop.xlane.xlu0 %6575
        %6577 = vadd.xlane.f32.xlu0 %v6558
        %v6578 = vpop.xlane.xlu0 %6577
        %v6579 = vmul.f32 %v6562, 0.0078125
        %v6580 = vmul.f32 %v6564, 0.0078125
        %v6581 = vmul.f32 %v6566, 0.0078125
        %v6582 = vmul.f32 %v6568, 0.0078125
        %v6583 = vmul.f32 %v6570, 0.0078125
        %v6584 = vmul.f32 %v6572, 0.0078125
        %v6585 = vmul.f32 %v6574, 0.0078125
        %v6586 = vmul.f32 %v6576, 0.0078125
        %v6587 = vmul.f32 %v6578, 0.0078125
        %v6588 = vmul.f32 %v6518, %v6518
        %v6589 = vmul.f32 %v6523, %v6523
        %v6590 = vmul.f32 %v6528, %v6528
        %v6591 = vmul.f32 %v6533, %v6533
        %v6592 = vmul.f32 %v6538, %v6538
        %v6593 = vmul.f32 %v6543, %v6543
        %v6594 = vmul.f32 %v6548, %v6548
        %v6595 = vmul.f32 %v6553, %v6553
        %v6596 = vmul.f32 %v6558, %v6558
        %6597 = vadd.xlane.f32.xlu0 %v6588
        %v6598 = vpop.xlane.xlu0 %6597
        %6599 = vadd.xlane.f32.xlu0 %v6589
        %v6600 = vpop.xlane.xlu0 %6599
        %6601 = vadd.xlane.f32.xlu0 %v6590
        %v6602 = vpop.xlane.xlu0 %6601
        %6603 = vadd.xlane.f32.xlu0 %v6591
        %v6604 = vpop.xlane.xlu0 %6603
        %6605 = vadd.xlane.f32.xlu0 %v6592
        %v6606 = vpop.xlane.xlu0 %6605
        %6607 = vadd.xlane.f32.xlu0 %v6593
        %v6608 = vpop.xlane.xlu0 %6607
        %6609 = vadd.xlane.f32.xlu0 %v6594
        %v6610 = vpop.xlane.xlu0 %6609
        %6611 = vadd.xlane.f32.xlu0 %v6595
        %v6612 = vpop.xlane.xlu0 %6611
        %6613 = vadd.xlane.f32.xlu0 %v6596
        %v6614 = vpop.xlane.xlu0 %6613
        %v6615 = vmul.f32 %v6598, 0.0078125
        %v6616 = vmul.f32 %v6600, 0.0078125
        %v6617 = vmul.f32 %v6602, 0.0078125
        %v6618 = vmul.f32 %v6604, 0.0078125
        %v6619 = vmul.f32 %v6606, 0.0078125
        %v6620 = vmul.f32 %v6608, 0.0078125
        %v6621 = vmul.f32 %v6610, 0.0078125
        %v6622 = vmul.f32 %v6612, 0.0078125
        %v6623 = vmul.f32 %v6614, 0.0078125
        %v6624 = vmul.f32 %v6579, %v6579
        %v6625 = vmul.f32 %v6580, %v6580
        %v6626 = vmul.f32 %v6581, %v6581
        %v6627 = vmul.f32 %v6582, %v6582
        %v6628 = vmul.f32 %v6583, %v6583
        %v6629 = vmul.f32 %v6584, %v6584
        %v6630 = vmul.f32 %v6585, %v6585
        %v6631 = vmul.f32 %v6586, %v6586
        %v6632 = vmul.f32 %v6587, %v6587
        %v6633 = vsub.f32 %v6615, %v6624
        %v6634 = vsub.f32 %v6616, %v6625
        %v6635 = vsub.f32 %v6617, %v6626
        %v6636 = vsub.f32 %v6618, %v6627
        %v6637 = vsub.f32 %v6619, %v6628
        %v6638 = vsub.f32 %v6620, %v6629
        %v6639 = vsub.f32 %v6621, %v6630
        %v6640 = vsub.f32 %v6622, %v6631
        %v6641 = vsub.f32 %v6623, %v6632
        %v6642 = vmax.f32 %v6633, 0.0
        %v6643 = vmax.f32 %v6634, 0.0
        %v6644 = vmax.f32 %v6635, 0.0
        %v6645 = vmax.f32 %v6636, 0.0
        %v6646 = vmax.f32 %v6637, 0.0
        %v6647 = vmax.f32 %v6638, 0.0
        %v6648 = vmax.f32 %v6639, 0.0
        %v6649 = vmax.f32 %v6640, 0.0
        %v6650 = vmax.f32 %v6641, 0.0
        %v6651 = vsub.f32 %v6518, %v6579
        %v6652 = vsub.f32 %v6523, %v6580
        %v6653 = vsub.f32 %v6528, %v6581
        %v6654 = vsub.f32 %v6533, %v6582
        %v6655 = vsub.f32 %v6538, %v6583
        %v6656 = vsub.f32 %v6543, %v6584
        %v6657 = vsub.f32 %v6548, %v6585
        %v6658 = vsub.f32 %v6553, %v6586
        %v6659 = vsub.f32 %v6558, %v6587
        %v6660 = vadd.f32 %v6642, 1e-05
        %v6661 = vadd.f32 %v6643, 1e-05
        %v6662 = vadd.f32 %v6644, 1e-05
        %v6663 = vadd.f32 %v6645, 1e-05
        %v6664 = vadd.f32 %v6646, 1e-05
        %v6665 = vadd.f32 %v6647, 1e-05
        %v6666 = vadd.f32 %v6648, 1e-05
        %v6667 = vadd.f32 %v6649, 1e-05
        %v6668 = vadd.f32 %v6650, 1e-05
        %v6669 = vrsqrt.pop %v6660
        %v6670 = vrsqrt.pop %v6661
        %v6671 = vrsqrt.pop %v6662
        %v6672 = vrsqrt.pop %v6663
        %v6673 = vrsqrt.pop %v6664
        %v6674 = vrsqrt.pop %v6665
        %v6675 = vrsqrt.pop %v6666
        %v6676 = vrsqrt.pop %v6667
        %v6677 = vrsqrt.pop %v6668
        %v6678 = vmul.f32 %v6651, %v6669
        %v6679 = vmul.f32 %v6652, %v6670
        %v6680 = vmul.f32 %v6653, %v6671
        %v6681 = vmul.f32 %v6654, %v6672
        %v6682 = vmul.f32 %v6655, %v6673
        %v6683 = vmul.f32 %v6656, %v6674
        %v6684 = vmul.f32 %v6657, %v6675
        %v6685 = vmul.f32 %v6658, %v6676
        %v6686 = vmul.f32 %v6659, %v6677
        %vm6687 = vcmp.gt.f32.partialorder %v6678, 0.0
        %vm6688 = vcmp.gt.f32.partialorder %v6679, 0.0
        %vm6689 = vcmp.gt.f32.partialorder %v6680, 0.0
        %vm6690 = vcmp.gt.f32.partialorder %v6681, 0.0
        %vm6691 = vcmp.gt.f32.partialorder %v6682, 0.0
        %vm6692 = vcmp.gt.f32.partialorder %v6683, 0.0
        %vm6693 = vcmp.gt.f32.partialorder %v6684, 0.0
        %vm6694 = vcmp.gt.f32.partialorder %v6685, 0.0
        %vm6695 = vcmp.gt.f32.partialorder %v6686, 0.0
        %v6696 = vmul.f32 %v6678, %v6106
        %v6697 = vmul.f32 %v6679, %v6106
        %v6698 = vmul.f32 %v6680, %v6106
        %v6699 = vmul.f32 %v6681, %v6106
        %v6700 = vmul.f32 %v6682, %v6106
        %v6701 = vmul.f32 %v6683, %v6106
        %v6702 = vmul.f32 %v6684, %v6106
        %v6703 = vmul.f32 %v6685, %v6106
        %v6704 = vmul.f32 %v6686, %v6106
        %v6705 = vsel %vm6687, %v6678, %v6696
        %v6706 = vsel %vm6688, %v6679, %v6697
        %v6707 = vsel %vm6689, %v6680, %v6698
        %v6708 = vsel %vm6690, %v6681, %v6699
        %v6709 = vsel %vm6691, %v6682, %v6700
        %v6710 = vsel %vm6692, %v6683, %v6701
        %v6711 = vsel %vm6693, %v6684, %v6702
        %v6712 = vsel %vm6694, %v6685, %v6703
        %v6713 = vsel %vm6695, %v6686, %v6704
        %6714 = vrot.lane.b32.xlu0 %v6705, 1
        %v6715 = vpop.permute.xlu0 %6714
        %6716 = vrot.lane.b32.xlu0 %v6706, 1
        %v6717 = vpop.permute.xlu0 %6716
        %6718 = vrot.lane.b32.xlu0 %v6707, 1
        %v6719 = vpop.permute.xlu0 %6718
        %6720 = vrot.lane.b32.xlu0 %v6708, 1
        %v6721 = vpop.permute.xlu0 %6720
        %6722 = vrot.lane.b32.xlu0 %v6709, 1
        %v6723 = vpop.permute.xlu0 %6722
        %6724 = vrot.lane.b32.xlu0 %v6710, 1
        %v6725 = vpop.permute.xlu0 %6724
        %6726 = vrot.lane.b32.xlu0 %v6711, 1
        %v6727 = vpop.permute.xlu0 %6726
        %6728 = vrot.lane.b32.xlu0 %v6712, 1
        %v6729 = vpop.permute.xlu0 %6728
        %6730 = vrot.lane.b32.xlu0 %v6713, 1
        %v6731 = vpop.permute.xlu0 %6730
        %v6732 = vsel %vm818, %v6715, 0.0
        %v6733 = vsel %vm818, %v6717, 0.0
        %v6734 = vsel %vm818, %v6719, 0.0
        %v6735 = vsel %vm818, %v6721, 0.0
        %v6736 = vsel %vm818, %v6723, 0.0
        %v6737 = vsel %vm818, %v6725, 0.0
        %v6738 = vsel %vm818, %v6727, 0.0
        %v6739 = vsel %vm818, %v6729, 0.0
        %v6740 = vsel %vm818, %v6731, 0.0
        %6741 = vrot.lane.b32.xlu0 %v6705, 127
        %v6742 = vpop.permute.xlu0 %6741
        %6743 = vrot.lane.b32.xlu0 %v6706, 127
        %v6744 = vpop.permute.xlu0 %6743
        %6745 = vrot.lane.b32.xlu0 %v6707, 127
        %v6746 = vpop.permute.xlu0 %6745
        %6747 = vrot.lane.b32.xlu0 %v6708, 127
        %v6748 = vpop.permute.xlu0 %6747
        %6749 = vrot.lane.b32.xlu0 %v6709, 127
        %v6750 = vpop.permute.xlu0 %6749
        %6751 = vrot.lane.b32.xlu0 %v6710, 127
        %v6752 = vpop.permute.xlu0 %6751
        %6753 = vrot.lane.b32.xlu0 %v6711, 127
        %v6754 = vpop.permute.xlu0 %6753
        %6755 = vrot.lane.b32.xlu0 %v6712, 127
        %v6756 = vpop.permute.xlu0 %6755
        %6757 = vrot.lane.b32.xlu0 %v6713, 127
        %v6758 = vpop.permute.xlu0 %6757
        %v6759 = vsel %vm822, %v6742, 0.0
        %v6760 = vsel %vm822, %v6744, 0.0
        %v6761 = vsel %vm822, %v6746, 0.0
        %v6762 = vsel %vm822, %v6748, 0.0
        %v6763 = vsel %vm822, %v6750, 0.0
        %v6764 = vsel %vm822, %v6752, 0.0
        %v6765 = vsel %vm822, %v6754, 0.0
        %v6766 = vsel %vm822, %v6756, 0.0
        %v6767 = vsel %vm822, %v6758, 0.0
        %v6768 = vld [vmem:[%s21] sm:$0xff]
        %v6769 = vld [vmem:[%s21 + $0x8] sm:$0xff]
        %v6770 = vld [vmem:[%s21 + $0x10] sm:$0xff]
        %v6771 = vld [vmem:[%s21 + $0x18] sm:$0xff]
        %v6772 = vld [vmem:[%s21 + $0x20] sm:$0xff]
        %v6773 = vld [vmem:[%s21 + $0x28] sm:$0xff]
        %v6774 = vld [vmem:[%s21 + $0x30] sm:$0xff]
        %v6775 = vld [vmem:[%s21 + $0x38] sm:$0xff]
        %v6776 = vld [vmem:[%s21 + $0x40] sm:$0xff]
        %v6777 = vld [vmem:[%s21 + $0x48] sm:$0xff]
        %v6778 = vld [vmem:[%s21 + $0x50] sm:$0xff]
        %v6779 = vld [vmem:[%s21 + $0x58] sm:$0xff]
        %v6780 = vld [vmem:[%s21 + $0x60] sm:$0xff]
        %v6781 = vld [vmem:[%s21 + $0x68] sm:$0xff]
        %v6782 = vld [vmem:[%s21 + $0x70] sm:$0xff]
        %v6783 = vld [vmem:[%s21 + $0x78] sm:$0xff]
        %v6784 = vld [vmem:[%s21 + $0x80] sm:$0xff]
        %v6785 = vld [vmem:[%s21 + $0x88] sm:$0xff]
        %v6786 = vld [vmem:[%s22] sm:$0xff]
        %v6787 = vld [vmem:[%s22 + $0x8] sm:$0xff]
        %v6788 = vld [vmem:[%s22 + $0x10] sm:$0xff]
        %v6789 = vld [vmem:[%s22 + $0x18] sm:$0xff]
        %v6790 = vld [vmem:[%s22 + $0x20] sm:$0xff]
        %v6791 = vld [vmem:[%s22 + $0x28] sm:$0xff]
        %v6792 = vld [vmem:[%s22 + $0x30] sm:$0xff]
        %v6793 = vld [vmem:[%s22 + $0x38] sm:$0xff]
        %v6794 = vld [vmem:[%s22 + $0x40] sm:$0xff]
        %6796 = vset.pattern.permute.xlu0 0
        %6797 = vperm.xlu0 %6796, %v6786
        %v6798 = vpop.permute.xlu0 %6797
        %6801 = vset.pattern.permute.xlu0 0
        %6802 = vperm.xlu0 %6801, %v6787
        %v6803 = vpop.permute.xlu0 %6802
        %6806 = vset.pattern.permute.xlu0 0
        %6807 = vperm.xlu0 %6806, %v6788
        %v6808 = vpop.permute.xlu0 %6807
        %6811 = vset.pattern.permute.xlu0 0
        %6812 = vperm.xlu0 %6811, %v6789
        %v6813 = vpop.permute.xlu0 %6812
        %6816 = vset.pattern.permute.xlu0 0
        %6817 = vperm.xlu0 %6816, %v6790
        %v6818 = vpop.permute.xlu0 %6817
        %6821 = vset.pattern.permute.xlu0 0
        %6822 = vperm.xlu0 %6821, %v6791
        %v6823 = vpop.permute.xlu0 %6822
        %6826 = vset.pattern.permute.xlu0 0
        %6827 = vperm.xlu0 %6826, %v6792
        %v6828 = vpop.permute.xlu0 %6827
        %6831 = vset.pattern.permute.xlu0 0
        %6832 = vperm.xlu0 %6831, %v6793
        %v6833 = vpop.permute.xlu0 %6832
        %6836 = vset.pattern.permute.xlu0 0
        %6837 = vperm.xlu0 %6836, %v6794
        %v6838 = vpop.permute.xlu0 %6837
        %v6841 = vsel %vm2887, %v6769, 0
        %v6844 = vsel %vm2887, %v6771, 0
        %v6847 = vsel %vm2887, %v6773, 0
        %v6850 = vsel %vm2887, %v6775, 0
        %v6853 = vsel %vm2887, %v6777, 0
        %v6856 = vsel %vm2887, %v6779, 0
        %v6859 = vsel %vm2887, %v6781, 0
        %v6862 = vsel %vm2887, %v6783, 0
        %v6865 = vsel %vm2887, %v6785, 0
        %6867 = vmatprep.subr.mxu0 0.0
        %6868 = vmatpush1.msra.mxu0 %v6711
        %6869 = vmatprep.subr.mxu0 0.0
        %6870 = vmatpush1.msra.mxu0 %v6710
        %6871 = vmatprep.subr.mxu0 0.0
        %6872 = vmatpush1.msra.mxu0 %v6709
        %6873 = vmatprep.subr.mxu0 0.0
        %6874 = vmatpush1.msra.mxu0 %v6708
        %6875 = vmatprep.subr.mxu0 0.0
        %6876 = vmatpush1.msra.mxu0 %v6707
        %6877 = vmatprep.subr.mxu0 0.0
        %6878 = vmatpush1.msra.mxu0 %v6706
        %6879 = vmatprep.subr.mxu0 0.0
        %6880 = vmatpush1.msra.mxu0 %v6705
        %6881 = vmatprep.subr.mxu0 0.0
        %6882 = vmatpush1.msra.mxu0 %v6740
        %6883 = vmatprep.subr.mxu0 0.0
        %6884 = vmatpush1.msra.mxu0 %v6739
        %6885 = vmatprep.subr.mxu0 0.0
        %6886 = vmatpush1.msra.mxu0 %v6738
        %6887 = vmatprep.subr.mxu0 0.0
        %6888 = vmatpush1.msra.mxu0 %v6737
        %6889 = vmatprep.subr.mxu0 0.0
        %6890 = vmatpush1.msra.mxu0 %v6736
        %6891 = vmatprep.subr.mxu0 0.0
        %6892 = vmatpush1.msra.mxu0 %v6735
        %6893 = vmatprep.subr.mxu0 0.0
        %6894 = vmatpush1.msra.mxu0 %v6734
        %6895 = vmatprep.subr.mxu0 0.0
        %6896 = vmatpush1.msra.mxu0 %v6733
        %6897 = vmatprep.subr.mxu0 0.0
        %6898 = vmatpush1.msra.mxu0 %v6732
        %6899 = vmatprep.subr.mxu0 0.0
        %6900 = vmatpush2.msra.mxu0 0.0
        %6901 = vmatprep.subr.mxu0 0.0
        %6902 = vmatpush2.msra.mxu0 0.0
        %6903 = vmatprep.subr.mxu0 0.0
        %6904 = vmatpush2.msra.mxu0 0.0
        %6905 = vmatprep.subr.mxu0 0.0
        %6906 = vmatpush2.msra.mxu0 0.0
        %6907 = vmatprep.subr.mxu0 0.0
        %6908 = vmatpush2.msra.mxu0 0.0
        %6909 = vmatprep.subr.mxu0 0.0
        %6910 = vmatpush2.msra.mxu0 %v6767
        %6911 = vmatprep.subr.mxu0 0.0
        %6912 = vmatpush2.msra.mxu0 %v6766
        %6913 = vmatprep.subr.mxu0 0.0
        %6914 = vmatpush2.msra.mxu0 %v6765
        %6915 = vmatprep.subr.mxu0 0.0
        %6916 = vmatpush2.msra.mxu0 %v6764
        %6917 = vmatprep.subr.mxu0 0.0
        %6918 = vmatpush2.msra.mxu0 %v6763
        %6919 = vmatprep.subr.mxu0 0.0
        %6920 = vmatpush2.msra.mxu0 %v6762
        %6921 = vmatprep.subr.mxu0 0.0
        %6922 = vmatpush2.msra.mxu0 %v6761
        %6923 = vmatprep.subr.mxu0 0.0
        %6924 = vmatpush2.msra.mxu0 %v6760
        %6925 = vmatprep.subr.mxu0 0.0
        %6926 = vmatpush2.msra.mxu0 %v6759
        %6927 = vmatprep.subr.mxu0 0.0
        %6928 = vmatpush2.msra.mxu0 %v6713
        %6929 = vmatprep.subr.mxu0 0.0
        %6930 = vmatpush2.msra.mxu0 %v6712
        %6931 = vmatprep.mubr.f32.mxu0 %v6841
        %6932 = vmatmul.mubr.f32.gmra.mxu0 %v6768
        %v6933 = vpop.f32.mrf.mxu0
        %v6934 = vadd.f32 %v6798, %v6933
        %v6935 = vpop.f32.mrf.mxu0
        %6936 = vmatprep.mubr.f32.mxu0 %v6844
        %6937 = vmatmul.mubr.f32.gmra.mxu0 %v6770
        %v6938 = vpop.f32.mrf.mxu0
        %v6939 = vadd.f32 %v6803, %v6938
        %v6940 = vpop.f32.mrf.mxu0
        %6941 = vmatprep.mubr.f32.mxu0 %v6847
        %6942 = vmatmul.mubr.f32.gmra.mxu0 %v6772
        %v6943 = vpop.f32.mrf.mxu0
        %v6944 = vadd.f32 %v6808, %v6943
        %v6945 = vpop.f32.mrf.mxu0
        %6946 = vmatprep.mubr.f32.mxu0 %v6850
        %6947 = vmatmul.mubr.f32.gmra.mxu0 %v6774
        %v6948 = vpop.f32.mrf.mxu0
        %v6949 = vadd.f32 %v6813, %v6948
        %v6950 = vpop.f32.mrf.mxu0
        %6951 = vmatprep.mubr.f32.mxu0 %v6853
        %6952 = vmatmul.mubr.f32.gmra.mxu0 %v6776
        %v6953 = vpop.f32.mrf.mxu0
        %v6954 = vadd.f32 %v6818, %v6953
        %v6955 = vpop.f32.mrf.mxu0
        %6956 = vmatprep.mubr.f32.mxu0 %v6856
        %6957 = vmatmul.mubr.f32.gmra.mxu0 %v6778
        %v6958 = vpop.f32.mrf.mxu0
        %v6959 = vadd.f32 %v6823, %v6958
        %v6960 = vpop.f32.mrf.mxu0
        %6961 = vmatprep.mubr.f32.mxu0 %v6859
        %6962 = vmatmul.mubr.f32.gmra.mxu0 %v6780
        %v6963 = vpop.f32.mrf.mxu0
        %v6964 = vadd.f32 %v6828, %v6963
        %v6965 = vpop.f32.mrf.mxu0
        %6966 = vmatprep.mubr.f32.mxu0 %v6862
        %6967 = vmatmul.mubr.f32.gmra.mxu0 %v6782
        %v6968 = vpop.f32.mrf.mxu0
        %v6969 = vadd.f32 %v6833, %v6968
        %v6970 = vpop.f32.mrf.mxu0
        %6971 = vmatprep.mubr.f32.mxu0 %v6865
        %6972 = vmatmul.mubr.f32.gmra.mxu0 %v6784
        %v6973 = vpop.f32.mrf.mxu0
        %v6974 = vadd.f32 %v6838, %v6973
        %v6975 = vpop.f32.mrf.mxu0
        %6976 = vdwg.mxu0
        %6977 = vadd.xlane.f32.xlu0 %v6934
        %v6978 = vpop.xlane.xlu0 %6977
        %6979 = vadd.xlane.f32.xlu0 %v6939
        %v6980 = vpop.xlane.xlu0 %6979
        %6981 = vadd.xlane.f32.xlu0 %v6944
        %v6982 = vpop.xlane.xlu0 %6981
        %6983 = vadd.xlane.f32.xlu0 %v6949
        %v6984 = vpop.xlane.xlu0 %6983
        %6985 = vadd.xlane.f32.xlu0 %v6954
        %v6986 = vpop.xlane.xlu0 %6985
        %6987 = vadd.xlane.f32.xlu0 %v6959
        %v6988 = vpop.xlane.xlu0 %6987
        %6989 = vadd.xlane.f32.xlu0 %v6964
        %v6990 = vpop.xlane.xlu0 %6989
        %6991 = vadd.xlane.f32.xlu0 %v6969
        %v6992 = vpop.xlane.xlu0 %6991
        %6993 = vadd.xlane.f32.xlu0 %v6974
        %v6994 = vpop.xlane.xlu0 %6993
        %v6995 = vmul.f32 %v6978, 0.0078125
        %v6996 = vmul.f32 %v6980, 0.0078125
        %v6997 = vmul.f32 %v6982, 0.0078125
        %v6998 = vmul.f32 %v6984, 0.0078125
        %v6999 = vmul.f32 %v6986, 0.0078125
        %v7000 = vmul.f32 %v6988, 0.0078125
        %v7001 = vmul.f32 %v6990, 0.0078125
        %v7002 = vmul.f32 %v6992, 0.0078125
        %v7003 = vmul.f32 %v6994, 0.0078125
        %v7004 = vmul.f32 %v6934, %v6934
        %v7005 = vmul.f32 %v6939, %v6939
        %v7006 = vmul.f32 %v6944, %v6944
        %v7007 = vmul.f32 %v6949, %v6949
        %v7008 = vmul.f32 %v6954, %v6954
        %v7009 = vmul.f32 %v6959, %v6959
        %v7010 = vmul.f32 %v6964, %v6964
        %v7011 = vmul.f32 %v6969, %v6969
        %v7012 = vmul.f32 %v6974, %v6974
        %7013 = vadd.xlane.f32.xlu0 %v7004
        %v7014 = vpop.xlane.xlu0 %7013
        %7015 = vadd.xlane.f32.xlu0 %v7005
        %v7016 = vpop.xlane.xlu0 %7015
        %7017 = vadd.xlane.f32.xlu0 %v7006
        %v7018 = vpop.xlane.xlu0 %7017
        %7019 = vadd.xlane.f32.xlu0 %v7007
        %v7020 = vpop.xlane.xlu0 %7019
        %7021 = vadd.xlane.f32.xlu0 %v7008
        %v7022 = vpop.xlane.xlu0 %7021
        %7023 = vadd.xlane.f32.xlu0 %v7009
        %v7024 = vpop.xlane.xlu0 %7023
        %7025 = vadd.xlane.f32.xlu0 %v7010
        %v7026 = vpop.xlane.xlu0 %7025
        %7027 = vadd.xlane.f32.xlu0 %v7011
        %v7028 = vpop.xlane.xlu0 %7027
        %7029 = vadd.xlane.f32.xlu0 %v7012
        %v7030 = vpop.xlane.xlu0 %7029
        %v7031 = vmul.f32 %v7014, 0.0078125
        %v7032 = vmul.f32 %v7016, 0.0078125
        %v7033 = vmul.f32 %v7018, 0.0078125
        %v7034 = vmul.f32 %v7020, 0.0078125
        %v7035 = vmul.f32 %v7022, 0.0078125
        %v7036 = vmul.f32 %v7024, 0.0078125
        %v7037 = vmul.f32 %v7026, 0.0078125
        %v7038 = vmul.f32 %v7028, 0.0078125
        %v7039 = vmul.f32 %v7030, 0.0078125
        %v7040 = vmul.f32 %v6995, %v6995
        %v7041 = vmul.f32 %v6996, %v6996
        %v7042 = vmul.f32 %v6997, %v6997
        %v7043 = vmul.f32 %v6998, %v6998
        %v7044 = vmul.f32 %v6999, %v6999
        %v7045 = vmul.f32 %v7000, %v7000
        %v7046 = vmul.f32 %v7001, %v7001
        %v7047 = vmul.f32 %v7002, %v7002
        %v7048 = vmul.f32 %v7003, %v7003
        %v7049 = vsub.f32 %v7031, %v7040
        %v7050 = vsub.f32 %v7032, %v7041
        %v7051 = vsub.f32 %v7033, %v7042
        %v7052 = vsub.f32 %v7034, %v7043
        %v7053 = vsub.f32 %v7035, %v7044
        %v7054 = vsub.f32 %v7036, %v7045
        %v7055 = vsub.f32 %v7037, %v7046
        %v7056 = vsub.f32 %v7038, %v7047
        %v7057 = vsub.f32 %v7039, %v7048
        %v7058 = vmax.f32 %v7049, 0.0
        %v7059 = vmax.f32 %v7050, 0.0
        %v7060 = vmax.f32 %v7051, 0.0
        %v7061 = vmax.f32 %v7052, 0.0
        %v7062 = vmax.f32 %v7053, 0.0
        %v7063 = vmax.f32 %v7054, 0.0
        %v7064 = vmax.f32 %v7055, 0.0
        %v7065 = vmax.f32 %v7056, 0.0
        %v7066 = vmax.f32 %v7057, 0.0
        %v7067 = vsub.f32 %v6934, %v6995
        %v7068 = vsub.f32 %v6939, %v6996
        %v7069 = vsub.f32 %v6944, %v6997
        %v7070 = vsub.f32 %v6949, %v6998
        %v7071 = vsub.f32 %v6954, %v6999
        %v7072 = vsub.f32 %v6959, %v7000
        %v7073 = vsub.f32 %v6964, %v7001
        %v7074 = vsub.f32 %v6969, %v7002
        %v7075 = vsub.f32 %v6974, %v7003
        %v7076 = vadd.f32 %v7058, 1e-05
        %v7077 = vadd.f32 %v7059, 1e-05
        %v7078 = vadd.f32 %v7060, 1e-05
        %v7079 = vadd.f32 %v7061, 1e-05
        %v7080 = vadd.f32 %v7062, 1e-05
        %v7081 = vadd.f32 %v7063, 1e-05
        %v7082 = vadd.f32 %v7064, 1e-05
        %v7083 = vadd.f32 %v7065, 1e-05
        %v7084 = vadd.f32 %v7066, 1e-05
        %v7085 = vrsqrt.pop %v7076
        %v7086 = vrsqrt.pop %v7077
        %v7087 = vrsqrt.pop %v7078
        %v7088 = vrsqrt.pop %v7079
        %v7089 = vrsqrt.pop %v7080
        %v7090 = vrsqrt.pop %v7081
        %v7091 = vrsqrt.pop %v7082
        %v7092 = vrsqrt.pop %v7083
        %v7093 = vrsqrt.pop %v7084
        %v7094 = vmul.f32 %v7067, %v7085
        %v7095 = vmul.f32 %v7068, %v7086
        %v7096 = vmul.f32 %v7069, %v7087
        %v7097 = vmul.f32 %v7070, %v7088
        %v7098 = vmul.f32 %v7071, %v7089
        %v7099 = vmul.f32 %v7072, %v7090
        %v7100 = vmul.f32 %v7073, %v7091
        %v7101 = vmul.f32 %v7074, %v7092
        %v7102 = vmul.f32 %v7075, %v7093
        %v7103 = vadd.f32 %v7094, %v5281
        %v7104 = vadd.f32 %v7095, %v5282
        %v7105 = vadd.f32 %v7096, %v5283
        %v7106 = vadd.f32 %v7097, %v5284
        %v7107 = vadd.f32 %v7098, %v5285
        %v7108 = vadd.f32 %v7099, %v5286
        %v7109 = vadd.f32 %v7100, %v5287
        %v7110 = vadd.f32 %v7101, %v5288
        %v7111 = vadd.f32 %v7102, %v5289
        %v7112 = vmax.f32 %v7103, 0.0
        %v7113 = vmax.f32 %v7104, 0.0
        %v7114 = vmax.f32 %v7105, 0.0
        %v7115 = vmax.f32 %v7106, 0.0
        %v7116 = vmax.f32 %v7107, 0.0
        %v7117 = vmax.f32 %v7108, 0.0
        %v7118 = vmax.f32 %v7109, 0.0
        %v7119 = vmax.f32 %v7110, 0.0
        %v7120 = vmax.f32 %v7111, 0.0
        %v7121 = vld [vmem:[%s23] sm:$0xff]
        %vm7122 = vcmask 588800
        %v7124 = vsel %vm7122, %v7121, 0
        %7126 = vmatprep.subr.mxu0 0.0
        %7127 = vmatpush1.msra.mxu0 0.0
        %7128 = vmatprep.subr.mxu0 0.0
        %7129 = vmatpush1.msra.mxu0 0.0
        %7130 = vmatprep.subr.mxu0 0.0
        %7131 = vmatpush1.msra.mxu0 0.0
        %7132 = vmatprep.subr.mxu0 0.0
        %7133 = vmatpush1.msra.mxu0 0.0
        %7134 = vmatprep.subr.mxu0 0.0
        %7135 = vmatpush1.msra.mxu0 0.0
        %7136 = vmatprep.subr.mxu0 0.0
        %7137 = vmatpush1.msra.mxu0 0.0
        %7138 = vmatprep.subr.mxu0 0.0
        %7139 = vmatpush1.msra.mxu0 0.0
        %7140 = vmatprep.subr.mxu0 0.0
        %7141 = vmatpush1.msra.mxu0 %v7120
        %7142 = vmatprep.subr.mxu0 0.0
        %7143 = vmatpush1.msra.mxu0 %v7119
        %7144 = vmatprep.subr.mxu0 0.0
        %7145 = vmatpush1.msra.mxu0 %v7118
        %7146 = vmatprep.subr.mxu0 0.0
        %7147 = vmatpush1.msra.mxu0 %v7117
        %7148 = vmatprep.subr.mxu0 0.0
        %7149 = vmatpush1.msra.mxu0 %v7116
        %7150 = vmatprep.subr.mxu0 0.0
        %7151 = vmatpush1.msra.mxu0 %v7115
        %7152 = vmatprep.subr.mxu0 0.0
        %7153 = vmatpush1.msra.mxu0 %v7114
        %7154 = vmatprep.subr.mxu0 0.0
        %7155 = vmatpush1.msra.mxu0 %v7113
        %7156 = vmatprep.subr.mxu0 0.0
        %7157 = vmatpush1.msra.mxu0 %v7112
        %7158 = vmatprep.subr.mxu0 0.0
        %7159 = vmatpush2.msra.mxu0 0.0
        %7160 = vmatprep.subr.mxu0 0.0
        %7161 = vmatpush2.msra.mxu0 0.0
        %7162 = vmatprep.subr.mxu0 0.0
        %7163 = vmatpush2.msra.mxu0 0.0
        %7164 = vmatprep.subr.mxu0 0.0
        %7165 = vmatpush2.msra.mxu0 0.0
        %7166 = vmatprep.subr.mxu0 0.0
        %7167 = vmatpush2.msra.mxu0 0.0
        %7168 = vmatprep.subr.mxu0 0.0
        %7169 = vmatpush2.msra.mxu0 0.0
        %7170 = vmatprep.subr.mxu0 0.0
        %7171 = vmatpush2.msra.mxu0 0.0
        %7172 = vmatprep.subr.mxu0 0.0
        %7173 = vmatpush2.msra.mxu0 0.0
        %7174 = vmatprep.subr.mxu0 0.0
        %7175 = vmatpush2.msra.mxu0 0.0
        %7176 = vmatprep.subr.mxu0 0.0
        %7177 = vmatpush2.msra.mxu0 0.0
        %7178 = vmatprep.subr.mxu0 0.0
        %7179 = vmatpush2.msra.mxu0 0.0
        %7180 = vmatprep.subr.mxu0 0.0
        %7181 = vmatpush2.msra.mxu0 0.0
        %7182 = vmatprep.subr.mxu0 0.0
        %7183 = vmatpush2.msra.mxu0 0.0
        %7184 = vmatprep.subr.mxu0 0.0
        %7185 = vmatpush2.msra.mxu0 0.0
        %7186 = vmatprep.subr.mxu0 0.0
        %7187 = vmatpush2.msra.mxu0 0.0
        %7188 = vmatprep.subr.mxu0 0.0
        %7189 = vmatpush2.msra.mxu0 0.0
        %7190 = vmatprep.mubr.f32.mxu0 0.0
        %7191 = vmatmul.mubr.f32.gmra.mxu0 %v7124
        %v7192 = vpop.f32.mrf.mxu0
        %v7193 = vadd.f32 0.0, %v7192
        %v7194 = vpop.f32.mrf.mxu0
        %7195 = vdwg.mxu0
        %7196 = vadd.xlane.f32.xlu0 %v7193
        %v7197 = vpop.xlane.xlu0 %7196
        %v7198 = vmul.f32 %v7197, 0.0078125
        %v7199 = vld [vmem:[%s24] sm:$0xff]
        %v7200 = vadd.f32 %v7198, %v7199
        %vm7201 = vcmask 7168
        %7202 = vst.msk [vmem:[%s787] sm:$0xff] %vm7201, %v7200
        %p7203 = scmp.lt.s32.totalorder %s37, 1
        %s7204 = scalar_select %p7203, %s37, 1
        %s7205 = smul.addr %s7204, 8
        %s7206 = scalar_lea.vmem %s25, %s7205
        // Predicated region
        $region125: #{resnet_forward.1} parent=119 // pred_check
          %p7207 = pneg %p590
        $region126: #{resnet_forward.1} parent=119 // pred_check_branch
          %7209 = sbr.rel (%p7207) target = $region128
        $region127: #{resnet_forward.1} parent=119 // pred_region
          _
        $region128: #{resnet_forward.1} parent=119 // pred_fallthru
          _
      $region120: #{resnet_forward.1} parent=5 // pred_fallthru
        _
      %p7210 = scmp.le.s32.totalorder 2, %s32
      // Predicated region
      $region129: #{resnet_forward.1} parent=5 // pred_check
        %p7211 = pneg %p7210
      $region130: #{resnet_forward.1} parent=5 // pred_check_branch
        %7213 = sbr.rel (%p7211) target = $region132
      $region131: #{resnet_forward.1} parent=5 // pred_region
        %s7214 = ssub.s32 %s32, 2
        // Predicated region
        $region133: #{resnet_forward.1} parent=131 // pred_check
          %p7215 = pneg %p596
        $region134: #{resnet_forward.1} parent=131 // pred_check_branch
          %7217 = sbr.rel (%p7215) target = $region136
        $region135: #{resnet_forward.1} parent=131 // pred_region
          %p7218 = scmp.lt.s32.totalorder %s38, 1
          %s7219 = scalar_select %p7218, %s38, 1
          %s7220 = smul.addr %s7219, 8
          %s7221 = scalar_lea.vmem %s25, %s7220
        $region136: #{resnet_forward.1} parent=131 // pred_fallthru
          _
      $region132: #{resnet_forward.1} parent=5 // pred_fallthru
        _
    $region6: #{resnet_forward.1} parent=1 // loop_footer
      %s36 = sadd.s32 1, %s32
    $region7: #{resnet_forward.1} parent=1 // loop_footer_branch
      %31 = sbr.rel target = $region3
    $region8: #{resnet_forward.1} parent=1 // loop_exit
      _
    %7222 = vsyncpa [#allocation3], 1
    %s7223 = scalar_lea.sflag [#allocation3], 1
    %7224 = vsyncpa %s7223, 1

</llo_original>
